<compile_context>
chip_gen: v6e
topology: v6e:2x2x1
jax: 0.10.0
libtpu: 0.0.40
codegen_flags: <defaults>
</compile_context>

<pallas_src>
import numpy as np
import jax
import jax.numpy as jnp
from jax import lax
from jax.experimental import pallas as pl
from jax.experimental.pallas import tpu as pltpu

NFC = 32                 # opt.nfc
B = 2
H = W = 16
HO = WO = 18             # tail output spatial size
M = H * W                # 256 spatial positions (head/body grid)
MT = HO * WO             # 324 spatial positions (tail grid)
C2 = 2 * NFC             # 64 fused (batch, channel) columns
NSTAT = B * H * W        # 512 samples per channel for BatchNorm stats
BN_EPS = 1e-5
LRELU_SLOPE = 0.2


# ---------------------------------------------------------------------------
# Fused Pallas kernel: head + body(3) + tail
# ---------------------------------------------------------------------------
def disc_fused_kernel(cols_ref, wh_ref, wb_ref, ktt_ref, tt_ref,
                      bias_ref, gamma_ref, beta_ref, tbias_ref, o_ref):
    f32 = jnp.float32
    bf16 = jnp.bfloat16

    # Boundary masks for the reflect-shift fix-ups (built in-kernel, no DMA).
    row = lax.broadcasted_iota(jnp.int32, (M, 1), 0)      # flat index 16*h + w
    w_idx = row & (W - 1)
    w_lo = w_idx == 0                   # w == 0
    w_hi = w_idx == (W - 1)             # w == 15
    h_lo = row < W                      # h == 0
    h_hi = row >= (M - W)               # h == 15

    def roll_rows(a, k):
        # result[i, :] = a[(i - k) % M, :]   (jnp.roll semantics, sublane axis)
        return pltpu.roll(a, k % M, axis=0)

    def shift_w(y):
        """Column (w) reflect-shifts of y: sources refl(w-1) and refl(w+1)."""
        rp = roll_rows(y, 1)            # rp[i] = y[i-1]
        rm = roll_rows(y, -1)           # rm[i] = y[i+1]
        cm1 = jnp.where(w_lo, rm, rp)   # source refl(w-1): w=0 reflects to w=1
        cp1 = jnp.where(w_hi, rp, rm)   # source refl(w+1): w=15 reflects to 14
        return cm1, cp1

    def shift_h(p, dy):
        """Row (h) reflect-shift of a partial sum; dy in {0, 2}."""
        rp = roll_rows(p, W)            # rp[i] = p[i-16]
        rm = roll_rows(p, -W)           # rm[i] = p[i+16]
        if dy == 0:                     # source refl(h-1)
            return jnp.where(h_lo, rm, rp)
        return jnp.where(h_hi, rp, rm)  # dy == 2: source refl(h+1)

    def bn_lrelu(z, li):
        # z: (256, 64) f32 pre-bias conv output.  One-pass batch statistics;
        # the two batch column blocks are combined with a lane roll by 32.
        zb = z + bias_ref[li:li + 1, :]
        s1 = jnp.sum(zb, axis=0, keepdims=True)                  # (1, 64)
        s2 = jnp.sum(zb * zb, axis=0, keepdims=True)             # (1, 64)
        s1 = s1 + pltpu.roll(s1, NFC, axis=1)                    # batch-combine
        s2 = s2 + pltpu.roll(s2, NFC, axis=1)
        mean = s1 * (1.0 / NSTAT)
        var = s2 * (1.0 / NSTAT) - mean * mean                   # biased var
        scale = gamma_ref[li:li + 1, :] * lax.rsqrt(var + BN_EPS)
        shift = beta_ref[li:li + 1, :] - mean * scale
        zh = zb * scale + shift                                  # folded affine
        return jnp.where(zh >= 0.0, zh, LRELU_SLOPE * zh)

    # ---- head: ConvBlock(1, nfc) (host-built tiny im2col, one dot) ---------
    z = jnp.dot(cols_ref[...], wh_ref[...], preferred_element_type=f32)
    y = bn_lrelu(z, 0)                                           # (256, 64) f32

    # ---- body: 3 x ConvBlock(nfc, nfc) --------------------------------------
    # reflect-pad + 3x3 conv == shift columns of y, matmul each tap, shift the
    # per-dy partial sums in h (row permutations commute with the matmul).
    for li in range(3):
        cm1, cp1 = shift_w(y)
        cols3 = (cm1.astype(bf16), y.astype(bf16), cp1.astype(bf16))
        acc = None
        for dy in range(3):
            p = None
            for dx in range(3):
                t = jnp.dot(cols3[dx], wb_ref[li, dy * 3 + dx],
                            preferred_element_type=f32)
                p = t if p is None else p + t
            if dy != 1:
                p = shift_h(p, dy)
            acc = p if acc is None else acc + p
        y = bn_lrelu(acc, li + 1)

    # ---- tail: ReflectionPad2d(1) + Conv2d(nfc, 1, 3, padding=1) -----------
    yb = y.astype(bf16)                                          # (256, 64)
    # One channel contraction for all 9 taps x 2 batches: row = d*2 + b.
    a_all = lax.dot_general(ktt_ref[...], yb,
                            dimension_numbers=(((1,), (1,)), ((), ())),
                            preferred_element_type=f32)          # (18, 256)
    out = None
    for d in range(9):
        a_d = a_all[2 * d:2 * d + 2, :].astype(bf16)             # (2, 256)
        # scatter onto the padded 18x18 output grid (0/1 select, lane-dense)
        t = jnp.dot(a_d, tt_ref[d], preferred_element_type=f32)  # (2, 324)
        out = t if out is None else out + t
    o_ref[...] = out + tbias_ref[...]                            # (2, 324)


# ---------------------------------------------------------------------------
# Host-side constant construction (built once, passed as kernel inputs)
# ---------------------------------------------------------------------------
def _refl(i, n=H):
    if i < 0:
        return -i
    if i >= n:
        return 2 * (n - 1) - i
    return i


def _build_tail_selection():
    # ReflectionPad2d(1) followed by the conv's own zero padding=1: map the
    # 20-wide padded axis back onto the 16-wide body axis (None == zero pad).
    def srcmap(j):
        if j == 0 or j == 19:
            return None
        return _refl(j - 2)

    rt = np.zeros((3, H, HO), np.float32)
    for dsh in range(3):
        for o in range(HO):
            sidx = srcmap(o + dsh)
            if sidx is not None:
                rt[dsh, sidx, o] = 1.0
    tt = np.zeros((9, M, MT), np.float32)
    for dy in range(3):
        for dx in range(3):
            tt[dy * 3 + dx] = np.kron(rt[dy], rt[dx])
    return jnp.asarray(tt, jnp.bfloat16)


def make_params(key, nfc=NFC):
    ks = jax.random.split(key, 10)
    eye2 = jnp.eye(2, dtype=jnp.float32)

    # --- synthetic PyTorch-layout weights ------------------------------------
    k_head = jax.random.normal(ks[0], (nfc, 1, 3, 3), jnp.float32) * 0.1
    b_head = jax.random.normal(ks[1], (nfc,), jnp.float32) * 0.01
    k_body = [jax.random.normal(ks[2 + i], (nfc, nfc, 3, 3), jnp.float32) * 0.1
              for i in range(3)]
    b_body = [jax.random.normal(ks[5 + i], (nfc,), jnp.float32) * 0.01
              for i in range(3)]
    k_tail = jax.random.normal(ks[8], (1, nfc, 3, 3), jnp.float32) * 0.1
    b_tail = jax.random.normal(ks[9], (1,), jnp.float32) * 0.01

    # --- head: (9, nfc) tap-major weight, block-diag over batch -> (18, 64)
    wh9 = jnp.transpose(k_head[:, 0], (1, 2, 0)).reshape(9, nfc)
    wh = jnp.kron(eye2, wh9).astype(jnp.bfloat16)

    # --- body: (3, 9, 64, 64) block-diag per-tap weights
    wc = jnp.stack([jnp.transpose(k, (2, 3, 1, 0)).reshape(9, nfc, nfc)
                    for k in k_body])                            # (3, 9, nfc, nfc)
    wb = jnp.kron(eye2[None, None], wc).astype(jnp.bfloat16)     # (3, 9, 64, 64)

    # --- tail: per-tap channel weights stacked to (18, 64), row = d*2 + b
    ktvec = jnp.transpose(k_tail[0], (1, 2, 0)).reshape(9, 1, nfc)
    ktt = jnp.kron(eye2[None], ktvec).reshape(18, 2 * nfc).astype(jnp.bfloat16)

    # --- per-layer conv bias / BN params, tiled over the 2 batch column blocks
    biases = jnp.stack([jnp.tile(b, 2) for b in [b_head] + b_body])   # (4, 64)
    gammas = jnp.ones((4, C2), jnp.float32)
    betas = jnp.zeros((4, C2), jnp.float32)

    return dict(wh=wh, wb=wb, ktt=ktt, Tt=_build_tail_selection(),
                bias=biases, gamma=gammas, beta=betas,
                tbias=b_tail.reshape(1, 1))


# ---------------------------------------------------------------------------
# Forward
# ---------------------------------------------------------------------------
def _build_head_cols(x_nchw):
    """(B,1,16,16) NCHW -> head im2col (256, 18), column index = b*9 + tap."""
    xp = jnp.pad(x_nchw, ((0, 0), (0, 0), (1, 1), (1, 1)), mode="reflect")
    parts = [xp[:, 0, dy:dy + H, dx:dx + W]
             for dy in range(3) for dx in range(3)]              # 9 x (B,16,16)
    p = jnp.stack(parts, axis=1)                                 # (B, 9, 16, 16)
    return jnp.transpose(p, (2, 3, 0, 1)).reshape(M, B * 9).astype(jnp.bfloat16)


@jax.jit
def discriminator_forward(x_nchw, params):
    cols = _build_head_cols(x_nchw)
    args = (cols, params["wh"], params["wb"], params["ktt"], params["Tt"],
            params["bias"], params["gamma"], params["beta"], params["tbias"])

    flops = 2 * (M * (B * 9) * C2              # head conv
                 + 3 * 9 * M * C2 * C2         # body convs (selection gone)
                 + (B * 9) * C2 * M            # tail channel contraction
                 + 9 * B * M * MT)             # tail scatter
    bytes_accessed = (sum(int(np.prod(a.shape)) * a.dtype.itemsize for a in args)
                      + B * MT * 4)

    out = pl.pallas_call(
        disc_fused_kernel,
        out_shape=jax.ShapeDtypeStruct((B, MT), jnp.float32),
        in_specs=[pl.BlockSpec(memory_space=pltpu.MemorySpace.VMEM)] * len(args),
        out_specs=pl.BlockSpec(memory_space=pltpu.MemorySpace.VMEM),
        cost_estimate=pl.CostEstimate(flops=flops, transcendentals=4 * C2,
                                      bytes_accessed=bytes_accessed),
    )(*args)
    # (B, 324) lane-dense output is already NCHW order for Cout=1
    return out.reshape(B, 1, HO, WO)


if __name__ == "__main__":
    key = jax.random.PRNGKey(0)
    kx, kp = jax.random.split(key)
    x = jax.random.normal(kx, (B, 1, H, W), jnp.float32)         # NCHW, like PyTorch
    params = make_params(kp)

    out = discriminator_forward(x, params)
    out = jax.block_until_ready(out)

    assert out.shape == (B, 1, HO, WO), out.shape
    assert out.dtype == jnp.float32
    assert bool(jnp.all(jnp.isfinite(out)))
    print("KERNEL_OK")
</pallas_src>

<mosaic_0001>
module attributes {stable_mosaic.version = 11 : i64} {
  func.func @disc_fused_kernel(%arg0: memref<256x18xbf16, #tpu.memory_space<vmem>>, %arg1: memref<18x64xbf16, #tpu.memory_space<vmem>>, %arg2: memref<3x9x64x64xbf16, #tpu.memory_space<vmem>>, %arg3: memref<18x64xbf16, #tpu.memory_space<vmem>>, %arg4: memref<9x256x324xbf16, #tpu.memory_space<vmem>>, %arg5: memref<4x64xf32, #tpu.memory_space<vmem>>, %arg6: memref<4x64xf32, #tpu.memory_space<vmem>>, %arg7: memref<4x64xf32, #tpu.memory_space<vmem>>, %arg8: memref<1x1xf32, #tpu.memory_space<vmem>>, %arg9: memref<2x324xf32, #tpu.memory_space<vmem>>) attributes {dimension_semantics = [], scalar_prefetch = 0 : i64, scratch_operands = 0 : i64, tpu.core_type = #tpu.core_type<tc>} {
    %0 = tpu.iota {dimensions = array<i32: 0>} : vector<256x1xi32>
    %c15_i32 = arith.constant 15 : i32
    %1 = vector.broadcast %c15_i32 : i32 to vector<256x1xi32>
    %2 = arith.andi %0, %1 : vector<256x1xi32>
    %c0_i32 = arith.constant 0 : i32
    %3 = vector.broadcast %c0_i32 : i32 to vector<256x1xi32>
    %4 = arith.cmpi eq, %2, %3 : vector<256x1xi32>
    %c15_i32_0 = arith.constant 15 : i32
    %5 = vector.broadcast %c15_i32_0 : i32 to vector<256x1xi32>
    %6 = arith.cmpi eq, %2, %5 : vector<256x1xi32>
    %c16_i32 = arith.constant 16 : i32
    %7 = vector.broadcast %c16_i32 : i32 to vector<256x1xi32>
    %8 = arith.cmpi slt, %0, %7 : vector<256x1xi32>
    %c240_i32 = arith.constant 240 : i32
    %9 = vector.broadcast %c240_i32 : i32 to vector<256x1xi32>
    %10 = arith.cmpi sge, %0, %9 : vector<256x1xi32>
    %c0 = arith.constant 0 : index
    %c0_1 = arith.constant 0 : index
    %11 = vector.load %arg0[%c0, %c0_1] : memref<256x18xbf16, #tpu.memory_space<vmem>>, vector<256x18xbf16>
    %c0_2 = arith.constant 0 : index
    %c0_3 = arith.constant 0 : index
    %12 = vector.load %arg1[%c0_2, %c0_3] : memref<18x64xbf16, #tpu.memory_space<vmem>>, vector<18x64xbf16>
    %cst = arith.constant dense<0.000000e+00> : vector<256x64xf32>
    %13 = tpu.matmul %11, %12, %cst {dimension_numbers = #tpu.dot_dimension_numbers<[1], [0], [0], [1], [0, 0, 1, 1], [], []>} : vector<256x18xbf16>, vector<18x64xbf16>, vector<256x64xf32> -> vector<256x64xf32>
    %c0_4 = arith.constant 0 : index
    %c0_5 = arith.constant 0 : index
    %14 = vector.load %arg5[%c0_4, %c0_5] : memref<4x64xf32, #tpu.memory_space<vmem>>, vector<1x64xf32>
    %15 = vector.broadcast %14 : vector<1x64xf32> to vector<256x64xf32>
    %16 = arith.addf %13, %15 : vector<256x64xf32>
    %cst_6 = arith.constant dense<0.000000e+00> : vector<64xf32>
    %17 = vector.multi_reduction <add>, %16, %cst_6 [0] : vector<256x64xf32> to vector<64xf32>
    %18 = vector.shape_cast %17 : vector<64xf32> to vector<1x64xf32>
    %19 = arith.mulf %16, %16 : vector<256x64xf32>
    %cst_7 = arith.constant dense<0.000000e+00> : vector<64xf32>
    %20 = vector.multi_reduction <add>, %19, %cst_7 [0] : vector<256x64xf32> to vector<64xf32>
    %21 = vector.shape_cast %20 : vector<64xf32> to vector<1x64xf32>
    %c32_i32 = arith.constant 32 : i32
    %22 = tpu.dynamic_rotate %18 by %c32_i32 dim 1 : vector<1x64xf32>, i32 -> vector<1x64xf32>
    %23 = arith.addf %18, %22 : vector<1x64xf32>
    %c32_i32_8 = arith.constant 32 : i32
    %24 = tpu.dynamic_rotate %21 by %c32_i32_8 dim 1 : vector<1x64xf32>, i32 -> vector<1x64xf32>
    %25 = arith.addf %21, %24 : vector<1x64xf32>
    %cst_9 = arith.constant 0.001953125 : f32
    %26 = vector.broadcast %cst_9 : f32 to vector<1x64xf32>
    %27 = arith.mulf %23, %26 : vector<1x64xf32>
    %cst_10 = arith.constant 0.001953125 : f32
    %28 = vector.broadcast %cst_10 : f32 to vector<1x64xf32>
    %29 = arith.mulf %25, %28 : vector<1x64xf32>
    %30 = arith.mulf %27, %27 : vector<1x64xf32>
    %31 = arith.subf %29, %30 : vector<1x64xf32>
    %c0_11 = arith.constant 0 : index
    %c0_12 = arith.constant 0 : index
    %32 = vector.load %arg6[%c0_11, %c0_12] : memref<4x64xf32, #tpu.memory_space<vmem>>, vector<1x64xf32>
    %cst_13 = arith.constant 9.99999974E-6 : f32
    %33 = vector.broadcast %cst_13 : f32 to vector<1x64xf32>
    %34 = arith.addf %31, %33 : vector<1x64xf32>
    %35 = math.rsqrt %34 : vector<1x64xf32>
    %36 = arith.mulf %32, %35 : vector<1x64xf32>
    %c0_14 = arith.constant 0 : index
    %c0_15 = arith.constant 0 : index
    %37 = vector.load %arg7[%c0_14, %c0_15] : memref<4x64xf32, #tpu.memory_space<vmem>>, vector<1x64xf32>
    %38 = arith.mulf %27, %36 : vector<1x64xf32>
    %39 = arith.subf %37, %38 : vector<1x64xf32>
    %40 = vector.broadcast %36 : vector<1x64xf32> to vector<256x64xf32>
    %41 = arith.mulf %16, %40 : vector<256x64xf32>
    %42 = vector.broadcast %39 : vector<1x64xf32> to vector<256x64xf32>
    %43 = arith.addf %41, %42 : vector<256x64xf32>
    %cst_16 = arith.constant 0.000000e+00 : f32
    %44 = vector.broadcast %cst_16 : f32 to vector<256x64xf32>
    %45 = arith.cmpf oge, %43, %44 : vector<256x64xf32>
    %cst_17 = arith.constant 2.000000e-01 : f32
    %46 = vector.broadcast %cst_17 : f32 to vector<256x64xf32>
    %47 = arith.mulf %46, %43 : vector<256x64xf32>
    %48 = arith.select %45, %43, %47 : vector<256x64xi1>, vector<256x64xf32>
    %c1_i32 = arith.constant 1 : i32
    %49 = tpu.dynamic_rotate %48 by %c1_i32 dim 0 : vector<256x64xf32>, i32 -> vector<256x64xf32>
    %c255_i32 = arith.constant 255 : i32
    %50 = tpu.dynamic_rotate %48 by %c255_i32 dim 0 : vector<256x64xf32>, i32 -> vector<256x64xf32>
    %51 = vector.shape_cast %4 : vector<256x1xi1> to vector<256x1xi1>
    %52 = vector.broadcast %51 : vector<256x1xi1> to vector<256x64xi1>
    %53 = arith.select %52, %50, %49 : vector<256x64xi1>, vector<256x64xf32>
    %54 = vector.shape_cast %6 : vector<256x1xi1> to vector<256x1xi1>
    %55 = vector.broadcast %54 : vector<256x1xi1> to vector<256x64xi1>
    %56 = arith.select %55, %49, %50 : vector<256x64xi1>, vector<256x64xf32>
    %57 = arith.truncf %53 : vector<256x64xf32> to vector<256x64xbf16>
    %58 = arith.truncf %48 : vector<256x64xf32> to vector<256x64xbf16>
    %59 = arith.truncf %56 : vector<256x64xf32> to vector<256x64xbf16>
    %c0_18 = arith.constant 0 : index
    %c0_19 = arith.constant 0 : index
    %c0_20 = arith.constant 0 : index
    %c0_21 = arith.constant 0 : index
    %60 = vector.load %arg2[%c0_18, %c0_19, %c0_20, %c0_21] : memref<3x9x64x64xbf16, #tpu.memory_space<vmem>>, vector<1x1x64x64xbf16>
    %61 = vector.shape_cast %60 : vector<1x1x64x64xbf16> to vector<64x64xbf16>
    %cst_22 = arith.constant dense<0.000000e+00> : vector<256x64xf32>
    %62 = tpu.matmul %57, %61, %cst_22 {dimension_numbers = #tpu.dot_dimension_numbers<[1], [0], [0], [1], [0, 0, 1, 1], [], []>} : vector<256x64xbf16>, vector<64x64xbf16>, vector<256x64xf32> -> vector<256x64xf32>
    %c0_23 = arith.constant 0 : index
    %c1 = arith.constant 1 : index
    %c0_24 = arith.constant 0 : index
    %c0_25 = arith.constant 0 : index
    %63 = vector.load %arg2[%c0_23, %c1, %c0_24, %c0_25] : memref<3x9x64x64xbf16, #tpu.memory_space<vmem>>, vector<1x1x64x64xbf16>
    %64 = vector.shape_cast %63 : vector<1x1x64x64xbf16> to vector<64x64xbf16>
    %cst_26 = arith.constant dense<0.000000e+00> : vector<256x64xf32>
    %65 = tpu.matmul %58, %64, %cst_26 {dimension_numbers = #tpu.dot_dimension_numbers<[1], [0], [0], [1], [0, 0, 1, 1], [], []>} : vector<256x64xbf16>, vector<64x64xbf16>, vector<256x64xf32> -> vector<256x64xf32>
    %66 = arith.addf %62, %65 : vector<256x64xf32>
    %c0_27 = arith.constant 0 : index
    %c2 = arith.constant 2 : index
    %c0_28 = arith.constant 0 : index
    %c0_29 = arith.constant 0 : index
    %67 = vector.load %arg2[%c0_27, %c2, %c0_28, %c0_29] : memref<3x9x64x64xbf16, #tpu.memory_space<vmem>>, vector<1x1x64x64xbf16>
    %68 = vector.shape_cast %67 : vector<1x1x64x64xbf16> to vector<64x64xbf16>
    %cst_30 = arith.constant dense<0.000000e+00> : vector<256x64xf32>
    %69 = tpu.matmul %59, %68, %cst_30 {dimension_numbers = #tpu.dot_dimension_numbers<[1], [0], [0], [1], [0, 0, 1, 1], [], []>} : vector<256x64xbf16>, vector<64x64xbf16>, vector<256x64xf32> -> vector<256x64xf32>
    %70 = arith.addf %66, %69 : vector<256x64xf32>
    %c16_i32_31 = arith.constant 16 : i32
    %71 = tpu.dynamic_rotate %70 by %c16_i32_31 dim 0 : vector<256x64xf32>, i32 -> vector<256x64xf32>
    %c240_i32_32 = arith.constant 240 : i32
    %72 = tpu.dynamic_rotate %70 by %c240_i32_32 dim 0 : vector<256x64xf32>, i32 -> vector<256x64xf32>
    %73 = vector.shape_cast %8 : vector<256x1xi1> to vector<256x1xi1>
    %74 = vector.broadcast %73 : vector<256x1xi1> to vector<256x64xi1>
    %75 = arith.select %74, %72, %71 : vector<256x64xi1>, vector<256x64xf32>
    %c0_33 = arith.constant 0 : index
    %c3 = arith.constant 3 : index
    %c0_34 = arith.constant 0 : index
    %c0_35 = arith.constant 0 : index
    %76 = vector.load %arg2[%c0_33, %c3, %c0_34, %c0_35] : memref<3x9x64x64xbf16, #tpu.memory_space<vmem>>, vector<1x1x64x64xbf16>
    %77 = vector.shape_cast %76 : vector<1x1x64x64xbf16> to vector<64x64xbf16>
    %cst_36 = arith.constant dense<0.000000e+00> : vector<256x64xf32>
    %78 = tpu.matmul %57, %77, %cst_36 {dimension_numbers = #tpu.dot_dimension_numbers<[1], [0], [0], [1], [0, 0, 1, 1], [], []>} : vector<256x64xbf16>, vector<64x64xbf16>, vector<256x64xf32> -> vector<256x64xf32>
    %c0_37 = arith.constant 0 : index
    %c4 = arith.constant 4 : index
    %c0_38 = arith.constant 0 : index
    %c0_39 = arith.constant 0 : index
    %79 = vector.load %arg2[%c0_37, %c4, %c0_38, %c0_39] : memref<3x9x64x64xbf16, #tpu.memory_space<vmem>>, vector<1x1x64x64xbf16>
    %80 = vector.shape_cast %79 : vector<1x1x64x64xbf16> to vector<64x64xbf16>
    %cst_40 = arith.constant dense<0.000000e+00> : vector<256x64xf32>
    %81 = tpu.matmul %58, %80, %cst_40 {dimension_numbers = #tpu.dot_dimension_numbers<[1], [0], [0], [1], [0, 0, 1, 1], [], []>} : vector<256x64xbf16>, vector<64x64xbf16>, vector<256x64xf32> -> vector<256x64xf32>
    %82 = arith.addf %78, %81 : vector<256x64xf32>
    %c0_41 = arith.constant 0 : index
    %c5 = arith.constant 5 : index
    %c0_42 = arith.constant 0 : index
    %c0_43 = arith.constant 0 : index
    %83 = vector.load %arg2[%c0_41, %c5, %c0_42, %c0_43] : memref<3x9x64x64xbf16, #tpu.memory_space<vmem>>, vector<1x1x64x64xbf16>
    %84 = vector.shape_cast %83 : vector<1x1x64x64xbf16> to vector<64x64xbf16>
    %cst_44 = arith.constant dense<0.000000e+00> : vector<256x64xf32>
    %85 = tpu.matmul %59, %84, %cst_44 {dimension_numbers = #tpu.dot_dimension_numbers<[1], [0], [0], [1], [0, 0, 1, 1], [], []>} : vector<256x64xbf16>, vector<64x64xbf16>, vector<256x64xf32> -> vector<256x64xf32>
    %86 = arith.addf %82, %85 : vector<256x64xf32>
    %87 = arith.addf %75, %86 : vector<256x64xf32>
    %c0_45 = arith.constant 0 : index
    %c6 = arith.constant 6 : index
    %c0_46 = arith.constant 0 : index
    %c0_47 = arith.constant 0 : index
    %88 = vector.load %arg2[%c0_45, %c6, %c0_46, %c0_47] : memref<3x9x64x64xbf16, #tpu.memory_space<vmem>>, vector<1x1x64x64xbf16>
    %89 = vector.shape_cast %88 : vector<1x1x64x64xbf16> to vector<64x64xbf16>
    %cst_48 = arith.constant dense<0.000000e+00> : vector<256x64xf32>
    %90 = tpu.matmul %57, %89, %cst_48 {dimension_numbers = #tpu.dot_dimension_numbers<[1], [0], [0], [1], [0, 0, 1, 1], [], []>} : vector<256x64xbf16>, vector<64x64xbf16>, vector<256x64xf32> -> vector<256x64xf32>
    %c0_49 = arith.constant 0 : index
    %c7 = arith.constant 7 : index
    %c0_50 = arith.constant 0 : index
    %c0_51 = arith.constant 0 : index
    %91 = vector.load %arg2[%c0_49, %c7, %c0_50, %c0_51] : memref<3x9x64x64xbf16, #tpu.memory_space<vmem>>, vector<1x1x64x64xbf16>
    %92 = vector.shape_cast %91 : vector<1x1x64x64xbf16> to vector<64x64xbf16>
    %cst_52 = arith.constant dense<0.000000e+00> : vector<256x64xf32>
    %93 = tpu.matmul %58, %92, %cst_52 {dimension_numbers = #tpu.dot_dimension_numbers<[1], [0], [0], [1], [0, 0, 1, 1], [], []>} : vector<256x64xbf16>, vector<64x64xbf16>, vector<256x64xf32> -> vector<256x64xf32>
    %94 = arith.addf %90, %93 : vector<256x64xf32>
    %c0_53 = arith.constant 0 : index
    %c8 = arith.constant 8 : index
    %c0_54 = arith.constant 0 : index
    %c0_55 = arith.constant 0 : index
    %95 = vector.load %arg2[%c0_53, %c8, %c0_54, %c0_55] : memref<3x9x64x64xbf16, #tpu.memory_space<vmem>>, vector<1x1x64x64xbf16>
    %96 = vector.shape_cast %95 : vector<1x1x64x64xbf16> to vector<64x64xbf16>
    %cst_56 = arith.constant dense<0.000000e+00> : vector<256x64xf32>
    %97 = tpu.matmul %59, %96, %cst_56 {dimension_numbers = #tpu.dot_dimension_numbers<[1], [0], [0], [1], [0, 0, 1, 1], [], []>} : vector<256x64xbf16>, vector<64x64xbf16>, vector<256x64xf32> -> vector<256x64xf32>
    %98 = arith.addf %94, %97 : vector<256x64xf32>
    %c16_i32_57 = arith.constant 16 : i32
    %99 = tpu.dynamic_rotate %98 by %c16_i32_57 dim 0 : vector<256x64xf32>, i32 -> vector<256x64xf32>
    %c240_i32_58 = arith.constant 240 : i32
    %100 = tpu.dynamic_rotate %98 by %c240_i32_58 dim 0 : vector<256x64xf32>, i32 -> vector<256x64xf32>
    %101 = vector.shape_cast %10 : vector<256x1xi1> to vector<256x1xi1>
    %102 = vector.broadcast %101 : vector<256x1xi1> to vector<256x64xi1>
    %103 = arith.select %102, %99, %100 : vector<256x64xi1>, vector<256x64xf32>
    %104 = arith.addf %87, %103 : vector<256x64xf32>
    %c1_59 = arith.constant 1 : index
    %c0_60 = arith.constant 0 : index
    %105 = vector.load %arg5[%c1_59, %c0_60] : memref<4x64xf32, #tpu.memory_space<vmem>>, vector<1x64xf32>
    %106 = vector.broadcast %105 : vector<1x64xf32> to vector<256x64xf32>
    %107 = arith.addf %104, %106 : vector<256x64xf32>
    %cst_61 = arith.constant dense<0.000000e+00> : vector<64xf32>
    %108 = vector.multi_reduction <add>, %107, %cst_61 [0] : vector<256x64xf32> to vector<64xf32>
    %109 = vector.shape_cast %108 : vector<64xf32> to vector<1x64xf32>
    %110 = arith.mulf %107, %107 : vector<256x64xf32>
    %cst_62 = arith.constant dense<0.000000e+00> : vector<64xf32>
    %111 = vector.multi_reduction <add>, %110, %cst_62 [0] : vector<256x64xf32> to vector<64xf32>
    %112 = vector.shape_cast %111 : vector<64xf32> to vector<1x64xf32>
    %c32_i32_63 = arith.constant 32 : i32
    %113 = tpu.dynamic_rotate %109 by %c32_i32_63 dim 1 : vector<1x64xf32>, i32 -> vector<1x64xf32>
    %114 = arith.addf %109, %113 : vector<1x64xf32>
    %c32_i32_64 = arith.constant 32 : i32
    %115 = tpu.dynamic_rotate %112 by %c32_i32_64 dim 1 : vector<1x64xf32>, i32 -> vector<1x64xf32>
    %116 = arith.addf %112, %115 : vector<1x64xf32>
    %cst_65 = arith.constant 0.001953125 : f32
    %117 = vector.broadcast %cst_65 : f32 to vector<1x64xf32>
    %118 = arith.mulf %114, %117 : vector<1x64xf32>
    %cst_66 = arith.constant 0.001953125 : f32
    %119 = vector.broadcast %cst_66 : f32 to vector<1x64xf32>
    %120 = arith.mulf %116, %119 : vector<1x64xf32>
    %121 = arith.mulf %118, %118 : vector<1x64xf32>
    %122 = arith.subf %120, %121 : vector<1x64xf32>
    %c1_67 = arith.constant 1 : index
    %c0_68 = arith.constant 0 : index
    %123 = vector.load %arg6[%c1_67, %c0_68] : memref<4x64xf32, #tpu.memory_space<vmem>>, vector<1x64xf32>
    %cst_69 = arith.constant 9.99999974E-6 : f32
    %124 = vector.broadcast %cst_69 : f32 to vector<1x64xf32>
    %125 = arith.addf %122, %124 : vector<1x64xf32>
    %126 = math.rsqrt %125 : vector<1x64xf32>
    %127 = arith.mulf %123, %126 : vector<1x64xf32>
    %c1_70 = arith.constant 1 : index
    %c0_71 = arith.constant 0 : index
    %128 = vector.load %arg7[%c1_70, %c0_71] : memref<4x64xf32, #tpu.memory_space<vmem>>, vector<1x64xf32>
    %129 = arith.mulf %118, %127 : vector<1x64xf32>
    %130 = arith.subf %128, %129 : vector<1x64xf32>
    %131 = vector.broadcast %127 : vector<1x64xf32> to vector<256x64xf32>
    %132 = arith.mulf %107, %131 : vector<256x64xf32>
    %133 = vector.broadcast %130 : vector<1x64xf32> to vector<256x64xf32>
    %134 = arith.addf %132, %133 : vector<256x64xf32>
    %cst_72 = arith.constant 0.000000e+00 : f32
    %135 = vector.broadcast %cst_72 : f32 to vector<256x64xf32>
    %136 = arith.cmpf oge, %134, %135 : vector<256x64xf32>
    %cst_73 = arith.constant 2.000000e-01 : f32
    %137 = vector.broadcast %cst_73 : f32 to vector<256x64xf32>
    %138 = arith.mulf %137, %134 : vector<256x64xf32>
    %139 = arith.select %136, %134, %138 : vector<256x64xi1>, vector<256x64xf32>
    %c1_i32_74 = arith.constant 1 : i32
    %140 = tpu.dynamic_rotate %139 by %c1_i32_74 dim 0 : vector<256x64xf32>, i32 -> vector<256x64xf32>
    %c255_i32_75 = arith.constant 255 : i32
    %141 = tpu.dynamic_rotate %139 by %c255_i32_75 dim 0 : vector<256x64xf32>, i32 -> vector<256x64xf32>
    %142 = vector.shape_cast %4 : vector<256x1xi1> to vector<256x1xi1>
    %143 = vector.broadcast %142 : vector<256x1xi1> to vector<256x64xi1>
    %144 = arith.select %143, %141, %140 : vector<256x64xi1>, vector<256x64xf32>
    %145 = vector.shape_cast %6 : vector<256x1xi1> to vector<256x1xi1>
    %146 = vector.broadcast %145 : vector<256x1xi1> to vector<256x64xi1>
    %147 = arith.select %146, %140, %141 : vector<256x64xi1>, vector<256x64xf32>
    %148 = arith.truncf %144 : vector<256x64xf32> to vector<256x64xbf16>
    %149 = arith.truncf %139 : vector<256x64xf32> to vector<256x64xbf16>
    %150 = arith.truncf %147 : vector<256x64xf32> to vector<256x64xbf16>
    %c1_76 = arith.constant 1 : index
    %c0_77 = arith.constant 0 : index
    %c0_78 = arith.constant 0 : index
    %c0_79 = arith.constant 0 : index
    %151 = vector.load %arg2[%c1_76, %c0_77, %c0_78, %c0_79] : memref<3x9x64x64xbf16, #tpu.memory_space<vmem>>, vector<1x1x64x64xbf16>
    %152 = vector.shape_cast %151 : vector<1x1x64x64xbf16> to vector<64x64xbf16>
    %cst_80 = arith.constant dense<0.000000e+00> : vector<256x64xf32>
    %153 = tpu.matmul %148, %152, %cst_80 {dimension_numbers = #tpu.dot_dimension_numbers<[1], [0], [0], [1], [0, 0, 1, 1], [], []>} : vector<256x64xbf16>, vector<64x64xbf16>, vector<256x64xf32> -> vector<256x64xf32>
    %c1_81 = arith.constant 1 : index
    %c1_82 = arith.constant 1 : index
    %c0_83 = arith.constant 0 : index
    %c0_84 = arith.constant 0 : index
    %154 = vector.load %arg2[%c1_81, %c1_82, %c0_83, %c0_84] : memref<3x9x64x64xbf16, #tpu.memory_space<vmem>>, vector<1x1x64x64xbf16>
    %155 = vector.shape_cast %154 : vector<1x1x64x64xbf16> to vector<64x64xbf16>
    %cst_85 = arith.constant dense<0.000000e+00> : vector<256x64xf32>
    %156 = tpu.matmul %149, %155, %cst_85 {dimension_numbers = #tpu.dot_dimension_numbers<[1], [0], [0], [1], [0, 0, 1, 1], [], []>} : vector<256x64xbf16>, vector<64x64xbf16>, vector<256x64xf32> -> vector<256x64xf32>
    %157 = arith.addf %153, %156 : vector<256x64xf32>
    %c1_86 = arith.constant 1 : index
    %c2_87 = arith.constant 2 : index
    %c0_88 = arith.constant 0 : index
    %c0_89 = arith.constant 0 : index
    %158 = vector.load %arg2[%c1_86, %c2_87, %c0_88, %c0_89] : memref<3x9x64x64xbf16, #tpu.memory_space<vmem>>, vector<1x1x64x64xbf16>
    %159 = vector.shape_cast %158 : vector<1x1x64x64xbf16> to vector<64x64xbf16>
    %cst_90 = arith.constant dense<0.000000e+00> : vector<256x64xf32>
    %160 = tpu.matmul %150, %159, %cst_90 {dimension_numbers = #tpu.dot_dimension_numbers<[1], [0], [0], [1], [0, 0, 1, 1], [], []>} : vector<256x64xbf16>, vector<64x64xbf16>, vector<256x64xf32> -> vector<256x64xf32>
    %161 = arith.addf %157, %160 : vector<256x64xf32>
    %c16_i32_91 = arith.constant 16 : i32
    %162 = tpu.dynamic_rotate %161 by %c16_i32_91 dim 0 : vector<256x64xf32>, i32 -> vector<256x64xf32>
    %c240_i32_92 = arith.constant 240 : i32
    %163 = tpu.dynamic_rotate %161 by %c240_i32_92 dim 0 : vector<256x64xf32>, i32 -> vector<256x64xf32>
    %164 = vector.shape_cast %8 : vector<256x1xi1> to vector<256x1xi1>
    %165 = vector.broadcast %164 : vector<256x1xi1> to vector<256x64xi1>
    %166 = arith.select %165, %163, %162 : vector<256x64xi1>, vector<256x64xf32>
    %c1_93 = arith.constant 1 : index
    %c3_94 = arith.constant 3 : index
    %c0_95 = arith.constant 0 : index
    %c0_96 = arith.constant 0 : index
    %167 = vector.load %arg2[%c1_93, %c3_94, %c0_95, %c0_96] : memref<3x9x64x64xbf16, #tpu.memory_space<vmem>>, vector<1x1x64x64xbf16>
    %168 = vector.shape_cast %167 : vector<1x1x64x64xbf16> to vector<64x64xbf16>
    %cst_97 = arith.constant dense<0.000000e+00> : vector<256x64xf32>
    %169 = tpu.matmul %148, %168, %cst_97 {dimension_numbers = #tpu.dot_dimension_numbers<[1], [0], [0], [1], [0, 0, 1, 1], [], []>} : vector<256x64xbf16>, vector<64x64xbf16>, vector<256x64xf32> -> vector<256x64xf32>
    %c1_98 = arith.constant 1 : index
    %c4_99 = arith.constant 4 : index
    %c0_100 = arith.constant 0 : index
    %c0_101 = arith.constant 0 : index
    %170 = vector.load %arg2[%c1_98, %c4_99, %c0_100, %c0_101] : memref<3x9x64x64xbf16, #tpu.memory_space<vmem>>, vector<1x1x64x64xbf16>
    %171 = vector.shape_cast %170 : vector<1x1x64x64xbf16> to vector<64x64xbf16>
    %cst_102 = arith.constant dense<0.000000e+00> : vector<256x64xf32>
    %172 = tpu.matmul %149, %171, %cst_102 {dimension_numbers = #tpu.dot_dimension_numbers<[1], [0], [0], [1], [0, 0, 1, 1], [], []>} : vector<256x64xbf16>, vector<64x64xbf16>, vector<256x64xf32> -> vector<256x64xf32>
    %173 = arith.addf %169, %172 : vector<256x64xf32>
    %c1_103 = arith.constant 1 : index
    %c5_104 = arith.constant 5 : index
    %c0_105 = arith.constant 0 : index
    %c0_106 = arith.constant 0 : index
    %174 = vector.load %arg2[%c1_103, %c5_104, %c0_105, %c0_106] : memref<3x9x64x64xbf16, #tpu.memory_space<vmem>>, vector<1x1x64x64xbf16>
    %175 = vector.shape_cast %174 : vector<1x1x64x64xbf16> to vector<64x64xbf16>
    %cst_107 = arith.constant dense<0.000000e+00> : vector<256x64xf32>
    %176 = tpu.matmul %150, %175, %cst_107 {dimension_numbers = #tpu.dot_dimension_numbers<[1], [0], [0], [1], [0, 0, 1, 1], [], []>} : vector<256x64xbf16>, vector<64x64xbf16>, vector<256x64xf32> -> vector<256x64xf32>
    %177 = arith.addf %173, %176 : vector<256x64xf32>
    %178 = arith.addf %166, %177 : vector<256x64xf32>
    %c1_108 = arith.constant 1 : index
    %c6_109 = arith.constant 6 : index
    %c0_110 = arith.constant 0 : index
    %c0_111 = arith.constant 0 : index
    %179 = vector.load %arg2[%c1_108, %c6_109, %c0_110, %c0_111] : memref<3x9x64x64xbf16, #tpu.memory_space<vmem>>, vector<1x1x64x64xbf16>
    %180 = vector.shape_cast %179 : vector<1x1x64x64xbf16> to vector<64x64xbf16>
    %cst_112 = arith.constant dense<0.000000e+00> : vector<256x64xf32>
    %181 = tpu.matmul %148, %180, %cst_112 {dimension_numbers = #tpu.dot_dimension_numbers<[1], [0], [0], [1], [0, 0, 1, 1], [], []>} : vector<256x64xbf16>, vector<64x64xbf16>, vector<256x64xf32> -> vector<256x64xf32>
    %c1_113 = arith.constant 1 : index
    %c7_114 = arith.constant 7 : index
    %c0_115 = arith.constant 0 : index
    %c0_116 = arith.constant 0 : index
    %182 = vector.load %arg2[%c1_113, %c7_114, %c0_115, %c0_116] : memref<3x9x64x64xbf16, #tpu.memory_space<vmem>>, vector<1x1x64x64xbf16>
    %183 = vector.shape_cast %182 : vector<1x1x64x64xbf16> to vector<64x64xbf16>
    %cst_117 = arith.constant dense<0.000000e+00> : vector<256x64xf32>
    %184 = tpu.matmul %149, %183, %cst_117 {dimension_numbers = #tpu.dot_dimension_numbers<[1], [0], [0], [1], [0, 0, 1, 1], [], []>} : vector<256x64xbf16>, vector<64x64xbf16>, vector<256x64xf32> -> vector<256x64xf32>
    %185 = arith.addf %181, %184 : vector<256x64xf32>
    %c1_118 = arith.constant 1 : index
    %c8_119 = arith.constant 8 : index
    %c0_120 = arith.constant 0 : index
    %c0_121 = arith.constant 0 : index
    %186 = vector.load %arg2[%c1_118, %c8_119, %c0_120, %c0_121] : memref<3x9x64x64xbf16, #tpu.memory_space<vmem>>, vector<1x1x64x64xbf16>
    %187 = vector.shape_cast %186 : vector<1x1x64x64xbf16> to vector<64x64xbf16>
    %cst_122 = arith.constant dense<0.000000e+00> : vector<256x64xf32>
    %188 = tpu.matmul %150, %187, %cst_122 {dimension_numbers = #tpu.dot_dimension_numbers<[1], [0], [0], [1], [0, 0, 1, 1], [], []>} : vector<256x64xbf16>, vector<64x64xbf16>, vector<256x64xf32> -> vector<256x64xf32>
    %189 = arith.addf %185, %188 : vector<256x64xf32>
    %c16_i32_123 = arith.constant 16 : i32
    %190 = tpu.dynamic_rotate %189 by %c16_i32_123 dim 0 : vector<256x64xf32>, i32 -> vector<256x64xf32>
    %c240_i32_124 = arith.constant 240 : i32
    %191 = tpu.dynamic_rotate %189 by %c240_i32_124 dim 0 : vector<256x64xf32>, i32 -> vector<256x64xf32>
    %192 = vector.shape_cast %10 : vector<256x1xi1> to vector<256x1xi1>
    %193 = vector.broadcast %192 : vector<256x1xi1> to vector<256x64xi1>
    %194 = arith.select %193, %190, %191 : vector<256x64xi1>, vector<256x64xf32>
    %195 = arith.addf %178, %194 : vector<256x64xf32>
    %c2_125 = arith.constant 2 : index
    %c0_126 = arith.constant 0 : index
    %196 = vector.load %arg5[%c2_125, %c0_126] : memref<4x64xf32, #tpu.memory_space<vmem>>, vector<1x64xf32>
    %197 = vector.broadcast %196 : vector<1x64xf32> to vector<256x64xf32>
    %198 = arith.addf %195, %197 : vector<256x64xf32>
    %cst_127 = arith.constant dense<0.000000e+00> : vector<64xf32>
    %199 = vector.multi_reduction <add>, %198, %cst_127 [0] : vector<256x64xf32> to vector<64xf32>
    %200 = vector.shape_cast %199 : vector<64xf32> to vector<1x64xf32>
    %201 = arith.mulf %198, %198 : vector<256x64xf32>
    %cst_128 = arith.constant dense<0.000000e+00> : vector<64xf32>
    %202 = vector.multi_reduction <add>, %201, %cst_128 [0] : vector<256x64xf32> to vector<64xf32>
    %203 = vector.shape_cast %202 : vector<64xf32> to vector<1x64xf32>
    %c32_i32_129 = arith.constant 32 : i32
    %204 = tpu.dynamic_rotate %200 by %c32_i32_129 dim 1 : vector<1x64xf32>, i32 -> vector<1x64xf32>
    %205 = arith.addf %200, %204 : vector<1x64xf32>
    %c32_i32_130 = arith.constant 32 : i32
    %206 = tpu.dynamic_rotate %203 by %c32_i32_130 dim 1 : vector<1x64xf32>, i32 -> vector<1x64xf32>
    %207 = arith.addf %203, %206 : vector<1x64xf32>
    %cst_131 = arith.constant 0.001953125 : f32
    %208 = vector.broadcast %cst_131 : f32 to vector<1x64xf32>
    %209 = arith.mulf %205, %208 : vector<1x64xf32>
    %cst_132 = arith.constant 0.001953125 : f32
    %210 = vector.broadcast %cst_132 : f32 to vector<1x64xf32>
    %211 = arith.mulf %207, %210 : vector<1x64xf32>
    %212 = arith.mulf %209, %209 : vector<1x64xf32>
    %213 = arith.subf %211, %212 : vector<1x64xf32>
    %c2_133 = arith.constant 2 : index
    %c0_134 = arith.constant 0 : index
    %214 = vector.load %arg6[%c2_133, %c0_134] : memref<4x64xf32, #tpu.memory_space<vmem>>, vector<1x64xf32>
    %cst_135 = arith.constant 9.99999974E-6 : f32
    %215 = vector.broadcast %cst_135 : f32 to vector<1x64xf32>
    %216 = arith.addf %213, %215 : vector<1x64xf32>
    %217 = math.rsqrt %216 : vector<1x64xf32>
    %218 = arith.mulf %214, %217 : vector<1x64xf32>
    %c2_136 = arith.constant 2 : index
    %c0_137 = arith.constant 0 : index
    %219 = vector.load %arg7[%c2_136, %c0_137] : memref<4x64xf32, #tpu.memory_space<vmem>>, vector<1x64xf32>
    %220 = arith.mulf %209, %218 : vector<1x64xf32>
    %221 = arith.subf %219, %220 : vector<1x64xf32>
    %222 = vector.broadcast %218 : vector<1x64xf32> to vector<256x64xf32>
    %223 = arith.mulf %198, %222 : vector<256x64xf32>
    %224 = vector.broadcast %221 : vector<1x64xf32> to vector<256x64xf32>
    %225 = arith.addf %223, %224 : vector<256x64xf32>
    %cst_138 = arith.constant 0.000000e+00 : f32
    %226 = vector.broadcast %cst_138 : f32 to vector<256x64xf32>
    %227 = arith.cmpf oge, %225, %226 : vector<256x64xf32>
    %cst_139 = arith.constant 2.000000e-01 : f32
    %228 = vector.broadcast %cst_139 : f32 to vector<256x64xf32>
    %229 = arith.mulf %228, %225 : vector<256x64xf32>
    %230 = arith.select %227, %225, %229 : vector<256x64xi1>, vector<256x64xf32>
    %c1_i32_140 = arith.constant 1 : i32
    %231 = tpu.dynamic_rotate %230 by %c1_i32_140 dim 0 : vector<256x64xf32>, i32 -> vector<256x64xf32>
    %c255_i32_141 = arith.constant 255 : i32
    %232 = tpu.dynamic_rotate %230 by %c255_i32_141 dim 0 : vector<256x64xf32>, i32 -> vector<256x64xf32>
    %233 = vector.shape_cast %4 : vector<256x1xi1> to vector<256x1xi1>
    %234 = vector.broadcast %233 : vector<256x1xi1> to vector<256x64xi1>
    %235 = arith.select %234, %232, %231 : vector<256x64xi1>, vector<256x64xf32>
    %236 = vector.shape_cast %6 : vector<256x1xi1> to vector<256x1xi1>
    %237 = vector.broadcast %236 : vector<256x1xi1> to vector<256x64xi1>
    %238 = arith.select %237, %231, %232 : vector<256x64xi1>, vector<256x64xf32>
    %239 = arith.truncf %235 : vector<256x64xf32> to vector<256x64xbf16>
    %240 = arith.truncf %230 : vector<256x64xf32> to vector<256x64xbf16>
    %241 = arith.truncf %238 : vector<256x64xf32> to vector<256x64xbf16>
    %c2_142 = arith.constant 2 : index
    %c0_143 = arith.constant 0 : index
    %c0_144 = arith.constant 0 : index
    %c0_145 = arith.constant 0 : index
    %242 = vector.load %arg2[%c2_142, %c0_143, %c0_144, %c0_145] : memref<3x9x64x64xbf16, #tpu.memory_space<vmem>>, vector<1x1x64x64xbf16>
    %243 = vector.shape_cast %242 : vector<1x1x64x64xbf16> to vector<64x64xbf16>
    %cst_146 = arith.constant dense<0.000000e+00> : vector<256x64xf32>
    %244 = tpu.matmul %239, %243, %cst_146 {dimension_numbers = #tpu.dot_dimension_numbers<[1], [0], [0], [1], [0, 0, 1, 1], [], []>} : vector<256x64xbf16>, vector<64x64xbf16>, vector<256x64xf32> -> vector<256x64xf32>
    %c2_147 = arith.constant 2 : index
    %c1_148 = arith.constant 1 : index
    %c0_149 = arith.constant 0 : index
    %c0_150 = arith.constant 0 : index
    %245 = vector.load %arg2[%c2_147, %c1_148, %c0_149, %c0_150] : memref<3x9x64x64xbf16, #tpu.memory_space<vmem>>, vector<1x1x64x64xbf16>
    %246 = vector.shape_cast %245 : vector<1x1x64x64xbf16> to vector<64x64xbf16>
    %cst_151 = arith.constant dense<0.000000e+00> : vector<256x64xf32>
    %247 = tpu.matmul %240, %246, %cst_151 {dimension_numbers = #tpu.dot_dimension_numbers<[1], [0], [0], [1], [0, 0, 1, 1], [], []>} : vector<256x64xbf16>, vector<64x64xbf16>, vector<256x64xf32> -> vector<256x64xf32>
    %248 = arith.addf %244, %247 : vector<256x64xf32>
    %c2_152 = arith.constant 2 : index
    %c2_153 = arith.constant 2 : index
    %c0_154 = arith.constant 0 : index
    %c0_155 = arith.constant 0 : index
    %249 = vector.load %arg2[%c2_152, %c2_153, %c0_154, %c0_155] : memref<3x9x64x64xbf16, #tpu.memory_space<vmem>>, vector<1x1x64x64xbf16>
    %250 = vector.shape_cast %249 : vector<1x1x64x64xbf16> to vector<64x64xbf16>
    %cst_156 = arith.constant dense<0.000000e+00> : vector<256x64xf32>
    %251 = tpu.matmul %241, %250, %cst_156 {dimension_numbers = #tpu.dot_dimension_numbers<[1], [0], [0], [1], [0, 0, 1, 1], [], []>} : vector<256x64xbf16>, vector<64x64xbf16>, vector<256x64xf32> -> vector<256x64xf32>
    %252 = arith.addf %248, %251 : vector<256x64xf32>
    %c16_i32_157 = arith.constant 16 : i32
    %253 = tpu.dynamic_rotate %252 by %c16_i32_157 dim 0 : vector<256x64xf32>, i32 -> vector<256x64xf32>
    %c240_i32_158 = arith.constant 240 : i32
    %254 = tpu.dynamic_rotate %252 by %c240_i32_158 dim 0 : vector<256x64xf32>, i32 -> vector<256x64xf32>
    %255 = vector.shape_cast %8 : vector<256x1xi1> to vector<256x1xi1>
    %256 = vector.broadcast %255 : vector<256x1xi1> to vector<256x64xi1>
    %257 = arith.select %256, %254, %253 : vector<256x64xi1>, vector<256x64xf32>
    %c2_159 = arith.constant 2 : index
    %c3_160 = arith.constant 3 : index
    %c0_161 = arith.constant 0 : index
    %c0_162 = arith.constant 0 : index
    %258 = vector.load %arg2[%c2_159, %c3_160, %c0_161, %c0_162] : memref<3x9x64x64xbf16, #tpu.memory_space<vmem>>, vector<1x1x64x64xbf16>
    %259 = vector.shape_cast %258 : vector<1x1x64x64xbf16> to vector<64x64xbf16>
    %cst_163 = arith.constant dense<0.000000e+00> : vector<256x64xf32>
    %260 = tpu.matmul %239, %259, %cst_163 {dimension_numbers = #tpu.dot_dimension_numbers<[1], [0], [0], [1], [0, 0, 1, 1], [], []>} : vector<256x64xbf16>, vector<64x64xbf16>, vector<256x64xf32> -> vector<256x64xf32>
    %c2_164 = arith.constant 2 : index
    %c4_165 = arith.constant 4 : index
    %c0_166 = arith.constant 0 : index
    %c0_167 = arith.constant 0 : index
    %261 = vector.load %arg2[%c2_164, %c4_165, %c0_166, %c0_167] : memref<3x9x64x64xbf16, #tpu.memory_space<vmem>>, vector<1x1x64x64xbf16>
    %262 = vector.shape_cast %261 : vector<1x1x64x64xbf16> to vector<64x64xbf16>
    %cst_168 = arith.constant dense<0.000000e+00> : vector<256x64xf32>
    %263 = tpu.matmul %240, %262, %cst_168 {dimension_numbers = #tpu.dot_dimension_numbers<[1], [0], [0], [1], [0, 0, 1, 1], [], []>} : vector<256x64xbf16>, vector<64x64xbf16>, vector<256x64xf32> -> vector<256x64xf32>
    %264 = arith.addf %260, %263 : vector<256x64xf32>
    %c2_169 = arith.constant 2 : index
    %c5_170 = arith.constant 5 : index
    %c0_171 = arith.constant 0 : index
    %c0_172 = arith.constant 0 : index
    %265 = vector.load %arg2[%c2_169, %c5_170, %c0_171, %c0_172] : memref<3x9x64x64xbf16, #tpu.memory_space<vmem>>, vector<1x1x64x64xbf16>
    %266 = vector.shape_cast %265 : vector<1x1x64x64xbf16> to vector<64x64xbf16>
    %cst_173 = arith.constant dense<0.000000e+00> : vector<256x64xf32>
    %267 = tpu.matmul %241, %266, %cst_173 {dimension_numbers = #tpu.dot_dimension_numbers<[1], [0], [0], [1], [0, 0, 1, 1], [], []>} : vector<256x64xbf16>, vector<64x64xbf16>, vector<256x64xf32> -> vector<256x64xf32>
    %268 = arith.addf %264, %267 : vector<256x64xf32>
    %269 = arith.addf %257, %268 : vector<256x64xf32>
    %c2_174 = arith.constant 2 : index
    %c6_175 = arith.constant 6 : index
    %c0_176 = arith.constant 0 : index
    %c0_177 = arith.constant 0 : index
    %270 = vector.load %arg2[%c2_174, %c6_175, %c0_176, %c0_177] : memref<3x9x64x64xbf16, #tpu.memory_space<vmem>>, vector<1x1x64x64xbf16>
    %271 = vector.shape_cast %270 : vector<1x1x64x64xbf16> to vector<64x64xbf16>
    %cst_178 = arith.constant dense<0.000000e+00> : vector<256x64xf32>
    %272 = tpu.matmul %239, %271, %cst_178 {dimension_numbers = #tpu.dot_dimension_numbers<[1], [0], [0], [1], [0, 0, 1, 1], [], []>} : vector<256x64xbf16>, vector<64x64xbf16>, vector<256x64xf32> -> vector<256x64xf32>
    %c2_179 = arith.constant 2 : index
    %c7_180 = arith.constant 7 : index
    %c0_181 = arith.constant 0 : index
    %c0_182 = arith.constant 0 : index
    %273 = vector.load %arg2[%c2_179, %c7_180, %c0_181, %c0_182] : memref<3x9x64x64xbf16, #tpu.memory_space<vmem>>, vector<1x1x64x64xbf16>
    %274 = vector.shape_cast %273 : vector<1x1x64x64xbf16> to vector<64x64xbf16>
    %cst_183 = arith.constant dense<0.000000e+00> : vector<256x64xf32>
    %275 = tpu.matmul %240, %274, %cst_183 {dimension_numbers = #tpu.dot_dimension_numbers<[1], [0], [0], [1], [0, 0, 1, 1], [], []>} : vector<256x64xbf16>, vector<64x64xbf16>, vector<256x64xf32> -> vector<256x64xf32>
    %276 = arith.addf %272, %275 : vector<256x64xf32>
    %c2_184 = arith.constant 2 : index
    %c8_185 = arith.constant 8 : index
    %c0_186 = arith.constant 0 : index
    %c0_187 = arith.constant 0 : index
    %277 = vector.load %arg2[%c2_184, %c8_185, %c0_186, %c0_187] : memref<3x9x64x64xbf16, #tpu.memory_space<vmem>>, vector<1x1x64x64xbf16>
    %278 = vector.shape_cast %277 : vector<1x1x64x64xbf16> to vector<64x64xbf16>
    %cst_188 = arith.constant dense<0.000000e+00> : vector<256x64xf32>
    %279 = tpu.matmul %241, %278, %cst_188 {dimension_numbers = #tpu.dot_dimension_numbers<[1], [0], [0], [1], [0, 0, 1, 1], [], []>} : vector<256x64xbf16>, vector<64x64xbf16>, vector<256x64xf32> -> vector<256x64xf32>
    %280 = arith.addf %276, %279 : vector<256x64xf32>
    %c16_i32_189 = arith.constant 16 : i32
    %281 = tpu.dynamic_rotate %280 by %c16_i32_189 dim 0 : vector<256x64xf32>, i32 -> vector<256x64xf32>
    %c240_i32_190 = arith.constant 240 : i32
    %282 = tpu.dynamic_rotate %280 by %c240_i32_190 dim 0 : vector<256x64xf32>, i32 -> vector<256x64xf32>
    %283 = vector.shape_cast %10 : vector<256x1xi1> to vector<256x1xi1>
    %284 = vector.broadcast %283 : vector<256x1xi1> to vector<256x64xi1>
    %285 = arith.select %284, %281, %282 : vector<256x64xi1>, vector<256x64xf32>
    %286 = arith.addf %269, %285 : vector<256x64xf32>
    %c3_191 = arith.constant 3 : index
    %c0_192 = arith.constant 0 : index
    %287 = vector.load %arg5[%c3_191, %c0_192] : memref<4x64xf32, #tpu.memory_space<vmem>>, vector<1x64xf32>
    %288 = vector.broadcast %287 : vector<1x64xf32> to vector<256x64xf32>
    %289 = arith.addf %286, %288 : vector<256x64xf32>
    %cst_193 = arith.constant dense<0.000000e+00> : vector<64xf32>
    %290 = vector.multi_reduction <add>, %289, %cst_193 [0] : vector<256x64xf32> to vector<64xf32>
    %291 = vector.shape_cast %290 : vector<64xf32> to vector<1x64xf32>
    %292 = arith.mulf %289, %289 : vector<256x64xf32>
    %cst_194 = arith.constant dense<0.000000e+00> : vector<64xf32>
    %293 = vector.multi_reduction <add>, %292, %cst_194 [0] : vector<256x64xf32> to vector<64xf32>
    %294 = vector.shape_cast %293 : vector<64xf32> to vector<1x64xf32>
    %c32_i32_195 = arith.constant 32 : i32
    %295 = tpu.dynamic_rotate %291 by %c32_i32_195 dim 1 : vector<1x64xf32>, i32 -> vector<1x64xf32>
    %296 = arith.addf %291, %295 : vector<1x64xf32>
    %c32_i32_196 = arith.constant 32 : i32
    %297 = tpu.dynamic_rotate %294 by %c32_i32_196 dim 1 : vector<1x64xf32>, i32 -> vector<1x64xf32>
    %298 = arith.addf %294, %297 : vector<1x64xf32>
    %cst_197 = arith.constant 0.001953125 : f32
    %299 = vector.broadcast %cst_197 : f32 to vector<1x64xf32>
    %300 = arith.mulf %296, %299 : vector<1x64xf32>
    %cst_198 = arith.constant 0.001953125 : f32
    %301 = vector.broadcast %cst_198 : f32 to vector<1x64xf32>
    %302 = arith.mulf %298, %301 : vector<1x64xf32>
    %303 = arith.mulf %300, %300 : vector<1x64xf32>
    %304 = arith.subf %302, %303 : vector<1x64xf32>
    %c3_199 = arith.constant 3 : index
    %c0_200 = arith.constant 0 : index
    %305 = vector.load %arg6[%c3_199, %c0_200] : memref<4x64xf32, #tpu.memory_space<vmem>>, vector<1x64xf32>
    %cst_201 = arith.constant 9.99999974E-6 : f32
    %306 = vector.broadcast %cst_201 : f32 to vector<1x64xf32>
    %307 = arith.addf %304, %306 : vector<1x64xf32>
    %308 = math.rsqrt %307 : vector<1x64xf32>
    %309 = arith.mulf %305, %308 : vector<1x64xf32>
    %c3_202 = arith.constant 3 : index
    %c0_203 = arith.constant 0 : index
    %310 = vector.load %arg7[%c3_202, %c0_203] : memref<4x64xf32, #tpu.memory_space<vmem>>, vector<1x64xf32>
    %311 = arith.mulf %300, %309 : vector<1x64xf32>
    %312 = arith.subf %310, %311 : vector<1x64xf32>
    %313 = vector.broadcast %309 : vector<1x64xf32> to vector<256x64xf32>
    %314 = arith.mulf %289, %313 : vector<256x64xf32>
    %315 = vector.broadcast %312 : vector<1x64xf32> to vector<256x64xf32>
    %316 = arith.addf %314, %315 : vector<256x64xf32>
    %cst_204 = arith.constant 0.000000e+00 : f32
    %317 = vector.broadcast %cst_204 : f32 to vector<256x64xf32>
    %318 = arith.cmpf oge, %316, %317 : vector<256x64xf32>
    %cst_205 = arith.constant 2.000000e-01 : f32
    %319 = vector.broadcast %cst_205 : f32 to vector<256x64xf32>
    %320 = arith.mulf %319, %316 : vector<256x64xf32>
    %321 = arith.select %318, %316, %320 : vector<256x64xi1>, vector<256x64xf32>
    %322 = arith.truncf %321 : vector<256x64xf32> to vector<256x64xbf16>
    %c0_206 = arith.constant 0 : index
    %c0_207 = arith.constant 0 : index
    %323 = vector.load %arg3[%c0_206, %c0_207] : memref<18x64xbf16, #tpu.memory_space<vmem>>, vector<18x64xbf16>
    %cst_208 = arith.constant dense<0.000000e+00> : vector<18x256xf32>
    %324 = tpu.matmul %323, %322, %cst_208 {dimension_numbers = #tpu.dot_dimension_numbers<[1], [1], [0], [0], [0, 0, 1, 0], [], []>} : vector<18x64xbf16>, vector<256x64xbf16>, vector<18x256xf32> -> vector<18x256xf32>
    %325 = vector.extract_strided_slice %324 {offsets = [0, 0], sizes = [2, 256], strides = [1, 1]} : vector<18x256xf32> to vector<2x256xf32>
    %326 = arith.truncf %325 : vector<2x256xf32> to vector<2x256xbf16>
    %c0_209 = arith.constant 0 : index
    %c0_210 = arith.constant 0 : index
    %c0_211 = arith.constant 0 : index
    %327 = vector.load %arg4[%c0_209, %c0_210, %c0_211] : memref<9x256x324xbf16, #tpu.memory_space<vmem>>, vector<1x256x324xbf16>
    %328 = vector.shape_cast %327 : vector<1x256x324xbf16> to vector<256x324xbf16>
    %cst_212 = arith.constant dense<0.000000e+00> : vector<2x324xf32>
    %329 = tpu.matmul %326, %328, %cst_212 {dimension_numbers = #tpu.dot_dimension_numbers<[1], [0], [0], [1], [0, 0, 1, 1], [], []>} : vector<2x256xbf16>, vector<256x324xbf16>, vector<2x324xf32> -> vector<2x324xf32>
    %330 = vector.extract_strided_slice %324 {offsets = [2, 0], sizes = [2, 256], strides = [1, 1]} : vector<18x256xf32> to vector<2x256xf32>
    %331 = arith.truncf %330 : vector<2x256xf32> to vector<2x256xbf16>
    %c1_213 = arith.constant 1 : index
    %c0_214 = arith.constant 0 : index
    %c0_215 = arith.constant 0 : index
    %332 = vector.load %arg4[%c1_213, %c0_214, %c0_215] : memref<9x256x324xbf16, #tpu.memory_space<vmem>>, vector<1x256x324xbf16>
    %333 = vector.shape_cast %332 : vector<1x256x324xbf16> to vector<256x324xbf16>
    %cst_216 = arith.constant dense<0.000000e+00> : vector<2x324xf32>
    %334 = tpu.matmul %331, %333, %cst_216 {dimension_numbers = #tpu.dot_dimension_numbers<[1], [0], [0], [1], [0, 0, 1, 1], [], []>} : vector<2x256xbf16>, vector<256x324xbf16>, vector<2x324xf32> -> vector<2x324xf32>
    %335 = arith.addf %329, %334 : vector<2x324xf32>
    %336 = vector.extract_strided_slice %324 {offsets = [4, 0], sizes = [2, 256], strides = [1, 1]} : vector<18x256xf32> to vector<2x256xf32>
    %337 = arith.truncf %336 : vector<2x256xf32> to vector<2x256xbf16>
    %c2_217 = arith.constant 2 : index
    %c0_218 = arith.constant 0 : index
    %c0_219 = arith.constant 0 : index
    %338 = vector.load %arg4[%c2_217, %c0_218, %c0_219] : memref<9x256x324xbf16, #tpu.memory_space<vmem>>, vector<1x256x324xbf16>
    %339 = vector.shape_cast %338 : vector<1x256x324xbf16> to vector<256x324xbf16>
    %cst_220 = arith.constant dense<0.000000e+00> : vector<2x324xf32>
    %340 = tpu.matmul %337, %339, %cst_220 {dimension_numbers = #tpu.dot_dimension_numbers<[1], [0], [0], [1], [0, 0, 1, 1], [], []>} : vector<2x256xbf16>, vector<256x324xbf16>, vector<2x324xf32> -> vector<2x324xf32>
    %341 = arith.addf %335, %340 : vector<2x324xf32>
    %342 = vector.extract_strided_slice %324 {offsets = [6, 0], sizes = [2, 256], strides = [1, 1]} : vector<18x256xf32> to vector<2x256xf32>
    %343 = arith.truncf %342 : vector<2x256xf32> to vector<2x256xbf16>
    %c3_221 = arith.constant 3 : index
    %c0_222 = arith.constant 0 : index
    %c0_223 = arith.constant 0 : index
    %344 = vector.load %arg4[%c3_221, %c0_222, %c0_223] : memref<9x256x324xbf16, #tpu.memory_space<vmem>>, vector<1x256x324xbf16>
    %345 = vector.shape_cast %344 : vector<1x256x324xbf16> to vector<256x324xbf16>
    %cst_224 = arith.constant dense<0.000000e+00> : vector<2x324xf32>
    %346 = tpu.matmul %343, %345, %cst_224 {dimension_numbers = #tpu.dot_dimension_numbers<[1], [0], [0], [1], [0, 0, 1, 1], [], []>} : vector<2x256xbf16>, vector<256x324xbf16>, vector<2x324xf32> -> vector<2x324xf32>
    %347 = arith.addf %341, %346 : vector<2x324xf32>
    %348 = vector.extract_strided_slice %324 {offsets = [8, 0], sizes = [2, 256], strides = [1, 1]} : vector<18x256xf32> to vector<2x256xf32>
    %349 = arith.truncf %348 : vector<2x256xf32> to vector<2x256xbf16>
    %c4_225 = arith.constant 4 : index
    %c0_226 = arith.constant 0 : index
    %c0_227 = arith.constant 0 : index
    %350 = vector.load %arg4[%c4_225, %c0_226, %c0_227] : memref<9x256x324xbf16, #tpu.memory_space<vmem>>, vector<1x256x324xbf16>
    %351 = vector.shape_cast %350 : vector<1x256x324xbf16> to vector<256x324xbf16>
    %cst_228 = arith.constant dense<0.000000e+00> : vector<2x324xf32>
    %352 = tpu.matmul %349, %351, %cst_228 {dimension_numbers = #tpu.dot_dimension_numbers<[1], [0], [0], [1], [0, 0, 1, 1], [], []>} : vector<2x256xbf16>, vector<256x324xbf16>, vector<2x324xf32> -> vector<2x324xf32>
    %353 = arith.addf %347, %352 : vector<2x324xf32>
    %354 = vector.extract_strided_slice %324 {offsets = [10, 0], sizes = [2, 256], strides = [1, 1]} : vector<18x256xf32> to vector<2x256xf32>
    %355 = arith.truncf %354 : vector<2x256xf32> to vector<2x256xbf16>
    %c5_229 = arith.constant 5 : index
    %c0_230 = arith.constant 0 : index
    %c0_231 = arith.constant 0 : index
    %356 = vector.load %arg4[%c5_229, %c0_230, %c0_231] : memref<9x256x324xbf16, #tpu.memory_space<vmem>>, vector<1x256x324xbf16>
    %357 = vector.shape_cast %356 : vector<1x256x324xbf16> to vector<256x324xbf16>
    %cst_232 = arith.constant dense<0.000000e+00> : vector<2x324xf32>
    %358 = tpu.matmul %355, %357, %cst_232 {dimension_numbers = #tpu.dot_dimension_numbers<[1], [0], [0], [1], [0, 0, 1, 1], [], []>} : vector<2x256xbf16>, vector<256x324xbf16>, vector<2x324xf32> -> vector<2x324xf32>
    %359 = arith.addf %353, %358 : vector<2x324xf32>
    %360 = vector.extract_strided_slice %324 {offsets = [12, 0], sizes = [2, 256], strides = [1, 1]} : vector<18x256xf32> to vector<2x256xf32>
    %361 = arith.truncf %360 : vector<2x256xf32> to vector<2x256xbf16>
    %c6_233 = arith.constant 6 : index
    %c0_234 = arith.constant 0 : index
    %c0_235 = arith.constant 0 : index
    %362 = vector.load %arg4[%c6_233, %c0_234, %c0_235] : memref<9x256x324xbf16, #tpu.memory_space<vmem>>, vector<1x256x324xbf16>
    %363 = vector.shape_cast %362 : vector<1x256x324xbf16> to vector<256x324xbf16>
    %cst_236 = arith.constant dense<0.000000e+00> : vector<2x324xf32>
    %364 = tpu.matmul %361, %363, %cst_236 {dimension_numbers = #tpu.dot_dimension_numbers<[1], [0], [0], [1], [0, 0, 1, 1], [], []>} : vector<2x256xbf16>, vector<256x324xbf16>, vector<2x324xf32> -> vector<2x324xf32>
    %365 = arith.addf %359, %364 : vector<2x324xf32>
    %366 = vector.extract_strided_slice %324 {offsets = [14, 0], sizes = [2, 256], strides = [1, 1]} : vector<18x256xf32> to vector<2x256xf32>
    %367 = arith.truncf %366 : vector<2x256xf32> to vector<2x256xbf16>
    %c7_237 = arith.constant 7 : index
    %c0_238 = arith.constant 0 : index
    %c0_239 = arith.constant 0 : index
    %368 = vector.load %arg4[%c7_237, %c0_238, %c0_239] : memref<9x256x324xbf16, #tpu.memory_space<vmem>>, vector<1x256x324xbf16>
    %369 = vector.shape_cast %368 : vector<1x256x324xbf16> to vector<256x324xbf16>
    %cst_240 = arith.constant dense<0.000000e+00> : vector<2x324xf32>
    %370 = tpu.matmul %367, %369, %cst_240 {dimension_numbers = #tpu.dot_dimension_numbers<[1], [0], [0], [1], [0, 0, 1, 1], [], []>} : vector<2x256xbf16>, vector<256x324xbf16>, vector<2x324xf32> -> vector<2x324xf32>
    %371 = arith.addf %365, %370 : vector<2x324xf32>
    %372 = vector.extract_strided_slice %324 {offsets = [16, 0], sizes = [2, 256], strides = [1, 1]} : vector<18x256xf32> to vector<2x256xf32>
    %373 = arith.truncf %372 : vector<2x256xf32> to vector<2x256xbf16>
    %c8_241 = arith.constant 8 : index
    %c0_242 = arith.constant 0 : index
    %c0_243 = arith.constant 0 : index
    %374 = vector.load %arg4[%c8_241, %c0_242, %c0_243] : memref<9x256x324xbf16, #tpu.memory_space<vmem>>, vector<1x256x324xbf16>
    %375 = vector.shape_cast %374 : vector<1x256x324xbf16> to vector<256x324xbf16>
    %cst_244 = arith.constant dense<0.000000e+00> : vector<2x324xf32>
    %376 = tpu.matmul %373, %375, %cst_244 {dimension_numbers = #tpu.dot_dimension_numbers<[1], [0], [0], [1], [0, 0, 1, 1], [], []>} : vector<2x256xbf16>, vector<256x324xbf16>, vector<2x324xf32> -> vector<2x324xf32>
    %377 = arith.addf %371, %376 : vector<2x324xf32>
    %c0_245 = arith.constant 0 : index
    %c0_246 = arith.constant 0 : index
    %378 = vector.load %arg8[%c0_245, %c0_246] : memref<1x1xf32, #tpu.memory_space<vmem>>, vector<1x1xf32>
    %379 = vector.broadcast %378 : vector<1x1xf32> to vector<2x324xf32>
    %380 = arith.addf %377, %379 : vector<2x324xf32>
    %c0_247 = arith.constant 0 : index
    %c0_248 = arith.constant 0 : index
    %381 = vector.load %arg9[%c0_247, %c0_248] : memref<2x324xf32, #tpu.memory_space<vmem>>, vector<2x324xf32>
    tpu.vector_store %arg9[%c0_247, %c0_248], %380 {strides = array<i32>} : memref<2x324xf32, #tpu.memory_space<vmem>>, vector<2x324xf32>,
    return
  }
}

</mosaic_0001>

<llo_original>
// kernel: discriminator_forward.1
$region0: #{discriminator_forward.1}
  #allocation0 [shape = 'u32[]', space=smem, size = 0x4, offset = 0x4, fixed_abs, tag = 'smem constant byte address 0x4 - core index']
  #allocation1 [shape = 'u32[144,128]{1,0:T(1,128)}', space=vmem, size = 0x12000, scoped, tag = 'internal scratch']
  #allocation2 [shape = 'f32[1,1]{1,0:T(1,128)S(1)}', space=vmem, size = 0x200, scoped, tag = 'scoped memory for discriminator_forward.1']
  %s0 = inlined_call_operand.vmem [shape: bf16[256,18], index: 0, kind: input, shape index: {}]
  %s1 = inlined_call_operand.vmem [shape: bf16[18,64], index: 1, kind: input, shape index: {}]
  %s2 = inlined_call_operand.vmem [shape: bf16[3,9,64,64], index: 2, kind: input, shape index: {}]
  %s3 = inlined_call_operand.vmem [shape: bf16[18,64], index: 3, kind: input, shape index: {}]
  %s4 = inlined_call_operand.vmem [shape: bf16[9,256,324], index: 4, kind: input, shape index: {}]
  %s5 = inlined_call_operand.vmem [shape: f32[4,64], index: 5, kind: input, shape index: {}]
  %s6 = inlined_call_operand.vmem [shape: f32[4,64], index: 6, kind: input, shape index: {}]
  %s7 = inlined_call_operand.vmem [shape: f32[4,64], index: 7, kind: input, shape index: {}]
  %s8 = inlined_call_operand.<no memory space> [shape: f32[1,1], index: 8, kind: input, shape index: {}]
  %s9 = inlined_call_operand.vmem [shape: f32[2,324], index: 9, kind: output, shape index: {}]
  %s10 = sld [smem:[#allocation0]]
  $region46: #{discriminator_forward.1} parent=0
    _
  %s12 = ssub.s32 1, %s10
  %s13 = scalar_select 0, %s12, %s10
  %v14 = vstv %s8
  %15 = vst [vmem:[#allocation2] sm:$0x1] %v14
  // Predicated region
  $region2: #{discriminator_forward.1} parent=0 // pred_check
    _
  $region3: #{discriminator_forward.1} parent=0 // pred_check_branch
    %17 = sbr.rel (0) target = $region5
  $region4: #{discriminator_forward.1} parent=0 // pred_region
    _
  $region5: #{discriminator_forward.1} parent=0 // pred_fallthru
    _
  // Predicated region
  $region6: #{discriminator_forward.1} parent=0 // pred_check
    _
  $region7: #{discriminator_forward.1} parent=0 // pred_check_branch
    %19 = sbr.rel (0) target = $region9
  $region8: #{discriminator_forward.1} parent=0 // pred_region
    _
  $region9: #{discriminator_forward.1} parent=0 // pred_fallthru
    _
  // Predicated region
  $region10: #{discriminator_forward.1} parent=0 // pred_check
    _
  $region11: #{discriminator_forward.1} parent=0 // pred_check_branch
    %21 = sbr.rel (0) target = $region13
  $region12: #{discriminator_forward.1} parent=0 // pred_region
    _
  $region13: #{discriminator_forward.1} parent=0 // pred_fallthru
    _
  // Predicated region
  $region14: #{discriminator_forward.1} parent=0 // pred_check
    _
  $region15: #{discriminator_forward.1} parent=0 // pred_check_branch
    %23 = sbr.rel (0) target = $region17
  $region16: #{discriminator_forward.1} parent=0 // pred_region
    _
  $region17: #{discriminator_forward.1} parent=0 // pred_fallthru
    _
  // Predicated region
  $region18: #{discriminator_forward.1} parent=0 // pred_check
    _
  $region19: #{discriminator_forward.1} parent=0 // pred_check_branch
    %25 = sbr.rel (0) target = $region21
  $region20: #{discriminator_forward.1} parent=0 // pred_region
    _
  $region21: #{discriminator_forward.1} parent=0 // pred_fallthru
    _
  // Predicated region
  $region22: #{discriminator_forward.1} parent=0 // pred_check
    _
  $region23: #{discriminator_forward.1} parent=0 // pred_check_branch
    %27 = sbr.rel (0) target = $region25
  $region24: #{discriminator_forward.1} parent=0 // pred_region
    _
  $region25: #{discriminator_forward.1} parent=0 // pred_fallthru
    _
  // Predicated region
  $region26: #{discriminator_forward.1} parent=0 // pred_check
    _
  $region27: #{discriminator_forward.1} parent=0 // pred_check_branch
    %29 = sbr.rel (0) target = $region29
  $region28: #{discriminator_forward.1} parent=0 // pred_region
    _
  $region29: #{discriminator_forward.1} parent=0 // pred_fallthru
    _
  // Predicated region
  $region30: #{discriminator_forward.1} parent=0 // pred_check
    _
  $region31: #{discriminator_forward.1} parent=0 // pred_check_branch
    %31 = sbr.rel (0) target = $region33
  $region32: #{discriminator_forward.1} parent=0 // pred_region
    _
  $region33: #{discriminator_forward.1} parent=0 // pred_fallthru
    _
  // Predicated region
  $region34: #{discriminator_forward.1} parent=0 // pred_check
    _
  $region35: #{discriminator_forward.1} parent=0 // pred_check_branch
    %33 = sbr.rel (0) target = $region37
  $region36: #{discriminator_forward.1} parent=0 // pred_region
    _
  $region37: #{discriminator_forward.1} parent=0 // pred_fallthru
    _
  %v35 = vlaneseq
  %v36 = vshrl.u32 %v35, 7
  %v37 = vadd.s32 %v36, 8
  %v38 = vadd.s32 %v36, 16
  %v39 = vadd.s32 %v36, 24
  %v40 = vadd.s32 %v36, 32
  %v41 = vadd.s32 %v36, 40
  %v42 = vadd.s32 %v36, 48
  %v43 = vadd.s32 %v36, 56
  %v44 = vadd.s32 %v36, 64
  %v45 = vadd.s32 %v36, 72
  %v46 = vadd.s32 %v36, 80
  %v47 = vadd.s32 %v36, 88
  %v48 = vadd.s32 %v36, 96
  %v49 = vadd.s32 %v36, 104
  %v50 = vadd.s32 %v36, 112
  %v51 = vadd.s32 %v36, 120
  %v52 = vadd.s32 %v36, 128
  %v53 = vadd.s32 %v36, 136
  %v54 = vadd.s32 %v36, 144
  %v55 = vadd.s32 %v36, 152
  %v56 = vadd.s32 %v36, 160
  %v57 = vadd.s32 %v36, 168
  %v58 = vadd.s32 %v36, 176
  %v59 = vadd.s32 %v36, 184
  %v60 = vadd.s32 %v36, 192
  %v61 = vadd.s32 %v36, 200
  %v62 = vadd.s32 %v36, 208
  %v63 = vadd.s32 %v36, 216
  %v64 = vadd.s32 %v36, 224
  %v65 = vadd.s32 %v36, 232
  %v66 = vadd.s32 %v36, 240
  %v67 = vadd.s32 %v36, 248
  %v68 = vand.u32 %v36, 15
  %v69 = vand.u32 %v37, 15
  %v70 = vand.u32 %v38, 15
  %v71 = vand.u32 %v39, 15
  %v72 = vand.u32 %v40, 15
  %v73 = vand.u32 %v41, 15
  %v74 = vand.u32 %v42, 15
  %v75 = vand.u32 %v43, 15
  %v76 = vand.u32 %v44, 15
  %v77 = vand.u32 %v45, 15
  %v78 = vand.u32 %v46, 15
  %v79 = vand.u32 %v47, 15
  %v80 = vand.u32 %v48, 15
  %v81 = vand.u32 %v49, 15
  %v82 = vand.u32 %v50, 15
  %v83 = vand.u32 %v51, 15
  %v84 = vand.u32 %v52, 15
  %v85 = vand.u32 %v53, 15
  %v86 = vand.u32 %v54, 15
  %v87 = vand.u32 %v55, 15
  %v88 = vand.u32 %v56, 15
  %v89 = vand.u32 %v57, 15
  %v90 = vand.u32 %v58, 15
  %v91 = vand.u32 %v59, 15
  %v92 = vand.u32 %v60, 15
  %v93 = vand.u32 %v61, 15
  %v94 = vand.u32 %v62, 15
  %v95 = vand.u32 %v63, 15
  %v96 = vand.u32 %v64, 15
  %v97 = vand.u32 %v65, 15
  %v98 = vand.u32 %v66, 15
  %v99 = vand.u32 %v67, 15
  %vm100 = vcmp.eq.s32.totalorder %v68, 0
  %vm101 = vcmp.eq.s32.totalorder %v69, 0
  %vm102 = vcmp.eq.s32.totalorder %v70, 0
  %vm103 = vcmp.eq.s32.totalorder %v71, 0
  %vm104 = vcmp.eq.s32.totalorder %v72, 0
  %vm105 = vcmp.eq.s32.totalorder %v73, 0
  %vm106 = vcmp.eq.s32.totalorder %v74, 0
  %vm107 = vcmp.eq.s32.totalorder %v75, 0
  %vm108 = vcmp.eq.s32.totalorder %v76, 0
  %vm109 = vcmp.eq.s32.totalorder %v77, 0
  %vm110 = vcmp.eq.s32.totalorder %v78, 0
  %vm111 = vcmp.eq.s32.totalorder %v79, 0
  %vm112 = vcmp.eq.s32.totalorder %v80, 0
  %vm113 = vcmp.eq.s32.totalorder %v81, 0
  %vm114 = vcmp.eq.s32.totalorder %v82, 0
  %vm115 = vcmp.eq.s32.totalorder %v83, 0
  %vm116 = vcmp.eq.s32.totalorder %v84, 0
  %vm117 = vcmp.eq.s32.totalorder %v85, 0
  %vm118 = vcmp.eq.s32.totalorder %v86, 0
  %vm119 = vcmp.eq.s32.totalorder %v87, 0
  %vm120 = vcmp.eq.s32.totalorder %v88, 0
  %vm121 = vcmp.eq.s32.totalorder %v89, 0
  %vm122 = vcmp.eq.s32.totalorder %v90, 0
  %vm123 = vcmp.eq.s32.totalorder %v91, 0
  %vm124 = vcmp.eq.s32.totalorder %v92, 0
  %vm125 = vcmp.eq.s32.totalorder %v93, 0
  %vm126 = vcmp.eq.s32.totalorder %v94, 0
  %vm127 = vcmp.eq.s32.totalorder %v95, 0
  %vm128 = vcmp.eq.s32.totalorder %v96, 0
  %vm129 = vcmp.eq.s32.totalorder %v97, 0
  %vm130 = vcmp.eq.s32.totalorder %v98, 0
  %vm131 = vcmp.eq.s32.totalorder %v99, 0
  %vm132 = vcmp.eq.s32.totalorder %v68, 15
  %vm133 = vcmp.eq.s32.totalorder %v69, 15
  %vm134 = vcmp.eq.s32.totalorder %v70, 15
  %vm135 = vcmp.eq.s32.totalorder %v71, 15
  %vm136 = vcmp.eq.s32.totalorder %v72, 15
  %vm137 = vcmp.eq.s32.totalorder %v73, 15
  %vm138 = vcmp.eq.s32.totalorder %v74, 15
  %vm139 = vcmp.eq.s32.totalorder %v75, 15
  %vm140 = vcmp.eq.s32.totalorder %v76, 15
  %vm141 = vcmp.eq.s32.totalorder %v77, 15
  %vm142 = vcmp.eq.s32.totalorder %v78, 15
  %vm143 = vcmp.eq.s32.totalorder %v79, 15
  %vm144 = vcmp.eq.s32.totalorder %v80, 15
  %vm145 = vcmp.eq.s32.totalorder %v81, 15
  %vm146 = vcmp.eq.s32.totalorder %v82, 15
  %vm147 = vcmp.eq.s32.totalorder %v83, 15
  %vm148 = vcmp.eq.s32.totalorder %v84, 15
  %vm149 = vcmp.eq.s32.totalorder %v85, 15
  %vm150 = vcmp.eq.s32.totalorder %v86, 15
  %vm151 = vcmp.eq.s32.totalorder %v87, 15
  %vm152 = vcmp.eq.s32.totalorder %v88, 15
  %vm153 = vcmp.eq.s32.totalorder %v89, 15
  %vm154 = vcmp.eq.s32.totalorder %v90, 15
  %vm155 = vcmp.eq.s32.totalorder %v91, 15
  %vm156 = vcmp.eq.s32.totalorder %v92, 15
  %vm157 = vcmp.eq.s32.totalorder %v93, 15
  %vm158 = vcmp.eq.s32.totalorder %v94, 15
  %vm159 = vcmp.eq.s32.totalorder %v95, 15
  %vm160 = vcmp.eq.s32.totalorder %v96, 15
  %vm161 = vcmp.eq.s32.totalorder %v97, 15
  %vm162 = vcmp.eq.s32.totalorder %v98, 15
  %vm163 = vcmp.eq.s32.totalorder %v99, 15
  %vm164 = vcmp.lt.s32.totalorder %v36, 16
  %vm165 = vcmp.lt.s32.totalorder %v37, 16
  %vm166 = vcmp.lt.s32.totalorder %v38, 16
  %vm167 = vcmp.lt.s32.totalorder %v39, 16
  %vm168 = vcmp.lt.s32.totalorder %v40, 16
  %vm169 = vcmp.lt.s32.totalorder %v41, 16
  %vm170 = vcmp.lt.s32.totalorder %v42, 16
  %vm171 = vcmp.lt.s32.totalorder %v43, 16
  %vm172 = vcmp.lt.s32.totalorder %v44, 16
  %vm173 = vcmp.lt.s32.totalorder %v45, 16
  %vm174 = vcmp.lt.s32.totalorder %v46, 16
  %vm175 = vcmp.lt.s32.totalorder %v47, 16
  %vm176 = vcmp.lt.s32.totalorder %v48, 16
  %vm177 = vcmp.lt.s32.totalorder %v49, 16
  %vm178 = vcmp.lt.s32.totalorder %v50, 16
  %vm179 = vcmp.lt.s32.totalorder %v51, 16
  %vm180 = vcmp.lt.s32.totalorder %v52, 16
  %vm181 = vcmp.lt.s32.totalorder %v53, 16
  %vm182 = vcmp.lt.s32.totalorder %v54, 16
  %vm183 = vcmp.lt.s32.totalorder %v55, 16
  %vm184 = vcmp.lt.s32.totalorder %v56, 16
  %vm185 = vcmp.lt.s32.totalorder %v57, 16
  %vm186 = vcmp.lt.s32.totalorder %v58, 16
  %vm187 = vcmp.lt.s32.totalorder %v59, 16
  %vm188 = vcmp.lt.s32.totalorder %v60, 16
  %vm189 = vcmp.lt.s32.totalorder %v61, 16
  %vm190 = vcmp.lt.s32.totalorder %v62, 16
  %vm191 = vcmp.lt.s32.totalorder %v63, 16
  %vm192 = vcmp.lt.s32.totalorder %v64, 16
  %vm193 = vcmp.lt.s32.totalorder %v65, 16
  %vm194 = vcmp.lt.s32.totalorder %v66, 16
  %vm195 = vcmp.lt.s32.totalorder %v67, 16
  %vm196 = vcmp.ge.s32.totalorder %v36, 240
  %vm197 = vcmp.ge.s32.totalorder %v37, 240
  %vm198 = vcmp.ge.s32.totalorder %v38, 240
  %vm199 = vcmp.ge.s32.totalorder %v39, 240
  %vm200 = vcmp.ge.s32.totalorder %v40, 240
  %vm201 = vcmp.ge.s32.totalorder %v41, 240
  %vm202 = vcmp.ge.s32.totalorder %v42, 240
  %vm203 = vcmp.ge.s32.totalorder %v43, 240
  %vm204 = vcmp.ge.s32.totalorder %v44, 240
  %vm205 = vcmp.ge.s32.totalorder %v45, 240
  %vm206 = vcmp.ge.s32.totalorder %v46, 240
  %vm207 = vcmp.ge.s32.totalorder %v47, 240
  %vm208 = vcmp.ge.s32.totalorder %v48, 240
  %vm209 = vcmp.ge.s32.totalorder %v49, 240
  %vm210 = vcmp.ge.s32.totalorder %v50, 240
  %vm211 = vcmp.ge.s32.totalorder %v51, 240
  %vm212 = vcmp.ge.s32.totalorder %v52, 240
  %vm213 = vcmp.ge.s32.totalorder %v53, 240
  %vm214 = vcmp.ge.s32.totalorder %v54, 240
  %vm215 = vcmp.ge.s32.totalorder %v55, 240
  %vm216 = vcmp.ge.s32.totalorder %v56, 240
  %vm217 = vcmp.ge.s32.totalorder %v57, 240
  %vm218 = vcmp.ge.s32.totalorder %v58, 240
  %vm219 = vcmp.ge.s32.totalorder %v59, 240
  %vm220 = vcmp.ge.s32.totalorder %v60, 240
  %vm221 = vcmp.ge.s32.totalorder %v61, 240
  %vm222 = vcmp.ge.s32.totalorder %v62, 240
  %vm223 = vcmp.ge.s32.totalorder %v63, 240
  %vm224 = vcmp.ge.s32.totalorder %v64, 240
  %vm225 = vcmp.ge.s32.totalorder %v65, 240
  %vm226 = vcmp.ge.s32.totalorder %v66, 240
  %vm227 = vcmp.ge.s32.totalorder %v67, 240
  %v228 = vld [vmem:[%s0] sm:$0xf]
  %v229 = vld [vmem:[%s0 + $0x4] sm:$0xf]
  %v230 = vld [vmem:[%s0 + $0x8] sm:$0xf]
  %v231 = vld [vmem:[%s0 + $0xc] sm:$0xf]
  %v232 = vld [vmem:[%s0 + $0x10] sm:$0xf]
  %v233 = vld [vmem:[%s0 + $0x14] sm:$0xf]
  %v234 = vld [vmem:[%s0 + $0x18] sm:$0xf]
  %v235 = vld [vmem:[%s0 + $0x1c] sm:$0xf]
  %v236 = vld [vmem:[%s0 + $0x20] sm:$0xf]
  %v237 = vld [vmem:[%s0 + $0x24] sm:$0xf]
  %v238 = vld [vmem:[%s0 + $0x28] sm:$0xf]
  %v239 = vld [vmem:[%s0 + $0x2c] sm:$0xf]
  %v240 = vld [vmem:[%s0 + $0x30] sm:$0xf]
  %v241 = vld [vmem:[%s0 + $0x34] sm:$0xf]
  %v242 = vld [vmem:[%s0 + $0x38] sm:$0xf]
  %v243 = vld [vmem:[%s0 + $0x3c] sm:$0xf]
  %v244 = vld [vmem:[%s0 + $0x40] sm:$0xf]
  %v245 = vld [vmem:[%s0 + $0x44] sm:$0xf]
  %v246 = vld [vmem:[%s0 + $0x48] sm:$0xf]
  %v247 = vld [vmem:[%s0 + $0x4c] sm:$0xf]
  %v248 = vld [vmem:[%s0 + $0x50] sm:$0xf]
  %v249 = vld [vmem:[%s0 + $0x54] sm:$0xf]
  %v250 = vld [vmem:[%s0 + $0x58] sm:$0xf]
  %v251 = vld [vmem:[%s0 + $0x5c] sm:$0xf]
  %v252 = vld [vmem:[%s0 + $0x60] sm:$0xf]
  %v253 = vld [vmem:[%s0 + $0x64] sm:$0xf]
  %v254 = vld [vmem:[%s0 + $0x68] sm:$0xf]
  %v255 = vld [vmem:[%s0 + $0x6c] sm:$0xf]
  %v256 = vld [vmem:[%s0 + $0x70] sm:$0xf]
  %v257 = vld [vmem:[%s0 + $0x74] sm:$0xf]
  %v258 = vld [vmem:[%s0 + $0x78] sm:$0xf]
  %v259 = vld [vmem:[%s0 + $0x7c] sm:$0xf]
  %v260 = vld [vmem:[%s1] sm:$0xf]
  %v261 = vld [vmem:[%s1 + $0x4] sm:$0xf]
  %v262 = vld [vmem:[%s1 + $0x8] sm:$0x1]
  %v263 = vld [vmem:[%s5] sm:$0x1]
  %v264 = vlaneseq
  %v265 = vshrl.u32 %v264, 7
  %v266 = vsub.s32 0, %v265
  %v267 = vrot.slane %v263, %v266
  %v300 = vunpack.c.l.b16 %v228
  %v301 = vunpack.c.l.b16 %v229
  %v302 = vunpack.c.l.b16 %v230
  %v303 = vunpack.c.l.b16 %v231
  %v304 = vunpack.c.l.b16 %v232
  %v305 = vunpack.c.l.b16 %v233
  %v306 = vunpack.c.l.b16 %v234
  %v307 = vunpack.c.l.b16 %v235
  %v308 = vunpack.c.l.b16 %v236
  %v309 = vunpack.c.l.b16 %v237
  %v310 = vunpack.c.l.b16 %v238
  %v311 = vunpack.c.l.b16 %v239
  %v312 = vunpack.c.l.b16 %v240
  %v313 = vunpack.c.l.b16 %v241
  %v314 = vunpack.c.l.b16 %v242
  %v315 = vunpack.c.l.b16 %v243
  %v316 = vunpack.c.l.b16 %v244
  %v317 = vunpack.c.l.b16 %v245
  %v318 = vunpack.c.l.b16 %v246
  %v319 = vunpack.c.l.b16 %v247
  %v320 = vunpack.c.l.b16 %v248
  %v321 = vunpack.c.l.b16 %v249
  %v322 = vunpack.c.l.b16 %v250
  %v323 = vunpack.c.l.b16 %v251
  %v324 = vunpack.c.l.b16 %v252
  %v325 = vunpack.c.l.b16 %v253
  %v326 = vunpack.c.l.b16 %v254
  %v327 = vunpack.c.l.b16 %v255
  %v328 = vunpack.c.l.b16 %v256
  %v329 = vunpack.c.l.b16 %v257
  %v330 = vunpack.c.l.b16 %v258
  %v331 = vunpack.c.l.b16 %v259
  %v332 = vpack.c.b16 %v301, %v300
  %v333 = vpack.c.b16 %v303, %v302
  %v334 = vpack.c.b16 %v305, %v304
  %v335 = vpack.c.b16 %v307, %v306
  %v336 = vpack.c.b16 %v309, %v308
  %v337 = vpack.c.b16 %v311, %v310
  %v338 = vpack.c.b16 %v313, %v312
  %v339 = vpack.c.b16 %v315, %v314
  %v340 = vpack.c.b16 %v317, %v316
  %v341 = vpack.c.b16 %v319, %v318
  %v342 = vpack.c.b16 %v321, %v320
  %v343 = vpack.c.b16 %v323, %v322
  %v344 = vpack.c.b16 %v325, %v324
  %v345 = vpack.c.b16 %v327, %v326
  %v346 = vpack.c.b16 %v329, %v328
  %v347 = vpack.c.b16 %v331, %v330
  %v351 = vunpack.c.l.b16 %v260
  %v352 = vunpack.c.l.b16 %v261
  %v353 = vunpack.c.l.b16 %v262
  %v354 = vpack.c.b16 %v352, %v351
  %v355 = vpack.c.b16 %v353, %v353
  %vm357 = vcmask 146432
  %v359 = vsel %vm357, %v332, 0
  %v362 = vsel %vm357, %v333, 0
  %v365 = vsel %vm357, %v334, 0
  %v368 = vsel %vm357, %v335, 0
  %v371 = vsel %vm357, %v336, 0
  %v374 = vsel %vm357, %v337, 0
  %v377 = vsel %vm357, %v338, 0
  %v380 = vsel %vm357, %v339, 0
  %v383 = vsel %vm357, %v340, 0
  %v386 = vsel %vm357, %v341, 0
  %v389 = vsel %vm357, %v342, 0
  %v392 = vsel %vm357, %v343, 0
  %v395 = vsel %vm357, %v344, 0
  %v398 = vsel %vm357, %v345, 0
  %v401 = vsel %vm357, %v346, 0
  %v404 = vsel %vm357, %v347, 0
  %vm406 = vcmask 1040384
  %v408 = vsel %vm406, %v355, 0
  %410 = vmatprep.subr.bf16.mxu0 0
  %411 = vmatpush1.bf16.msra.mxu0 0
  %412 = vmatprep.subr.bf16.mxu0 0
  %413 = vmatpush1.bf16.msra.mxu0 0
  %414 = vmatprep.subr.bf16.mxu0 0
  %415 = vmatpush1.bf16.msra.mxu0 0
  %416 = vmatprep.subr.bf16.mxu0 0
  %417 = vmatpush1.bf16.msra.mxu0 0
  %418 = vmatprep.subr.bf16.mxu0 0
  %419 = vmatpush1.bf16.msra.mxu0 0
  %420 = vmatprep.subr.bf16.mxu0 0
  %421 = vmatpush1.bf16.msra.mxu0 0
  %422 = vmatprep.subr.bf16.mxu0 0
  %423 = vmatpush1.bf16.msra.mxu0 %v408
  %424 = vmatprep.subr.bf16.mxu0 0
  %425 = vmatpush1.bf16.msra.mxu0 %v354
  %426 = vmatprep.subr.bf16.mxu0 0
  %427 = vmatpush2.bf16.msra.mxu0 0
  %428 = vmatprep.subr.bf16.mxu0 0
  %429 = vmatpush2.bf16.msra.mxu0 0
  %430 = vmatprep.subr.bf16.mxu0 0
  %431 = vmatpush2.bf16.msra.mxu0 0
  %432 = vmatprep.subr.bf16.mxu0 0
  %433 = vmatpush2.bf16.msra.mxu0 0
  %434 = vmatprep.subr.bf16.mxu0 0
  %435 = vmatpush2.bf16.msra.mxu0 0
  %436 = vmatprep.subr.bf16.mxu0 0
  %437 = vmatpush2.bf16.msra.mxu0 0
  %438 = vmatprep.subr.bf16.mxu0 0
  %439 = vmatpush2.bf16.msra.mxu0 0
  %440 = vmatprep.subr.bf16.mxu0 0
  %441 = vmatpush2.bf16.msra.mxu0 0
  %442 = vmatprep.mubr.bf16.mxu0 0
  %443 = vmatmul.mubr.bf16.gmra.mxu0 %v359
  %v444 = vpop.f32.mrf.mxu0
  %v445 = vadd.f32 %v267, %v444
  %v446 = vpop.f32.mrf.mxu0
  %v447 = vpop.f32.mrf.mxu0
  %v448 = vadd.f32 %v267, %v447
  %v449 = vpop.f32.mrf.mxu0
  %450 = vmatprep.mubr.bf16.mxu0 0
  %451 = vmatmul.mubr.bf16.gmra.mxu0 %v362
  %v452 = vpop.f32.mrf.mxu0
  %v453 = vadd.f32 %v267, %v452
  %v454 = vpop.f32.mrf.mxu0
  %v455 = vpop.f32.mrf.mxu0
  %v456 = vadd.f32 %v267, %v455
  %v457 = vpop.f32.mrf.mxu0
  %458 = vmatprep.mubr.bf16.mxu0 0
  %459 = vmatmul.mubr.bf16.gmra.mxu0 %v365
  %v460 = vpop.f32.mrf.mxu0
  %v461 = vadd.f32 %v267, %v460
  %v462 = vpop.f32.mrf.mxu0
  %v463 = vpop.f32.mrf.mxu0
  %v464 = vadd.f32 %v267, %v463
  %v465 = vpop.f32.mrf.mxu0
  %466 = vmatprep.mubr.bf16.mxu0 0
  %467 = vmatmul.mubr.bf16.gmra.mxu0 %v368
  %v468 = vpop.f32.mrf.mxu0
  %v469 = vadd.f32 %v267, %v468
  %v470 = vpop.f32.mrf.mxu0
  %v471 = vpop.f32.mrf.mxu0
  %v472 = vadd.f32 %v267, %v471
  %v473 = vpop.f32.mrf.mxu0
  %474 = vmatprep.mubr.bf16.mxu0 0
  %475 = vmatmul.mubr.bf16.gmra.mxu0 %v371
  %v476 = vpop.f32.mrf.mxu0
  %v477 = vadd.f32 %v267, %v476
  %v478 = vpop.f32.mrf.mxu0
  %v479 = vpop.f32.mrf.mxu0
  %v480 = vadd.f32 %v267, %v479
  %v481 = vpop.f32.mrf.mxu0
  %482 = vmatprep.mubr.bf16.mxu0 0
  %483 = vmatmul.mubr.bf16.gmra.mxu0 %v374
  %v484 = vpop.f32.mrf.mxu0
  %v485 = vadd.f32 %v267, %v484
  %v486 = vpop.f32.mrf.mxu0
  %v487 = vpop.f32.mrf.mxu0
  %v488 = vadd.f32 %v267, %v487
  %v489 = vpop.f32.mrf.mxu0
  %490 = vmatprep.mubr.bf16.mxu0 0
  %491 = vmatmul.mubr.bf16.gmra.mxu0 %v377
  %v492 = vpop.f32.mrf.mxu0
  %v493 = vadd.f32 %v267, %v492
  %v494 = vpop.f32.mrf.mxu0
  %v495 = vpop.f32.mrf.mxu0
  %v496 = vadd.f32 %v267, %v495
  %v497 = vpop.f32.mrf.mxu0
  %498 = vmatprep.mubr.bf16.mxu0 0
  %499 = vmatmul.mubr.bf16.gmra.mxu0 %v380
  %v500 = vpop.f32.mrf.mxu0
  %v501 = vadd.f32 %v267, %v500
  %v502 = vpop.f32.mrf.mxu0
  %v503 = vpop.f32.mrf.mxu0
  %v504 = vadd.f32 %v267, %v503
  %v505 = vpop.f32.mrf.mxu0
  %506 = vmatprep.mubr.bf16.mxu0 0
  %507 = vmatmul.mubr.bf16.gmra.mxu0 %v383
  %v508 = vpop.f32.mrf.mxu0
  %v509 = vadd.f32 %v267, %v508
  %v510 = vpop.f32.mrf.mxu0
  %v511 = vpop.f32.mrf.mxu0
  %v512 = vadd.f32 %v267, %v511
  %v513 = vpop.f32.mrf.mxu0
  %514 = vmatprep.mubr.bf16.mxu0 0
  %515 = vmatmul.mubr.bf16.gmra.mxu0 %v386
  %v516 = vpop.f32.mrf.mxu0
  %v517 = vadd.f32 %v267, %v516
  %v518 = vpop.f32.mrf.mxu0
  %v519 = vpop.f32.mrf.mxu0
  %v520 = vadd.f32 %v267, %v519
  %v521 = vpop.f32.mrf.mxu0
  %522 = vmatprep.mubr.bf16.mxu0 0
  %523 = vmatmul.mubr.bf16.gmra.mxu0 %v389
  %v524 = vpop.f32.mrf.mxu0
  %v525 = vadd.f32 %v267, %v524
  %v526 = vpop.f32.mrf.mxu0
  %v527 = vpop.f32.mrf.mxu0
  %v528 = vadd.f32 %v267, %v527
  %v529 = vpop.f32.mrf.mxu0
  %530 = vmatprep.mubr.bf16.mxu0 0
  %531 = vmatmul.mubr.bf16.gmra.mxu0 %v392
  %v532 = vpop.f32.mrf.mxu0
  %v533 = vadd.f32 %v267, %v532
  %v534 = vpop.f32.mrf.mxu0
  %v535 = vpop.f32.mrf.mxu0
  %v536 = vadd.f32 %v267, %v535
  %v537 = vpop.f32.mrf.mxu0
  %538 = vmatprep.mubr.bf16.mxu0 0
  %539 = vmatmul.mubr.bf16.gmra.mxu0 %v395
  %v540 = vpop.f32.mrf.mxu0
  %v541 = vadd.f32 %v267, %v540
  %v542 = vpop.f32.mrf.mxu0
  %v543 = vpop.f32.mrf.mxu0
  %v544 = vadd.f32 %v267, %v543
  %v545 = vpop.f32.mrf.mxu0
  %546 = vmatprep.mubr.bf16.mxu0 0
  %547 = vmatmul.mubr.bf16.gmra.mxu0 %v398
  %v548 = vpop.f32.mrf.mxu0
  %v549 = vadd.f32 %v267, %v548
  %v550 = vpop.f32.mrf.mxu0
  %v551 = vpop.f32.mrf.mxu0
  %v552 = vadd.f32 %v267, %v551
  %v553 = vpop.f32.mrf.mxu0
  %554 = vmatprep.mubr.bf16.mxu0 0
  %555 = vmatmul.mubr.bf16.gmra.mxu0 %v401
  %v556 = vpop.f32.mrf.mxu0
  %v557 = vadd.f32 %v267, %v556
  %v558 = vpop.f32.mrf.mxu0
  %v559 = vpop.f32.mrf.mxu0
  %v560 = vadd.f32 %v267, %v559
  %v561 = vpop.f32.mrf.mxu0
  %562 = vmatprep.mubr.bf16.mxu0 0
  %563 = vmatmul.mubr.bf16.gmra.mxu0 %v404
  %v564 = vpop.f32.mrf.mxu0
  %v565 = vadd.f32 %v267, %v564
  %v566 = vpop.f32.mrf.mxu0
  %v567 = vpop.f32.mrf.mxu0
  %v568 = vadd.f32 %v267, %v567
  %v569 = vpop.f32.mrf.mxu0
  %570 = vdwg.mxu0
  %vm571 = vcmask 523264
  %v572 = vsel %vm571, %v445, 0.0
  %v573 = vsel %vm571, %v448, 0.0
  %v574 = vadd.f32 %v572, %v573
  %v575 = vsel %vm571, %v453, 0.0
  %v576 = vadd.f32 %v574, %v575
  %v577 = vsel %vm571, %v456, 0.0
  %v578 = vadd.f32 %v576, %v577
  %v579 = vsel %vm571, %v461, 0.0
  %v580 = vadd.f32 %v578, %v579
  %v581 = vsel %vm571, %v464, 0.0
  %v582 = vadd.f32 %v580, %v581
  %v583 = vsel %vm571, %v469, 0.0
  %v584 = vadd.f32 %v582, %v583
  %v585 = vsel %vm571, %v472, 0.0
  %v586 = vadd.f32 %v584, %v585
  %v587 = vsel %vm571, %v477, 0.0
  %v588 = vadd.f32 %v586, %v587
  %v589 = vsel %vm571, %v480, 0.0
  %v590 = vadd.f32 %v588, %v589
  %v591 = vsel %vm571, %v485, 0.0
  %v592 = vadd.f32 %v590, %v591
  %v593 = vsel %vm571, %v488, 0.0
  %v594 = vadd.f32 %v592, %v593
  %v595 = vsel %vm571, %v493, 0.0
  %v596 = vadd.f32 %v594, %v595
  %v597 = vsel %vm571, %v496, 0.0
  %v598 = vadd.f32 %v596, %v597
  %v599 = vsel %vm571, %v501, 0.0
  %v600 = vadd.f32 %v598, %v599
  %v601 = vsel %vm571, %v504, 0.0
  %v602 = vadd.f32 %v600, %v601
  %v603 = vsel %vm571, %v509, 0.0
  %v604 = vadd.f32 %v602, %v603
  %v605 = vsel %vm571, %v512, 0.0
  %v606 = vadd.f32 %v604, %v605
  %v607 = vsel %vm571, %v517, 0.0
  %v608 = vadd.f32 %v606, %v607
  %v609 = vsel %vm571, %v520, 0.0
  %v610 = vadd.f32 %v608, %v609
  %v611 = vsel %vm571, %v525, 0.0
  %v612 = vadd.f32 %v610, %v611
  %v613 = vsel %vm571, %v528, 0.0
  %v614 = vadd.f32 %v612, %v613
  %v615 = vsel %vm571, %v533, 0.0
  %v616 = vadd.f32 %v614, %v615
  %v617 = vsel %vm571, %v536, 0.0
  %v618 = vadd.f32 %v616, %v617
  %v619 = vsel %vm571, %v541, 0.0
  %v620 = vadd.f32 %v618, %v619
  %v621 = vsel %vm571, %v544, 0.0
  %v622 = vadd.f32 %v620, %v621
  %v623 = vsel %vm571, %v549, 0.0
  %v624 = vadd.f32 %v622, %v623
  %v625 = vsel %vm571, %v552, 0.0
  %v626 = vadd.f32 %v624, %v625
  %v627 = vsel %vm571, %v557, 0.0
  %v628 = vadd.f32 %v626, %v627
  %v629 = vsel %vm571, %v560, 0.0
  %v630 = vadd.f32 %v628, %v629
  %v631 = vsel %vm571, %v565, 0.0
  %v632 = vadd.f32 %v630, %v631
  %v633 = vsel %vm571, %v568, 0.0
  %v634 = vadd.f32 %v632, %v633
  %v635 = vrot.slane %v634, 4
  %v636 = vadd.f32 %v634, %v635
  %v637 = vrot.slane %v636, 2
  %v638 = vadd.f32 %v636, %v637
  %v639 = vrot.slane %v638, 1
  %v640 = vadd.f32 %v638, %v639
  %v641 = vmul.f32 %v445, %v445
  %v642 = vmul.f32 %v448, %v448
  %v643 = vmul.f32 %v453, %v453
  %v644 = vmul.f32 %v456, %v456
  %v645 = vmul.f32 %v461, %v461
  %v646 = vmul.f32 %v464, %v464
  %v647 = vmul.f32 %v469, %v469
  %v648 = vmul.f32 %v472, %v472
  %v649 = vmul.f32 %v477, %v477
  %v650 = vmul.f32 %v480, %v480
  %v651 = vmul.f32 %v485, %v485
  %v652 = vmul.f32 %v488, %v488
  %v653 = vmul.f32 %v493, %v493
  %v654 = vmul.f32 %v496, %v496
  %v655 = vmul.f32 %v501, %v501
  %v656 = vmul.f32 %v504, %v504
  %v657 = vmul.f32 %v509, %v509
  %v658 = vmul.f32 %v512, %v512
  %v659 = vmul.f32 %v517, %v517
  %v660 = vmul.f32 %v520, %v520
  %v661 = vmul.f32 %v525, %v525
  %v662 = vmul.f32 %v528, %v528
  %v663 = vmul.f32 %v533, %v533
  %v664 = vmul.f32 %v536, %v536
  %v665 = vmul.f32 %v541, %v541
  %v666 = vmul.f32 %v544, %v544
  %v667 = vmul.f32 %v549, %v549
  %v668 = vmul.f32 %v552, %v552
  %v669 = vmul.f32 %v557, %v557
  %v670 = vmul.f32 %v560, %v560
  %v671 = vmul.f32 %v565, %v565
  %v672 = vmul.f32 %v568, %v568
  %v673 = vsel %vm571, %v641, 0.0
  %v674 = vsel %vm571, %v642, 0.0
  %v675 = vadd.f32 %v673, %v674
  %v676 = vsel %vm571, %v643, 0.0
  %v677 = vadd.f32 %v675, %v676
  %v678 = vsel %vm571, %v644, 0.0
  %v679 = vadd.f32 %v677, %v678
  %v680 = vsel %vm571, %v645, 0.0
  %v681 = vadd.f32 %v679, %v680
  %v682 = vsel %vm571, %v646, 0.0
  %v683 = vadd.f32 %v681, %v682
  %v684 = vsel %vm571, %v647, 0.0
  %v685 = vadd.f32 %v683, %v684
  %v686 = vsel %vm571, %v648, 0.0
  %v687 = vadd.f32 %v685, %v686
  %v688 = vsel %vm571, %v649, 0.0
  %v689 = vadd.f32 %v687, %v688
  %v690 = vsel %vm571, %v650, 0.0
  %v691 = vadd.f32 %v689, %v690
  %v692 = vsel %vm571, %v651, 0.0
  %v693 = vadd.f32 %v691, %v692
  %v694 = vsel %vm571, %v652, 0.0
  %v695 = vadd.f32 %v693, %v694
  %v696 = vsel %vm571, %v653, 0.0
  %v697 = vadd.f32 %v695, %v696
  %v698 = vsel %vm571, %v654, 0.0
  %v699 = vadd.f32 %v697, %v698
  %v700 = vsel %vm571, %v655, 0.0
  %v701 = vadd.f32 %v699, %v700
  %v702 = vsel %vm571, %v656, 0.0
  %v703 = vadd.f32 %v701, %v702
  %v704 = vsel %vm571, %v657, 0.0
  %v705 = vadd.f32 %v703, %v704
  %v706 = vsel %vm571, %v658, 0.0
  %v707 = vadd.f32 %v705, %v706
  %v708 = vsel %vm571, %v659, 0.0
  %v709 = vadd.f32 %v707, %v708
  %v710 = vsel %vm571, %v660, 0.0
  %v711 = vadd.f32 %v709, %v710
  %v712 = vsel %vm571, %v661, 0.0
  %v713 = vadd.f32 %v711, %v712
  %v714 = vsel %vm571, %v662, 0.0
  %v715 = vadd.f32 %v713, %v714
  %v716 = vsel %vm571, %v663, 0.0
  %v717 = vadd.f32 %v715, %v716
  %v718 = vsel %vm571, %v664, 0.0
  %v719 = vadd.f32 %v717, %v718
  %v720 = vsel %vm571, %v665, 0.0
  %v721 = vadd.f32 %v719, %v720
  %v722 = vsel %vm571, %v666, 0.0
  %v723 = vadd.f32 %v721, %v722
  %v724 = vsel %vm571, %v667, 0.0
  %v725 = vadd.f32 %v723, %v724
  %v726 = vsel %vm571, %v668, 0.0
  %v727 = vadd.f32 %v725, %v726
  %v728 = vsel %vm571, %v669, 0.0
  %v729 = vadd.f32 %v727, %v728
  %v730 = vsel %vm571, %v670, 0.0
  %v731 = vadd.f32 %v729, %v730
  %v732 = vsel %vm571, %v671, 0.0
  %v733 = vadd.f32 %v731, %v732
  %v734 = vsel %vm571, %v672, 0.0
  %v735 = vadd.f32 %v733, %v734
  %v736 = vrot.slane %v735, 4
  %v737 = vadd.f32 %v735, %v736
  %v738 = vrot.slane %v737, 2
  %v739 = vadd.f32 %v737, %v738
  %v740 = vrot.slane %v739, 1
  %v741 = vadd.f32 %v739, %v740
  %vm742 = vcmask 1048064
  %743 = vrot.lane.b32.xlu0 %v640, 64
  %v744 = vpop.permute.xlu0 %743
  %v745 = vsel %vm742, %v744, %v640
  %746 = vrot.lane.b32.xlu0 %v745, 64
  %v747 = vpop.permute.xlu0 %746
  %v748 = vsel %vm742, %v747, %v640
  %750 = vrot.lane.b32.xlu0 %v748, 96
  %v751 = vpop.permute.xlu0 %750
  %v753 = vadd.f32 %v640, %v751
  %754 = vrot.lane.b32.xlu0 %v741, 64
  %v755 = vpop.permute.xlu0 %754
  %v756 = vsel %vm742, %v755, %v741
  %757 = vrot.lane.b32.xlu0 %v756, 64
  %v758 = vpop.permute.xlu0 %757
  %v759 = vsel %vm742, %v758, %v741
  %761 = vrot.lane.b32.xlu0 %v759, 96
  %v762 = vpop.permute.xlu0 %761
  %v764 = vadd.f32 %v741, %v762
  %v765 = vmul.f32 %v753, 0.001953125
  %v766 = vmul.f32 %v764, 0.001953125
  %v767 = vmul.f32 %v765, %v765
  %v768 = vsub.f32 %v766, %v767
  %v769 = vld [vmem:[%s6] sm:$0x1]
  %v770 = vadd.f32 %v768, 1e-05
  %v771 = vrsqrt.pop %v770
  %v772 = vmul.f32 %v769, %v771
  %v773 = vld [vmem:[%s7] sm:$0x1]
  %v774 = vmul.f32 %v765, %v772
  %v775 = vsub.f32 %v773, %v774
  %v776 = vlaneseq
  %v777 = vshrl.u32 %v776, 7
  %v778 = vsub.s32 0, %v777
  %v779 = vrot.slane %v772, %v778
  %v780 = vmul.f32 %v445, %v779
  %v781 = vmul.f32 %v448, %v779
  %v782 = vmul.f32 %v453, %v779
  %v783 = vmul.f32 %v456, %v779
  %v784 = vmul.f32 %v461, %v779
  %v785 = vmul.f32 %v464, %v779
  %v786 = vmul.f32 %v469, %v779
  %v787 = vmul.f32 %v472, %v779
  %v788 = vmul.f32 %v477, %v779
  %v789 = vmul.f32 %v480, %v779
  %v790 = vmul.f32 %v485, %v779
  %v791 = vmul.f32 %v488, %v779
  %v792 = vmul.f32 %v493, %v779
  %v793 = vmul.f32 %v496, %v779
  %v794 = vmul.f32 %v501, %v779
  %v795 = vmul.f32 %v504, %v779
  %v796 = vmul.f32 %v509, %v779
  %v797 = vmul.f32 %v512, %v779
  %v798 = vmul.f32 %v517, %v779
  %v799 = vmul.f32 %v520, %v779
  %v800 = vmul.f32 %v525, %v779
  %v801 = vmul.f32 %v528, %v779
  %v802 = vmul.f32 %v533, %v779
  %v803 = vmul.f32 %v536, %v779
  %v804 = vmul.f32 %v541, %v779
  %v805 = vmul.f32 %v544, %v779
  %v806 = vmul.f32 %v549, %v779
  %v807 = vmul.f32 %v552, %v779
  %v808 = vmul.f32 %v557, %v779
  %v809 = vmul.f32 %v560, %v779
  %v810 = vmul.f32 %v565, %v779
  %v811 = vmul.f32 %v568, %v779
  %v812 = vlaneseq
  %v813 = vshrl.u32 %v812, 7
  %v814 = vsub.s32 0, %v813
  %v815 = vrot.slane %v775, %v814
  %v816 = vadd.f32 %v780, %v815
  %v817 = vadd.f32 %v781, %v815
  %v818 = vadd.f32 %v782, %v815
  %v819 = vadd.f32 %v783, %v815
  %v820 = vadd.f32 %v784, %v815
  %v821 = vadd.f32 %v785, %v815
  %v822 = vadd.f32 %v786, %v815
  %v823 = vadd.f32 %v787, %v815
  %v824 = vadd.f32 %v788, %v815
  %v825 = vadd.f32 %v789, %v815
  %v826 = vadd.f32 %v790, %v815
  %v827 = vadd.f32 %v791, %v815
  %v828 = vadd.f32 %v792, %v815
  %v829 = vadd.f32 %v793, %v815
  %v830 = vadd.f32 %v794, %v815
  %v831 = vadd.f32 %v795, %v815
  %v832 = vadd.f32 %v796, %v815
  %v833 = vadd.f32 %v797, %v815
  %v834 = vadd.f32 %v798, %v815
  %v835 = vadd.f32 %v799, %v815
  %v836 = vadd.f32 %v800, %v815
  %v837 = vadd.f32 %v801, %v815
  %v838 = vadd.f32 %v802, %v815
  %v839 = vadd.f32 %v803, %v815
  %v840 = vadd.f32 %v804, %v815
  %v841 = vadd.f32 %v805, %v815
  %v842 = vadd.f32 %v806, %v815
  %v843 = vadd.f32 %v807, %v815
  %v844 = vadd.f32 %v808, %v815
  %v845 = vadd.f32 %v809, %v815
  %v846 = vadd.f32 %v810, %v815
  %v847 = vadd.f32 %v811, %v815
  %vm848 = vcmp.ge.f32.partialorder %v816, 0.0
  %vm849 = vcmp.ge.f32.partialorder %v817, 0.0
  %vm850 = vcmp.ge.f32.partialorder %v818, 0.0
  %vm851 = vcmp.ge.f32.partialorder %v819, 0.0
  %vm852 = vcmp.ge.f32.partialorder %v820, 0.0
  %vm853 = vcmp.ge.f32.partialorder %v821, 0.0
  %vm854 = vcmp.ge.f32.partialorder %v822, 0.0
  %vm855 = vcmp.ge.f32.partialorder %v823, 0.0
  %vm856 = vcmp.ge.f32.partialorder %v824, 0.0
  %vm857 = vcmp.ge.f32.partialorder %v825, 0.0
  %vm858 = vcmp.ge.f32.partialorder %v826, 0.0
  %vm859 = vcmp.ge.f32.partialorder %v827, 0.0
  %vm860 = vcmp.ge.f32.partialorder %v828, 0.0
  %vm861 = vcmp.ge.f32.partialorder %v829, 0.0
  %vm862 = vcmp.ge.f32.partialorder %v830, 0.0
  %vm863 = vcmp.ge.f32.partialorder %v831, 0.0
  %vm864 = vcmp.ge.f32.partialorder %v832, 0.0
  %vm865 = vcmp.ge.f32.partialorder %v833, 0.0
  %vm866 = vcmp.ge.f32.partialorder %v834, 0.0
  %vm867 = vcmp.ge.f32.partialorder %v835, 0.0
  %vm868 = vcmp.ge.f32.partialorder %v836, 0.0
  %vm869 = vcmp.ge.f32.partialorder %v837, 0.0
  %vm870 = vcmp.ge.f32.partialorder %v838, 0.0
  %vm871 = vcmp.ge.f32.partialorder %v839, 0.0
  %vm872 = vcmp.ge.f32.partialorder %v840, 0.0
  %vm873 = vcmp.ge.f32.partialorder %v841, 0.0
  %vm874 = vcmp.ge.f32.partialorder %v842, 0.0
  %vm875 = vcmp.ge.f32.partialorder %v843, 0.0
  %vm876 = vcmp.ge.f32.partialorder %v844, 0.0
  %vm877 = vcmp.ge.f32.partialorder %v845, 0.0
  %vm878 = vcmp.ge.f32.partialorder %v846, 0.0
  %vm879 = vcmp.ge.f32.partialorder %v847, 0.0
  %v880 = vmul.f32 %v816, 0.2
  %v881 = vmul.f32 %v817, 0.2
  %v882 = vmul.f32 %v818, 0.2
  %v883 = vmul.f32 %v819, 0.2
  %v884 = vmul.f32 %v820, 0.2
  %v885 = vmul.f32 %v821, 0.2
  %v886 = vmul.f32 %v822, 0.2
  %v887 = vmul.f32 %v823, 0.2
  %v888 = vmul.f32 %v824, 0.2
  %v889 = vmul.f32 %v825, 0.2
  %v890 = vmul.f32 %v826, 0.2
  %v891 = vmul.f32 %v827, 0.2
  %v892 = vmul.f32 %v828, 0.2
  %v893 = vmul.f32 %v829, 0.2
  %v894 = vmul.f32 %v830, 0.2
  %v895 = vmul.f32 %v831, 0.2
  %v896 = vmul.f32 %v832, 0.2
  %v897 = vmul.f32 %v833, 0.2
  %v898 = vmul.f32 %v834, 0.2
  %v899 = vmul.f32 %v835, 0.2
  %v900 = vmul.f32 %v836, 0.2
  %v901 = vmul.f32 %v837, 0.2
  %v902 = vmul.f32 %v838, 0.2
  %v903 = vmul.f32 %v839, 0.2
  %v904 = vmul.f32 %v840, 0.2
  %v905 = vmul.f32 %v841, 0.2
  %v906 = vmul.f32 %v842, 0.2
  %v907 = vmul.f32 %v843, 0.2
  %v908 = vmul.f32 %v844, 0.2
  %v909 = vmul.f32 %v845, 0.2
  %v910 = vmul.f32 %v846, 0.2
  %v911 = vmul.f32 %v847, 0.2
  %v912 = vsel %vm848, %v816, %v880
  %v913 = vsel %vm849, %v817, %v881
  %v914 = vsel %vm850, %v818, %v882
  %v915 = vsel %vm851, %v819, %v883
  %v916 = vsel %vm852, %v820, %v884
  %v917 = vsel %vm853, %v821, %v885
  %v918 = vsel %vm854, %v822, %v886
  %v919 = vsel %vm855, %v823, %v887
  %v920 = vsel %vm856, %v824, %v888
  %v921 = vsel %vm857, %v825, %v889
  %v922 = vsel %vm858, %v826, %v890
  %v923 = vsel %vm859, %v827, %v891
  %v924 = vsel %vm860, %v828, %v892
  %v925 = vsel %vm861, %v829, %v893
  %v926 = vsel %vm862, %v830, %v894
  %v927 = vsel %vm863, %v831, %v895
  %v928 = vsel %vm864, %v832, %v896
  %v929 = vsel %vm865, %v833, %v897
  %v930 = vsel %vm866, %v834, %v898
  %v931 = vsel %vm867, %v835, %v899
  %v932 = vsel %vm868, %v836, %v900
  %v933 = vsel %vm869, %v837, %v901
  %v934 = vsel %vm870, %v838, %v902
  %v935 = vsel %vm871, %v839, %v903
  %v936 = vsel %vm872, %v840, %v904
  %v937 = vsel %vm873, %v841, %v905
  %v938 = vsel %vm874, %v842, %v906
  %v939 = vsel %vm875, %v843, %v907
  %v940 = vsel %vm876, %v844, %v908
  %v941 = vsel %vm877, %v845, %v909
  %v942 = vsel %vm878, %v846, %v910
  %v943 = vsel %vm879, %v847, %v911
  %v944 = vrot.slane %v912, 7
  %v945 = vrot.slane %v913, 7
  %v946 = vrot.slane %v914, 7
  %v947 = vrot.slane %v915, 7
  %v948 = vrot.slane %v916, 7
  %v949 = vrot.slane %v917, 7
  %v950 = vrot.slane %v918, 7
  %v951 = vrot.slane %v919, 7
  %v952 = vrot.slane %v920, 7
  %v953 = vrot.slane %v921, 7
  %v954 = vrot.slane %v922, 7
  %v955 = vrot.slane %v923, 7
  %v956 = vrot.slane %v924, 7
  %v957 = vrot.slane %v925, 7
  %v958 = vrot.slane %v926, 7
  %v959 = vrot.slane %v927, 7
  %v960 = vrot.slane %v928, 7
  %v961 = vrot.slane %v929, 7
  %v962 = vrot.slane %v930, 7
  %v963 = vrot.slane %v931, 7
  %v964 = vrot.slane %v932, 7
  %v965 = vrot.slane %v933, 7
  %v966 = vrot.slane %v934, 7
  %v967 = vrot.slane %v935, 7
  %v968 = vrot.slane %v936, 7
  %v969 = vrot.slane %v937, 7
  %v970 = vrot.slane %v938, 7
  %v971 = vrot.slane %v939, 7
  %v972 = vrot.slane %v940, 7
  %v973 = vrot.slane %v941, 7
  %v974 = vrot.slane %v942, 7
  %v975 = vrot.slane %v943, 7
  %vm976 = vcmp.lt.s32.totalorder %v36, 1
  %v977 = vsel %vm976, %v974, %v975
  %v978 = vsel %vm976, %v973, %v974
  %v979 = vsel %vm976, %v972, %v973
  %v980 = vsel %vm976, %v971, %v972
  %v981 = vsel %vm976, %v970, %v971
  %v982 = vsel %vm976, %v969, %v970
  %v983 = vsel %vm976, %v968, %v969
  %v984 = vsel %vm976, %v967, %v968
  %v985 = vsel %vm976, %v966, %v967
  %v986 = vsel %vm976, %v965, %v966
  %v987 = vsel %vm976, %v964, %v965
  %v988 = vsel %vm976, %v963, %v964
  %v989 = vsel %vm976, %v962, %v963
  %v990 = vsel %vm976, %v961, %v962
  %v991 = vsel %vm976, %v960, %v961
  %v992 = vsel %vm976, %v959, %v960
  %v993 = vsel %vm976, %v958, %v959
  %v994 = vsel %vm976, %v957, %v958
  %v995 = vsel %vm976, %v956, %v957
  %v996 = vsel %vm976, %v955, %v956
  %v997 = vsel %vm976, %v954, %v955
  %v998 = vsel %vm976, %v953, %v954
  %v999 = vsel %vm976, %v952, %v953
  %v1000 = vsel %vm976, %v951, %v952
  %v1001 = vsel %vm976, %v950, %v951
  %v1002 = vsel %vm976, %v949, %v950
  %v1003 = vsel %vm976, %v948, %v949
  %v1004 = vsel %vm976, %v947, %v948
  %v1005 = vsel %vm976, %v946, %v947
  %v1006 = vsel %vm976, %v945, %v946
  %v1007 = vsel %vm976, %v944, %v945
  %v1008 = vsel %vm976, %v975, %v944
  %v1009 = vrot.slane %v912, 1
  %v1010 = vrot.slane %v913, 1
  %v1011 = vrot.slane %v914, 1
  %v1012 = vrot.slane %v915, 1
  %v1013 = vrot.slane %v916, 1
  %v1014 = vrot.slane %v917, 1
  %v1015 = vrot.slane %v918, 1
  %v1016 = vrot.slane %v919, 1
  %v1017 = vrot.slane %v920, 1
  %v1018 = vrot.slane %v921, 1
  %v1019 = vrot.slane %v922, 1
  %v1020 = vrot.slane %v923, 1
  %v1021 = vrot.slane %v924, 1
  %v1022 = vrot.slane %v925, 1
  %v1023 = vrot.slane %v926, 1
  %v1024 = vrot.slane %v927, 1
  %v1025 = vrot.slane %v928, 1
  %v1026 = vrot.slane %v929, 1
  %v1027 = vrot.slane %v930, 1
  %v1028 = vrot.slane %v931, 1
  %v1029 = vrot.slane %v932, 1
  %v1030 = vrot.slane %v933, 1
  %v1031 = vrot.slane %v934, 1
  %v1032 = vrot.slane %v935, 1
  %v1033 = vrot.slane %v936, 1
  %v1034 = vrot.slane %v937, 1
  %v1035 = vrot.slane %v938, 1
  %v1036 = vrot.slane %v939, 1
  %v1037 = vrot.slane %v940, 1
  %v1038 = vrot.slane %v941, 1
  %v1039 = vrot.slane %v942, 1
  %v1040 = vrot.slane %v943, 1
  %vm1041 = vcmp.lt.s32.totalorder %v36, 7
  %v1042 = vsel %vm1041, %v1039, %v1040
  %v1043 = vsel %vm1041, %v1038, %v1039
  %v1044 = vsel %vm1041, %v1037, %v1038
  %v1045 = vsel %vm1041, %v1036, %v1037
  %v1046 = vsel %vm1041, %v1035, %v1036
  %v1047 = vsel %vm1041, %v1034, %v1035
  %v1048 = vsel %vm1041, %v1033, %v1034
  %v1049 = vsel %vm1041, %v1032, %v1033
  %v1050 = vsel %vm1041, %v1031, %v1032
  %v1051 = vsel %vm1041, %v1030, %v1031
  %v1052 = vsel %vm1041, %v1029, %v1030
  %v1053 = vsel %vm1041, %v1028, %v1029
  %v1054 = vsel %vm1041, %v1027, %v1028
  %v1055 = vsel %vm1041, %v1026, %v1027
  %v1056 = vsel %vm1041, %v1025, %v1026
  %v1057 = vsel %vm1041, %v1024, %v1025
  %v1058 = vsel %vm1041, %v1023, %v1024
  %v1059 = vsel %vm1041, %v1022, %v1023
  %v1060 = vsel %vm1041, %v1021, %v1022
  %v1061 = vsel %vm1041, %v1020, %v1021
  %v1062 = vsel %vm1041, %v1019, %v1020
  %v1063 = vsel %vm1041, %v1018, %v1019
  %v1064 = vsel %vm1041, %v1017, %v1018
  %v1065 = vsel %vm1041, %v1016, %v1017
  %v1066 = vsel %vm1041, %v1015, %v1016
  %v1067 = vsel %vm1041, %v1014, %v1015
  %v1068 = vsel %vm1041, %v1013, %v1014
  %v1069 = vsel %vm1041, %v1012, %v1013
  %v1070 = vsel %vm1041, %v1011, %v1012
  %v1071 = vsel %vm1041, %v1010, %v1011
  %v1072 = vsel %vm1041, %v1009, %v1010
  %v1073 = vsel %vm1041, %v1040, %v1009
  %v1074 = vsel %vm100, 1, 0
  %v1075 = vsel %vm101, 1, 0
  %v1076 = vsel %vm102, 1, 0
  %v1077 = vsel %vm103, 1, 0
  %v1078 = vsel %vm104, 1, 0
  %v1079 = vsel %vm105, 1, 0
  %v1080 = vsel %vm106, 1, 0
  %v1081 = vsel %vm107, 1, 0
  %v1082 = vsel %vm108, 1, 0
  %v1083 = vsel %vm109, 1, 0
  %v1084 = vsel %vm110, 1, 0
  %v1085 = vsel %vm111, 1, 0
  %v1086 = vsel %vm112, 1, 0
  %v1087 = vsel %vm113, 1, 0
  %v1088 = vsel %vm114, 1, 0
  %v1089 = vsel %vm115, 1, 0
  %v1090 = vsel %vm116, 1, 0
  %v1091 = vsel %vm117, 1, 0
  %v1092 = vsel %vm118, 1, 0
  %v1093 = vsel %vm119, 1, 0
  %v1094 = vsel %vm120, 1, 0
  %v1095 = vsel %vm121, 1, 0
  %v1096 = vsel %vm122, 1, 0
  %v1097 = vsel %vm123, 1, 0
  %v1098 = vsel %vm124, 1, 0
  %v1099 = vsel %vm125, 1, 0
  %v1100 = vsel %vm126, 1, 0
  %v1101 = vsel %vm127, 1, 0
  %v1102 = vsel %vm128, 1, 0
  %v1103 = vsel %vm129, 1, 0
  %v1104 = vsel %vm130, 1, 0
  %v1105 = vsel %vm131, 1, 0
  %vm1106 = vcmp.eq.s32.totalorder %v1074, 1
  %vm1107 = vcmp.eq.s32.totalorder %v1075, 1
  %vm1108 = vcmp.eq.s32.totalorder %v1076, 1
  %vm1109 = vcmp.eq.s32.totalorder %v1077, 1
  %vm1110 = vcmp.eq.s32.totalorder %v1078, 1
  %vm1111 = vcmp.eq.s32.totalorder %v1079, 1
  %vm1112 = vcmp.eq.s32.totalorder %v1080, 1
  %vm1113 = vcmp.eq.s32.totalorder %v1081, 1
  %vm1114 = vcmp.eq.s32.totalorder %v1082, 1
  %vm1115 = vcmp.eq.s32.totalorder %v1083, 1
  %vm1116 = vcmp.eq.s32.totalorder %v1084, 1
  %vm1117 = vcmp.eq.s32.totalorder %v1085, 1
  %vm1118 = vcmp.eq.s32.totalorder %v1086, 1
  %vm1119 = vcmp.eq.s32.totalorder %v1087, 1
  %vm1120 = vcmp.eq.s32.totalorder %v1088, 1
  %vm1121 = vcmp.eq.s32.totalorder %v1089, 1
  %vm1122 = vcmp.eq.s32.totalorder %v1090, 1
  %vm1123 = vcmp.eq.s32.totalorder %v1091, 1
  %vm1124 = vcmp.eq.s32.totalorder %v1092, 1
  %vm1125 = vcmp.eq.s32.totalorder %v1093, 1
  %vm1126 = vcmp.eq.s32.totalorder %v1094, 1
  %vm1127 = vcmp.eq.s32.totalorder %v1095, 1
  %vm1128 = vcmp.eq.s32.totalorder %v1096, 1
  %vm1129 = vcmp.eq.s32.totalorder %v1097, 1
  %vm1130 = vcmp.eq.s32.totalorder %v1098, 1
  %vm1131 = vcmp.eq.s32.totalorder %v1099, 1
  %vm1132 = vcmp.eq.s32.totalorder %v1100, 1
  %vm1133 = vcmp.eq.s32.totalorder %v1101, 1
  %vm1134 = vcmp.eq.s32.totalorder %v1102, 1
  %vm1135 = vcmp.eq.s32.totalorder %v1103, 1
  %vm1136 = vcmp.eq.s32.totalorder %v1104, 1
  %vm1137 = vcmp.eq.s32.totalorder %v1105, 1
  %v1138 = vsel %vm1106, %v1072, %v1008
  %v1139 = vsel %vm1107, %v1071, %v1007
  %v1140 = vsel %vm1108, %v1070, %v1006
  %v1141 = vsel %vm1109, %v1069, %v1005
  %v1142 = vsel %vm1110, %v1068, %v1004
  %v1143 = vsel %vm1111, %v1067, %v1003
  %v1144 = vsel %vm1112, %v1066, %v1002
  %v1145 = vsel %vm1113, %v1065, %v1001
  %v1146 = vsel %vm1114, %v1064, %v1000
  %v1147 = vsel %vm1115, %v1063, %v999
  %v1148 = vsel %vm1116, %v1062, %v998
  %v1149 = vsel %vm1117, %v1061, %v997
  %v1150 = vsel %vm1118, %v1060, %v996
  %v1151 = vsel %vm1119, %v1059, %v995
  %v1152 = vsel %vm1120, %v1058, %v994
  %v1153 = vsel %vm1121, %v1057, %v993
  %v1154 = vsel %vm1122, %v1056, %v992
  %v1155 = vsel %vm1123, %v1055, %v991
  %v1156 = vsel %vm1124, %v1054, %v990
  %v1157 = vsel %vm1125, %v1053, %v989
  %v1158 = vsel %vm1126, %v1052, %v988
  %v1159 = vsel %vm1127, %v1051, %v987
  %v1160 = vsel %vm1128, %v1050, %v986
  %v1161 = vsel %vm1129, %v1049, %v985
  %v1162 = vsel %vm1130, %v1048, %v984
  %v1163 = vsel %vm1131, %v1047, %v983
  %v1164 = vsel %vm1132, %v1046, %v982
  %v1165 = vsel %vm1133, %v1045, %v981
  %v1166 = vsel %vm1134, %v1044, %v980
  %v1167 = vsel %vm1135, %v1043, %v979
  %v1168 = vsel %vm1136, %v1042, %v978
  %v1169 = vsel %vm1137, %v1073, %v977
  %v1170 = vsel %vm132, 1, 0
  %v1171 = vsel %vm133, 1, 0
  %v1172 = vsel %vm134, 1, 0
  %v1173 = vsel %vm135, 1, 0
  %v1174 = vsel %vm136, 1, 0
  %v1175 = vsel %vm137, 1, 0
  %v1176 = vsel %vm138, 1, 0
  %v1177 = vsel %vm139, 1, 0
  %v1178 = vsel %vm140, 1, 0
  %v1179 = vsel %vm141, 1, 0
  %v1180 = vsel %vm142, 1, 0
  %v1181 = vsel %vm143, 1, 0
  %v1182 = vsel %vm144, 1, 0
  %v1183 = vsel %vm145, 1, 0
  %v1184 = vsel %vm146, 1, 0
  %v1185 = vsel %vm147, 1, 0
  %v1186 = vsel %vm148, 1, 0
  %v1187 = vsel %vm149, 1, 0
  %v1188 = vsel %vm150, 1, 0
  %v1189 = vsel %vm151, 1, 0
  %v1190 = vsel %vm152, 1, 0
  %v1191 = vsel %vm153, 1, 0
  %v1192 = vsel %vm154, 1, 0
  %v1193 = vsel %vm155, 1, 0
  %v1194 = vsel %vm156, 1, 0
  %v1195 = vsel %vm157, 1, 0
  %v1196 = vsel %vm158, 1, 0
  %v1197 = vsel %vm159, 1, 0
  %v1198 = vsel %vm160, 1, 0
  %v1199 = vsel %vm161, 1, 0
  %v1200 = vsel %vm162, 1, 0
  %v1201 = vsel %vm163, 1, 0
  %vm1202 = vcmp.eq.s32.totalorder %v1170, 1
  %vm1203 = vcmp.eq.s32.totalorder %v1171, 1
  %vm1204 = vcmp.eq.s32.totalorder %v1172, 1
  %vm1205 = vcmp.eq.s32.totalorder %v1173, 1
  %vm1206 = vcmp.eq.s32.totalorder %v1174, 1
  %vm1207 = vcmp.eq.s32.totalorder %v1175, 1
  %vm1208 = vcmp.eq.s32.totalorder %v1176, 1
  %vm1209 = vcmp.eq.s32.totalorder %v1177, 1
  %vm1210 = vcmp.eq.s32.totalorder %v1178, 1
  %vm1211 = vcmp.eq.s32.totalorder %v1179, 1
  %vm1212 = vcmp.eq.s32.totalorder %v1180, 1
  %vm1213 = vcmp.eq.s32.totalorder %v1181, 1
  %vm1214 = vcmp.eq.s32.totalorder %v1182, 1
  %vm1215 = vcmp.eq.s32.totalorder %v1183, 1
  %vm1216 = vcmp.eq.s32.totalorder %v1184, 1
  %vm1217 = vcmp.eq.s32.totalorder %v1185, 1
  %vm1218 = vcmp.eq.s32.totalorder %v1186, 1
  %vm1219 = vcmp.eq.s32.totalorder %v1187, 1
  %vm1220 = vcmp.eq.s32.totalorder %v1188, 1
  %vm1221 = vcmp.eq.s32.totalorder %v1189, 1
  %vm1222 = vcmp.eq.s32.totalorder %v1190, 1
  %vm1223 = vcmp.eq.s32.totalorder %v1191, 1
  %vm1224 = vcmp.eq.s32.totalorder %v1192, 1
  %vm1225 = vcmp.eq.s32.totalorder %v1193, 1
  %vm1226 = vcmp.eq.s32.totalorder %v1194, 1
  %vm1227 = vcmp.eq.s32.totalorder %v1195, 1
  %vm1228 = vcmp.eq.s32.totalorder %v1196, 1
  %vm1229 = vcmp.eq.s32.totalorder %v1197, 1
  %vm1230 = vcmp.eq.s32.totalorder %v1198, 1
  %vm1231 = vcmp.eq.s32.totalorder %v1199, 1
  %vm1232 = vcmp.eq.s32.totalorder %v1200, 1
  %vm1233 = vcmp.eq.s32.totalorder %v1201, 1
  %v1234 = vsel %vm1202, %v1008, %v1072
  %v1235 = vsel %vm1203, %v1007, %v1071
  %v1236 = vsel %vm1204, %v1006, %v1070
  %v1237 = vsel %vm1205, %v1005, %v1069
  %v1238 = vsel %vm1206, %v1004, %v1068
  %v1239 = vsel %vm1207, %v1003, %v1067
  %v1240 = vsel %vm1208, %v1002, %v1066
  %v1241 = vsel %vm1209, %v1001, %v1065
  %v1242 = vsel %vm1210, %v1000, %v1064
  %v1243 = vsel %vm1211, %v999, %v1063
  %v1244 = vsel %vm1212, %v998, %v1062
  %v1245 = vsel %vm1213, %v997, %v1061
  %v1246 = vsel %vm1214, %v996, %v1060
  %v1247 = vsel %vm1215, %v995, %v1059
  %v1248 = vsel %vm1216, %v994, %v1058
  %v1249 = vsel %vm1217, %v993, %v1057
  %v1250 = vsel %vm1218, %v992, %v1056
  %v1251 = vsel %vm1219, %v991, %v1055
  %v1252 = vsel %vm1220, %v990, %v1054
  %v1253 = vsel %vm1221, %v989, %v1053
  %v1254 = vsel %vm1222, %v988, %v1052
  %v1255 = vsel %vm1223, %v987, %v1051
  %v1256 = vsel %vm1224, %v986, %v1050
  %v1257 = vsel %vm1225, %v985, %v1049
  %v1258 = vsel %vm1226, %v984, %v1048
  %v1259 = vsel %vm1227, %v983, %v1047
  %v1260 = vsel %vm1228, %v982, %v1046
  %v1261 = vsel %vm1229, %v981, %v1045
  %v1262 = vsel %vm1230, %v980, %v1044
  %v1263 = vsel %vm1231, %v979, %v1043
  %v1264 = vsel %vm1232, %v978, %v1042
  %v1265 = vsel %vm1233, %v977, %v1073
  %v1266 = vpack.c.bf16 %v1139, %v1138
  %v1267 = vpack.c.bf16 %v1141, %v1140
  %v1268 = vpack.c.bf16 %v1143, %v1142
  %v1269 = vpack.c.bf16 %v1145, %v1144
  %v1270 = vpack.c.bf16 %v1147, %v1146
  %v1271 = vpack.c.bf16 %v1149, %v1148
  %v1272 = vpack.c.bf16 %v1151, %v1150
  %v1273 = vpack.c.bf16 %v1153, %v1152
  %v1274 = vpack.c.bf16 %v1155, %v1154
  %v1275 = vpack.c.bf16 %v1157, %v1156
  %v1276 = vpack.c.bf16 %v1159, %v1158
  %v1277 = vpack.c.bf16 %v1161, %v1160
  %v1278 = vpack.c.bf16 %v1163, %v1162
  %v1279 = vpack.c.bf16 %v1165, %v1164
  %v1280 = vpack.c.bf16 %v1167, %v1166
  %v1281 = vpack.c.bf16 %v1169, %v1168
  %v1282 = vpack.c.bf16 %v913, %v912
  %v1283 = vpack.c.bf16 %v915, %v914
  %v1284 = vpack.c.bf16 %v917, %v916
  %v1285 = vpack.c.bf16 %v919, %v918
  %v1286 = vpack.c.bf16 %v921, %v920
  %v1287 = vpack.c.bf16 %v923, %v922
  %v1288 = vpack.c.bf16 %v925, %v924
  %v1289 = vpack.c.bf16 %v927, %v926
  %v1290 = vpack.c.bf16 %v929, %v928
  %v1291 = vpack.c.bf16 %v931, %v930
  %v1292 = vpack.c.bf16 %v933, %v932
  %v1293 = vpack.c.bf16 %v935, %v934
  %v1294 = vpack.c.bf16 %v937, %v936
  %v1295 = vpack.c.bf16 %v939, %v938
  %v1296 = vpack.c.bf16 %v941, %v940
  %v1297 = vpack.c.bf16 %v943, %v942
  %v1298 = vpack.c.bf16 %v1235, %v1234
  %v1299 = vpack.c.bf16 %v1237, %v1236
  %v1300 = vpack.c.bf16 %v1239, %v1238
  %v1301 = vpack.c.bf16 %v1241, %v1240
  %v1302 = vpack.c.bf16 %v1243, %v1242
  %v1303 = vpack.c.bf16 %v1245, %v1244
  %v1304 = vpack.c.bf16 %v1247, %v1246
  %v1305 = vpack.c.bf16 %v1249, %v1248
  %v1306 = vpack.c.bf16 %v1251, %v1250
  %v1307 = vpack.c.bf16 %v1253, %v1252
  %v1308 = vpack.c.bf16 %v1255, %v1254
  %v1309 = vpack.c.bf16 %v1257, %v1256
  %v1310 = vpack.c.bf16 %v1259, %v1258
  %v1311 = vpack.c.bf16 %v1261, %v1260
  %v1312 = vpack.c.bf16 %v1263, %v1262
  %v1313 = vpack.c.bf16 %v1265, %v1264
  %v1314 = vld [vmem:[%s2] sm:$0xf]
  %v1315 = vld [vmem:[%s2 + $0x4] sm:$0xf]
  %v1316 = vld [vmem:[%s2 + $0x8] sm:$0xf]
  %v1317 = vld [vmem:[%s2 + $0xc] sm:$0xf]
  %v1318 = vld [vmem:[%s2 + $0x10] sm:$0xf]
  %v1319 = vld [vmem:[%s2 + $0x14] sm:$0xf]
  %v1320 = vld [vmem:[%s2 + $0x18] sm:$0xf]
  %v1321 = vld [vmem:[%s2 + $0x1c] sm:$0xf]
  %s1322 = scalar_lea.vmem %s2, 32
  %v1323 = vld [vmem:[%s1322] sm:$0xf]
  %v1324 = vld [vmem:[%s1322 + $0x4] sm:$0xf]
  %v1325 = vld [vmem:[%s1322 + $0x8] sm:$0xf]
  %v1326 = vld [vmem:[%s1322 + $0xc] sm:$0xf]
  %v1327 = vld [vmem:[%s1322 + $0x10] sm:$0xf]
  %v1328 = vld [vmem:[%s1322 + $0x14] sm:$0xf]
  %v1329 = vld [vmem:[%s1322 + $0x18] sm:$0xf]
  %v1330 = vld [vmem:[%s1322 + $0x1c] sm:$0xf]
  %v1339 = vunpack.c.l.b16 %v1323
  %v1340 = vunpack.c.l.b16 %v1324
  %v1341 = vunpack.c.l.b16 %v1325
  %v1342 = vunpack.c.l.b16 %v1326
  %v1343 = vunpack.c.l.b16 %v1327
  %v1344 = vunpack.c.l.b16 %v1328
  %v1345 = vunpack.c.l.b16 %v1329
  %v1346 = vunpack.c.l.b16 %v1330
  %v1347 = vpack.c.b16 %v1340, %v1339
  %v1348 = vpack.c.b16 %v1342, %v1341
  %v1349 = vpack.c.b16 %v1344, %v1343
  %v1350 = vpack.c.b16 %v1346, %v1345
  %v1356 = vsel %vm571, %v1282, 0
  %v1359 = vsel %vm571, %v1283, 0
  %v1362 = vsel %vm571, %v1284, 0
  %v1365 = vsel %vm571, %v1285, 0
  %v1368 = vsel %vm571, %v1286, 0
  %v1371 = vsel %vm571, %v1287, 0
  %v1374 = vsel %vm571, %v1288, 0
  %v1377 = vsel %vm571, %v1289, 0
  %v1380 = vsel %vm571, %v1290, 0
  %v1383 = vsel %vm571, %v1291, 0
  %v1386 = vsel %vm571, %v1292, 0
  %v1389 = vsel %vm571, %v1293, 0
  %v1392 = vsel %vm571, %v1294, 0
  %v1395 = vsel %vm571, %v1295, 0
  %v1398 = vsel %vm571, %v1296, 0
  %v1401 = vsel %vm571, %v1297, 0
  %1403 = vmatprep.subr.bf16.mxu0 0
  %1404 = vmatpush1.bf16.msra.mxu0 0
  %1405 = vmatprep.subr.bf16.mxu0 0
  %1406 = vmatpush1.bf16.msra.mxu0 0
  %1407 = vmatprep.subr.bf16.mxu0 0
  %1408 = vmatpush1.bf16.msra.mxu0 0
  %1409 = vmatprep.subr.bf16.mxu0 0
  %1410 = vmatpush1.bf16.msra.mxu0 0
  %1411 = vmatprep.subr.bf16.mxu0 0
  %1412 = vmatpush1.bf16.msra.mxu0 %v1350
  %1413 = vmatprep.subr.bf16.mxu0 0
  %1414 = vmatpush1.bf16.msra.mxu0 %v1349
  %1415 = vmatprep.subr.bf16.mxu0 0
  %1416 = vmatpush1.bf16.msra.mxu0 %v1348
  %1417 = vmatprep.subr.bf16.mxu0 0
  %1418 = vmatpush1.bf16.msra.mxu0 %v1347
  %1419 = vmatprep.subr.bf16.mxu0 0
  %1420 = vmatpush2.bf16.msra.mxu0 0
  %1421 = vmatprep.subr.bf16.mxu0 0
  %1422 = vmatpush2.bf16.msra.mxu0 0
  %1423 = vmatprep.subr.bf16.mxu0 0
  %1424 = vmatpush2.bf16.msra.mxu0 0
  %1425 = vmatprep.subr.bf16.mxu0 0
  %1426 = vmatpush2.bf16.msra.mxu0 0
  %1427 = vmatprep.subr.bf16.mxu0 0
  %1428 = vmatpush2.bf16.msra.mxu0 0
  %1429 = vmatprep.subr.bf16.mxu0 0
  %1430 = vmatpush2.bf16.msra.mxu0 0
  %1431 = vmatprep.subr.bf16.mxu0 0
  %1432 = vmatpush2.bf16.msra.mxu0 0
  %1433 = vmatprep.subr.bf16.mxu0 0
  %1434 = vmatpush2.bf16.msra.mxu0 0
  %1435 = vmatprep.mubr.bf16.mxu0 0
  %1436 = vmatmul.mubr.bf16.gmra.mxu0 %v1356
  %v1437 = vpop.f32.mrf.mxu0
  %v1438 = vadd.f32 0.0, %v1437
  %v1439 = vpop.f32.mrf.mxu0
  %v1440 = vpop.f32.mrf.mxu0
  %v1441 = vadd.f32 0.0, %v1440
  %v1442 = vpop.f32.mrf.mxu0
  %1443 = vmatprep.mubr.bf16.mxu0 0
  %1444 = vmatmul.mubr.bf16.gmra.mxu0 %v1359
  %v1445 = vpop.f32.mrf.mxu0
  %v1446 = vadd.f32 0.0, %v1445
  %v1447 = vpop.f32.mrf.mxu0
  %v1448 = vpop.f32.mrf.mxu0
  %v1449 = vadd.f32 0.0, %v1448
  %v1450 = vpop.f32.mrf.mxu0
  %1451 = vmatprep.mubr.bf16.mxu0 0
  %1452 = vmatmul.mubr.bf16.gmra.mxu0 %v1362
  %v1453 = vpop.f32.mrf.mxu0
  %v1454 = vadd.f32 0.0, %v1453
  %v1455 = vpop.f32.mrf.mxu0
  %v1456 = vpop.f32.mrf.mxu0
  %v1457 = vadd.f32 0.0, %v1456
  %v1458 = vpop.f32.mrf.mxu0
  %1459 = vmatprep.mubr.bf16.mxu0 0
  %1460 = vmatmul.mubr.bf16.gmra.mxu0 %v1365
  %v1461 = vpop.f32.mrf.mxu0
  %v1462 = vadd.f32 0.0, %v1461
  %v1463 = vpop.f32.mrf.mxu0
  %v1464 = vpop.f32.mrf.mxu0
  %v1465 = vadd.f32 0.0, %v1464
  %v1466 = vpop.f32.mrf.mxu0
  %1467 = vmatprep.mubr.bf16.mxu0 0
  %1468 = vmatmul.mubr.bf16.gmra.mxu0 %v1368
  %v1469 = vpop.f32.mrf.mxu0
  %v1470 = vadd.f32 0.0, %v1469
  %v1471 = vpop.f32.mrf.mxu0
  %v1472 = vpop.f32.mrf.mxu0
  %v1473 = vadd.f32 0.0, %v1472
  %v1474 = vpop.f32.mrf.mxu0
  %1475 = vmatprep.mubr.bf16.mxu0 0
  %1476 = vmatmul.mubr.bf16.gmra.mxu0 %v1371
  %v1477 = vpop.f32.mrf.mxu0
  %v1478 = vadd.f32 0.0, %v1477
  %v1479 = vpop.f32.mrf.mxu0
  %v1480 = vpop.f32.mrf.mxu0
  %v1481 = vadd.f32 0.0, %v1480
  %v1482 = vpop.f32.mrf.mxu0
  %1483 = vmatprep.mubr.bf16.mxu0 0
  %1484 = vmatmul.mubr.bf16.gmra.mxu0 %v1374
  %v1485 = vpop.f32.mrf.mxu0
  %v1486 = vadd.f32 0.0, %v1485
  %v1487 = vpop.f32.mrf.mxu0
  %v1488 = vpop.f32.mrf.mxu0
  %v1489 = vadd.f32 0.0, %v1488
  %v1490 = vpop.f32.mrf.mxu0
  %1491 = vmatprep.mubr.bf16.mxu0 0
  %1492 = vmatmul.mubr.bf16.gmra.mxu0 %v1377
  %v1493 = vpop.f32.mrf.mxu0
  %v1494 = vadd.f32 0.0, %v1493
  %v1495 = vpop.f32.mrf.mxu0
  %v1496 = vpop.f32.mrf.mxu0
  %v1497 = vadd.f32 0.0, %v1496
  %v1498 = vpop.f32.mrf.mxu0
  %1499 = vmatprep.mubr.bf16.mxu0 0
  %1500 = vmatmul.mubr.bf16.gmra.mxu0 %v1380
  %v1501 = vpop.f32.mrf.mxu0
  %v1502 = vadd.f32 0.0, %v1501
  %v1503 = vpop.f32.mrf.mxu0
  %v1504 = vpop.f32.mrf.mxu0
  %v1505 = vadd.f32 0.0, %v1504
  %v1506 = vpop.f32.mrf.mxu0
  %1507 = vmatprep.mubr.bf16.mxu0 0
  %1508 = vmatmul.mubr.bf16.gmra.mxu0 %v1383
  %v1509 = vpop.f32.mrf.mxu0
  %v1510 = vadd.f32 0.0, %v1509
  %v1511 = vpop.f32.mrf.mxu0
  %v1512 = vpop.f32.mrf.mxu0
  %v1513 = vadd.f32 0.0, %v1512
  %v1514 = vpop.f32.mrf.mxu0
  %1515 = vmatprep.mubr.bf16.mxu0 0
  %1516 = vmatmul.mubr.bf16.gmra.mxu0 %v1386
  %v1517 = vpop.f32.mrf.mxu0
  %v1518 = vadd.f32 0.0, %v1517
  %v1519 = vpop.f32.mrf.mxu0
  %v1520 = vpop.f32.mrf.mxu0
  %v1521 = vadd.f32 0.0, %v1520
  %v1522 = vpop.f32.mrf.mxu0
  %1523 = vmatprep.mubr.bf16.mxu0 0
  %1524 = vmatmul.mubr.bf16.gmra.mxu0 %v1389
  %v1525 = vpop.f32.mrf.mxu0
  %v1526 = vadd.f32 0.0, %v1525
  %v1527 = vpop.f32.mrf.mxu0
  %v1528 = vpop.f32.mrf.mxu0
  %v1529 = vadd.f32 0.0, %v1528
  %v1530 = vpop.f32.mrf.mxu0
  %1531 = vmatprep.mubr.bf16.mxu0 0
  %1532 = vmatmul.mubr.bf16.gmra.mxu0 %v1392
  %v1533 = vpop.f32.mrf.mxu0
  %v1534 = vadd.f32 0.0, %v1533
  %v1535 = vpop.f32.mrf.mxu0
  %v1536 = vpop.f32.mrf.mxu0
  %v1537 = vadd.f32 0.0, %v1536
  %v1538 = vpop.f32.mrf.mxu0
  %1539 = vmatprep.mubr.bf16.mxu0 0
  %1540 = vmatmul.mubr.bf16.gmra.mxu0 %v1395
  %v1541 = vpop.f32.mrf.mxu0
  %v1542 = vadd.f32 0.0, %v1541
  %v1543 = vpop.f32.mrf.mxu0
  %v1544 = vpop.f32.mrf.mxu0
  %v1545 = vadd.f32 0.0, %v1544
  %v1546 = vpop.f32.mrf.mxu0
  %1547 = vmatprep.mubr.bf16.mxu0 0
  %1548 = vmatmul.mubr.bf16.gmra.mxu0 %v1398
  %v1549 = vpop.f32.mrf.mxu0
  %v1550 = vadd.f32 0.0, %v1549
  %v1551 = vpop.f32.mrf.mxu0
  %v1552 = vpop.f32.mrf.mxu0
  %v1553 = vadd.f32 0.0, %v1552
  %v1554 = vpop.f32.mrf.mxu0
  %1555 = vmatprep.mubr.bf16.mxu0 0
  %1556 = vmatmul.mubr.bf16.gmra.mxu0 %v1401
  %v1557 = vpop.f32.mrf.mxu0
  %v1558 = vadd.f32 0.0, %v1557
  %v1559 = vpop.f32.mrf.mxu0
  %v1560 = vpop.f32.mrf.mxu0
  %v1561 = vadd.f32 0.0, %v1560
  %v1562 = vpop.f32.mrf.mxu0
  %1563 = vdwg.mxu0
  %v1572 = vunpack.c.l.b16 %v1314
  %v1573 = vunpack.c.l.b16 %v1315
  %v1574 = vunpack.c.l.b16 %v1316
  %v1575 = vunpack.c.l.b16 %v1317
  %v1576 = vunpack.c.l.b16 %v1318
  %v1577 = vunpack.c.l.b16 %v1319
  %v1578 = vunpack.c.l.b16 %v1320
  %v1579 = vunpack.c.l.b16 %v1321
  %v1580 = vpack.c.b16 %v1573, %v1572
  %v1581 = vpack.c.b16 %v1575, %v1574
  %v1582 = vpack.c.b16 %v1577, %v1576
  %v1583 = vpack.c.b16 %v1579, %v1578
  %v1589 = vsel %vm571, %v1266, 0
  %v1592 = vsel %vm571, %v1267, 0
  %v1595 = vsel %vm571, %v1268, 0
  %v1598 = vsel %vm571, %v1269, 0
  %v1601 = vsel %vm571, %v1270, 0
  %v1604 = vsel %vm571, %v1271, 0
  %v1607 = vsel %vm571, %v1272, 0
  %v1610 = vsel %vm571, %v1273, 0
  %v1613 = vsel %vm571, %v1274, 0
  %v1616 = vsel %vm571, %v1275, 0
  %v1619 = vsel %vm571, %v1276, 0
  %v1622 = vsel %vm571, %v1277, 0
  %v1625 = vsel %vm571, %v1278, 0
  %v1628 = vsel %vm571, %v1279, 0
  %v1631 = vsel %vm571, %v1280, 0
  %v1634 = vsel %vm571, %v1281, 0
  %1636 = vmatprep.subr.bf16.mxu0 0
  %1637 = vmatpush1.bf16.msra.mxu0 0
  %1638 = vmatprep.subr.bf16.mxu0 0
  %1639 = vmatpush1.bf16.msra.mxu0 0
  %1640 = vmatprep.subr.bf16.mxu0 0
  %1641 = vmatpush1.bf16.msra.mxu0 0
  %1642 = vmatprep.subr.bf16.mxu0 0
  %1643 = vmatpush1.bf16.msra.mxu0 0
  %1644 = vmatprep.subr.bf16.mxu0 0
  %1645 = vmatpush1.bf16.msra.mxu0 %v1583
  %1646 = vmatprep.subr.bf16.mxu0 0
  %1647 = vmatpush1.bf16.msra.mxu0 %v1582
  %1648 = vmatprep.subr.bf16.mxu0 0
  %1649 = vmatpush1.bf16.msra.mxu0 %v1581
  %1650 = vmatprep.subr.bf16.mxu0 0
  %1651 = vmatpush1.bf16.msra.mxu0 %v1580
  %1652 = vmatprep.subr.bf16.mxu0 0
  %1653 = vmatpush2.bf16.msra.mxu0 0
  %1654 = vmatprep.subr.bf16.mxu0 0
  %1655 = vmatpush2.bf16.msra.mxu0 0
  %1656 = vmatprep.subr.bf16.mxu0 0
  %1657 = vmatpush2.bf16.msra.mxu0 0
  %1658 = vmatprep.subr.bf16.mxu0 0
  %1659 = vmatpush2.bf16.msra.mxu0 0
  %1660 = vmatprep.subr.bf16.mxu0 0
  %1661 = vmatpush2.bf16.msra.mxu0 0
  %1662 = vmatprep.subr.bf16.mxu0 0
  %1663 = vmatpush2.bf16.msra.mxu0 0
  %1664 = vmatprep.subr.bf16.mxu0 0
  %1665 = vmatpush2.bf16.msra.mxu0 0
  %1666 = vmatprep.subr.bf16.mxu0 0
  %1667 = vmatpush2.bf16.msra.mxu0 0
  %1668 = vmatprep.mubr.bf16.mxu0 0
  %1669 = vmatmul.mubr.bf16.gmra.mxu0 %v1589
  %v1670 = vpop.f32.mrf.mxu0
  %v1671 = vadd.f32 %v1438, %v1670
  %v1672 = vpop.f32.mrf.mxu0
  %v1673 = vpop.f32.mrf.mxu0
  %v1674 = vadd.f32 %v1441, %v1673
  %v1675 = vpop.f32.mrf.mxu0
  %1676 = vmatprep.mubr.bf16.mxu0 0
  %1677 = vmatmul.mubr.bf16.gmra.mxu0 %v1592
  %v1678 = vpop.f32.mrf.mxu0
  %v1679 = vadd.f32 %v1446, %v1678
  %v1680 = vpop.f32.mrf.mxu0
  %v1681 = vpop.f32.mrf.mxu0
  %v1682 = vadd.f32 %v1449, %v1681
  %v1683 = vpop.f32.mrf.mxu0
  %1684 = vmatprep.mubr.bf16.mxu0 0
  %1685 = vmatmul.mubr.bf16.gmra.mxu0 %v1595
  %v1686 = vpop.f32.mrf.mxu0
  %v1687 = vadd.f32 %v1454, %v1686
  %v1688 = vpop.f32.mrf.mxu0
  %v1689 = vpop.f32.mrf.mxu0
  %v1690 = vadd.f32 %v1457, %v1689
  %v1691 = vpop.f32.mrf.mxu0
  %1692 = vmatprep.mubr.bf16.mxu0 0
  %1693 = vmatmul.mubr.bf16.gmra.mxu0 %v1598
  %v1694 = vpop.f32.mrf.mxu0
  %v1695 = vadd.f32 %v1462, %v1694
  %v1696 = vpop.f32.mrf.mxu0
  %v1697 = vpop.f32.mrf.mxu0
  %v1698 = vadd.f32 %v1465, %v1697
  %v1699 = vpop.f32.mrf.mxu0
  %1700 = vmatprep.mubr.bf16.mxu0 0
  %1701 = vmatmul.mubr.bf16.gmra.mxu0 %v1601
  %v1702 = vpop.f32.mrf.mxu0
  %v1703 = vadd.f32 %v1470, %v1702
  %v1704 = vpop.f32.mrf.mxu0
  %v1705 = vpop.f32.mrf.mxu0
  %v1706 = vadd.f32 %v1473, %v1705
  %v1707 = vpop.f32.mrf.mxu0
  %1708 = vmatprep.mubr.bf16.mxu0 0
  %1709 = vmatmul.mubr.bf16.gmra.mxu0 %v1604
  %v1710 = vpop.f32.mrf.mxu0
  %v1711 = vadd.f32 %v1478, %v1710
  %v1712 = vpop.f32.mrf.mxu0
  %v1713 = vpop.f32.mrf.mxu0
  %v1714 = vadd.f32 %v1481, %v1713
  %v1715 = vpop.f32.mrf.mxu0
  %1716 = vmatprep.mubr.bf16.mxu0 0
  %1717 = vmatmul.mubr.bf16.gmra.mxu0 %v1607
  %v1718 = vpop.f32.mrf.mxu0
  %v1719 = vadd.f32 %v1486, %v1718
  %v1720 = vpop.f32.mrf.mxu0
  %v1721 = vpop.f32.mrf.mxu0
  %v1722 = vadd.f32 %v1489, %v1721
  %v1723 = vpop.f32.mrf.mxu0
  %1724 = vmatprep.mubr.bf16.mxu0 0
  %1725 = vmatmul.mubr.bf16.gmra.mxu0 %v1610
  %v1726 = vpop.f32.mrf.mxu0
  %v1727 = vadd.f32 %v1494, %v1726
  %v1728 = vpop.f32.mrf.mxu0
  %v1729 = vpop.f32.mrf.mxu0
  %v1730 = vadd.f32 %v1497, %v1729
  %v1731 = vpop.f32.mrf.mxu0
  %1732 = vmatprep.mubr.bf16.mxu0 0
  %1733 = vmatmul.mubr.bf16.gmra.mxu0 %v1613
  %v1734 = vpop.f32.mrf.mxu0
  %v1735 = vadd.f32 %v1502, %v1734
  %v1736 = vpop.f32.mrf.mxu0
  %v1737 = vpop.f32.mrf.mxu0
  %v1738 = vadd.f32 %v1505, %v1737
  %v1739 = vpop.f32.mrf.mxu0
  %1740 = vmatprep.mubr.bf16.mxu0 0
  %1741 = vmatmul.mubr.bf16.gmra.mxu0 %v1616
  %v1742 = vpop.f32.mrf.mxu0
  %v1743 = vadd.f32 %v1510, %v1742
  %v1744 = vpop.f32.mrf.mxu0
  %v1745 = vpop.f32.mrf.mxu0
  %v1746 = vadd.f32 %v1513, %v1745
  %v1747 = vpop.f32.mrf.mxu0
  %1748 = vmatprep.mubr.bf16.mxu0 0
  %1749 = vmatmul.mubr.bf16.gmra.mxu0 %v1619
  %v1750 = vpop.f32.mrf.mxu0
  %v1751 = vadd.f32 %v1518, %v1750
  %v1752 = vpop.f32.mrf.mxu0
  %v1753 = vpop.f32.mrf.mxu0
  %v1754 = vadd.f32 %v1521, %v1753
  %v1755 = vpop.f32.mrf.mxu0
  %1756 = vmatprep.mubr.bf16.mxu0 0
  %1757 = vmatmul.mubr.bf16.gmra.mxu0 %v1622
  %v1758 = vpop.f32.mrf.mxu0
  %v1759 = vadd.f32 %v1526, %v1758
  %v1760 = vpop.f32.mrf.mxu0
  %v1761 = vpop.f32.mrf.mxu0
  %v1762 = vadd.f32 %v1529, %v1761
  %v1763 = vpop.f32.mrf.mxu0
  %1764 = vmatprep.mubr.bf16.mxu0 0
  %1765 = vmatmul.mubr.bf16.gmra.mxu0 %v1625
  %v1766 = vpop.f32.mrf.mxu0
  %v1767 = vadd.f32 %v1534, %v1766
  %v1768 = vpop.f32.mrf.mxu0
  %v1769 = vpop.f32.mrf.mxu0
  %v1770 = vadd.f32 %v1537, %v1769
  %v1771 = vpop.f32.mrf.mxu0
  %1772 = vmatprep.mubr.bf16.mxu0 0
  %1773 = vmatmul.mubr.bf16.gmra.mxu0 %v1628
  %v1774 = vpop.f32.mrf.mxu0
  %v1775 = vadd.f32 %v1542, %v1774
  %v1776 = vpop.f32.mrf.mxu0
  %v1777 = vpop.f32.mrf.mxu0
  %v1778 = vadd.f32 %v1545, %v1777
  %v1779 = vpop.f32.mrf.mxu0
  %1780 = vmatprep.mubr.bf16.mxu0 0
  %1781 = vmatmul.mubr.bf16.gmra.mxu0 %v1631
  %v1782 = vpop.f32.mrf.mxu0
  %v1783 = vadd.f32 %v1550, %v1782
  %v1784 = vpop.f32.mrf.mxu0
  %v1785 = vpop.f32.mrf.mxu0
  %v1786 = vadd.f32 %v1553, %v1785
  %v1787 = vpop.f32.mrf.mxu0
  %1788 = vmatprep.mubr.bf16.mxu0 0
  %1789 = vmatmul.mubr.bf16.gmra.mxu0 %v1634
  %v1790 = vpop.f32.mrf.mxu0
  %v1791 = vadd.f32 %v1558, %v1790
  %v1792 = vpop.f32.mrf.mxu0
  %v1793 = vpop.f32.mrf.mxu0
  %v1794 = vadd.f32 %v1561, %v1793
  %v1795 = vpop.f32.mrf.mxu0
  %1796 = vdwg.mxu0
  %s1797 = scalar_lea.vmem %s2, 64
  %v1798 = vld [vmem:[%s1797] sm:$0xf]
  %v1799 = vld [vmem:[%s1797 + $0x4] sm:$0xf]
  %v1800 = vld [vmem:[%s1797 + $0x8] sm:$0xf]
  %v1801 = vld [vmem:[%s1797 + $0xc] sm:$0xf]
  %v1802 = vld [vmem:[%s1797 + $0x10] sm:$0xf]
  %v1803 = vld [vmem:[%s1797 + $0x14] sm:$0xf]
  %v1804 = vld [vmem:[%s1797 + $0x18] sm:$0xf]
  %v1805 = vld [vmem:[%s1797 + $0x1c] sm:$0xf]
  %v1814 = vunpack.c.l.b16 %v1798
  %v1815 = vunpack.c.l.b16 %v1799
  %v1816 = vunpack.c.l.b16 %v1800
  %v1817 = vunpack.c.l.b16 %v1801
  %v1818 = vunpack.c.l.b16 %v1802
  %v1819 = vunpack.c.l.b16 %v1803
  %v1820 = vunpack.c.l.b16 %v1804
  %v1821 = vunpack.c.l.b16 %v1805
  %v1822 = vpack.c.b16 %v1815, %v1814
  %v1823 = vpack.c.b16 %v1817, %v1816
  %v1824 = vpack.c.b16 %v1819, %v1818
  %v1825 = vpack.c.b16 %v1821, %v1820
  %v1831 = vsel %vm571, %v1298, 0
  %v1834 = vsel %vm571, %v1299, 0
  %v1837 = vsel %vm571, %v1300, 0
  %v1840 = vsel %vm571, %v1301, 0
  %v1843 = vsel %vm571, %v1302, 0
  %v1846 = vsel %vm571, %v1303, 0
  %v1849 = vsel %vm571, %v1304, 0
  %v1852 = vsel %vm571, %v1305, 0
  %v1855 = vsel %vm571, %v1306, 0
  %v1858 = vsel %vm571, %v1307, 0
  %v1861 = vsel %vm571, %v1308, 0
  %v1864 = vsel %vm571, %v1309, 0
  %v1867 = vsel %vm571, %v1310, 0
  %v1870 = vsel %vm571, %v1311, 0
  %v1873 = vsel %vm571, %v1312, 0
  %v1876 = vsel %vm571, %v1313, 0
  %1878 = vmatprep.subr.bf16.mxu0 0
  %1879 = vmatpush1.bf16.msra.mxu0 0
  %1880 = vmatprep.subr.bf16.mxu0 0
  %1881 = vmatpush1.bf16.msra.mxu0 0
  %1882 = vmatprep.subr.bf16.mxu0 0
  %1883 = vmatpush1.bf16.msra.mxu0 0
  %1884 = vmatprep.subr.bf16.mxu0 0
  %1885 = vmatpush1.bf16.msra.mxu0 0
  %1886 = vmatprep.subr.bf16.mxu0 0
  %1887 = vmatpush1.bf16.msra.mxu0 %v1825
  %1888 = vmatprep.subr.bf16.mxu0 0
  %1889 = vmatpush1.bf16.msra.mxu0 %v1824
  %1890 = vmatprep.subr.bf16.mxu0 0
  %1891 = vmatpush1.bf16.msra.mxu0 %v1823
  %1892 = vmatprep.subr.bf16.mxu0 0
  %1893 = vmatpush1.bf16.msra.mxu0 %v1822
  %1894 = vmatprep.subr.bf16.mxu0 0
  %1895 = vmatpush2.bf16.msra.mxu0 0
  %1896 = vmatprep.subr.bf16.mxu0 0
  %1897 = vmatpush2.bf16.msra.mxu0 0
  %1898 = vmatprep.subr.bf16.mxu0 0
  %1899 = vmatpush2.bf16.msra.mxu0 0
  %1900 = vmatprep.subr.bf16.mxu0 0
  %1901 = vmatpush2.bf16.msra.mxu0 0
  %1902 = vmatprep.subr.bf16.mxu0 0
  %1903 = vmatpush2.bf16.msra.mxu0 0
  %1904 = vmatprep.subr.bf16.mxu0 0
  %1905 = vmatpush2.bf16.msra.mxu0 0
  %1906 = vmatprep.subr.bf16.mxu0 0
  %1907 = vmatpush2.bf16.msra.mxu0 0
  %1908 = vmatprep.subr.bf16.mxu0 0
  %1909 = vmatpush2.bf16.msra.mxu0 0
  %1910 = vmatprep.mubr.bf16.mxu0 0
  %1911 = vmatmul.mubr.bf16.gmra.mxu0 %v1831
  %v1912 = vpop.f32.mrf.mxu0
  %v1913 = vadd.f32 0.0, %v1912
  %v1914 = vpop.f32.mrf.mxu0
  %v1915 = vpop.f32.mrf.mxu0
  %v1916 = vadd.f32 0.0, %v1915
  %v1917 = vpop.f32.mrf.mxu0
  %1918 = vmatprep.mubr.bf16.mxu0 0
  %1919 = vmatmul.mubr.bf16.gmra.mxu0 %v1834
  %v1920 = vpop.f32.mrf.mxu0
  %v1921 = vadd.f32 0.0, %v1920
  %v1922 = vpop.f32.mrf.mxu0
  %v1923 = vpop.f32.mrf.mxu0
  %v1924 = vadd.f32 0.0, %v1923
  %v1925 = vpop.f32.mrf.mxu0
  %1926 = vmatprep.mubr.bf16.mxu0 0
  %1927 = vmatmul.mubr.bf16.gmra.mxu0 %v1837
  %v1928 = vpop.f32.mrf.mxu0
  %v1929 = vadd.f32 0.0, %v1928
  %v1930 = vpop.f32.mrf.mxu0
  %v1931 = vpop.f32.mrf.mxu0
  %v1932 = vadd.f32 0.0, %v1931
  %v1933 = vpop.f32.mrf.mxu0
  %1934 = vmatprep.mubr.bf16.mxu0 0
  %1935 = vmatmul.mubr.bf16.gmra.mxu0 %v1840
  %v1936 = vpop.f32.mrf.mxu0
  %v1937 = vadd.f32 0.0, %v1936
  %v1938 = vpop.f32.mrf.mxu0
  %v1939 = vpop.f32.mrf.mxu0
  %v1940 = vadd.f32 0.0, %v1939
  %v1941 = vpop.f32.mrf.mxu0
  %1942 = vmatprep.mubr.bf16.mxu0 0
  %1943 = vmatmul.mubr.bf16.gmra.mxu0 %v1843
  %v1944 = vpop.f32.mrf.mxu0
  %v1945 = vadd.f32 0.0, %v1944
  %v1946 = vpop.f32.mrf.mxu0
  %v1947 = vpop.f32.mrf.mxu0
  %v1948 = vadd.f32 0.0, %v1947
  %v1949 = vpop.f32.mrf.mxu0
  %1950 = vmatprep.mubr.bf16.mxu0 0
  %1951 = vmatmul.mubr.bf16.gmra.mxu0 %v1846
  %v1952 = vpop.f32.mrf.mxu0
  %v1953 = vadd.f32 0.0, %v1952
  %v1954 = vpop.f32.mrf.mxu0
  %v1955 = vpop.f32.mrf.mxu0
  %v1956 = vadd.f32 0.0, %v1955
  %v1957 = vpop.f32.mrf.mxu0
  %1958 = vmatprep.mubr.bf16.mxu0 0
  %1959 = vmatmul.mubr.bf16.gmra.mxu0 %v1849
  %v1960 = vpop.f32.mrf.mxu0
  %v1961 = vadd.f32 0.0, %v1960
  %v1962 = vpop.f32.mrf.mxu0
  %v1963 = vpop.f32.mrf.mxu0
  %v1964 = vadd.f32 0.0, %v1963
  %v1965 = vpop.f32.mrf.mxu0
  %1966 = vmatprep.mubr.bf16.mxu0 0
  %1967 = vmatmul.mubr.bf16.gmra.mxu0 %v1852
  %v1968 = vpop.f32.mrf.mxu0
  %v1969 = vadd.f32 0.0, %v1968
  %v1970 = vpop.f32.mrf.mxu0
  %v1971 = vpop.f32.mrf.mxu0
  %v1972 = vadd.f32 0.0, %v1971
  %v1973 = vpop.f32.mrf.mxu0
  %1974 = vmatprep.mubr.bf16.mxu0 0
  %1975 = vmatmul.mubr.bf16.gmra.mxu0 %v1855
  %v1976 = vpop.f32.mrf.mxu0
  %v1977 = vadd.f32 0.0, %v1976
  %v1978 = vpop.f32.mrf.mxu0
  %v1979 = vpop.f32.mrf.mxu0
  %v1980 = vadd.f32 0.0, %v1979
  %v1981 = vpop.f32.mrf.mxu0
  %1982 = vmatprep.mubr.bf16.mxu0 0
  %1983 = vmatmul.mubr.bf16.gmra.mxu0 %v1858
  %v1984 = vpop.f32.mrf.mxu0
  %v1985 = vadd.f32 0.0, %v1984
  %v1986 = vpop.f32.mrf.mxu0
  %v1987 = vpop.f32.mrf.mxu0
  %v1988 = vadd.f32 0.0, %v1987
  %v1989 = vpop.f32.mrf.mxu0
  %1990 = vmatprep.mubr.bf16.mxu0 0
  %1991 = vmatmul.mubr.bf16.gmra.mxu0 %v1861
  %v1992 = vpop.f32.mrf.mxu0
  %v1993 = vadd.f32 0.0, %v1992
  %v1994 = vpop.f32.mrf.mxu0
  %v1995 = vpop.f32.mrf.mxu0
  %v1996 = vadd.f32 0.0, %v1995
  %v1997 = vpop.f32.mrf.mxu0
  %1998 = vmatprep.mubr.bf16.mxu0 0
  %1999 = vmatmul.mubr.bf16.gmra.mxu0 %v1864
  %v2000 = vpop.f32.mrf.mxu0
  %v2001 = vadd.f32 0.0, %v2000
  %v2002 = vpop.f32.mrf.mxu0
  %v2003 = vpop.f32.mrf.mxu0
  %v2004 = vadd.f32 0.0, %v2003
  %v2005 = vpop.f32.mrf.mxu0
  %2006 = vmatprep.mubr.bf16.mxu0 0
  %2007 = vmatmul.mubr.bf16.gmra.mxu0 %v1867
  %v2008 = vpop.f32.mrf.mxu0
  %v2009 = vadd.f32 0.0, %v2008
  %v2010 = vpop.f32.mrf.mxu0
  %v2011 = vpop.f32.mrf.mxu0
  %v2012 = vadd.f32 0.0, %v2011
  %v2013 = vpop.f32.mrf.mxu0
  %2014 = vmatprep.mubr.bf16.mxu0 0
  %2015 = vmatmul.mubr.bf16.gmra.mxu0 %v1870
  %v2016 = vpop.f32.mrf.mxu0
  %v2017 = vadd.f32 0.0, %v2016
  %v2018 = vpop.f32.mrf.mxu0
  %v2019 = vpop.f32.mrf.mxu0
  %v2020 = vadd.f32 0.0, %v2019
  %v2021 = vpop.f32.mrf.mxu0
  %2022 = vmatprep.mubr.bf16.mxu0 0
  %2023 = vmatmul.mubr.bf16.gmra.mxu0 %v1873
  %v2024 = vpop.f32.mrf.mxu0
  %v2025 = vadd.f32 0.0, %v2024
  %v2026 = vpop.f32.mrf.mxu0
  %v2027 = vpop.f32.mrf.mxu0
  %v2028 = vadd.f32 0.0, %v2027
  %v2029 = vpop.f32.mrf.mxu0
  %2030 = vmatprep.mubr.bf16.mxu0 0
  %2031 = vmatmul.mubr.bf16.gmra.mxu0 %v1876
  %v2032 = vpop.f32.mrf.mxu0
  %v2033 = vadd.f32 0.0, %v2032
  %v2034 = vpop.f32.mrf.mxu0
  %v2035 = vpop.f32.mrf.mxu0
  %v2036 = vadd.f32 0.0, %v2035
  %v2037 = vpop.f32.mrf.mxu0
  %2038 = vdwg.mxu0
  %v2039 = vadd.f32 %v1671, %v1913
  %v2040 = vadd.f32 %v1674, %v1916
  %v2041 = vadd.f32 %v1679, %v1921
  %v2042 = vadd.f32 %v1682, %v1924
  %v2043 = vadd.f32 %v1687, %v1929
  %v2044 = vadd.f32 %v1690, %v1932
  %v2045 = vadd.f32 %v1695, %v1937
  %v2046 = vadd.f32 %v1698, %v1940
  %v2047 = vadd.f32 %v1703, %v1945
  %v2048 = vadd.f32 %v1706, %v1948
  %v2049 = vadd.f32 %v1711, %v1953
  %v2050 = vadd.f32 %v1714, %v1956
  %v2051 = vadd.f32 %v1719, %v1961
  %v2052 = vadd.f32 %v1722, %v1964
  %v2053 = vadd.f32 %v1727, %v1969
  %v2054 = vadd.f32 %v1730, %v1972
  %v2055 = vadd.f32 %v1735, %v1977
  %v2056 = vadd.f32 %v1738, %v1980
  %v2057 = vadd.f32 %v1743, %v1985
  %v2058 = vadd.f32 %v1746, %v1988
  %v2059 = vadd.f32 %v1751, %v1993
  %v2060 = vadd.f32 %v1754, %v1996
  %v2061 = vadd.f32 %v1759, %v2001
  %v2062 = vadd.f32 %v1762, %v2004
  %v2063 = vadd.f32 %v1767, %v2009
  %v2064 = vadd.f32 %v1770, %v2012
  %v2065 = vadd.f32 %v1775, %v2017
  %v2066 = vadd.f32 %v1778, %v2020
  %v2067 = vadd.f32 %v1783, %v2025
  %v2068 = vadd.f32 %v1786, %v2028
  %v2069 = vadd.f32 %v1791, %v2033
  %v2070 = vadd.f32 %v1794, %v2036
  %v2071 = vsel %vm164, 1, 0
  %v2072 = vsel %vm165, 1, 0
  %v2073 = vsel %vm166, 1, 0
  %v2074 = vsel %vm167, 1, 0
  %v2075 = vsel %vm168, 1, 0
  %v2076 = vsel %vm169, 1, 0
  %v2077 = vsel %vm170, 1, 0
  %v2078 = vsel %vm171, 1, 0
  %v2079 = vsel %vm172, 1, 0
  %v2080 = vsel %vm173, 1, 0
  %v2081 = vsel %vm174, 1, 0
  %v2082 = vsel %vm175, 1, 0
  %v2083 = vsel %vm176, 1, 0
  %v2084 = vsel %vm177, 1, 0
  %v2085 = vsel %vm178, 1, 0
  %v2086 = vsel %vm179, 1, 0
  %v2087 = vsel %vm180, 1, 0
  %v2088 = vsel %vm181, 1, 0
  %v2089 = vsel %vm182, 1, 0
  %v2090 = vsel %vm183, 1, 0
  %v2091 = vsel %vm184, 1, 0
  %v2092 = vsel %vm185, 1, 0
  %v2093 = vsel %vm186, 1, 0
  %v2094 = vsel %vm187, 1, 0
  %v2095 = vsel %vm188, 1, 0
  %v2096 = vsel %vm189, 1, 0
  %v2097 = vsel %vm190, 1, 0
  %v2098 = vsel %vm191, 1, 0
  %v2099 = vsel %vm192, 1, 0
  %v2100 = vsel %vm193, 1, 0
  %v2101 = vsel %vm194, 1, 0
  %v2102 = vsel %vm195, 1, 0
  %vm2103 = vcmp.eq.s32.totalorder %v2071, 1
  %vm2104 = vcmp.eq.s32.totalorder %v2072, 1
  %vm2105 = vcmp.eq.s32.totalorder %v2073, 1
  %vm2106 = vcmp.eq.s32.totalorder %v2074, 1
  %vm2107 = vcmp.eq.s32.totalorder %v2075, 1
  %vm2108 = vcmp.eq.s32.totalorder %v2076, 1
  %vm2109 = vcmp.eq.s32.totalorder %v2077, 1
  %vm2110 = vcmp.eq.s32.totalorder %v2078, 1
  %vm2111 = vcmp.eq.s32.totalorder %v2079, 1
  %vm2112 = vcmp.eq.s32.totalorder %v2080, 1
  %vm2113 = vcmp.eq.s32.totalorder %v2081, 1
  %vm2114 = vcmp.eq.s32.totalorder %v2082, 1
  %vm2115 = vcmp.eq.s32.totalorder %v2083, 1
  %vm2116 = vcmp.eq.s32.totalorder %v2084, 1
  %vm2117 = vcmp.eq.s32.totalorder %v2085, 1
  %vm2118 = vcmp.eq.s32.totalorder %v2086, 1
  %vm2119 = vcmp.eq.s32.totalorder %v2087, 1
  %vm2120 = vcmp.eq.s32.totalorder %v2088, 1
  %vm2121 = vcmp.eq.s32.totalorder %v2089, 1
  %vm2122 = vcmp.eq.s32.totalorder %v2090, 1
  %vm2123 = vcmp.eq.s32.totalorder %v2091, 1
  %vm2124 = vcmp.eq.s32.totalorder %v2092, 1
  %vm2125 = vcmp.eq.s32.totalorder %v2093, 1
  %vm2126 = vcmp.eq.s32.totalorder %v2094, 1
  %vm2127 = vcmp.eq.s32.totalorder %v2095, 1
  %vm2128 = vcmp.eq.s32.totalorder %v2096, 1
  %vm2129 = vcmp.eq.s32.totalorder %v2097, 1
  %vm2130 = vcmp.eq.s32.totalorder %v2098, 1
  %vm2131 = vcmp.eq.s32.totalorder %v2099, 1
  %vm2132 = vcmp.eq.s32.totalorder %v2100, 1
  %vm2133 = vcmp.eq.s32.totalorder %v2101, 1
  %vm2134 = vcmp.eq.s32.totalorder %v2102, 1
  %v2135 = vsel %vm2103, %v2041, %v2069
  %v2136 = vsel %vm2104, %v2042, %v2070
  %v2137 = vsel %vm2105, %v2043, %v2039
  %v2138 = vsel %vm2106, %v2044, %v2040
  %v2139 = vsel %vm2107, %v2045, %v2041
  %v2140 = vsel %vm2108, %v2046, %v2042
  %v2141 = vsel %vm2109, %v2047, %v2043
  %v2142 = vsel %vm2110, %v2048, %v2044
  %v2143 = vsel %vm2111, %v2049, %v2045
  %v2144 = vsel %vm2112, %v2050, %v2046
  %v2145 = vsel %vm2113, %v2051, %v2047
  %v2146 = vsel %vm2114, %v2052, %v2048
  %v2147 = vsel %vm2115, %v2053, %v2049
  %v2148 = vsel %vm2116, %v2054, %v2050
  %v2149 = vsel %vm2117, %v2055, %v2051
  %v2150 = vsel %vm2118, %v2056, %v2052
  %v2151 = vsel %vm2119, %v2057, %v2053
  %v2152 = vsel %vm2120, %v2058, %v2054
  %v2153 = vsel %vm2121, %v2059, %v2055
  %v2154 = vsel %vm2122, %v2060, %v2056
  %v2155 = vsel %vm2123, %v2061, %v2057
  %v2156 = vsel %vm2124, %v2062, %v2058
  %v2157 = vsel %vm2125, %v2063, %v2059
  %v2158 = vsel %vm2126, %v2064, %v2060
  %v2159 = vsel %vm2127, %v2065, %v2061
  %v2160 = vsel %vm2128, %v2066, %v2062
  %v2161 = vsel %vm2129, %v2067, %v2063
  %v2162 = vsel %vm2130, %v2068, %v2064
  %v2163 = vsel %vm2131, %v2069, %v2065
  %v2164 = vsel %vm2132, %v2070, %v2066
  %v2165 = vsel %vm2133, %v2039, %v2067
  %v2166 = vsel %vm2134, %v2040, %v2068
  %s2167 = scalar_lea.vmem %s2, 96
  %v2168 = vld [vmem:[%s2167] sm:$0xf]
  %v2169 = vld [vmem:[%s2167 + $0x4] sm:$0xf]
  %v2170 = vld [vmem:[%s2167 + $0x8] sm:$0xf]
  %v2171 = vld [vmem:[%s2167 + $0xc] sm:$0xf]
  %v2172 = vld [vmem:[%s2167 + $0x10] sm:$0xf]
  %v2173 = vld [vmem:[%s2167 + $0x14] sm:$0xf]
  %v2174 = vld [vmem:[%s2167 + $0x18] sm:$0xf]
  %v2175 = vld [vmem:[%s2167 + $0x1c] sm:$0xf]
  %s2176 = scalar_lea.vmem %s2, 128
  %v2177 = vld [vmem:[%s2176] sm:$0xf]
  %v2178 = vld [vmem:[%s2176 + $0x4] sm:$0xf]
  %v2179 = vld [vmem:[%s2176 + $0x8] sm:$0xf]
  %v2180 = vld [vmem:[%s2176 + $0xc] sm:$0xf]
  %v2181 = vld [vmem:[%s2176 + $0x10] sm:$0xf]
  %v2182 = vld [vmem:[%s2176 + $0x14] sm:$0xf]
  %v2183 = vld [vmem:[%s2176 + $0x18] sm:$0xf]
  %v2184 = vld [vmem:[%s2176 + $0x1c] sm:$0xf]
  %v2193 = vunpack.c.l.b16 %v2177
  %v2194 = vunpack.c.l.b16 %v2178
  %v2195 = vunpack.c.l.b16 %v2179
  %v2196 = vunpack.c.l.b16 %v2180
  %v2197 = vunpack.c.l.b16 %v2181
  %v2198 = vunpack.c.l.b16 %v2182
  %v2199 = vunpack.c.l.b16 %v2183
  %v2200 = vunpack.c.l.b16 %v2184
  %v2201 = vpack.c.b16 %v2194, %v2193
  %v2202 = vpack.c.b16 %v2196, %v2195
  %v2203 = vpack.c.b16 %v2198, %v2197
  %v2204 = vpack.c.b16 %v2200, %v2199
  %2209 = vmatprep.subr.bf16.mxu0 0
  %2210 = vmatpush1.bf16.msra.mxu0 0
  %2211 = vmatprep.subr.bf16.mxu0 0
  %2212 = vmatpush1.bf16.msra.mxu0 0
  %2213 = vmatprep.subr.bf16.mxu0 0
  %2214 = vmatpush1.bf16.msra.mxu0 0
  %2215 = vmatprep.subr.bf16.mxu0 0
  %2216 = vmatpush1.bf16.msra.mxu0 0
  %2217 = vmatprep.subr.bf16.mxu0 0
  %2218 = vmatpush1.bf16.msra.mxu0 %v2204
  %2219 = vmatprep.subr.bf16.mxu0 0
  %2220 = vmatpush1.bf16.msra.mxu0 %v2203
  %2221 = vmatprep.subr.bf16.mxu0 0
  %2222 = vmatpush1.bf16.msra.mxu0 %v2202
  %2223 = vmatprep.subr.bf16.mxu0 0
  %2224 = vmatpush1.bf16.msra.mxu0 %v2201
  %2225 = vmatprep.subr.bf16.mxu0 0
  %2226 = vmatpush2.bf16.msra.mxu0 0
  %2227 = vmatprep.subr.bf16.mxu0 0
  %2228 = vmatpush2.bf16.msra.mxu0 0
  %2229 = vmatprep.subr.bf16.mxu0 0
  %2230 = vmatpush2.bf16.msra.mxu0 0
  %2231 = vmatprep.subr.bf16.mxu0 0
  %2232 = vmatpush2.bf16.msra.mxu0 0
  %2233 = vmatprep.subr.bf16.mxu0 0
  %2234 = vmatpush2.bf16.msra.mxu0 0
  %2235 = vmatprep.subr.bf16.mxu0 0
  %2236 = vmatpush2.bf16.msra.mxu0 0
  %2237 = vmatprep.subr.bf16.mxu0 0
  %2238 = vmatpush2.bf16.msra.mxu0 0
  %2239 = vmatprep.subr.bf16.mxu0 0
  %2240 = vmatpush2.bf16.msra.mxu0 0
  %2241 = vmatprep.mubr.bf16.mxu0 0
  %2242 = vmatmul.mubr.bf16.gmra.mxu0 %v1356
  %v2243 = vpop.f32.mrf.mxu0
  %v2244 = vadd.f32 0.0, %v2243
  %v2245 = vpop.f32.mrf.mxu0
  %v2246 = vpop.f32.mrf.mxu0
  %v2247 = vadd.f32 0.0, %v2246
  %v2248 = vpop.f32.mrf.mxu0
  %2249 = vmatprep.mubr.bf16.mxu0 0
  %2250 = vmatmul.mubr.bf16.gmra.mxu0 %v1359
  %v2251 = vpop.f32.mrf.mxu0
  %v2252 = vadd.f32 0.0, %v2251
  %v2253 = vpop.f32.mrf.mxu0
  %v2254 = vpop.f32.mrf.mxu0
  %v2255 = vadd.f32 0.0, %v2254
  %v2256 = vpop.f32.mrf.mxu0
  %2257 = vmatprep.mubr.bf16.mxu0 0
  %2258 = vmatmul.mubr.bf16.gmra.mxu0 %v1362
  %v2259 = vpop.f32.mrf.mxu0
  %v2260 = vadd.f32 0.0, %v2259
  %v2261 = vpop.f32.mrf.mxu0
  %v2262 = vpop.f32.mrf.mxu0
  %v2263 = vadd.f32 0.0, %v2262
  %v2264 = vpop.f32.mrf.mxu0
  %2265 = vmatprep.mubr.bf16.mxu0 0
  %2266 = vmatmul.mubr.bf16.gmra.mxu0 %v1365
  %v2267 = vpop.f32.mrf.mxu0
  %v2268 = vadd.f32 0.0, %v2267
  %v2269 = vpop.f32.mrf.mxu0
  %v2270 = vpop.f32.mrf.mxu0
  %v2271 = vadd.f32 0.0, %v2270
  %v2272 = vpop.f32.mrf.mxu0
  %2273 = vmatprep.mubr.bf16.mxu0 0
  %2274 = vmatmul.mubr.bf16.gmra.mxu0 %v1368
  %v2275 = vpop.f32.mrf.mxu0
  %v2276 = vadd.f32 0.0, %v2275
  %v2277 = vpop.f32.mrf.mxu0
  %v2278 = vpop.f32.mrf.mxu0
  %v2279 = vadd.f32 0.0, %v2278
  %v2280 = vpop.f32.mrf.mxu0
  %2281 = vmatprep.mubr.bf16.mxu0 0
  %2282 = vmatmul.mubr.bf16.gmra.mxu0 %v1371
  %v2283 = vpop.f32.mrf.mxu0
  %v2284 = vadd.f32 0.0, %v2283
  %v2285 = vpop.f32.mrf.mxu0
  %v2286 = vpop.f32.mrf.mxu0
  %v2287 = vadd.f32 0.0, %v2286
  %v2288 = vpop.f32.mrf.mxu0
  %2289 = vmatprep.mubr.bf16.mxu0 0
  %2290 = vmatmul.mubr.bf16.gmra.mxu0 %v1374
  %v2291 = vpop.f32.mrf.mxu0
  %v2292 = vadd.f32 0.0, %v2291
  %v2293 = vpop.f32.mrf.mxu0
  %v2294 = vpop.f32.mrf.mxu0
  %v2295 = vadd.f32 0.0, %v2294
  %v2296 = vpop.f32.mrf.mxu0
  %2297 = vmatprep.mubr.bf16.mxu0 0
  %2298 = vmatmul.mubr.bf16.gmra.mxu0 %v1377
  %v2299 = vpop.f32.mrf.mxu0
  %v2300 = vadd.f32 0.0, %v2299
  %v2301 = vpop.f32.mrf.mxu0
  %v2302 = vpop.f32.mrf.mxu0
  %v2303 = vadd.f32 0.0, %v2302
  %v2304 = vpop.f32.mrf.mxu0
  %2305 = vmatprep.mubr.bf16.mxu0 0
  %2306 = vmatmul.mubr.bf16.gmra.mxu0 %v1380
  %v2307 = vpop.f32.mrf.mxu0
  %v2308 = vadd.f32 0.0, %v2307
  %v2309 = vpop.f32.mrf.mxu0
  %v2310 = vpop.f32.mrf.mxu0
  %v2311 = vadd.f32 0.0, %v2310
  %v2312 = vpop.f32.mrf.mxu0
  %2313 = vmatprep.mubr.bf16.mxu0 0
  %2314 = vmatmul.mubr.bf16.gmra.mxu0 %v1383
  %v2315 = vpop.f32.mrf.mxu0
  %v2316 = vadd.f32 0.0, %v2315
  %v2317 = vpop.f32.mrf.mxu0
  %v2318 = vpop.f32.mrf.mxu0
  %v2319 = vadd.f32 0.0, %v2318
  %v2320 = vpop.f32.mrf.mxu0
  %2321 = vmatprep.mubr.bf16.mxu0 0
  %2322 = vmatmul.mubr.bf16.gmra.mxu0 %v1386
  %v2323 = vpop.f32.mrf.mxu0
  %v2324 = vadd.f32 0.0, %v2323
  %v2325 = vpop.f32.mrf.mxu0
  %v2326 = vpop.f32.mrf.mxu0
  %v2327 = vadd.f32 0.0, %v2326
  %v2328 = vpop.f32.mrf.mxu0
  %2329 = vmatprep.mubr.bf16.mxu0 0
  %2330 = vmatmul.mubr.bf16.gmra.mxu0 %v1389
  %v2331 = vpop.f32.mrf.mxu0
  %v2332 = vadd.f32 0.0, %v2331
  %v2333 = vpop.f32.mrf.mxu0
  %v2334 = vpop.f32.mrf.mxu0
  %v2335 = vadd.f32 0.0, %v2334
  %v2336 = vpop.f32.mrf.mxu0
  %2337 = vmatprep.mubr.bf16.mxu0 0
  %2338 = vmatmul.mubr.bf16.gmra.mxu0 %v1392
  %v2339 = vpop.f32.mrf.mxu0
  %v2340 = vadd.f32 0.0, %v2339
  %v2341 = vpop.f32.mrf.mxu0
  %v2342 = vpop.f32.mrf.mxu0
  %v2343 = vadd.f32 0.0, %v2342
  %v2344 = vpop.f32.mrf.mxu0
  %2345 = vmatprep.mubr.bf16.mxu0 0
  %2346 = vmatmul.mubr.bf16.gmra.mxu0 %v1395
  %v2347 = vpop.f32.mrf.mxu0
  %v2348 = vadd.f32 0.0, %v2347
  %v2349 = vpop.f32.mrf.mxu0
  %v2350 = vpop.f32.mrf.mxu0
  %v2351 = vadd.f32 0.0, %v2350
  %v2352 = vpop.f32.mrf.mxu0
  %2353 = vmatprep.mubr.bf16.mxu0 0
  %2354 = vmatmul.mubr.bf16.gmra.mxu0 %v1398
  %v2355 = vpop.f32.mrf.mxu0
  %v2356 = vadd.f32 0.0, %v2355
  %v2357 = vpop.f32.mrf.mxu0
  %v2358 = vpop.f32.mrf.mxu0
  %v2359 = vadd.f32 0.0, %v2358
  %v2360 = vpop.f32.mrf.mxu0
  %2361 = vmatprep.mubr.bf16.mxu0 0
  %2362 = vmatmul.mubr.bf16.gmra.mxu0 %v1401
  %v2363 = vpop.f32.mrf.mxu0
  %v2364 = vadd.f32 0.0, %v2363
  %v2365 = vpop.f32.mrf.mxu0
  %v2366 = vpop.f32.mrf.mxu0
  %v2367 = vadd.f32 0.0, %v2366
  %v2368 = vpop.f32.mrf.mxu0
  %2369 = vdwg.mxu0
  %v2378 = vunpack.c.l.b16 %v2168
  %v2379 = vunpack.c.l.b16 %v2169
  %v2380 = vunpack.c.l.b16 %v2170
  %v2381 = vunpack.c.l.b16 %v2171
  %v2382 = vunpack.c.l.b16 %v2172
  %v2383 = vunpack.c.l.b16 %v2173
  %v2384 = vunpack.c.l.b16 %v2174
  %v2385 = vunpack.c.l.b16 %v2175
  %v2386 = vpack.c.b16 %v2379, %v2378
  %v2387 = vpack.c.b16 %v2381, %v2380
  %v2388 = vpack.c.b16 %v2383, %v2382
  %v2389 = vpack.c.b16 %v2385, %v2384
  %2394 = vmatprep.subr.bf16.mxu0 0
  %2395 = vmatpush1.bf16.msra.mxu0 0
  %2396 = vmatprep.subr.bf16.mxu0 0
  %2397 = vmatpush1.bf16.msra.mxu0 0
  %2398 = vmatprep.subr.bf16.mxu0 0
  %2399 = vmatpush1.bf16.msra.mxu0 0
  %2400 = vmatprep.subr.bf16.mxu0 0
  %2401 = vmatpush1.bf16.msra.mxu0 0
  %2402 = vmatprep.subr.bf16.mxu0 0
  %2403 = vmatpush1.bf16.msra.mxu0 %v2389
  %2404 = vmatprep.subr.bf16.mxu0 0
  %2405 = vmatpush1.bf16.msra.mxu0 %v2388
  %2406 = vmatprep.subr.bf16.mxu0 0
  %2407 = vmatpush1.bf16.msra.mxu0 %v2387
  %2408 = vmatprep.subr.bf16.mxu0 0
  %2409 = vmatpush1.bf16.msra.mxu0 %v2386
  %2410 = vmatprep.subr.bf16.mxu0 0
  %2411 = vmatpush2.bf16.msra.mxu0 0
  %2412 = vmatprep.subr.bf16.mxu0 0
  %2413 = vmatpush2.bf16.msra.mxu0 0
  %2414 = vmatprep.subr.bf16.mxu0 0
  %2415 = vmatpush2.bf16.msra.mxu0 0
  %2416 = vmatprep.subr.bf16.mxu0 0
  %2417 = vmatpush2.bf16.msra.mxu0 0
  %2418 = vmatprep.subr.bf16.mxu0 0
  %2419 = vmatpush2.bf16.msra.mxu0 0
  %2420 = vmatprep.subr.bf16.mxu0 0
  %2421 = vmatpush2.bf16.msra.mxu0 0
  %2422 = vmatprep.subr.bf16.mxu0 0
  %2423 = vmatpush2.bf16.msra.mxu0 0
  %2424 = vmatprep.subr.bf16.mxu0 0
  %2425 = vmatpush2.bf16.msra.mxu0 0
  %2426 = vmatprep.mubr.bf16.mxu0 0
  %2427 = vmatmul.mubr.bf16.gmra.mxu0 %v1589
  %v2428 = vpop.f32.mrf.mxu0
  %v2429 = vadd.f32 %v2244, %v2428
  %v2430 = vpop.f32.mrf.mxu0
  %v2431 = vpop.f32.mrf.mxu0
  %v2432 = vadd.f32 %v2247, %v2431
  %v2433 = vpop.f32.mrf.mxu0
  %2434 = vmatprep.mubr.bf16.mxu0 0
  %2435 = vmatmul.mubr.bf16.gmra.mxu0 %v1592
  %v2436 = vpop.f32.mrf.mxu0
  %v2437 = vadd.f32 %v2252, %v2436
  %v2438 = vpop.f32.mrf.mxu0
  %v2439 = vpop.f32.mrf.mxu0
  %v2440 = vadd.f32 %v2255, %v2439
  %v2441 = vpop.f32.mrf.mxu0
  %2442 = vmatprep.mubr.bf16.mxu0 0
  %2443 = vmatmul.mubr.bf16.gmra.mxu0 %v1595
  %v2444 = vpop.f32.mrf.mxu0
  %v2445 = vadd.f32 %v2260, %v2444
  %v2446 = vpop.f32.mrf.mxu0
  %v2447 = vpop.f32.mrf.mxu0
  %v2448 = vadd.f32 %v2263, %v2447
  %v2449 = vpop.f32.mrf.mxu0
  %2450 = vmatprep.mubr.bf16.mxu0 0
  %2451 = vmatmul.mubr.bf16.gmra.mxu0 %v1598
  %v2452 = vpop.f32.mrf.mxu0
  %v2453 = vadd.f32 %v2268, %v2452
  %v2454 = vpop.f32.mrf.mxu0
  %v2455 = vpop.f32.mrf.mxu0
  %v2456 = vadd.f32 %v2271, %v2455
  %v2457 = vpop.f32.mrf.mxu0
  %2458 = vmatprep.mubr.bf16.mxu0 0
  %2459 = vmatmul.mubr.bf16.gmra.mxu0 %v1601
  %v2460 = vpop.f32.mrf.mxu0
  %v2461 = vadd.f32 %v2276, %v2460
  %v2462 = vpop.f32.mrf.mxu0
  %v2463 = vpop.f32.mrf.mxu0
  %v2464 = vadd.f32 %v2279, %v2463
  %v2465 = vpop.f32.mrf.mxu0
  %2466 = vmatprep.mubr.bf16.mxu0 0
  %2467 = vmatmul.mubr.bf16.gmra.mxu0 %v1604
  %v2468 = vpop.f32.mrf.mxu0
  %v2469 = vadd.f32 %v2284, %v2468
  %v2470 = vpop.f32.mrf.mxu0
  %v2471 = vpop.f32.mrf.mxu0
  %v2472 = vadd.f32 %v2287, %v2471
  %v2473 = vpop.f32.mrf.mxu0
  %2474 = vmatprep.mubr.bf16.mxu0 0
  %2475 = vmatmul.mubr.bf16.gmra.mxu0 %v1607
  %v2476 = vpop.f32.mrf.mxu0
  %v2477 = vadd.f32 %v2292, %v2476
  %v2478 = vpop.f32.mrf.mxu0
  %v2479 = vpop.f32.mrf.mxu0
  %v2480 = vadd.f32 %v2295, %v2479
  %v2481 = vpop.f32.mrf.mxu0
  %2482 = vmatprep.mubr.bf16.mxu0 0
  %2483 = vmatmul.mubr.bf16.gmra.mxu0 %v1610
  %v2484 = vpop.f32.mrf.mxu0
  %v2485 = vadd.f32 %v2300, %v2484
  %v2486 = vpop.f32.mrf.mxu0
  %v2487 = vpop.f32.mrf.mxu0
  %v2488 = vadd.f32 %v2303, %v2487
  %v2489 = vpop.f32.mrf.mxu0
  %2490 = vmatprep.mubr.bf16.mxu0 0
  %2491 = vmatmul.mubr.bf16.gmra.mxu0 %v1613
  %v2492 = vpop.f32.mrf.mxu0
  %v2493 = vadd.f32 %v2308, %v2492
  %v2494 = vpop.f32.mrf.mxu0
  %v2495 = vpop.f32.mrf.mxu0
  %v2496 = vadd.f32 %v2311, %v2495
  %v2497 = vpop.f32.mrf.mxu0
  %2498 = vmatprep.mubr.bf16.mxu0 0
  %2499 = vmatmul.mubr.bf16.gmra.mxu0 %v1616
  %v2500 = vpop.f32.mrf.mxu0
  %v2501 = vadd.f32 %v2316, %v2500
  %v2502 = vpop.f32.mrf.mxu0
  %v2503 = vpop.f32.mrf.mxu0
  %v2504 = vadd.f32 %v2319, %v2503
  %v2505 = vpop.f32.mrf.mxu0
  %2506 = vmatprep.mubr.bf16.mxu0 0
  %2507 = vmatmul.mubr.bf16.gmra.mxu0 %v1619
  %v2508 = vpop.f32.mrf.mxu0
  %v2509 = vadd.f32 %v2324, %v2508
  %v2510 = vpop.f32.mrf.mxu0
  %v2511 = vpop.f32.mrf.mxu0
  %v2512 = vadd.f32 %v2327, %v2511
  %v2513 = vpop.f32.mrf.mxu0
  %2514 = vmatprep.mubr.bf16.mxu0 0
  %2515 = vmatmul.mubr.bf16.gmra.mxu0 %v1622
  %v2516 = vpop.f32.mrf.mxu0
  %v2517 = vadd.f32 %v2332, %v2516
  %v2518 = vpop.f32.mrf.mxu0
  %v2519 = vpop.f32.mrf.mxu0
  %v2520 = vadd.f32 %v2335, %v2519
  %v2521 = vpop.f32.mrf.mxu0
  %2522 = vmatprep.mubr.bf16.mxu0 0
  %2523 = vmatmul.mubr.bf16.gmra.mxu0 %v1625
  %v2524 = vpop.f32.mrf.mxu0
  %v2525 = vadd.f32 %v2340, %v2524
  %v2526 = vpop.f32.mrf.mxu0
  %v2527 = vpop.f32.mrf.mxu0
  %v2528 = vadd.f32 %v2343, %v2527
  %v2529 = vpop.f32.mrf.mxu0
  %2530 = vmatprep.mubr.bf16.mxu0 0
  %2531 = vmatmul.mubr.bf16.gmra.mxu0 %v1628
  %v2532 = vpop.f32.mrf.mxu0
  %v2533 = vadd.f32 %v2348, %v2532
  %v2534 = vpop.f32.mrf.mxu0
  %v2535 = vpop.f32.mrf.mxu0
  %v2536 = vadd.f32 %v2351, %v2535
  %v2537 = vpop.f32.mrf.mxu0
  %2538 = vmatprep.mubr.bf16.mxu0 0
  %2539 = vmatmul.mubr.bf16.gmra.mxu0 %v1631
  %v2540 = vpop.f32.mrf.mxu0
  %v2541 = vadd.f32 %v2356, %v2540
  %v2542 = vpop.f32.mrf.mxu0
  %v2543 = vpop.f32.mrf.mxu0
  %v2544 = vadd.f32 %v2359, %v2543
  %v2545 = vpop.f32.mrf.mxu0
  %2546 = vmatprep.mubr.bf16.mxu0 0
  %2547 = vmatmul.mubr.bf16.gmra.mxu0 %v1634
  %v2548 = vpop.f32.mrf.mxu0
  %v2549 = vadd.f32 %v2364, %v2548
  %v2550 = vpop.f32.mrf.mxu0
  %v2551 = vpop.f32.mrf.mxu0
  %v2552 = vadd.f32 %v2367, %v2551
  %v2553 = vpop.f32.mrf.mxu0
  %2554 = vdwg.mxu0
  %s2555 = scalar_lea.vmem %s2, 160
  %v2556 = vld [vmem:[%s2555] sm:$0xf]
  %v2557 = vld [vmem:[%s2555 + $0x4] sm:$0xf]
  %v2558 = vld [vmem:[%s2555 + $0x8] sm:$0xf]
  %v2559 = vld [vmem:[%s2555 + $0xc] sm:$0xf]
  %v2560 = vld [vmem:[%s2555 + $0x10] sm:$0xf]
  %v2561 = vld [vmem:[%s2555 + $0x14] sm:$0xf]
  %v2562 = vld [vmem:[%s2555 + $0x18] sm:$0xf]
  %v2563 = vld [vmem:[%s2555 + $0x1c] sm:$0xf]
  %v2572 = vunpack.c.l.b16 %v2556
  %v2573 = vunpack.c.l.b16 %v2557
  %v2574 = vunpack.c.l.b16 %v2558
  %v2575 = vunpack.c.l.b16 %v2559
  %v2576 = vunpack.c.l.b16 %v2560
  %v2577 = vunpack.c.l.b16 %v2561
  %v2578 = vunpack.c.l.b16 %v2562
  %v2579 = vunpack.c.l.b16 %v2563
  %v2580 = vpack.c.b16 %v2573, %v2572
  %v2581 = vpack.c.b16 %v2575, %v2574
  %v2582 = vpack.c.b16 %v2577, %v2576
  %v2583 = vpack.c.b16 %v2579, %v2578
  %2588 = vmatprep.subr.bf16.mxu0 0
  %2589 = vmatpush1.bf16.msra.mxu0 0
  %2590 = vmatprep.subr.bf16.mxu0 0
  %2591 = vmatpush1.bf16.msra.mxu0 0
  %2592 = vmatprep.subr.bf16.mxu0 0
  %2593 = vmatpush1.bf16.msra.mxu0 0
  %2594 = vmatprep.subr.bf16.mxu0 0
  %2595 = vmatpush1.bf16.msra.mxu0 0
  %2596 = vmatprep.subr.bf16.mxu0 0
  %2597 = vmatpush1.bf16.msra.mxu0 %v2583
  %2598 = vmatprep.subr.bf16.mxu0 0
  %2599 = vmatpush1.bf16.msra.mxu0 %v2582
  %2600 = vmatprep.subr.bf16.mxu0 0
  %2601 = vmatpush1.bf16.msra.mxu0 %v2581
  %2602 = vmatprep.subr.bf16.mxu0 0
  %2603 = vmatpush1.bf16.msra.mxu0 %v2580
  %2604 = vmatprep.subr.bf16.mxu0 0
  %2605 = vmatpush2.bf16.msra.mxu0 0
  %2606 = vmatprep.subr.bf16.mxu0 0
  %2607 = vmatpush2.bf16.msra.mxu0 0
  %2608 = vmatprep.subr.bf16.mxu0 0
  %2609 = vmatpush2.bf16.msra.mxu0 0
  %2610 = vmatprep.subr.bf16.mxu0 0
  %2611 = vmatpush2.bf16.msra.mxu0 0
  %2612 = vmatprep.subr.bf16.mxu0 0
  %2613 = vmatpush2.bf16.msra.mxu0 0
  %2614 = vmatprep.subr.bf16.mxu0 0
  %2615 = vmatpush2.bf16.msra.mxu0 0
  %2616 = vmatprep.subr.bf16.mxu0 0
  %2617 = vmatpush2.bf16.msra.mxu0 0
  %2618 = vmatprep.subr.bf16.mxu0 0
  %2619 = vmatpush2.bf16.msra.mxu0 0
  %2620 = vmatprep.mubr.bf16.mxu0 0
  %2621 = vmatmul.mubr.bf16.gmra.mxu0 %v1831
  %v2622 = vpop.f32.mrf.mxu0
  %v2623 = vadd.f32 0.0, %v2622
  %v2624 = vpop.f32.mrf.mxu0
  %v2625 = vpop.f32.mrf.mxu0
  %v2626 = vadd.f32 0.0, %v2625
  %v2627 = vpop.f32.mrf.mxu0
  %2628 = vmatprep.mubr.bf16.mxu0 0
  %2629 = vmatmul.mubr.bf16.gmra.mxu0 %v1834
  %v2630 = vpop.f32.mrf.mxu0
  %v2631 = vadd.f32 0.0, %v2630
  %v2632 = vpop.f32.mrf.mxu0
  %v2633 = vpop.f32.mrf.mxu0
  %v2634 = vadd.f32 0.0, %v2633
  %v2635 = vpop.f32.mrf.mxu0
  %2636 = vmatprep.mubr.bf16.mxu0 0
  %2637 = vmatmul.mubr.bf16.gmra.mxu0 %v1837
  %v2638 = vpop.f32.mrf.mxu0
  %v2639 = vadd.f32 0.0, %v2638
  %v2640 = vpop.f32.mrf.mxu0
  %v2641 = vpop.f32.mrf.mxu0
  %v2642 = vadd.f32 0.0, %v2641
  %v2643 = vpop.f32.mrf.mxu0
  %2644 = vmatprep.mubr.bf16.mxu0 0
  %2645 = vmatmul.mubr.bf16.gmra.mxu0 %v1840
  %v2646 = vpop.f32.mrf.mxu0
  %v2647 = vadd.f32 0.0, %v2646
  %v2648 = vpop.f32.mrf.mxu0
  %v2649 = vpop.f32.mrf.mxu0
  %v2650 = vadd.f32 0.0, %v2649
  %v2651 = vpop.f32.mrf.mxu0
  %2652 = vmatprep.mubr.bf16.mxu0 0
  %2653 = vmatmul.mubr.bf16.gmra.mxu0 %v1843
  %v2654 = vpop.f32.mrf.mxu0
  %v2655 = vadd.f32 0.0, %v2654
  %v2656 = vpop.f32.mrf.mxu0
  %v2657 = vpop.f32.mrf.mxu0
  %v2658 = vadd.f32 0.0, %v2657
  %v2659 = vpop.f32.mrf.mxu0
  %2660 = vmatprep.mubr.bf16.mxu0 0
  %2661 = vmatmul.mubr.bf16.gmra.mxu0 %v1846
  %v2662 = vpop.f32.mrf.mxu0
  %v2663 = vadd.f32 0.0, %v2662
  %v2664 = vpop.f32.mrf.mxu0
  %v2665 = vpop.f32.mrf.mxu0
  %v2666 = vadd.f32 0.0, %v2665
  %v2667 = vpop.f32.mrf.mxu0
  %2668 = vmatprep.mubr.bf16.mxu0 0
  %2669 = vmatmul.mubr.bf16.gmra.mxu0 %v1849
  %v2670 = vpop.f32.mrf.mxu0
  %v2671 = vadd.f32 0.0, %v2670
  %v2672 = vpop.f32.mrf.mxu0
  %v2673 = vpop.f32.mrf.mxu0
  %v2674 = vadd.f32 0.0, %v2673
  %v2675 = vpop.f32.mrf.mxu0
  %2676 = vmatprep.mubr.bf16.mxu0 0
  %2677 = vmatmul.mubr.bf16.gmra.mxu0 %v1852
  %v2678 = vpop.f32.mrf.mxu0
  %v2679 = vadd.f32 0.0, %v2678
  %v2680 = vpop.f32.mrf.mxu0
  %v2681 = vpop.f32.mrf.mxu0
  %v2682 = vadd.f32 0.0, %v2681
  %v2683 = vpop.f32.mrf.mxu0
  %2684 = vmatprep.mubr.bf16.mxu0 0
  %2685 = vmatmul.mubr.bf16.gmra.mxu0 %v1855
  %v2686 = vpop.f32.mrf.mxu0
  %v2687 = vadd.f32 0.0, %v2686
  %v2688 = vpop.f32.mrf.mxu0
  %v2689 = vpop.f32.mrf.mxu0
  %v2690 = vadd.f32 0.0, %v2689
  %v2691 = vpop.f32.mrf.mxu0
  %2692 = vmatprep.mubr.bf16.mxu0 0
  %2693 = vmatmul.mubr.bf16.gmra.mxu0 %v1858
  %v2694 = vpop.f32.mrf.mxu0
  %v2695 = vadd.f32 0.0, %v2694
  %v2696 = vpop.f32.mrf.mxu0
  %v2697 = vpop.f32.mrf.mxu0
  %v2698 = vadd.f32 0.0, %v2697
  %v2699 = vpop.f32.mrf.mxu0
  %2700 = vmatprep.mubr.bf16.mxu0 0
  %2701 = vmatmul.mubr.bf16.gmra.mxu0 %v1861
  %v2702 = vpop.f32.mrf.mxu0
  %v2703 = vadd.f32 0.0, %v2702
  %v2704 = vpop.f32.mrf.mxu0
  %v2705 = vpop.f32.mrf.mxu0
  %v2706 = vadd.f32 0.0, %v2705
  %v2707 = vpop.f32.mrf.mxu0
  %2708 = vmatprep.mubr.bf16.mxu0 0
  %2709 = vmatmul.mubr.bf16.gmra.mxu0 %v1864
  %v2710 = vpop.f32.mrf.mxu0
  %v2711 = vadd.f32 0.0, %v2710
  %v2712 = vpop.f32.mrf.mxu0
  %v2713 = vpop.f32.mrf.mxu0
  %v2714 = vadd.f32 0.0, %v2713
  %v2715 = vpop.f32.mrf.mxu0
  %2716 = vmatprep.mubr.bf16.mxu0 0
  %2717 = vmatmul.mubr.bf16.gmra.mxu0 %v1867
  %v2718 = vpop.f32.mrf.mxu0
  %v2719 = vadd.f32 0.0, %v2718
  %v2720 = vpop.f32.mrf.mxu0
  %v2721 = vpop.f32.mrf.mxu0
  %v2722 = vadd.f32 0.0, %v2721
  %v2723 = vpop.f32.mrf.mxu0
  %2724 = vmatprep.mubr.bf16.mxu0 0
  %2725 = vmatmul.mubr.bf16.gmra.mxu0 %v1870
  %v2726 = vpop.f32.mrf.mxu0
  %v2727 = vadd.f32 0.0, %v2726
  %v2728 = vpop.f32.mrf.mxu0
  %v2729 = vpop.f32.mrf.mxu0
  %v2730 = vadd.f32 0.0, %v2729
  %v2731 = vpop.f32.mrf.mxu0
  %2732 = vmatprep.mubr.bf16.mxu0 0
  %2733 = vmatmul.mubr.bf16.gmra.mxu0 %v1873
  %v2734 = vpop.f32.mrf.mxu0
  %v2735 = vadd.f32 0.0, %v2734
  %v2736 = vpop.f32.mrf.mxu0
  %v2737 = vpop.f32.mrf.mxu0
  %v2738 = vadd.f32 0.0, %v2737
  %v2739 = vpop.f32.mrf.mxu0
  %2740 = vmatprep.mubr.bf16.mxu0 0
  %2741 = vmatmul.mubr.bf16.gmra.mxu0 %v1876
  %v2742 = vpop.f32.mrf.mxu0
  %v2743 = vadd.f32 0.0, %v2742
  %v2744 = vpop.f32.mrf.mxu0
  %v2745 = vpop.f32.mrf.mxu0
  %v2746 = vadd.f32 0.0, %v2745
  %v2747 = vpop.f32.mrf.mxu0
  %2748 = vdwg.mxu0
  %v2749 = vadd.f32 %v2429, %v2623
  %v2750 = vadd.f32 %v2432, %v2626
  %v2751 = vadd.f32 %v2437, %v2631
  %v2752 = vadd.f32 %v2440, %v2634
  %v2753 = vadd.f32 %v2445, %v2639
  %v2754 = vadd.f32 %v2448, %v2642
  %v2755 = vadd.f32 %v2453, %v2647
  %v2756 = vadd.f32 %v2456, %v2650
  %v2757 = vadd.f32 %v2461, %v2655
  %v2758 = vadd.f32 %v2464, %v2658
  %v2759 = vadd.f32 %v2469, %v2663
  %v2760 = vadd.f32 %v2472, %v2666
  %v2761 = vadd.f32 %v2477, %v2671
  %v2762 = vadd.f32 %v2480, %v2674
  %v2763 = vadd.f32 %v2485, %v2679
  %v2764 = vadd.f32 %v2488, %v2682
  %v2765 = vadd.f32 %v2493, %v2687
  %v2766 = vadd.f32 %v2496, %v2690
  %v2767 = vadd.f32 %v2501, %v2695
  %v2768 = vadd.f32 %v2504, %v2698
  %v2769 = vadd.f32 %v2509, %v2703
  %v2770 = vadd.f32 %v2512, %v2706
  %v2771 = vadd.f32 %v2517, %v2711
  %v2772 = vadd.f32 %v2520, %v2714
  %v2773 = vadd.f32 %v2525, %v2719
  %v2774 = vadd.f32 %v2528, %v2722
  %v2775 = vadd.f32 %v2533, %v2727
  %v2776 = vadd.f32 %v2536, %v2730
  %v2777 = vadd.f32 %v2541, %v2735
  %v2778 = vadd.f32 %v2544, %v2738
  %v2779 = vadd.f32 %v2549, %v2743
  %v2780 = vadd.f32 %v2552, %v2746
  %v2781 = vadd.f32 %v2135, %v2749
  %v2782 = vadd.f32 %v2136, %v2750
  %v2783 = vadd.f32 %v2137, %v2751
  %v2784 = vadd.f32 %v2138, %v2752
  %v2785 = vadd.f32 %v2139, %v2753
  %v2786 = vadd.f32 %v2140, %v2754
  %v2787 = vadd.f32 %v2141, %v2755
  %v2788 = vadd.f32 %v2142, %v2756
  %v2789 = vadd.f32 %v2143, %v2757
  %v2790 = vadd.f32 %v2144, %v2758
  %v2791 = vadd.f32 %v2145, %v2759
  %v2792 = vadd.f32 %v2146, %v2760
  %v2793 = vadd.f32 %v2147, %v2761
  %v2794 = vadd.f32 %v2148, %v2762
  %v2795 = vadd.f32 %v2149, %v2763
  %v2796 = vadd.f32 %v2150, %v2764
  %v2797 = vadd.f32 %v2151, %v2765
  %v2798 = vadd.f32 %v2152, %v2766
  %v2799 = vadd.f32 %v2153, %v2767
  %v2800 = vadd.f32 %v2154, %v2768
  %v2801 = vadd.f32 %v2155, %v2769
  %v2802 = vadd.f32 %v2156, %v2770
  %v2803 = vadd.f32 %v2157, %v2771
  %v2804 = vadd.f32 %v2158, %v2772
  %v2805 = vadd.f32 %v2159, %v2773
  %v2806 = vadd.f32 %v2160, %v2774
  %v2807 = vadd.f32 %v2161, %v2775
  %v2808 = vadd.f32 %v2162, %v2776
  %v2809 = vadd.f32 %v2163, %v2777
  %v2810 = vadd.f32 %v2164, %v2778
  %v2811 = vadd.f32 %v2165, %v2779
  %v2812 = vadd.f32 %v2166, %v2780
  %s2813 = scalar_lea.vmem %s2, 192
  %v2814 = vld [vmem:[%s2813] sm:$0xf]
  %v2815 = vld [vmem:[%s2813 + $0x4] sm:$0xf]
  %v2816 = vld [vmem:[%s2813 + $0x8] sm:$0xf]
  %v2817 = vld [vmem:[%s2813 + $0xc] sm:$0xf]
  %v2818 = vld [vmem:[%s2813 + $0x10] sm:$0xf]
  %v2819 = vld [vmem:[%s2813 + $0x14] sm:$0xf]
  %v2820 = vld [vmem:[%s2813 + $0x18] sm:$0xf]
  %v2821 = vld [vmem:[%s2813 + $0x1c] sm:$0xf]
  %s2822 = scalar_lea.vmem %s2, 224
  %v2823 = vld [vmem:[%s2822] sm:$0xf]
  %v2824 = vld [vmem:[%s2822 + $0x4] sm:$0xf]
  %v2825 = vld [vmem:[%s2822 + $0x8] sm:$0xf]
  %v2826 = vld [vmem:[%s2822 + $0xc] sm:$0xf]
  %v2827 = vld [vmem:[%s2822 + $0x10] sm:$0xf]
  %v2828 = vld [vmem:[%s2822 + $0x14] sm:$0xf]
  %v2829 = vld [vmem:[%s2822 + $0x18] sm:$0xf]
  %v2830 = vld [vmem:[%s2822 + $0x1c] sm:$0xf]
  %v2839 = vunpack.c.l.b16 %v2823
  %v2840 = vunpack.c.l.b16 %v2824
  %v2841 = vunpack.c.l.b16 %v2825
  %v2842 = vunpack.c.l.b16 %v2826
  %v2843 = vunpack.c.l.b16 %v2827
  %v2844 = vunpack.c.l.b16 %v2828
  %v2845 = vunpack.c.l.b16 %v2829
  %v2846 = vunpack.c.l.b16 %v2830
  %v2847 = vpack.c.b16 %v2840, %v2839
  %v2848 = vpack.c.b16 %v2842, %v2841
  %v2849 = vpack.c.b16 %v2844, %v2843
  %v2850 = vpack.c.b16 %v2846, %v2845
  %2855 = vmatprep.subr.bf16.mxu0 0
  %2856 = vmatpush1.bf16.msra.mxu0 0
  %2857 = vmatprep.subr.bf16.mxu0 0
  %2858 = vmatpush1.bf16.msra.mxu0 0
  %2859 = vmatprep.subr.bf16.mxu0 0
  %2860 = vmatpush1.bf16.msra.mxu0 0
  %2861 = vmatprep.subr.bf16.mxu0 0
  %2862 = vmatpush1.bf16.msra.mxu0 0
  %2863 = vmatprep.subr.bf16.mxu0 0
  %2864 = vmatpush1.bf16.msra.mxu0 %v2850
  %2865 = vmatprep.subr.bf16.mxu0 0
  %2866 = vmatpush1.bf16.msra.mxu0 %v2849
  %2867 = vmatprep.subr.bf16.mxu0 0
  %2868 = vmatpush1.bf16.msra.mxu0 %v2848
  %2869 = vmatprep.subr.bf16.mxu0 0
  %2870 = vmatpush1.bf16.msra.mxu0 %v2847
  %2871 = vmatprep.subr.bf16.mxu0 0
  %2872 = vmatpush2.bf16.msra.mxu0 0
  %2873 = vmatprep.subr.bf16.mxu0 0
  %2874 = vmatpush2.bf16.msra.mxu0 0
  %2875 = vmatprep.subr.bf16.mxu0 0
  %2876 = vmatpush2.bf16.msra.mxu0 0
  %2877 = vmatprep.subr.bf16.mxu0 0
  %2878 = vmatpush2.bf16.msra.mxu0 0
  %2879 = vmatprep.subr.bf16.mxu0 0
  %2880 = vmatpush2.bf16.msra.mxu0 0
  %2881 = vmatprep.subr.bf16.mxu0 0
  %2882 = vmatpush2.bf16.msra.mxu0 0
  %2883 = vmatprep.subr.bf16.mxu0 0
  %2884 = vmatpush2.bf16.msra.mxu0 0
  %2885 = vmatprep.subr.bf16.mxu0 0
  %2886 = vmatpush2.bf16.msra.mxu0 0
  %2887 = vmatprep.mubr.bf16.mxu0 0
  %2888 = vmatmul.mubr.bf16.gmra.mxu0 %v1356
  %v2889 = vpop.f32.mrf.mxu0
  %v2890 = vadd.f32 0.0, %v2889
  %v2891 = vpop.f32.mrf.mxu0
  %v2892 = vpop.f32.mrf.mxu0
  %v2893 = vadd.f32 0.0, %v2892
  %v2894 = vpop.f32.mrf.mxu0
  %2895 = vmatprep.mubr.bf16.mxu0 0
  %2896 = vmatmul.mubr.bf16.gmra.mxu0 %v1359
  %v2897 = vpop.f32.mrf.mxu0
  %v2898 = vadd.f32 0.0, %v2897
  %v2899 = vpop.f32.mrf.mxu0
  %v2900 = vpop.f32.mrf.mxu0
  %v2901 = vadd.f32 0.0, %v2900
  %v2902 = vpop.f32.mrf.mxu0
  %2903 = vmatprep.mubr.bf16.mxu0 0
  %2904 = vmatmul.mubr.bf16.gmra.mxu0 %v1362
  %v2905 = vpop.f32.mrf.mxu0
  %v2906 = vadd.f32 0.0, %v2905
  %v2907 = vpop.f32.mrf.mxu0
  %v2908 = vpop.f32.mrf.mxu0
  %v2909 = vadd.f32 0.0, %v2908
  %v2910 = vpop.f32.mrf.mxu0
  %2911 = vmatprep.mubr.bf16.mxu0 0
  %2912 = vmatmul.mubr.bf16.gmra.mxu0 %v1365
  %v2913 = vpop.f32.mrf.mxu0
  %v2914 = vadd.f32 0.0, %v2913
  %v2915 = vpop.f32.mrf.mxu0
  %v2916 = vpop.f32.mrf.mxu0
  %v2917 = vadd.f32 0.0, %v2916
  %v2918 = vpop.f32.mrf.mxu0
  %2919 = vmatprep.mubr.bf16.mxu0 0
  %2920 = vmatmul.mubr.bf16.gmra.mxu0 %v1368
  %v2921 = vpop.f32.mrf.mxu0
  %v2922 = vadd.f32 0.0, %v2921
  %v2923 = vpop.f32.mrf.mxu0
  %v2924 = vpop.f32.mrf.mxu0
  %v2925 = vadd.f32 0.0, %v2924
  %v2926 = vpop.f32.mrf.mxu0
  %2927 = vmatprep.mubr.bf16.mxu0 0
  %2928 = vmatmul.mubr.bf16.gmra.mxu0 %v1371
  %v2929 = vpop.f32.mrf.mxu0
  %v2930 = vadd.f32 0.0, %v2929
  %v2931 = vpop.f32.mrf.mxu0
  %v2932 = vpop.f32.mrf.mxu0
  %v2933 = vadd.f32 0.0, %v2932
  %v2934 = vpop.f32.mrf.mxu0
  %2935 = vmatprep.mubr.bf16.mxu0 0
  %2936 = vmatmul.mubr.bf16.gmra.mxu0 %v1374
  %v2937 = vpop.f32.mrf.mxu0
  %v2938 = vadd.f32 0.0, %v2937
  %v2939 = vpop.f32.mrf.mxu0
  %v2940 = vpop.f32.mrf.mxu0
  %v2941 = vadd.f32 0.0, %v2940
  %v2942 = vpop.f32.mrf.mxu0
  %2943 = vmatprep.mubr.bf16.mxu0 0
  %2944 = vmatmul.mubr.bf16.gmra.mxu0 %v1377
  %v2945 = vpop.f32.mrf.mxu0
  %v2946 = vadd.f32 0.0, %v2945
  %v2947 = vpop.f32.mrf.mxu0
  %v2948 = vpop.f32.mrf.mxu0
  %v2949 = vadd.f32 0.0, %v2948
  %v2950 = vpop.f32.mrf.mxu0
  %2951 = vmatprep.mubr.bf16.mxu0 0
  %2952 = vmatmul.mubr.bf16.gmra.mxu0 %v1380
  %v2953 = vpop.f32.mrf.mxu0
  %v2954 = vadd.f32 0.0, %v2953
  %v2955 = vpop.f32.mrf.mxu0
  %v2956 = vpop.f32.mrf.mxu0
  %v2957 = vadd.f32 0.0, %v2956
  %v2958 = vpop.f32.mrf.mxu0
  %2959 = vmatprep.mubr.bf16.mxu0 0
  %2960 = vmatmul.mubr.bf16.gmra.mxu0 %v1383
  %v2961 = vpop.f32.mrf.mxu0
  %v2962 = vadd.f32 0.0, %v2961
  %v2963 = vpop.f32.mrf.mxu0
  %v2964 = vpop.f32.mrf.mxu0
  %v2965 = vadd.f32 0.0, %v2964
  %v2966 = vpop.f32.mrf.mxu0
  %2967 = vmatprep.mubr.bf16.mxu0 0
  %2968 = vmatmul.mubr.bf16.gmra.mxu0 %v1386
  %v2969 = vpop.f32.mrf.mxu0
  %v2970 = vadd.f32 0.0, %v2969
  %v2971 = vpop.f32.mrf.mxu0
  %v2972 = vpop.f32.mrf.mxu0
  %v2973 = vadd.f32 0.0, %v2972
  %v2974 = vpop.f32.mrf.mxu0
  %2975 = vmatprep.mubr.bf16.mxu0 0
  %2976 = vmatmul.mubr.bf16.gmra.mxu0 %v1389
  %v2977 = vpop.f32.mrf.mxu0
  %v2978 = vadd.f32 0.0, %v2977
  %v2979 = vpop.f32.mrf.mxu0
  %v2980 = vpop.f32.mrf.mxu0
  %v2981 = vadd.f32 0.0, %v2980
  %v2982 = vpop.f32.mrf.mxu0
  %2983 = vmatprep.mubr.bf16.mxu0 0
  %2984 = vmatmul.mubr.bf16.gmra.mxu0 %v1392
  %v2985 = vpop.f32.mrf.mxu0
  %v2986 = vadd.f32 0.0, %v2985
  %v2987 = vpop.f32.mrf.mxu0
  %v2988 = vpop.f32.mrf.mxu0
  %v2989 = vadd.f32 0.0, %v2988
  %v2990 = vpop.f32.mrf.mxu0
  %2991 = vmatprep.mubr.bf16.mxu0 0
  %2992 = vmatmul.mubr.bf16.gmra.mxu0 %v1395
  %v2993 = vpop.f32.mrf.mxu0
  %v2994 = vadd.f32 0.0, %v2993
  %v2995 = vpop.f32.mrf.mxu0
  %v2996 = vpop.f32.mrf.mxu0
  %v2997 = vadd.f32 0.0, %v2996
  %v2998 = vpop.f32.mrf.mxu0
  %2999 = vmatprep.mubr.bf16.mxu0 0
  %3000 = vmatmul.mubr.bf16.gmra.mxu0 %v1398
  %v3001 = vpop.f32.mrf.mxu0
  %v3002 = vadd.f32 0.0, %v3001
  %v3003 = vpop.f32.mrf.mxu0
  %v3004 = vpop.f32.mrf.mxu0
  %v3005 = vadd.f32 0.0, %v3004
  %v3006 = vpop.f32.mrf.mxu0
  %3007 = vmatprep.mubr.bf16.mxu0 0
  %3008 = vmatmul.mubr.bf16.gmra.mxu0 %v1401
  %v3009 = vpop.f32.mrf.mxu0
  %v3010 = vadd.f32 0.0, %v3009
  %v3011 = vpop.f32.mrf.mxu0
  %v3012 = vpop.f32.mrf.mxu0
  %v3013 = vadd.f32 0.0, %v3012
  %v3014 = vpop.f32.mrf.mxu0
  %3015 = vdwg.mxu0
  %v3024 = vunpack.c.l.b16 %v2814
  %v3025 = vunpack.c.l.b16 %v2815
  %v3026 = vunpack.c.l.b16 %v2816
  %v3027 = vunpack.c.l.b16 %v2817
  %v3028 = vunpack.c.l.b16 %v2818
  %v3029 = vunpack.c.l.b16 %v2819
  %v3030 = vunpack.c.l.b16 %v2820
  %v3031 = vunpack.c.l.b16 %v2821
  %v3032 = vpack.c.b16 %v3025, %v3024
  %v3033 = vpack.c.b16 %v3027, %v3026
  %v3034 = vpack.c.b16 %v3029, %v3028
  %v3035 = vpack.c.b16 %v3031, %v3030
  %3040 = vmatprep.subr.bf16.mxu0 0
  %3041 = vmatpush1.bf16.msra.mxu0 0
  %3042 = vmatprep.subr.bf16.mxu0 0
  %3043 = vmatpush1.bf16.msra.mxu0 0
  %3044 = vmatprep.subr.bf16.mxu0 0
  %3045 = vmatpush1.bf16.msra.mxu0 0
  %3046 = vmatprep.subr.bf16.mxu0 0
  %3047 = vmatpush1.bf16.msra.mxu0 0
  %3048 = vmatprep.subr.bf16.mxu0 0
  %3049 = vmatpush1.bf16.msra.mxu0 %v3035
  %3050 = vmatprep.subr.bf16.mxu0 0
  %3051 = vmatpush1.bf16.msra.mxu0 %v3034
  %3052 = vmatprep.subr.bf16.mxu0 0
  %3053 = vmatpush1.bf16.msra.mxu0 %v3033
  %3054 = vmatprep.subr.bf16.mxu0 0
  %3055 = vmatpush1.bf16.msra.mxu0 %v3032
  %3056 = vmatprep.subr.bf16.mxu0 0
  %3057 = vmatpush2.bf16.msra.mxu0 0
  %3058 = vmatprep.subr.bf16.mxu0 0
  %3059 = vmatpush2.bf16.msra.mxu0 0
  %3060 = vmatprep.subr.bf16.mxu0 0
  %3061 = vmatpush2.bf16.msra.mxu0 0
  %3062 = vmatprep.subr.bf16.mxu0 0
  %3063 = vmatpush2.bf16.msra.mxu0 0
  %3064 = vmatprep.subr.bf16.mxu0 0
  %3065 = vmatpush2.bf16.msra.mxu0 0
  %3066 = vmatprep.subr.bf16.mxu0 0
  %3067 = vmatpush2.bf16.msra.mxu0 0
  %3068 = vmatprep.subr.bf16.mxu0 0
  %3069 = vmatpush2.bf16.msra.mxu0 0
  %3070 = vmatprep.subr.bf16.mxu0 0
  %3071 = vmatpush2.bf16.msra.mxu0 0
  %3072 = vmatprep.mubr.bf16.mxu0 0
  %3073 = vmatmul.mubr.bf16.gmra.mxu0 %v1589
  %v3074 = vpop.f32.mrf.mxu0
  %v3075 = vadd.f32 %v2890, %v3074
  %v3076 = vpop.f32.mrf.mxu0
  %v3077 = vpop.f32.mrf.mxu0
  %v3078 = vadd.f32 %v2893, %v3077
  %v3079 = vpop.f32.mrf.mxu0
  %3080 = vmatprep.mubr.bf16.mxu0 0
  %3081 = vmatmul.mubr.bf16.gmra.mxu0 %v1592
  %v3082 = vpop.f32.mrf.mxu0
  %v3083 = vadd.f32 %v2898, %v3082
  %v3084 = vpop.f32.mrf.mxu0
  %v3085 = vpop.f32.mrf.mxu0
  %v3086 = vadd.f32 %v2901, %v3085
  %v3087 = vpop.f32.mrf.mxu0
  %3088 = vmatprep.mubr.bf16.mxu0 0
  %3089 = vmatmul.mubr.bf16.gmra.mxu0 %v1595
  %v3090 = vpop.f32.mrf.mxu0
  %v3091 = vadd.f32 %v2906, %v3090
  %v3092 = vpop.f32.mrf.mxu0
  %v3093 = vpop.f32.mrf.mxu0
  %v3094 = vadd.f32 %v2909, %v3093
  %v3095 = vpop.f32.mrf.mxu0
  %3096 = vmatprep.mubr.bf16.mxu0 0
  %3097 = vmatmul.mubr.bf16.gmra.mxu0 %v1598
  %v3098 = vpop.f32.mrf.mxu0
  %v3099 = vadd.f32 %v2914, %v3098
  %v3100 = vpop.f32.mrf.mxu0
  %v3101 = vpop.f32.mrf.mxu0
  %v3102 = vadd.f32 %v2917, %v3101
  %v3103 = vpop.f32.mrf.mxu0
  %3104 = vmatprep.mubr.bf16.mxu0 0
  %3105 = vmatmul.mubr.bf16.gmra.mxu0 %v1601
  %v3106 = vpop.f32.mrf.mxu0
  %v3107 = vadd.f32 %v2922, %v3106
  %v3108 = vpop.f32.mrf.mxu0
  %v3109 = vpop.f32.mrf.mxu0
  %v3110 = vadd.f32 %v2925, %v3109
  %v3111 = vpop.f32.mrf.mxu0
  %3112 = vmatprep.mubr.bf16.mxu0 0
  %3113 = vmatmul.mubr.bf16.gmra.mxu0 %v1604
  %v3114 = vpop.f32.mrf.mxu0
  %v3115 = vadd.f32 %v2930, %v3114
  %v3116 = vpop.f32.mrf.mxu0
  %v3117 = vpop.f32.mrf.mxu0
  %v3118 = vadd.f32 %v2933, %v3117
  %v3119 = vpop.f32.mrf.mxu0
  %3120 = vmatprep.mubr.bf16.mxu0 0
  %3121 = vmatmul.mubr.bf16.gmra.mxu0 %v1607
  %v3122 = vpop.f32.mrf.mxu0
  %v3123 = vadd.f32 %v2938, %v3122
  %v3124 = vpop.f32.mrf.mxu0
  %v3125 = vpop.f32.mrf.mxu0
  %v3126 = vadd.f32 %v2941, %v3125
  %v3127 = vpop.f32.mrf.mxu0
  %3128 = vmatprep.mubr.bf16.mxu0 0
  %3129 = vmatmul.mubr.bf16.gmra.mxu0 %v1610
  %v3130 = vpop.f32.mrf.mxu0
  %v3131 = vadd.f32 %v2946, %v3130
  %v3132 = vpop.f32.mrf.mxu0
  %v3133 = vpop.f32.mrf.mxu0
  %v3134 = vadd.f32 %v2949, %v3133
  %v3135 = vpop.f32.mrf.mxu0
  %3136 = vmatprep.mubr.bf16.mxu0 0
  %3137 = vmatmul.mubr.bf16.gmra.mxu0 %v1613
  %v3138 = vpop.f32.mrf.mxu0
  %v3139 = vadd.f32 %v2954, %v3138
  %v3140 = vpop.f32.mrf.mxu0
  %v3141 = vpop.f32.mrf.mxu0
  %v3142 = vadd.f32 %v2957, %v3141
  %v3143 = vpop.f32.mrf.mxu0
  %3144 = vmatprep.mubr.bf16.mxu0 0
  %3145 = vmatmul.mubr.bf16.gmra.mxu0 %v1616
  %v3146 = vpop.f32.mrf.mxu0
  %v3147 = vadd.f32 %v2962, %v3146
  %v3148 = vpop.f32.mrf.mxu0
  %v3149 = vpop.f32.mrf.mxu0
  %v3150 = vadd.f32 %v2965, %v3149
  %v3151 = vpop.f32.mrf.mxu0
  %3152 = vmatprep.mubr.bf16.mxu0 0
  %3153 = vmatmul.mubr.bf16.gmra.mxu0 %v1619
  %v3154 = vpop.f32.mrf.mxu0
  %v3155 = vadd.f32 %v2970, %v3154
  %v3156 = vpop.f32.mrf.mxu0
  %v3157 = vpop.f32.mrf.mxu0
  %v3158 = vadd.f32 %v2973, %v3157
  %v3159 = vpop.f32.mrf.mxu0
  %3160 = vmatprep.mubr.bf16.mxu0 0
  %3161 = vmatmul.mubr.bf16.gmra.mxu0 %v1622
  %v3162 = vpop.f32.mrf.mxu0
  %v3163 = vadd.f32 %v2978, %v3162
  %v3164 = vpop.f32.mrf.mxu0
  %v3165 = vpop.f32.mrf.mxu0
  %v3166 = vadd.f32 %v2981, %v3165
  %v3167 = vpop.f32.mrf.mxu0
  %3168 = vmatprep.mubr.bf16.mxu0 0
  %3169 = vmatmul.mubr.bf16.gmra.mxu0 %v1625
  %v3170 = vpop.f32.mrf.mxu0
  %v3171 = vadd.f32 %v2986, %v3170
  %v3172 = vpop.f32.mrf.mxu0
  %v3173 = vpop.f32.mrf.mxu0
  %v3174 = vadd.f32 %v2989, %v3173
  %v3175 = vpop.f32.mrf.mxu0
  %3176 = vmatprep.mubr.bf16.mxu0 0
  %3177 = vmatmul.mubr.bf16.gmra.mxu0 %v1628
  %v3178 = vpop.f32.mrf.mxu0
  %v3179 = vadd.f32 %v2994, %v3178
  %v3180 = vpop.f32.mrf.mxu0
  %v3181 = vpop.f32.mrf.mxu0
  %v3182 = vadd.f32 %v2997, %v3181
  %v3183 = vpop.f32.mrf.mxu0
  %3184 = vmatprep.mubr.bf16.mxu0 0
  %3185 = vmatmul.mubr.bf16.gmra.mxu0 %v1631
  %v3186 = vpop.f32.mrf.mxu0
  %v3187 = vadd.f32 %v3002, %v3186
  %v3188 = vpop.f32.mrf.mxu0
  %v3189 = vpop.f32.mrf.mxu0
  %v3190 = vadd.f32 %v3005, %v3189
  %v3191 = vpop.f32.mrf.mxu0
  %3192 = vmatprep.mubr.bf16.mxu0 0
  %3193 = vmatmul.mubr.bf16.gmra.mxu0 %v1634
  %v3194 = vpop.f32.mrf.mxu0
  %v3195 = vadd.f32 %v3010, %v3194
  %v3196 = vpop.f32.mrf.mxu0
  %v3197 = vpop.f32.mrf.mxu0
  %v3198 = vadd.f32 %v3013, %v3197
  %v3199 = vpop.f32.mrf.mxu0
  %3200 = vdwg.mxu0
  %s3201 = scalar_lea.vmem %s2, 256
  %v3202 = vld [vmem:[%s3201] sm:$0xf]
  %v3203 = vld [vmem:[%s3201 + $0x4] sm:$0xf]
  %v3204 = vld [vmem:[%s3201 + $0x8] sm:$0xf]
  %v3205 = vld [vmem:[%s3201 + $0xc] sm:$0xf]
  %v3206 = vld [vmem:[%s3201 + $0x10] sm:$0xf]
  %v3207 = vld [vmem:[%s3201 + $0x14] sm:$0xf]
  %v3208 = vld [vmem:[%s3201 + $0x18] sm:$0xf]
  %v3209 = vld [vmem:[%s3201 + $0x1c] sm:$0xf]
  %v3218 = vunpack.c.l.b16 %v3202
  %v3219 = vunpack.c.l.b16 %v3203
  %v3220 = vunpack.c.l.b16 %v3204
  %v3221 = vunpack.c.l.b16 %v3205
  %v3222 = vunpack.c.l.b16 %v3206
  %v3223 = vunpack.c.l.b16 %v3207
  %v3224 = vunpack.c.l.b16 %v3208
  %v3225 = vunpack.c.l.b16 %v3209
  %v3226 = vpack.c.b16 %v3219, %v3218
  %v3227 = vpack.c.b16 %v3221, %v3220
  %v3228 = vpack.c.b16 %v3223, %v3222
  %v3229 = vpack.c.b16 %v3225, %v3224
  %3234 = vmatprep.subr.bf16.mxu0 0
  %3235 = vmatpush1.bf16.msra.mxu0 0
  %3236 = vmatprep.subr.bf16.mxu0 0
  %3237 = vmatpush1.bf16.msra.mxu0 0
  %3238 = vmatprep.subr.bf16.mxu0 0
  %3239 = vmatpush1.bf16.msra.mxu0 0
  %3240 = vmatprep.subr.bf16.mxu0 0
  %3241 = vmatpush1.bf16.msra.mxu0 0
  %3242 = vmatprep.subr.bf16.mxu0 0
  %3243 = vmatpush1.bf16.msra.mxu0 %v3229
  %3244 = vmatprep.subr.bf16.mxu0 0
  %3245 = vmatpush1.bf16.msra.mxu0 %v3228
  %3246 = vmatprep.subr.bf16.mxu0 0
  %3247 = vmatpush1.bf16.msra.mxu0 %v3227
  %3248 = vmatprep.subr.bf16.mxu0 0
  %3249 = vmatpush1.bf16.msra.mxu0 %v3226
  %3250 = vmatprep.subr.bf16.mxu0 0
  %3251 = vmatpush2.bf16.msra.mxu0 0
  %3252 = vmatprep.subr.bf16.mxu0 0
  %3253 = vmatpush2.bf16.msra.mxu0 0
  %3254 = vmatprep.subr.bf16.mxu0 0
  %3255 = vmatpush2.bf16.msra.mxu0 0
  %3256 = vmatprep.subr.bf16.mxu0 0
  %3257 = vmatpush2.bf16.msra.mxu0 0
  %3258 = vmatprep.subr.bf16.mxu0 0
  %3259 = vmatpush2.bf16.msra.mxu0 0
  %3260 = vmatprep.subr.bf16.mxu0 0
  %3261 = vmatpush2.bf16.msra.mxu0 0
  %3262 = vmatprep.subr.bf16.mxu0 0
  %3263 = vmatpush2.bf16.msra.mxu0 0
  %3264 = vmatprep.subr.bf16.mxu0 0
  %3265 = vmatpush2.bf16.msra.mxu0 0
  %3266 = vmatprep.mubr.bf16.mxu0 0
  %3267 = vmatmul.mubr.bf16.gmra.mxu0 %v1831
  %v3268 = vpop.f32.mrf.mxu0
  %v3269 = vadd.f32 0.0, %v3268
  %v3270 = vpop.f32.mrf.mxu0
  %v3271 = vpop.f32.mrf.mxu0
  %v3272 = vadd.f32 0.0, %v3271
  %v3273 = vpop.f32.mrf.mxu0
  %3274 = vmatprep.mubr.bf16.mxu0 0
  %3275 = vmatmul.mubr.bf16.gmra.mxu0 %v1834
  %v3276 = vpop.f32.mrf.mxu0
  %v3277 = vadd.f32 0.0, %v3276
  %v3278 = vpop.f32.mrf.mxu0
  %v3279 = vpop.f32.mrf.mxu0
  %v3280 = vadd.f32 0.0, %v3279
  %v3281 = vpop.f32.mrf.mxu0
  %3282 = vmatprep.mubr.bf16.mxu0 0
  %3283 = vmatmul.mubr.bf16.gmra.mxu0 %v1837
  %v3284 = vpop.f32.mrf.mxu0
  %v3285 = vadd.f32 0.0, %v3284
  %v3286 = vpop.f32.mrf.mxu0
  %v3287 = vpop.f32.mrf.mxu0
  %v3288 = vadd.f32 0.0, %v3287
  %v3289 = vpop.f32.mrf.mxu0
  %3290 = vmatprep.mubr.bf16.mxu0 0
  %3291 = vmatmul.mubr.bf16.gmra.mxu0 %v1840
  %v3292 = vpop.f32.mrf.mxu0
  %v3293 = vadd.f32 0.0, %v3292
  %v3294 = vpop.f32.mrf.mxu0
  %v3295 = vpop.f32.mrf.mxu0
  %v3296 = vadd.f32 0.0, %v3295
  %v3297 = vpop.f32.mrf.mxu0
  %3298 = vmatprep.mubr.bf16.mxu0 0
  %3299 = vmatmul.mubr.bf16.gmra.mxu0 %v1843
  %v3300 = vpop.f32.mrf.mxu0
  %v3301 = vadd.f32 0.0, %v3300
  %v3302 = vpop.f32.mrf.mxu0
  %v3303 = vpop.f32.mrf.mxu0
  %v3304 = vadd.f32 0.0, %v3303
  %v3305 = vpop.f32.mrf.mxu0
  %3306 = vmatprep.mubr.bf16.mxu0 0
  %3307 = vmatmul.mubr.bf16.gmra.mxu0 %v1846
  %v3308 = vpop.f32.mrf.mxu0
  %v3309 = vadd.f32 0.0, %v3308
  %v3310 = vpop.f32.mrf.mxu0
  %v3311 = vpop.f32.mrf.mxu0
  %v3312 = vadd.f32 0.0, %v3311
  %v3313 = vpop.f32.mrf.mxu0
  %3314 = vmatprep.mubr.bf16.mxu0 0
  %3315 = vmatmul.mubr.bf16.gmra.mxu0 %v1849
  %v3316 = vpop.f32.mrf.mxu0
  %v3317 = vadd.f32 0.0, %v3316
  %v3318 = vpop.f32.mrf.mxu0
  %v3319 = vpop.f32.mrf.mxu0
  %v3320 = vadd.f32 0.0, %v3319
  %v3321 = vpop.f32.mrf.mxu0
  %3322 = vmatprep.mubr.bf16.mxu0 0
  %3323 = vmatmul.mubr.bf16.gmra.mxu0 %v1852
  %v3324 = vpop.f32.mrf.mxu0
  %v3325 = vadd.f32 0.0, %v3324
  %v3326 = vpop.f32.mrf.mxu0
  %v3327 = vpop.f32.mrf.mxu0
  %v3328 = vadd.f32 0.0, %v3327
  %v3329 = vpop.f32.mrf.mxu0
  %3330 = vmatprep.mubr.bf16.mxu0 0
  %3331 = vmatmul.mubr.bf16.gmra.mxu0 %v1855
  %v3332 = vpop.f32.mrf.mxu0
  %v3333 = vadd.f32 0.0, %v3332
  %v3334 = vpop.f32.mrf.mxu0
  %v3335 = vpop.f32.mrf.mxu0
  %v3336 = vadd.f32 0.0, %v3335
  %v3337 = vpop.f32.mrf.mxu0
  %3338 = vmatprep.mubr.bf16.mxu0 0
  %3339 = vmatmul.mubr.bf16.gmra.mxu0 %v1858
  %v3340 = vpop.f32.mrf.mxu0
  %v3341 = vadd.f32 0.0, %v3340
  %v3342 = vpop.f32.mrf.mxu0
  %v3343 = vpop.f32.mrf.mxu0
  %v3344 = vadd.f32 0.0, %v3343
  %v3345 = vpop.f32.mrf.mxu0
  %3346 = vmatprep.mubr.bf16.mxu0 0
  %3347 = vmatmul.mubr.bf16.gmra.mxu0 %v1861
  %v3348 = vpop.f32.mrf.mxu0
  %v3349 = vadd.f32 0.0, %v3348
  %v3350 = vpop.f32.mrf.mxu0
  %v3351 = vpop.f32.mrf.mxu0
  %v3352 = vadd.f32 0.0, %v3351
  %v3353 = vpop.f32.mrf.mxu0
  %3354 = vmatprep.mubr.bf16.mxu0 0
  %3355 = vmatmul.mubr.bf16.gmra.mxu0 %v1864
  %v3356 = vpop.f32.mrf.mxu0
  %v3357 = vadd.f32 0.0, %v3356
  %v3358 = vpop.f32.mrf.mxu0
  %v3359 = vpop.f32.mrf.mxu0
  %v3360 = vadd.f32 0.0, %v3359
  %v3361 = vpop.f32.mrf.mxu0
  %3362 = vmatprep.mubr.bf16.mxu0 0
  %3363 = vmatmul.mubr.bf16.gmra.mxu0 %v1867
  %v3364 = vpop.f32.mrf.mxu0
  %v3365 = vadd.f32 0.0, %v3364
  %v3366 = vpop.f32.mrf.mxu0
  %v3367 = vpop.f32.mrf.mxu0
  %v3368 = vadd.f32 0.0, %v3367
  %v3369 = vpop.f32.mrf.mxu0
  %3370 = vmatprep.mubr.bf16.mxu0 0
  %3371 = vmatmul.mubr.bf16.gmra.mxu0 %v1870
  %v3372 = vpop.f32.mrf.mxu0
  %v3373 = vadd.f32 0.0, %v3372
  %v3374 = vpop.f32.mrf.mxu0
  %v3375 = vpop.f32.mrf.mxu0
  %v3376 = vadd.f32 0.0, %v3375
  %v3377 = vpop.f32.mrf.mxu0
  %3378 = vmatprep.mubr.bf16.mxu0 0
  %3379 = vmatmul.mubr.bf16.gmra.mxu0 %v1873
  %v3380 = vpop.f32.mrf.mxu0
  %v3381 = vadd.f32 0.0, %v3380
  %v3382 = vpop.f32.mrf.mxu0
  %v3383 = vpop.f32.mrf.mxu0
  %v3384 = vadd.f32 0.0, %v3383
  %v3385 = vpop.f32.mrf.mxu0
  %3386 = vmatprep.mubr.bf16.mxu0 0
  %3387 = vmatmul.mubr.bf16.gmra.mxu0 %v1876
  %v3388 = vpop.f32.mrf.mxu0
  %v3389 = vadd.f32 0.0, %v3388
  %v3390 = vpop.f32.mrf.mxu0
  %v3391 = vpop.f32.mrf.mxu0
  %v3392 = vadd.f32 0.0, %v3391
  %v3393 = vpop.f32.mrf.mxu0
  %3394 = vdwg.mxu0
  %v3395 = vadd.f32 %v3075, %v3269
  %v3396 = vadd.f32 %v3078, %v3272
  %v3397 = vadd.f32 %v3083, %v3277
  %v3398 = vadd.f32 %v3086, %v3280
  %v3399 = vadd.f32 %v3091, %v3285
  %v3400 = vadd.f32 %v3094, %v3288
  %v3401 = vadd.f32 %v3099, %v3293
  %v3402 = vadd.f32 %v3102, %v3296
  %v3403 = vadd.f32 %v3107, %v3301
  %v3404 = vadd.f32 %v3110, %v3304
  %v3405 = vadd.f32 %v3115, %v3309
  %v3406 = vadd.f32 %v3118, %v3312
  %v3407 = vadd.f32 %v3123, %v3317
  %v3408 = vadd.f32 %v3126, %v3320
  %v3409 = vadd.f32 %v3131, %v3325
  %v3410 = vadd.f32 %v3134, %v3328
  %v3411 = vadd.f32 %v3139, %v3333
  %v3412 = vadd.f32 %v3142, %v3336
  %v3413 = vadd.f32 %v3147, %v3341
  %v3414 = vadd.f32 %v3150, %v3344
  %v3415 = vadd.f32 %v3155, %v3349
  %v3416 = vadd.f32 %v3158, %v3352
  %v3417 = vadd.f32 %v3163, %v3357
  %v3418 = vadd.f32 %v3166, %v3360
  %v3419 = vadd.f32 %v3171, %v3365
  %v3420 = vadd.f32 %v3174, %v3368
  %v3421 = vadd.f32 %v3179, %v3373
  %v3422 = vadd.f32 %v3182, %v3376
  %v3423 = vadd.f32 %v3187, %v3381
  %v3424 = vadd.f32 %v3190, %v3384
  %v3425 = vadd.f32 %v3195, %v3389
  %v3426 = vadd.f32 %v3198, %v3392
  %v3427 = vsel %vm196, 1, 0
  %v3428 = vsel %vm197, 1, 0
  %v3429 = vsel %vm198, 1, 0
  %v3430 = vsel %vm199, 1, 0
  %v3431 = vsel %vm200, 1, 0
  %v3432 = vsel %vm201, 1, 0
  %v3433 = vsel %vm202, 1, 0
  %v3434 = vsel %vm203, 1, 0
  %v3435 = vsel %vm204, 1, 0
  %v3436 = vsel %vm205, 1, 0
  %v3437 = vsel %vm206, 1, 0
  %v3438 = vsel %vm207, 1, 0
  %v3439 = vsel %vm208, 1, 0
  %v3440 = vsel %vm209, 1, 0
  %v3441 = vsel %vm210, 1, 0
  %v3442 = vsel %vm211, 1, 0
  %v3443 = vsel %vm212, 1, 0
  %v3444 = vsel %vm213, 1, 0
  %v3445 = vsel %vm214, 1, 0
  %v3446 = vsel %vm215, 1, 0
  %v3447 = vsel %vm216, 1, 0
  %v3448 = vsel %vm217, 1, 0
  %v3449 = vsel %vm218, 1, 0
  %v3450 = vsel %vm219, 1, 0
  %v3451 = vsel %vm220, 1, 0
  %v3452 = vsel %vm221, 1, 0
  %v3453 = vsel %vm222, 1, 0
  %v3454 = vsel %vm223, 1, 0
  %v3455 = vsel %vm224, 1, 0
  %v3456 = vsel %vm225, 1, 0
  %v3457 = vsel %vm226, 1, 0
  %v3458 = vsel %vm227, 1, 0
  %vm3459 = vcmp.eq.s32.totalorder %v3427, 1
  %vm3460 = vcmp.eq.s32.totalorder %v3428, 1
  %vm3461 = vcmp.eq.s32.totalorder %v3429, 1
  %vm3462 = vcmp.eq.s32.totalorder %v3430, 1
  %vm3463 = vcmp.eq.s32.totalorder %v3431, 1
  %vm3464 = vcmp.eq.s32.totalorder %v3432, 1
  %vm3465 = vcmp.eq.s32.totalorder %v3433, 1
  %vm3466 = vcmp.eq.s32.totalorder %v3434, 1
  %vm3467 = vcmp.eq.s32.totalorder %v3435, 1
  %vm3468 = vcmp.eq.s32.totalorder %v3436, 1
  %vm3469 = vcmp.eq.s32.totalorder %v3437, 1
  %vm3470 = vcmp.eq.s32.totalorder %v3438, 1
  %vm3471 = vcmp.eq.s32.totalorder %v3439, 1
  %vm3472 = vcmp.eq.s32.totalorder %v3440, 1
  %vm3473 = vcmp.eq.s32.totalorder %v3441, 1
  %vm3474 = vcmp.eq.s32.totalorder %v3442, 1
  %vm3475 = vcmp.eq.s32.totalorder %v3443, 1
  %vm3476 = vcmp.eq.s32.totalorder %v3444, 1
  %vm3477 = vcmp.eq.s32.totalorder %v3445, 1
  %vm3478 = vcmp.eq.s32.totalorder %v3446, 1
  %vm3479 = vcmp.eq.s32.totalorder %v3447, 1
  %vm3480 = vcmp.eq.s32.totalorder %v3448, 1
  %vm3481 = vcmp.eq.s32.totalorder %v3449, 1
  %vm3482 = vcmp.eq.s32.totalorder %v3450, 1
  %vm3483 = vcmp.eq.s32.totalorder %v3451, 1
  %vm3484 = vcmp.eq.s32.totalorder %v3452, 1
  %vm3485 = vcmp.eq.s32.totalorder %v3453, 1
  %vm3486 = vcmp.eq.s32.totalorder %v3454, 1
  %vm3487 = vcmp.eq.s32.totalorder %v3455, 1
  %vm3488 = vcmp.eq.s32.totalorder %v3456, 1
  %vm3489 = vcmp.eq.s32.totalorder %v3457, 1
  %vm3490 = vcmp.eq.s32.totalorder %v3458, 1
  %v3491 = vsel %vm3459, %v3425, %v3397
  %v3492 = vsel %vm3460, %v3426, %v3398
  %v3493 = vsel %vm3461, %v3395, %v3399
  %v3494 = vsel %vm3462, %v3396, %v3400
  %v3495 = vsel %vm3463, %v3397, %v3401
  %v3496 = vsel %vm3464, %v3398, %v3402
  %v3497 = vsel %vm3465, %v3399, %v3403
  %v3498 = vsel %vm3466, %v3400, %v3404
  %v3499 = vsel %vm3467, %v3401, %v3405
  %v3500 = vsel %vm3468, %v3402, %v3406
  %v3501 = vsel %vm3469, %v3403, %v3407
  %v3502 = vsel %vm3470, %v3404, %v3408
  %v3503 = vsel %vm3471, %v3405, %v3409
  %v3504 = vsel %vm3472, %v3406, %v3410
  %v3505 = vsel %vm3473, %v3407, %v3411
  %v3506 = vsel %vm3474, %v3408, %v3412
  %v3507 = vsel %vm3475, %v3409, %v3413
  %v3508 = vsel %vm3476, %v3410, %v3414
  %v3509 = vsel %vm3477, %v3411, %v3415
  %v3510 = vsel %vm3478, %v3412, %v3416
  %v3511 = vsel %vm3479, %v3413, %v3417
  %v3512 = vsel %vm3480, %v3414, %v3418
  %v3513 = vsel %vm3481, %v3415, %v3419
  %v3514 = vsel %vm3482, %v3416, %v3420
  %v3515 = vsel %vm3483, %v3417, %v3421
  %v3516 = vsel %vm3484, %v3418, %v3422
  %v3517 = vsel %vm3485, %v3419, %v3423
  %v3518 = vsel %vm3486, %v3420, %v3424
  %v3519 = vsel %vm3487, %v3421, %v3425
  %v3520 = vsel %vm3488, %v3422, %v3426
  %v3521 = vsel %vm3489, %v3423, %v3395
  %v3522 = vsel %vm3490, %v3424, %v3396
  %v3523 = vadd.f32 %v2781, %v3491
  %v3524 = vadd.f32 %v2782, %v3492
  %v3525 = vadd.f32 %v2783, %v3493
  %v3526 = vadd.f32 %v2784, %v3494
  %v3527 = vadd.f32 %v2785, %v3495
  %v3528 = vadd.f32 %v2786, %v3496
  %v3529 = vadd.f32 %v2787, %v3497
  %v3530 = vadd.f32 %v2788, %v3498
  %v3531 = vadd.f32 %v2789, %v3499
  %v3532 = vadd.f32 %v2790, %v3500
  %v3533 = vadd.f32 %v2791, %v3501
  %v3534 = vadd.f32 %v2792, %v3502
  %v3535 = vadd.f32 %v2793, %v3503
  %v3536 = vadd.f32 %v2794, %v3504
  %v3537 = vadd.f32 %v2795, %v3505
  %v3538 = vadd.f32 %v2796, %v3506
  %v3539 = vadd.f32 %v2797, %v3507
  %v3540 = vadd.f32 %v2798, %v3508
  %v3541 = vadd.f32 %v2799, %v3509
  %v3542 = vadd.f32 %v2800, %v3510
  %v3543 = vadd.f32 %v2801, %v3511
  %v3544 = vadd.f32 %v2802, %v3512
  %v3545 = vadd.f32 %v2803, %v3513
  %v3546 = vadd.f32 %v2804, %v3514
  %v3547 = vadd.f32 %v2805, %v3515
  %v3548 = vadd.f32 %v2806, %v3516
  %v3549 = vadd.f32 %v2807, %v3517
  %v3550 = vadd.f32 %v2808, %v3518
  %v3551 = vadd.f32 %v2809, %v3519
  %v3552 = vadd.f32 %v2810, %v3520
  %v3553 = vadd.f32 %v2811, %v3521
  %v3554 = vadd.f32 %v2812, %v3522
  %v3555 = vld [vmem:[%s5 + $0x1] sm:$0x1]
  %v3556 = vlaneseq
  %v3557 = vshrl.u32 %v3556, 7
  %v3558 = vsub.s32 0, %v3557
  %v3559 = vrot.slane %v3555, %v3558
  %v3560 = vadd.f32 %v3523, %v3559
  %v3561 = vadd.f32 %v3524, %v3559
  %v3562 = vadd.f32 %v3525, %v3559
  %v3563 = vadd.f32 %v3526, %v3559
  %v3564 = vadd.f32 %v3527, %v3559
  %v3565 = vadd.f32 %v3528, %v3559
  %v3566 = vadd.f32 %v3529, %v3559
  %v3567 = vadd.f32 %v3530, %v3559
  %v3568 = vadd.f32 %v3531, %v3559
  %v3569 = vadd.f32 %v3532, %v3559
  %v3570 = vadd.f32 %v3533, %v3559
  %v3571 = vadd.f32 %v3534, %v3559
  %v3572 = vadd.f32 %v3535, %v3559
  %v3573 = vadd.f32 %v3536, %v3559
  %v3574 = vadd.f32 %v3537, %v3559
  %v3575 = vadd.f32 %v3538, %v3559
  %v3576 = vadd.f32 %v3539, %v3559
  %v3577 = vadd.f32 %v3540, %v3559
  %v3578 = vadd.f32 %v3541, %v3559
  %v3579 = vadd.f32 %v3542, %v3559
  %v3580 = vadd.f32 %v3543, %v3559
  %v3581 = vadd.f32 %v3544, %v3559
  %v3582 = vadd.f32 %v3545, %v3559
  %v3583 = vadd.f32 %v3546, %v3559
  %v3584 = vadd.f32 %v3547, %v3559
  %v3585 = vadd.f32 %v3548, %v3559
  %v3586 = vadd.f32 %v3549, %v3559
  %v3587 = vadd.f32 %v3550, %v3559
  %v3588 = vadd.f32 %v3551, %v3559
  %v3589 = vadd.f32 %v3552, %v3559
  %v3590 = vadd.f32 %v3553, %v3559
  %v3591 = vadd.f32 %v3554, %v3559
  %v3592 = vsel %vm571, %v3560, 0.0
  %v3593 = vsel %vm571, %v3561, 0.0
  %v3594 = vadd.f32 %v3592, %v3593
  %v3595 = vsel %vm571, %v3562, 0.0
  %v3596 = vadd.f32 %v3594, %v3595
  %v3597 = vsel %vm571, %v3563, 0.0
  %v3598 = vadd.f32 %v3596, %v3597
  %v3599 = vsel %vm571, %v3564, 0.0
  %v3600 = vadd.f32 %v3598, %v3599
  %v3601 = vsel %vm571, %v3565, 0.0
  %v3602 = vadd.f32 %v3600, %v3601
  %v3603 = vsel %vm571, %v3566, 0.0
  %v3604 = vadd.f32 %v3602, %v3603
  %v3605 = vsel %vm571, %v3567, 0.0
  %v3606 = vadd.f32 %v3604, %v3605
  %v3607 = vsel %vm571, %v3568, 0.0
  %v3608 = vadd.f32 %v3606, %v3607
  %v3609 = vsel %vm571, %v3569, 0.0
  %v3610 = vadd.f32 %v3608, %v3609
  %v3611 = vsel %vm571, %v3570, 0.0
  %v3612 = vadd.f32 %v3610, %v3611
  %v3613 = vsel %vm571, %v3571, 0.0
  %v3614 = vadd.f32 %v3612, %v3613
  %v3615 = vsel %vm571, %v3572, 0.0
  %v3616 = vadd.f32 %v3614, %v3615
  %v3617 = vsel %vm571, %v3573, 0.0
  %v3618 = vadd.f32 %v3616, %v3617
  %v3619 = vsel %vm571, %v3574, 0.0
  %v3620 = vadd.f32 %v3618, %v3619
  %v3621 = vsel %vm571, %v3575, 0.0
  %v3622 = vadd.f32 %v3620, %v3621
  %v3623 = vsel %vm571, %v3576, 0.0
  %v3624 = vadd.f32 %v3622, %v3623
  %v3625 = vsel %vm571, %v3577, 0.0
  %v3626 = vadd.f32 %v3624, %v3625
  %v3627 = vsel %vm571, %v3578, 0.0
  %v3628 = vadd.f32 %v3626, %v3627
  %v3629 = vsel %vm571, %v3579, 0.0
  %v3630 = vadd.f32 %v3628, %v3629
  %v3631 = vsel %vm571, %v3580, 0.0
  %v3632 = vadd.f32 %v3630, %v3631
  %v3633 = vsel %vm571, %v3581, 0.0
  %v3634 = vadd.f32 %v3632, %v3633
  %v3635 = vsel %vm571, %v3582, 0.0
  %v3636 = vadd.f32 %v3634, %v3635
  %v3637 = vsel %vm571, %v3583, 0.0
  %v3638 = vadd.f32 %v3636, %v3637
  %v3639 = vsel %vm571, %v3584, 0.0
  %v3640 = vadd.f32 %v3638, %v3639
  %v3641 = vsel %vm571, %v3585, 0.0
  %v3642 = vadd.f32 %v3640, %v3641
  %v3643 = vsel %vm571, %v3586, 0.0
  %v3644 = vadd.f32 %v3642, %v3643
  %v3645 = vsel %vm571, %v3587, 0.0
  %v3646 = vadd.f32 %v3644, %v3645
  %v3647 = vsel %vm571, %v3588, 0.0
  %v3648 = vadd.f32 %v3646, %v3647
  %v3649 = vsel %vm571, %v3589, 0.0
  %v3650 = vadd.f32 %v3648, %v3649
  %v3651 = vsel %vm571, %v3590, 0.0
  %v3652 = vadd.f32 %v3650, %v3651
  %v3653 = vsel %vm571, %v3591, 0.0
  %v3654 = vadd.f32 %v3652, %v3653
  %v3655 = vrot.slane %v3654, 4
  %v3656 = vadd.f32 %v3654, %v3655
  %v3657 = vrot.slane %v3656, 2
  %v3658 = vadd.f32 %v3656, %v3657
  %v3659 = vrot.slane %v3658, 1
  %v3660 = vadd.f32 %v3658, %v3659
  %v3661 = vmul.f32 %v3560, %v3560
  %v3662 = vmul.f32 %v3561, %v3561
  %v3663 = vmul.f32 %v3562, %v3562
  %v3664 = vmul.f32 %v3563, %v3563
  %v3665 = vmul.f32 %v3564, %v3564
  %v3666 = vmul.f32 %v3565, %v3565
  %v3667 = vmul.f32 %v3566, %v3566
  %v3668 = vmul.f32 %v3567, %v3567
  %v3669 = vmul.f32 %v3568, %v3568
  %v3670 = vmul.f32 %v3569, %v3569
  %v3671 = vmul.f32 %v3570, %v3570
  %v3672 = vmul.f32 %v3571, %v3571
  %v3673 = vmul.f32 %v3572, %v3572
  %v3674 = vmul.f32 %v3573, %v3573
  %v3675 = vmul.f32 %v3574, %v3574
  %v3676 = vmul.f32 %v3575, %v3575
  %v3677 = vmul.f32 %v3576, %v3576
  %v3678 = vmul.f32 %v3577, %v3577
  %v3679 = vmul.f32 %v3578, %v3578
  %v3680 = vmul.f32 %v3579, %v3579
  %v3681 = vmul.f32 %v3580, %v3580
  %v3682 = vmul.f32 %v3581, %v3581
  %v3683 = vmul.f32 %v3582, %v3582
  %v3684 = vmul.f32 %v3583, %v3583
  %v3685 = vmul.f32 %v3584, %v3584
  %v3686 = vmul.f32 %v3585, %v3585
  %v3687 = vmul.f32 %v3586, %v3586
  %v3688 = vmul.f32 %v3587, %v3587
  %v3689 = vmul.f32 %v3588, %v3588
  %v3690 = vmul.f32 %v3589, %v3589
  %v3691 = vmul.f32 %v3590, %v3590
  %v3692 = vmul.f32 %v3591, %v3591
  %v3693 = vsel %vm571, %v3661, 0.0
  %v3694 = vsel %vm571, %v3662, 0.0
  %v3695 = vadd.f32 %v3693, %v3694
  %v3696 = vsel %vm571, %v3663, 0.0
  %v3697 = vadd.f32 %v3695, %v3696
  %v3698 = vsel %vm571, %v3664, 0.0
  %v3699 = vadd.f32 %v3697, %v3698
  %v3700 = vsel %vm571, %v3665, 0.0
  %v3701 = vadd.f32 %v3699, %v3700
  %v3702 = vsel %vm571, %v3666, 0.0
  %v3703 = vadd.f32 %v3701, %v3702
  %v3704 = vsel %vm571, %v3667, 0.0
  %v3705 = vadd.f32 %v3703, %v3704
  %v3706 = vsel %vm571, %v3668, 0.0
  %v3707 = vadd.f32 %v3705, %v3706
  %v3708 = vsel %vm571, %v3669, 0.0
  %v3709 = vadd.f32 %v3707, %v3708
  %v3710 = vsel %vm571, %v3670, 0.0
  %v3711 = vadd.f32 %v3709, %v3710
  %v3712 = vsel %vm571, %v3671, 0.0
  %v3713 = vadd.f32 %v3711, %v3712
  %v3714 = vsel %vm571, %v3672, 0.0
  %v3715 = vadd.f32 %v3713, %v3714
  %v3716 = vsel %vm571, %v3673, 0.0
  %v3717 = vadd.f32 %v3715, %v3716
  %v3718 = vsel %vm571, %v3674, 0.0
  %v3719 = vadd.f32 %v3717, %v3718
  %v3720 = vsel %vm571, %v3675, 0.0
  %v3721 = vadd.f32 %v3719, %v3720
  %v3722 = vsel %vm571, %v3676, 0.0
  %v3723 = vadd.f32 %v3721, %v3722
  %v3724 = vsel %vm571, %v3677, 0.0
  %v3725 = vadd.f32 %v3723, %v3724
  %v3726 = vsel %vm571, %v3678, 0.0
  %v3727 = vadd.f32 %v3725, %v3726
  %v3728 = vsel %vm571, %v3679, 0.0
  %v3729 = vadd.f32 %v3727, %v3728
  %v3730 = vsel %vm571, %v3680, 0.0
  %v3731 = vadd.f32 %v3729, %v3730
  %v3732 = vsel %vm571, %v3681, 0.0
  %v3733 = vadd.f32 %v3731, %v3732
  %v3734 = vsel %vm571, %v3682, 0.0
  %v3735 = vadd.f32 %v3733, %v3734
  %v3736 = vsel %vm571, %v3683, 0.0
  %v3737 = vadd.f32 %v3735, %v3736
  %v3738 = vsel %vm571, %v3684, 0.0
  %v3739 = vadd.f32 %v3737, %v3738
  %v3740 = vsel %vm571, %v3685, 0.0
  %v3741 = vadd.f32 %v3739, %v3740
  %v3742 = vsel %vm571, %v3686, 0.0
  %v3743 = vadd.f32 %v3741, %v3742
  %v3744 = vsel %vm571, %v3687, 0.0
  %v3745 = vadd.f32 %v3743, %v3744
  %v3746 = vsel %vm571, %v3688, 0.0
  %v3747 = vadd.f32 %v3745, %v3746
  %v3748 = vsel %vm571, %v3689, 0.0
  %v3749 = vadd.f32 %v3747, %v3748
  %v3750 = vsel %vm571, %v3690, 0.0
  %v3751 = vadd.f32 %v3749, %v3750
  %v3752 = vsel %vm571, %v3691, 0.0
  %v3753 = vadd.f32 %v3751, %v3752
  %v3754 = vsel %vm571, %v3692, 0.0
  %v3755 = vadd.f32 %v3753, %v3754
  %v3756 = vrot.slane %v3755, 4
  %v3757 = vadd.f32 %v3755, %v3756
  %v3758 = vrot.slane %v3757, 2
  %v3759 = vadd.f32 %v3757, %v3758
  %v3760 = vrot.slane %v3759, 1
  %v3761 = vadd.f32 %v3759, %v3760
  %3762 = vrot.lane.b32.xlu0 %v3660, 64
  %v3763 = vpop.permute.xlu0 %3762
  %v3764 = vsel %vm742, %v3763, %v3660
  %3765 = vrot.lane.b32.xlu0 %v3764, 64
  %v3766 = vpop.permute.xlu0 %3765
  %v3767 = vsel %vm742, %v3766, %v3660
  %3769 = vrot.lane.b32.xlu0 %v3767, 96
  %v3770 = vpop.permute.xlu0 %3769
  %v3772 = vadd.f32 %v3660, %v3770
  %3773 = vrot.lane.b32.xlu0 %v3761, 64
  %v3774 = vpop.permute.xlu0 %3773
  %v3775 = vsel %vm742, %v3774, %v3761
  %3776 = vrot.lane.b32.xlu0 %v3775, 64
  %v3777 = vpop.permute.xlu0 %3776
  %v3778 = vsel %vm742, %v3777, %v3761
  %3780 = vrot.lane.b32.xlu0 %v3778, 96
  %v3781 = vpop.permute.xlu0 %3780
  %v3783 = vadd.f32 %v3761, %v3781
  %v3784 = vmul.f32 %v3772, 0.001953125
  %v3785 = vmul.f32 %v3783, 0.001953125
  %v3786 = vmul.f32 %v3784, %v3784
  %v3787 = vsub.f32 %v3785, %v3786
  %v3788 = vld [vmem:[%s6 + $0x1] sm:$0x1]
  %v3789 = vadd.f32 %v3787, 1e-05
  %v3790 = vrsqrt.pop %v3789
  %v3791 = vmul.f32 %v3788, %v3790
  %v3792 = vld [vmem:[%s7 + $0x1] sm:$0x1]
  %v3793 = vmul.f32 %v3784, %v3791
  %v3794 = vsub.f32 %v3792, %v3793
  %v3795 = vlaneseq
  %v3796 = vshrl.u32 %v3795, 7
  %v3797 = vsub.s32 0, %v3796
  %v3798 = vrot.slane %v3791, %v3797
  %v3799 = vmul.f32 %v3560, %v3798
  %v3800 = vmul.f32 %v3561, %v3798
  %v3801 = vmul.f32 %v3562, %v3798
  %v3802 = vmul.f32 %v3563, %v3798
  %v3803 = vmul.f32 %v3564, %v3798
  %v3804 = vmul.f32 %v3565, %v3798
  %v3805 = vmul.f32 %v3566, %v3798
  %v3806 = vmul.f32 %v3567, %v3798
  %v3807 = vmul.f32 %v3568, %v3798
  %v3808 = vmul.f32 %v3569, %v3798
  %v3809 = vmul.f32 %v3570, %v3798
  %v3810 = vmul.f32 %v3571, %v3798
  %v3811 = vmul.f32 %v3572, %v3798
  %v3812 = vmul.f32 %v3573, %v3798
  %v3813 = vmul.f32 %v3574, %v3798
  %v3814 = vmul.f32 %v3575, %v3798
  %v3815 = vmul.f32 %v3576, %v3798
  %v3816 = vmul.f32 %v3577, %v3798
  %v3817 = vmul.f32 %v3578, %v3798
  %v3818 = vmul.f32 %v3579, %v3798
  %v3819 = vmul.f32 %v3580, %v3798
  %v3820 = vmul.f32 %v3581, %v3798
  %v3821 = vmul.f32 %v3582, %v3798
  %v3822 = vmul.f32 %v3583, %v3798
  %v3823 = vmul.f32 %v3584, %v3798
  %v3824 = vmul.f32 %v3585, %v3798
  %v3825 = vmul.f32 %v3586, %v3798
  %v3826 = vmul.f32 %v3587, %v3798
  %v3827 = vmul.f32 %v3588, %v3798
  %v3828 = vmul.f32 %v3589, %v3798
  %v3829 = vmul.f32 %v3590, %v3798
  %v3830 = vmul.f32 %v3591, %v3798
  %v3831 = vlaneseq
  %v3832 = vshrl.u32 %v3831, 7
  %v3833 = vsub.s32 0, %v3832
  %v3834 = vrot.slane %v3794, %v3833
  %v3835 = vadd.f32 %v3799, %v3834
  %v3836 = vadd.f32 %v3800, %v3834
  %v3837 = vadd.f32 %v3801, %v3834
  %v3838 = vadd.f32 %v3802, %v3834
  %v3839 = vadd.f32 %v3803, %v3834
  %v3840 = vadd.f32 %v3804, %v3834
  %v3841 = vadd.f32 %v3805, %v3834
  %v3842 = vadd.f32 %v3806, %v3834
  %v3843 = vadd.f32 %v3807, %v3834
  %v3844 = vadd.f32 %v3808, %v3834
  %v3845 = vadd.f32 %v3809, %v3834
  %v3846 = vadd.f32 %v3810, %v3834
  %v3847 = vadd.f32 %v3811, %v3834
  %v3848 = vadd.f32 %v3812, %v3834
  %v3849 = vadd.f32 %v3813, %v3834
  %v3850 = vadd.f32 %v3814, %v3834
  %v3851 = vadd.f32 %v3815, %v3834
  %v3852 = vadd.f32 %v3816, %v3834
  %v3853 = vadd.f32 %v3817, %v3834
  %v3854 = vadd.f32 %v3818, %v3834
  %v3855 = vadd.f32 %v3819, %v3834
  %v3856 = vadd.f32 %v3820, %v3834
  %v3857 = vadd.f32 %v3821, %v3834
  %v3858 = vadd.f32 %v3822, %v3834
  %v3859 = vadd.f32 %v3823, %v3834
  %v3860 = vadd.f32 %v3824, %v3834
  %v3861 = vadd.f32 %v3825, %v3834
  %v3862 = vadd.f32 %v3826, %v3834
  %v3863 = vadd.f32 %v3827, %v3834
  %v3864 = vadd.f32 %v3828, %v3834
  %v3865 = vadd.f32 %v3829, %v3834
  %v3866 = vadd.f32 %v3830, %v3834
  %vm3867 = vcmp.ge.f32.partialorder %v3835, 0.0
  %vm3868 = vcmp.ge.f32.partialorder %v3836, 0.0
  %vm3869 = vcmp.ge.f32.partialorder %v3837, 0.0
  %vm3870 = vcmp.ge.f32.partialorder %v3838, 0.0
  %vm3871 = vcmp.ge.f32.partialorder %v3839, 0.0
  %vm3872 = vcmp.ge.f32.partialorder %v3840, 0.0
  %vm3873 = vcmp.ge.f32.partialorder %v3841, 0.0
  %vm3874 = vcmp.ge.f32.partialorder %v3842, 0.0
  %vm3875 = vcmp.ge.f32.partialorder %v3843, 0.0
  %vm3876 = vcmp.ge.f32.partialorder %v3844, 0.0
  %vm3877 = vcmp.ge.f32.partialorder %v3845, 0.0
  %vm3878 = vcmp.ge.f32.partialorder %v3846, 0.0
  %vm3879 = vcmp.ge.f32.partialorder %v3847, 0.0
  %vm3880 = vcmp.ge.f32.partialorder %v3848, 0.0
  %vm3881 = vcmp.ge.f32.partialorder %v3849, 0.0
  %vm3882 = vcmp.ge.f32.partialorder %v3850, 0.0
  %vm3883 = vcmp.ge.f32.partialorder %v3851, 0.0
  %vm3884 = vcmp.ge.f32.partialorder %v3852, 0.0
  %vm3885 = vcmp.ge.f32.partialorder %v3853, 0.0
  %vm3886 = vcmp.ge.f32.partialorder %v3854, 0.0
  %vm3887 = vcmp.ge.f32.partialorder %v3855, 0.0
  %vm3888 = vcmp.ge.f32.partialorder %v3856, 0.0
  %vm3889 = vcmp.ge.f32.partialorder %v3857, 0.0
  %vm3890 = vcmp.ge.f32.partialorder %v3858, 0.0
  %vm3891 = vcmp.ge.f32.partialorder %v3859, 0.0
  %vm3892 = vcmp.ge.f32.partialorder %v3860, 0.0
  %vm3893 = vcmp.ge.f32.partialorder %v3861, 0.0
  %vm3894 = vcmp.ge.f32.partialorder %v3862, 0.0
  %vm3895 = vcmp.ge.f32.partialorder %v3863, 0.0
  %vm3896 = vcmp.ge.f32.partialorder %v3864, 0.0
  %vm3897 = vcmp.ge.f32.partialorder %v3865, 0.0
  %vm3898 = vcmp.ge.f32.partialorder %v3866, 0.0
  %v3899 = vmul.f32 %v3835, 0.2
  %v3900 = vmul.f32 %v3836, 0.2
  %v3901 = vmul.f32 %v3837, 0.2
  %v3902 = vmul.f32 %v3838, 0.2
  %v3903 = vmul.f32 %v3839, 0.2
  %v3904 = vmul.f32 %v3840, 0.2
  %v3905 = vmul.f32 %v3841, 0.2
  %v3906 = vmul.f32 %v3842, 0.2
  %v3907 = vmul.f32 %v3843, 0.2
  %v3908 = vmul.f32 %v3844, 0.2
  %v3909 = vmul.f32 %v3845, 0.2
  %v3910 = vmul.f32 %v3846, 0.2
  %v3911 = vmul.f32 %v3847, 0.2
  %v3912 = vmul.f32 %v3848, 0.2
  %v3913 = vmul.f32 %v3849, 0.2
  %v3914 = vmul.f32 %v3850, 0.2
  %v3915 = vmul.f32 %v3851, 0.2
  %v3916 = vmul.f32 %v3852, 0.2
  %v3917 = vmul.f32 %v3853, 0.2
  %v3918 = vmul.f32 %v3854, 0.2
  %v3919 = vmul.f32 %v3855, 0.2
  %v3920 = vmul.f32 %v3856, 0.2
  %v3921 = vmul.f32 %v3857, 0.2
  %v3922 = vmul.f32 %v3858, 0.2
  %v3923 = vmul.f32 %v3859, 0.2
  %v3924 = vmul.f32 %v3860, 0.2
  %v3925 = vmul.f32 %v3861, 0.2
  %v3926 = vmul.f32 %v3862, 0.2
  %v3927 = vmul.f32 %v3863, 0.2
  %v3928 = vmul.f32 %v3864, 0.2
  %v3929 = vmul.f32 %v3865, 0.2
  %v3930 = vmul.f32 %v3866, 0.2
  %v3931 = vsel %vm3867, %v3835, %v3899
  %v3932 = vsel %vm3868, %v3836, %v3900
  %v3933 = vsel %vm3869, %v3837, %v3901
  %v3934 = vsel %vm3870, %v3838, %v3902
  %v3935 = vsel %vm3871, %v3839, %v3903
  %v3936 = vsel %vm3872, %v3840, %v3904
  %v3937 = vsel %vm3873, %v3841, %v3905
  %v3938 = vsel %vm3874, %v3842, %v3906
  %v3939 = vsel %vm3875, %v3843, %v3907
  %v3940 = vsel %vm3876, %v3844, %v3908
  %v3941 = vsel %vm3877, %v3845, %v3909
  %v3942 = vsel %vm3878, %v3846, %v3910
  %v3943 = vsel %vm3879, %v3847, %v3911
  %v3944 = vsel %vm3880, %v3848, %v3912
  %v3945 = vsel %vm3881, %v3849, %v3913
  %v3946 = vsel %vm3882, %v3850, %v3914
  %v3947 = vsel %vm3883, %v3851, %v3915
  %v3948 = vsel %vm3884, %v3852, %v3916
  %v3949 = vsel %vm3885, %v3853, %v3917
  %v3950 = vsel %vm3886, %v3854, %v3918
  %v3951 = vsel %vm3887, %v3855, %v3919
  %v3952 = vsel %vm3888, %v3856, %v3920
  %v3953 = vsel %vm3889, %v3857, %v3921
  %v3954 = vsel %vm3890, %v3858, %v3922
  %v3955 = vsel %vm3891, %v3859, %v3923
  %v3956 = vsel %vm3892, %v3860, %v3924
  %v3957 = vsel %vm3893, %v3861, %v3925
  %v3958 = vsel %vm3894, %v3862, %v3926
  %v3959 = vsel %vm3895, %v3863, %v3927
  %v3960 = vsel %vm3896, %v3864, %v3928
  %v3961 = vsel %vm3897, %v3865, %v3929
  %v3962 = vsel %vm3898, %v3866, %v3930
  %v3963 = vrot.slane %v3931, 7
  %v3964 = vrot.slane %v3932, 7
  %v3965 = vrot.slane %v3933, 7
  %v3966 = vrot.slane %v3934, 7
  %v3967 = vrot.slane %v3935, 7
  %v3968 = vrot.slane %v3936, 7
  %v3969 = vrot.slane %v3937, 7
  %v3970 = vrot.slane %v3938, 7
  %v3971 = vrot.slane %v3939, 7
  %v3972 = vrot.slane %v3940, 7
  %v3973 = vrot.slane %v3941, 7
  %v3974 = vrot.slane %v3942, 7
  %v3975 = vrot.slane %v3943, 7
  %v3976 = vrot.slane %v3944, 7
  %v3977 = vrot.slane %v3945, 7
  %v3978 = vrot.slane %v3946, 7
  %v3979 = vrot.slane %v3947, 7
  %v3980 = vrot.slane %v3948, 7
  %v3981 = vrot.slane %v3949, 7
  %v3982 = vrot.slane %v3950, 7
  %v3983 = vrot.slane %v3951, 7
  %v3984 = vrot.slane %v3952, 7
  %v3985 = vrot.slane %v3953, 7
  %v3986 = vrot.slane %v3954, 7
  %v3987 = vrot.slane %v3955, 7
  %v3988 = vrot.slane %v3956, 7
  %v3989 = vrot.slane %v3957, 7
  %v3990 = vrot.slane %v3958, 7
  %v3991 = vrot.slane %v3959, 7
  %v3992 = vrot.slane %v3960, 7
  %v3993 = vrot.slane %v3961, 7
  %v3994 = vrot.slane %v3962, 7
  %v3995 = vsel %vm976, %v3993, %v3994
  %v3996 = vsel %vm976, %v3992, %v3993
  %v3997 = vsel %vm976, %v3991, %v3992
  %v3998 = vsel %vm976, %v3990, %v3991
  %v3999 = vsel %vm976, %v3989, %v3990
  %v4000 = vsel %vm976, %v3988, %v3989
  %v4001 = vsel %vm976, %v3987, %v3988
  %v4002 = vsel %vm976, %v3986, %v3987
  %v4003 = vsel %vm976, %v3985, %v3986
  %v4004 = vsel %vm976, %v3984, %v3985
  %v4005 = vsel %vm976, %v3983, %v3984
  %v4006 = vsel %vm976, %v3982, %v3983
  %v4007 = vsel %vm976, %v3981, %v3982
  %v4008 = vsel %vm976, %v3980, %v3981
  %v4009 = vsel %vm976, %v3979, %v3980
  %v4010 = vsel %vm976, %v3978, %v3979
  %v4011 = vsel %vm976, %v3977, %v3978
  %v4012 = vsel %vm976, %v3976, %v3977
  %v4013 = vsel %vm976, %v3975, %v3976
  %v4014 = vsel %vm976, %v3974, %v3975
  %v4015 = vsel %vm976, %v3973, %v3974
  %v4016 = vsel %vm976, %v3972, %v3973
  %v4017 = vsel %vm976, %v3971, %v3972
  %v4018 = vsel %vm976, %v3970, %v3971
  %v4019 = vsel %vm976, %v3969, %v3970
  %v4020 = vsel %vm976, %v3968, %v3969
  %v4021 = vsel %vm976, %v3967, %v3968
  %v4022 = vsel %vm976, %v3966, %v3967
  %v4023 = vsel %vm976, %v3965, %v3966
  %v4024 = vsel %vm976, %v3964, %v3965
  %v4025 = vsel %vm976, %v3963, %v3964
  %v4026 = vsel %vm976, %v3994, %v3963
  %v4027 = vrot.slane %v3931, 1
  %v4028 = vrot.slane %v3932, 1
  %v4029 = vrot.slane %v3933, 1
  %v4030 = vrot.slane %v3934, 1
  %v4031 = vrot.slane %v3935, 1
  %v4032 = vrot.slane %v3936, 1
  %v4033 = vrot.slane %v3937, 1
  %v4034 = vrot.slane %v3938, 1
  %v4035 = vrot.slane %v3939, 1
  %v4036 = vrot.slane %v3940, 1
  %v4037 = vrot.slane %v3941, 1
  %v4038 = vrot.slane %v3942, 1
  %v4039 = vrot.slane %v3943, 1
  %v4040 = vrot.slane %v3944, 1
  %v4041 = vrot.slane %v3945, 1
  %v4042 = vrot.slane %v3946, 1
  %v4043 = vrot.slane %v3947, 1
  %v4044 = vrot.slane %v3948, 1
  %v4045 = vrot.slane %v3949, 1
  %v4046 = vrot.slane %v3950, 1
  %v4047 = vrot.slane %v3951, 1
  %v4048 = vrot.slane %v3952, 1
  %v4049 = vrot.slane %v3953, 1
  %v4050 = vrot.slane %v3954, 1
  %v4051 = vrot.slane %v3955, 1
  %v4052 = vrot.slane %v3956, 1
  %v4053 = vrot.slane %v3957, 1
  %v4054 = vrot.slane %v3958, 1
  %v4055 = vrot.slane %v3959, 1
  %v4056 = vrot.slane %v3960, 1
  %v4057 = vrot.slane %v3961, 1
  %v4058 = vrot.slane %v3962, 1
  %v4059 = vsel %vm1041, %v4057, %v4058
  %v4060 = vsel %vm1041, %v4056, %v4057
  %v4061 = vsel %vm1041, %v4055, %v4056
  %v4062 = vsel %vm1041, %v4054, %v4055
  %v4063 = vsel %vm1041, %v4053, %v4054
  %v4064 = vsel %vm1041, %v4052, %v4053
  %v4065 = vsel %vm1041, %v4051, %v4052
  %v4066 = vsel %vm1041, %v4050, %v4051
  %v4067 = vsel %vm1041, %v4049, %v4050
  %v4068 = vsel %vm1041, %v4048, %v4049
  %v4069 = vsel %vm1041, %v4047, %v4048
  %v4070 = vsel %vm1041, %v4046, %v4047
  %v4071 = vsel %vm1041, %v4045, %v4046
  %v4072 = vsel %vm1041, %v4044, %v4045
  %v4073 = vsel %vm1041, %v4043, %v4044
  %v4074 = vsel %vm1041, %v4042, %v4043
  %v4075 = vsel %vm1041, %v4041, %v4042
  %v4076 = vsel %vm1041, %v4040, %v4041
  %v4077 = vsel %vm1041, %v4039, %v4040
  %v4078 = vsel %vm1041, %v4038, %v4039
  %v4079 = vsel %vm1041, %v4037, %v4038
  %v4080 = vsel %vm1041, %v4036, %v4037
  %v4081 = vsel %vm1041, %v4035, %v4036
  %v4082 = vsel %vm1041, %v4034, %v4035
  %v4083 = vsel %vm1041, %v4033, %v4034
  %v4084 = vsel %vm1041, %v4032, %v4033
  %v4085 = vsel %vm1041, %v4031, %v4032
  %v4086 = vsel %vm1041, %v4030, %v4031
  %v4087 = vsel %vm1041, %v4029, %v4030
  %v4088 = vsel %vm1041, %v4028, %v4029
  %v4089 = vsel %vm1041, %v4027, %v4028
  %v4090 = vsel %vm1041, %v4058, %v4027
  %v4091 = vsel %vm1106, %v4089, %v4026
  %v4092 = vsel %vm1107, %v4088, %v4025
  %v4093 = vsel %vm1108, %v4087, %v4024
  %v4094 = vsel %vm1109, %v4086, %v4023
  %v4095 = vsel %vm1110, %v4085, %v4022
  %v4096 = vsel %vm1111, %v4084, %v4021
  %v4097 = vsel %vm1112, %v4083, %v4020
  %v4098 = vsel %vm1113, %v4082, %v4019
  %v4099 = vsel %vm1114, %v4081, %v4018
  %v4100 = vsel %vm1115, %v4080, %v4017
  %v4101 = vsel %vm1116, %v4079, %v4016
  %v4102 = vsel %vm1117, %v4078, %v4015
  %v4103 = vsel %vm1118, %v4077, %v4014
  %v4104 = vsel %vm1119, %v4076, %v4013
  %v4105 = vsel %vm1120, %v4075, %v4012
  %v4106 = vsel %vm1121, %v4074, %v4011
  %v4107 = vsel %vm1122, %v4073, %v4010
  %v4108 = vsel %vm1123, %v4072, %v4009
  %v4109 = vsel %vm1124, %v4071, %v4008
  %v4110 = vsel %vm1125, %v4070, %v4007
  %v4111 = vsel %vm1126, %v4069, %v4006
  %v4112 = vsel %vm1127, %v4068, %v4005
  %v4113 = vsel %vm1128, %v4067, %v4004
  %v4114 = vsel %vm1129, %v4066, %v4003
  %v4115 = vsel %vm1130, %v4065, %v4002
  %v4116 = vsel %vm1131, %v4064, %v4001
  %v4117 = vsel %vm1132, %v4063, %v4000
  %v4118 = vsel %vm1133, %v4062, %v3999
  %v4119 = vsel %vm1134, %v4061, %v3998
  %v4120 = vsel %vm1135, %v4060, %v3997
  %v4121 = vsel %vm1136, %v4059, %v3996
  %v4122 = vsel %vm1137, %v4090, %v3995
  %v4123 = vsel %vm1202, %v4026, %v4089
  %v4124 = vsel %vm1203, %v4025, %v4088
  %v4125 = vsel %vm1204, %v4024, %v4087
  %v4126 = vsel %vm1205, %v4023, %v4086
  %v4127 = vsel %vm1206, %v4022, %v4085
  %v4128 = vsel %vm1207, %v4021, %v4084
  %v4129 = vsel %vm1208, %v4020, %v4083
  %v4130 = vsel %vm1209, %v4019, %v4082
  %v4131 = vsel %vm1210, %v4018, %v4081
  %v4132 = vsel %vm1211, %v4017, %v4080
  %v4133 = vsel %vm1212, %v4016, %v4079
  %v4134 = vsel %vm1213, %v4015, %v4078
  %v4135 = vsel %vm1214, %v4014, %v4077
  %v4136 = vsel %vm1215, %v4013, %v4076
  %v4137 = vsel %vm1216, %v4012, %v4075
  %v4138 = vsel %vm1217, %v4011, %v4074
  %v4139 = vsel %vm1218, %v4010, %v4073
  %v4140 = vsel %vm1219, %v4009, %v4072
  %v4141 = vsel %vm1220, %v4008, %v4071
  %v4142 = vsel %vm1221, %v4007, %v4070
  %v4143 = vsel %vm1222, %v4006, %v4069
  %v4144 = vsel %vm1223, %v4005, %v4068
  %v4145 = vsel %vm1224, %v4004, %v4067
  %v4146 = vsel %vm1225, %v4003, %v4066
  %v4147 = vsel %vm1226, %v4002, %v4065
  %v4148 = vsel %vm1227, %v4001, %v4064
  %v4149 = vsel %vm1228, %v4000, %v4063
  %v4150 = vsel %vm1229, %v3999, %v4062
  %v4151 = vsel %vm1230, %v3998, %v4061
  %v4152 = vsel %vm1231, %v3997, %v4060
  %v4153 = vsel %vm1232, %v3996, %v4059
  %v4154 = vsel %vm1233, %v3995, %v4090
  %v4155 = vpack.c.bf16 %v4092, %v4091
  %v4156 = vpack.c.bf16 %v4094, %v4093
  %v4157 = vpack.c.bf16 %v4096, %v4095
  %v4158 = vpack.c.bf16 %v4098, %v4097
  %v4159 = vpack.c.bf16 %v4100, %v4099
  %v4160 = vpack.c.bf16 %v4102, %v4101
  %v4161 = vpack.c.bf16 %v4104, %v4103
  %v4162 = vpack.c.bf16 %v4106, %v4105
  %v4163 = vpack.c.bf16 %v4108, %v4107
  %v4164 = vpack.c.bf16 %v4110, %v4109
  %v4165 = vpack.c.bf16 %v4112, %v4111
  %v4166 = vpack.c.bf16 %v4114, %v4113
  %v4167 = vpack.c.bf16 %v4116, %v4115
  %v4168 = vpack.c.bf16 %v4118, %v4117
  %v4169 = vpack.c.bf16 %v4120, %v4119
  %v4170 = vpack.c.bf16 %v4122, %v4121
  %v4171 = vpack.c.bf16 %v3932, %v3931
  %v4172 = vpack.c.bf16 %v3934, %v3933
  %v4173 = vpack.c.bf16 %v3936, %v3935
  %v4174 = vpack.c.bf16 %v3938, %v3937
  %v4175 = vpack.c.bf16 %v3940, %v3939
  %v4176 = vpack.c.bf16 %v3942, %v3941
  %v4177 = vpack.c.bf16 %v3944, %v3943
  %v4178 = vpack.c.bf16 %v3946, %v3945
  %v4179 = vpack.c.bf16 %v3948, %v3947
  %v4180 = vpack.c.bf16 %v3950, %v3949
  %v4181 = vpack.c.bf16 %v3952, %v3951
  %v4182 = vpack.c.bf16 %v3954, %v3953
  %v4183 = vpack.c.bf16 %v3956, %v3955
  %v4184 = vpack.c.bf16 %v3958, %v3957
  %v4185 = vpack.c.bf16 %v3960, %v3959
  %v4186 = vpack.c.bf16 %v3962, %v3961
  %v4187 = vpack.c.bf16 %v4124, %v4123
  %v4188 = vpack.c.bf16 %v4126, %v4125
  %v4189 = vpack.c.bf16 %v4128, %v4127
  %v4190 = vpack.c.bf16 %v4130, %v4129
  %v4191 = vpack.c.bf16 %v4132, %v4131
  %v4192 = vpack.c.bf16 %v4134, %v4133
  %v4193 = vpack.c.bf16 %v4136, %v4135
  %v4194 = vpack.c.bf16 %v4138, %v4137
  %v4195 = vpack.c.bf16 %v4140, %v4139
  %v4196 = vpack.c.bf16 %v4142, %v4141
  %v4197 = vpack.c.bf16 %v4144, %v4143
  %v4198 = vpack.c.bf16 %v4146, %v4145
  %v4199 = vpack.c.bf16 %v4148, %v4147
  %v4200 = vpack.c.bf16 %v4150, %v4149
  %v4201 = vpack.c.bf16 %v4152, %v4151
  %v4202 = vpack.c.bf16 %v4154, %v4153
  %s4203 = scalar_lea.vmem %s2, 288
  %v4204 = vld [vmem:[%s4203] sm:$0xf]
  %v4205 = vld [vmem:[%s4203 + $0x4] sm:$0xf]
  %v4206 = vld [vmem:[%s4203 + $0x8] sm:$0xf]
  %v4207 = vld [vmem:[%s4203 + $0xc] sm:$0xf]
  %v4208 = vld [vmem:[%s4203 + $0x10] sm:$0xf]
  %v4209 = vld [vmem:[%s4203 + $0x14] sm:$0xf]
  %v4210 = vld [vmem:[%s4203 + $0x18] sm:$0xf]
  %v4211 = vld [vmem:[%s4203 + $0x1c] sm:$0xf]
  %s4212 = scalar_lea.vmem %s2, 320
  %v4213 = vld [vmem:[%s4212] sm:$0xf]
  %v4214 = vld [vmem:[%s4212 + $0x4] sm:$0xf]
  %v4215 = vld [vmem:[%s4212 + $0x8] sm:$0xf]
  %v4216 = vld [vmem:[%s4212 + $0xc] sm:$0xf]
  %v4217 = vld [vmem:[%s4212 + $0x10] sm:$0xf]
  %v4218 = vld [vmem:[%s4212 + $0x14] sm:$0xf]
  %v4219 = vld [vmem:[%s4212 + $0x18] sm:$0xf]
  %v4220 = vld [vmem:[%s4212 + $0x1c] sm:$0xf]
  %v4229 = vunpack.c.l.b16 %v4213
  %v4230 = vunpack.c.l.b16 %v4214
  %v4231 = vunpack.c.l.b16 %v4215
  %v4232 = vunpack.c.l.b16 %v4216
  %v4233 = vunpack.c.l.b16 %v4217
  %v4234 = vunpack.c.l.b16 %v4218
  %v4235 = vunpack.c.l.b16 %v4219
  %v4236 = vunpack.c.l.b16 %v4220
  %v4237 = vpack.c.b16 %v4230, %v4229
  %v4238 = vpack.c.b16 %v4232, %v4231
  %v4239 = vpack.c.b16 %v4234, %v4233
  %v4240 = vpack.c.b16 %v4236, %v4235
  %v4246 = vsel %vm571, %v4171, 0
  %v4249 = vsel %vm571, %v4172, 0
  %v4252 = vsel %vm571, %v4173, 0
  %v4255 = vsel %vm571, %v4174, 0
  %v4258 = vsel %vm571, %v4175, 0
  %v4261 = vsel %vm571, %v4176, 0
  %v4264 = vsel %vm571, %v4177, 0
  %v4267 = vsel %vm571, %v4178, 0
  %v4270 = vsel %vm571, %v4179, 0
  %v4273 = vsel %vm571, %v4180, 0
  %v4276 = vsel %vm571, %v4181, 0
  %v4279 = vsel %vm571, %v4182, 0
  %v4282 = vsel %vm571, %v4183, 0
  %v4285 = vsel %vm571, %v4184, 0
  %v4288 = vsel %vm571, %v4185, 0
  %v4291 = vsel %vm571, %v4186, 0
  %4293 = vmatprep.subr.bf16.mxu0 0
  %4294 = vmatpush1.bf16.msra.mxu0 0
  %4295 = vmatprep.subr.bf16.mxu0 0
  %4296 = vmatpush1.bf16.msra.mxu0 0
  %4297 = vmatprep.subr.bf16.mxu0 0
  %4298 = vmatpush1.bf16.msra.mxu0 0
  %4299 = vmatprep.subr.bf16.mxu0 0
  %4300 = vmatpush1.bf16.msra.mxu0 0
  %4301 = vmatprep.subr.bf16.mxu0 0
  %4302 = vmatpush1.bf16.msra.mxu0 %v4240
  %4303 = vmatprep.subr.bf16.mxu0 0
  %4304 = vmatpush1.bf16.msra.mxu0 %v4239
  %4305 = vmatprep.subr.bf16.mxu0 0
  %4306 = vmatpush1.bf16.msra.mxu0 %v4238
  %4307 = vmatprep.subr.bf16.mxu0 0
  %4308 = vmatpush1.bf16.msra.mxu0 %v4237
  %4309 = vmatprep.subr.bf16.mxu0 0
  %4310 = vmatpush2.bf16.msra.mxu0 0
  %4311 = vmatprep.subr.bf16.mxu0 0
  %4312 = vmatpush2.bf16.msra.mxu0 0
  %4313 = vmatprep.subr.bf16.mxu0 0
  %4314 = vmatpush2.bf16.msra.mxu0 0
  %4315 = vmatprep.subr.bf16.mxu0 0
  %4316 = vmatpush2.bf16.msra.mxu0 0
  %4317 = vmatprep.subr.bf16.mxu0 0
  %4318 = vmatpush2.bf16.msra.mxu0 0
  %4319 = vmatprep.subr.bf16.mxu0 0
  %4320 = vmatpush2.bf16.msra.mxu0 0
  %4321 = vmatprep.subr.bf16.mxu0 0
  %4322 = vmatpush2.bf16.msra.mxu0 0
  %4323 = vmatprep.subr.bf16.mxu0 0
  %4324 = vmatpush2.bf16.msra.mxu0 0
  %4325 = vmatprep.mubr.bf16.mxu0 0
  %4326 = vmatmul.mubr.bf16.gmra.mxu0 %v4246
  %v4327 = vpop.f32.mrf.mxu0
  %v4328 = vadd.f32 0.0, %v4327
  %v4329 = vpop.f32.mrf.mxu0
  %v4330 = vpop.f32.mrf.mxu0
  %v4331 = vadd.f32 0.0, %v4330
  %v4332 = vpop.f32.mrf.mxu0
  %4333 = vmatprep.mubr.bf16.mxu0 0
  %4334 = vmatmul.mubr.bf16.gmra.mxu0 %v4249
  %v4335 = vpop.f32.mrf.mxu0
  %v4336 = vadd.f32 0.0, %v4335
  %v4337 = vpop.f32.mrf.mxu0
  %v4338 = vpop.f32.mrf.mxu0
  %v4339 = vadd.f32 0.0, %v4338
  %v4340 = vpop.f32.mrf.mxu0
  %4341 = vmatprep.mubr.bf16.mxu0 0
  %4342 = vmatmul.mubr.bf16.gmra.mxu0 %v4252
  %v4343 = vpop.f32.mrf.mxu0
  %v4344 = vadd.f32 0.0, %v4343
  %v4345 = vpop.f32.mrf.mxu0
  %v4346 = vpop.f32.mrf.mxu0
  %v4347 = vadd.f32 0.0, %v4346
  %v4348 = vpop.f32.mrf.mxu0
  %4349 = vmatprep.mubr.bf16.mxu0 0
  %4350 = vmatmul.mubr.bf16.gmra.mxu0 %v4255
  %v4351 = vpop.f32.mrf.mxu0
  %v4352 = vadd.f32 0.0, %v4351
  %v4353 = vpop.f32.mrf.mxu0
  %v4354 = vpop.f32.mrf.mxu0
  %v4355 = vadd.f32 0.0, %v4354
  %v4356 = vpop.f32.mrf.mxu0
  %4357 = vmatprep.mubr.bf16.mxu0 0
  %4358 = vmatmul.mubr.bf16.gmra.mxu0 %v4258
  %v4359 = vpop.f32.mrf.mxu0
  %v4360 = vadd.f32 0.0, %v4359
  %v4361 = vpop.f32.mrf.mxu0
  %v4362 = vpop.f32.mrf.mxu0
  %v4363 = vadd.f32 0.0, %v4362
  %v4364 = vpop.f32.mrf.mxu0
  %4365 = vmatprep.mubr.bf16.mxu0 0
  %4366 = vmatmul.mubr.bf16.gmra.mxu0 %v4261
  %v4367 = vpop.f32.mrf.mxu0
  %v4368 = vadd.f32 0.0, %v4367
  %v4369 = vpop.f32.mrf.mxu0
  %v4370 = vpop.f32.mrf.mxu0
  %v4371 = vadd.f32 0.0, %v4370
  %v4372 = vpop.f32.mrf.mxu0
  %4373 = vmatprep.mubr.bf16.mxu0 0
  %4374 = vmatmul.mubr.bf16.gmra.mxu0 %v4264
  %v4375 = vpop.f32.mrf.mxu0
  %v4376 = vadd.f32 0.0, %v4375
  %v4377 = vpop.f32.mrf.mxu0
  %v4378 = vpop.f32.mrf.mxu0
  %v4379 = vadd.f32 0.0, %v4378
  %v4380 = vpop.f32.mrf.mxu0
  %4381 = vmatprep.mubr.bf16.mxu0 0
  %4382 = vmatmul.mubr.bf16.gmra.mxu0 %v4267
  %v4383 = vpop.f32.mrf.mxu0
  %v4384 = vadd.f32 0.0, %v4383
  %v4385 = vpop.f32.mrf.mxu0
  %v4386 = vpop.f32.mrf.mxu0
  %v4387 = vadd.f32 0.0, %v4386
  %v4388 = vpop.f32.mrf.mxu0
  %4389 = vmatprep.mubr.bf16.mxu0 0
  %4390 = vmatmul.mubr.bf16.gmra.mxu0 %v4270
  %v4391 = vpop.f32.mrf.mxu0
  %v4392 = vadd.f32 0.0, %v4391
  %v4393 = vpop.f32.mrf.mxu0
  %v4394 = vpop.f32.mrf.mxu0
  %v4395 = vadd.f32 0.0, %v4394
  %v4396 = vpop.f32.mrf.mxu0
  %4397 = vmatprep.mubr.bf16.mxu0 0
  %4398 = vmatmul.mubr.bf16.gmra.mxu0 %v4273
  %v4399 = vpop.f32.mrf.mxu0
  %v4400 = vadd.f32 0.0, %v4399
  %v4401 = vpop.f32.mrf.mxu0
  %v4402 = vpop.f32.mrf.mxu0
  %v4403 = vadd.f32 0.0, %v4402
  %v4404 = vpop.f32.mrf.mxu0
  %4405 = vmatprep.mubr.bf16.mxu0 0
  %4406 = vmatmul.mubr.bf16.gmra.mxu0 %v4276
  %v4407 = vpop.f32.mrf.mxu0
  %v4408 = vadd.f32 0.0, %v4407
  %v4409 = vpop.f32.mrf.mxu0
  %v4410 = vpop.f32.mrf.mxu0
  %v4411 = vadd.f32 0.0, %v4410
  %v4412 = vpop.f32.mrf.mxu0
  %4413 = vmatprep.mubr.bf16.mxu0 0
  %4414 = vmatmul.mubr.bf16.gmra.mxu0 %v4279
  %v4415 = vpop.f32.mrf.mxu0
  %v4416 = vadd.f32 0.0, %v4415
  %v4417 = vpop.f32.mrf.mxu0
  %v4418 = vpop.f32.mrf.mxu0
  %v4419 = vadd.f32 0.0, %v4418
  %v4420 = vpop.f32.mrf.mxu0
  %4421 = vmatprep.mubr.bf16.mxu0 0
  %4422 = vmatmul.mubr.bf16.gmra.mxu0 %v4282
  %v4423 = vpop.f32.mrf.mxu0
  %v4424 = vadd.f32 0.0, %v4423
  %v4425 = vpop.f32.mrf.mxu0
  %v4426 = vpop.f32.mrf.mxu0
  %v4427 = vadd.f32 0.0, %v4426
  %v4428 = vpop.f32.mrf.mxu0
  %4429 = vmatprep.mubr.bf16.mxu0 0
  %4430 = vmatmul.mubr.bf16.gmra.mxu0 %v4285
  %v4431 = vpop.f32.mrf.mxu0
  %v4432 = vadd.f32 0.0, %v4431
  %v4433 = vpop.f32.mrf.mxu0
  %v4434 = vpop.f32.mrf.mxu0
  %v4435 = vadd.f32 0.0, %v4434
  %v4436 = vpop.f32.mrf.mxu0
  %4437 = vmatprep.mubr.bf16.mxu0 0
  %4438 = vmatmul.mubr.bf16.gmra.mxu0 %v4288
  %v4439 = vpop.f32.mrf.mxu0
  %v4440 = vadd.f32 0.0, %v4439
  %v4441 = vpop.f32.mrf.mxu0
  %v4442 = vpop.f32.mrf.mxu0
  %v4443 = vadd.f32 0.0, %v4442
  %v4444 = vpop.f32.mrf.mxu0
  %4445 = vmatprep.mubr.bf16.mxu0 0
  %4446 = vmatmul.mubr.bf16.gmra.mxu0 %v4291
  %v4447 = vpop.f32.mrf.mxu0
  %v4448 = vadd.f32 0.0, %v4447
  %v4449 = vpop.f32.mrf.mxu0
  %v4450 = vpop.f32.mrf.mxu0
  %v4451 = vadd.f32 0.0, %v4450
  %v4452 = vpop.f32.mrf.mxu0
  %4453 = vdwg.mxu0
  %v4462 = vunpack.c.l.b16 %v4204
  %v4463 = vunpack.c.l.b16 %v4205
  %v4464 = vunpack.c.l.b16 %v4206
  %v4465 = vunpack.c.l.b16 %v4207
  %v4466 = vunpack.c.l.b16 %v4208
  %v4467 = vunpack.c.l.b16 %v4209
  %v4468 = vunpack.c.l.b16 %v4210
  %v4469 = vunpack.c.l.b16 %v4211
  %v4470 = vpack.c.b16 %v4463, %v4462
  %v4471 = vpack.c.b16 %v4465, %v4464
  %v4472 = vpack.c.b16 %v4467, %v4466
  %v4473 = vpack.c.b16 %v4469, %v4468
  %v4479 = vsel %vm571, %v4155, 0
  %v4482 = vsel %vm571, %v4156, 0
  %v4485 = vsel %vm571, %v4157, 0
  %v4488 = vsel %vm571, %v4158, 0
  %v4491 = vsel %vm571, %v4159, 0
  %v4494 = vsel %vm571, %v4160, 0
  %v4497 = vsel %vm571, %v4161, 0
  %v4500 = vsel %vm571, %v4162, 0
  %v4503 = vsel %vm571, %v4163, 0
  %v4506 = vsel %vm571, %v4164, 0
  %v4509 = vsel %vm571, %v4165, 0
  %v4512 = vsel %vm571, %v4166, 0
  %v4515 = vsel %vm571, %v4167, 0
  %v4518 = vsel %vm571, %v4168, 0
  %v4521 = vsel %vm571, %v4169, 0
  %v4524 = vsel %vm571, %v4170, 0
  %4526 = vmatprep.subr.bf16.mxu0 0
  %4527 = vmatpush1.bf16.msra.mxu0 0
  %4528 = vmatprep.subr.bf16.mxu0 0
  %4529 = vmatpush1.bf16.msra.mxu0 0
  %4530 = vmatprep.subr.bf16.mxu0 0
  %4531 = vmatpush1.bf16.msra.mxu0 0
  %4532 = vmatprep.subr.bf16.mxu0 0
  %4533 = vmatpush1.bf16.msra.mxu0 0
  %4534 = vmatprep.subr.bf16.mxu0 0
  %4535 = vmatpush1.bf16.msra.mxu0 %v4473
  %4536 = vmatprep.subr.bf16.mxu0 0
  %4537 = vmatpush1.bf16.msra.mxu0 %v4472
  %4538 = vmatprep.subr.bf16.mxu0 0
  %4539 = vmatpush1.bf16.msra.mxu0 %v4471
  %4540 = vmatprep.subr.bf16.mxu0 0
  %4541 = vmatpush1.bf16.msra.mxu0 %v4470
  %4542 = vmatprep.subr.bf16.mxu0 0
  %4543 = vmatpush2.bf16.msra.mxu0 0
  %4544 = vmatprep.subr.bf16.mxu0 0
  %4545 = vmatpush2.bf16.msra.mxu0 0
  %4546 = vmatprep.subr.bf16.mxu0 0
  %4547 = vmatpush2.bf16.msra.mxu0 0
  %4548 = vmatprep.subr.bf16.mxu0 0
  %4549 = vmatpush2.bf16.msra.mxu0 0
  %4550 = vmatprep.subr.bf16.mxu0 0
  %4551 = vmatpush2.bf16.msra.mxu0 0
  %4552 = vmatprep.subr.bf16.mxu0 0
  %4553 = vmatpush2.bf16.msra.mxu0 0
  %4554 = vmatprep.subr.bf16.mxu0 0
  %4555 = vmatpush2.bf16.msra.mxu0 0
  %4556 = vmatprep.subr.bf16.mxu0 0
  %4557 = vmatpush2.bf16.msra.mxu0 0
  %4558 = vmatprep.mubr.bf16.mxu0 0
  %4559 = vmatmul.mubr.bf16.gmra.mxu0 %v4479
  %v4560 = vpop.f32.mrf.mxu0
  %v4561 = vadd.f32 %v4328, %v4560
  %v4562 = vpop.f32.mrf.mxu0
  %v4563 = vpop.f32.mrf.mxu0
  %v4564 = vadd.f32 %v4331, %v4563
  %v4565 = vpop.f32.mrf.mxu0
  %4566 = vmatprep.mubr.bf16.mxu0 0
  %4567 = vmatmul.mubr.bf16.gmra.mxu0 %v4482
  %v4568 = vpop.f32.mrf.mxu0
  %v4569 = vadd.f32 %v4336, %v4568
  %v4570 = vpop.f32.mrf.mxu0
  %v4571 = vpop.f32.mrf.mxu0
  %v4572 = vadd.f32 %v4339, %v4571
  %v4573 = vpop.f32.mrf.mxu0
  %4574 = vmatprep.mubr.bf16.mxu0 0
  %4575 = vmatmul.mubr.bf16.gmra.mxu0 %v4485
  %v4576 = vpop.f32.mrf.mxu0
  %v4577 = vadd.f32 %v4344, %v4576
  %v4578 = vpop.f32.mrf.mxu0
  %v4579 = vpop.f32.mrf.mxu0
  %v4580 = vadd.f32 %v4347, %v4579
  %v4581 = vpop.f32.mrf.mxu0
  %4582 = vmatprep.mubr.bf16.mxu0 0
  %4583 = vmatmul.mubr.bf16.gmra.mxu0 %v4488
  %v4584 = vpop.f32.mrf.mxu0
  %v4585 = vadd.f32 %v4352, %v4584
  %v4586 = vpop.f32.mrf.mxu0
  %v4587 = vpop.f32.mrf.mxu0
  %v4588 = vadd.f32 %v4355, %v4587
  %v4589 = vpop.f32.mrf.mxu0
  %4590 = vmatprep.mubr.bf16.mxu0 0
  %4591 = vmatmul.mubr.bf16.gmra.mxu0 %v4491
  %v4592 = vpop.f32.mrf.mxu0
  %v4593 = vadd.f32 %v4360, %v4592
  %v4594 = vpop.f32.mrf.mxu0
  %v4595 = vpop.f32.mrf.mxu0
  %v4596 = vadd.f32 %v4363, %v4595
  %v4597 = vpop.f32.mrf.mxu0
  %4598 = vmatprep.mubr.bf16.mxu0 0
  %4599 = vmatmul.mubr.bf16.gmra.mxu0 %v4494
  %v4600 = vpop.f32.mrf.mxu0
  %v4601 = vadd.f32 %v4368, %v4600
  %v4602 = vpop.f32.mrf.mxu0
  %v4603 = vpop.f32.mrf.mxu0
  %v4604 = vadd.f32 %v4371, %v4603
  %v4605 = vpop.f32.mrf.mxu0
  %4606 = vmatprep.mubr.bf16.mxu0 0
  %4607 = vmatmul.mubr.bf16.gmra.mxu0 %v4497
  %v4608 = vpop.f32.mrf.mxu0
  %v4609 = vadd.f32 %v4376, %v4608
  %v4610 = vpop.f32.mrf.mxu0
  %v4611 = vpop.f32.mrf.mxu0
  %v4612 = vadd.f32 %v4379, %v4611
  %v4613 = vpop.f32.mrf.mxu0
  %4614 = vmatprep.mubr.bf16.mxu0 0
  %4615 = vmatmul.mubr.bf16.gmra.mxu0 %v4500
  %v4616 = vpop.f32.mrf.mxu0
  %v4617 = vadd.f32 %v4384, %v4616
  %v4618 = vpop.f32.mrf.mxu0
  %v4619 = vpop.f32.mrf.mxu0
  %v4620 = vadd.f32 %v4387, %v4619
  %v4621 = vpop.f32.mrf.mxu0
  %4622 = vmatprep.mubr.bf16.mxu0 0
  %4623 = vmatmul.mubr.bf16.gmra.mxu0 %v4503
  %v4624 = vpop.f32.mrf.mxu0
  %v4625 = vadd.f32 %v4392, %v4624
  %v4626 = vpop.f32.mrf.mxu0
  %v4627 = vpop.f32.mrf.mxu0
  %v4628 = vadd.f32 %v4395, %v4627
  %v4629 = vpop.f32.mrf.mxu0
  %4630 = vmatprep.mubr.bf16.mxu0 0
  %4631 = vmatmul.mubr.bf16.gmra.mxu0 %v4506
  %v4632 = vpop.f32.mrf.mxu0
  %v4633 = vadd.f32 %v4400, %v4632
  %v4634 = vpop.f32.mrf.mxu0
  %v4635 = vpop.f32.mrf.mxu0
  %v4636 = vadd.f32 %v4403, %v4635
  %v4637 = vpop.f32.mrf.mxu0
  %4638 = vmatprep.mubr.bf16.mxu0 0
  %4639 = vmatmul.mubr.bf16.gmra.mxu0 %v4509
  %v4640 = vpop.f32.mrf.mxu0
  %v4641 = vadd.f32 %v4408, %v4640
  %v4642 = vpop.f32.mrf.mxu0
  %v4643 = vpop.f32.mrf.mxu0
  %v4644 = vadd.f32 %v4411, %v4643
  %v4645 = vpop.f32.mrf.mxu0
  %4646 = vmatprep.mubr.bf16.mxu0 0
  %4647 = vmatmul.mubr.bf16.gmra.mxu0 %v4512
  %v4648 = vpop.f32.mrf.mxu0
  %v4649 = vadd.f32 %v4416, %v4648
  %v4650 = vpop.f32.mrf.mxu0
  %v4651 = vpop.f32.mrf.mxu0
  %v4652 = vadd.f32 %v4419, %v4651
  %v4653 = vpop.f32.mrf.mxu0
  %4654 = vmatprep.mubr.bf16.mxu0 0
  %4655 = vmatmul.mubr.bf16.gmra.mxu0 %v4515
  %v4656 = vpop.f32.mrf.mxu0
  %v4657 = vadd.f32 %v4424, %v4656
  %v4658 = vpop.f32.mrf.mxu0
  %v4659 = vpop.f32.mrf.mxu0
  %v4660 = vadd.f32 %v4427, %v4659
  %v4661 = vpop.f32.mrf.mxu0
  %4662 = vmatprep.mubr.bf16.mxu0 0
  %4663 = vmatmul.mubr.bf16.gmra.mxu0 %v4518
  %v4664 = vpop.f32.mrf.mxu0
  %v4665 = vadd.f32 %v4432, %v4664
  %v4666 = vpop.f32.mrf.mxu0
  %v4667 = vpop.f32.mrf.mxu0
  %v4668 = vadd.f32 %v4435, %v4667
  %v4669 = vpop.f32.mrf.mxu0
  %4670 = vmatprep.mubr.bf16.mxu0 0
  %4671 = vmatmul.mubr.bf16.gmra.mxu0 %v4521
  %v4672 = vpop.f32.mrf.mxu0
  %v4673 = vadd.f32 %v4440, %v4672
  %v4674 = vpop.f32.mrf.mxu0
  %v4675 = vpop.f32.mrf.mxu0
  %v4676 = vadd.f32 %v4443, %v4675
  %v4677 = vpop.f32.mrf.mxu0
  %4678 = vmatprep.mubr.bf16.mxu0 0
  %4679 = vmatmul.mubr.bf16.gmra.mxu0 %v4524
  %v4680 = vpop.f32.mrf.mxu0
  %v4681 = vadd.f32 %v4448, %v4680
  %v4682 = vpop.f32.mrf.mxu0
  %v4683 = vpop.f32.mrf.mxu0
  %v4684 = vadd.f32 %v4451, %v4683
  %v4685 = vpop.f32.mrf.mxu0
  %4686 = vdwg.mxu0
  %s4687 = scalar_lea.vmem %s2, 352
  %v4688 = vld [vmem:[%s4687] sm:$0xf]
  %v4689 = vld [vmem:[%s4687 + $0x4] sm:$0xf]
  %v4690 = vld [vmem:[%s4687 + $0x8] sm:$0xf]
  %v4691 = vld [vmem:[%s4687 + $0xc] sm:$0xf]
  %v4692 = vld [vmem:[%s4687 + $0x10] sm:$0xf]
  %v4693 = vld [vmem:[%s4687 + $0x14] sm:$0xf]
  %v4694 = vld [vmem:[%s4687 + $0x18] sm:$0xf]
  %v4695 = vld [vmem:[%s4687 + $0x1c] sm:$0xf]
  %v4704 = vunpack.c.l.b16 %v4688
  %v4705 = vunpack.c.l.b16 %v4689
  %v4706 = vunpack.c.l.b16 %v4690
  %v4707 = vunpack.c.l.b16 %v4691
  %v4708 = vunpack.c.l.b16 %v4692
  %v4709 = vunpack.c.l.b16 %v4693
  %v4710 = vunpack.c.l.b16 %v4694
  %v4711 = vunpack.c.l.b16 %v4695
  %v4712 = vpack.c.b16 %v4705, %v4704
  %v4713 = vpack.c.b16 %v4707, %v4706
  %v4714 = vpack.c.b16 %v4709, %v4708
  %v4715 = vpack.c.b16 %v4711, %v4710
  %v4721 = vsel %vm571, %v4187, 0
  %v4724 = vsel %vm571, %v4188, 0
  %v4727 = vsel %vm571, %v4189, 0
  %v4730 = vsel %vm571, %v4190, 0
  %v4733 = vsel %vm571, %v4191, 0
  %v4736 = vsel %vm571, %v4192, 0
  %v4739 = vsel %vm571, %v4193, 0
  %v4742 = vsel %vm571, %v4194, 0
  %v4745 = vsel %vm571, %v4195, 0
  %v4748 = vsel %vm571, %v4196, 0
  %v4751 = vsel %vm571, %v4197, 0
  %v4754 = vsel %vm571, %v4198, 0
  %v4757 = vsel %vm571, %v4199, 0
  %v4760 = vsel %vm571, %v4200, 0
  %v4763 = vsel %vm571, %v4201, 0
  %v4766 = vsel %vm571, %v4202, 0
  %4768 = vmatprep.subr.bf16.mxu0 0
  %4769 = vmatpush1.bf16.msra.mxu0 0
  %4770 = vmatprep.subr.bf16.mxu0 0
  %4771 = vmatpush1.bf16.msra.mxu0 0
  %4772 = vmatprep.subr.bf16.mxu0 0
  %4773 = vmatpush1.bf16.msra.mxu0 0
  %4774 = vmatprep.subr.bf16.mxu0 0
  %4775 = vmatpush1.bf16.msra.mxu0 0
  %4776 = vmatprep.subr.bf16.mxu0 0
  %4777 = vmatpush1.bf16.msra.mxu0 %v4715
  %4778 = vmatprep.subr.bf16.mxu0 0
  %4779 = vmatpush1.bf16.msra.mxu0 %v4714
  %4780 = vmatprep.subr.bf16.mxu0 0
  %4781 = vmatpush1.bf16.msra.mxu0 %v4713
  %4782 = vmatprep.subr.bf16.mxu0 0
  %4783 = vmatpush1.bf16.msra.mxu0 %v4712
  %4784 = vmatprep.subr.bf16.mxu0 0
  %4785 = vmatpush2.bf16.msra.mxu0 0
  %4786 = vmatprep.subr.bf16.mxu0 0
  %4787 = vmatpush2.bf16.msra.mxu0 0
  %4788 = vmatprep.subr.bf16.mxu0 0
  %4789 = vmatpush2.bf16.msra.mxu0 0
  %4790 = vmatprep.subr.bf16.mxu0 0
  %4791 = vmatpush2.bf16.msra.mxu0 0
  %4792 = vmatprep.subr.bf16.mxu0 0
  %4793 = vmatpush2.bf16.msra.mxu0 0
  %4794 = vmatprep.subr.bf16.mxu0 0
  %4795 = vmatpush2.bf16.msra.mxu0 0
  %4796 = vmatprep.subr.bf16.mxu0 0
  %4797 = vmatpush2.bf16.msra.mxu0 0
  %4798 = vmatprep.subr.bf16.mxu0 0
  %4799 = vmatpush2.bf16.msra.mxu0 0
  %4800 = vmatprep.mubr.bf16.mxu0 0
  %4801 = vmatmul.mubr.bf16.gmra.mxu0 %v4721
  %v4802 = vpop.f32.mrf.mxu0
  %v4803 = vadd.f32 0.0, %v4802
  %v4804 = vpop.f32.mrf.mxu0
  %v4805 = vpop.f32.mrf.mxu0
  %v4806 = vadd.f32 0.0, %v4805
  %v4807 = vpop.f32.mrf.mxu0
  %4808 = vmatprep.mubr.bf16.mxu0 0
  %4809 = vmatmul.mubr.bf16.gmra.mxu0 %v4724
  %v4810 = vpop.f32.mrf.mxu0
  %v4811 = vadd.f32 0.0, %v4810
  %v4812 = vpop.f32.mrf.mxu0
  %v4813 = vpop.f32.mrf.mxu0
  %v4814 = vadd.f32 0.0, %v4813
  %v4815 = vpop.f32.mrf.mxu0
  %4816 = vmatprep.mubr.bf16.mxu0 0
  %4817 = vmatmul.mubr.bf16.gmra.mxu0 %v4727
  %v4818 = vpop.f32.mrf.mxu0
  %v4819 = vadd.f32 0.0, %v4818
  %v4820 = vpop.f32.mrf.mxu0
  %v4821 = vpop.f32.mrf.mxu0
  %v4822 = vadd.f32 0.0, %v4821
  %v4823 = vpop.f32.mrf.mxu0
  %4824 = vmatprep.mubr.bf16.mxu0 0
  %4825 = vmatmul.mubr.bf16.gmra.mxu0 %v4730
  %v4826 = vpop.f32.mrf.mxu0
  %v4827 = vadd.f32 0.0, %v4826
  %v4828 = vpop.f32.mrf.mxu0
  %v4829 = vpop.f32.mrf.mxu0
  %v4830 = vadd.f32 0.0, %v4829
  %v4831 = vpop.f32.mrf.mxu0
  %4832 = vmatprep.mubr.bf16.mxu0 0
  %4833 = vmatmul.mubr.bf16.gmra.mxu0 %v4733
  %v4834 = vpop.f32.mrf.mxu0
  %v4835 = vadd.f32 0.0, %v4834
  %v4836 = vpop.f32.mrf.mxu0
  %v4837 = vpop.f32.mrf.mxu0
  %v4838 = vadd.f32 0.0, %v4837
  %v4839 = vpop.f32.mrf.mxu0
  %4840 = vmatprep.mubr.bf16.mxu0 0
  %4841 = vmatmul.mubr.bf16.gmra.mxu0 %v4736
  %v4842 = vpop.f32.mrf.mxu0
  %v4843 = vadd.f32 0.0, %v4842
  %v4844 = vpop.f32.mrf.mxu0
  %v4845 = vpop.f32.mrf.mxu0
  %v4846 = vadd.f32 0.0, %v4845
  %v4847 = vpop.f32.mrf.mxu0
  %4848 = vmatprep.mubr.bf16.mxu0 0
  %4849 = vmatmul.mubr.bf16.gmra.mxu0 %v4739
  %v4850 = vpop.f32.mrf.mxu0
  %v4851 = vadd.f32 0.0, %v4850
  %v4852 = vpop.f32.mrf.mxu0
  %v4853 = vpop.f32.mrf.mxu0
  %v4854 = vadd.f32 0.0, %v4853
  %v4855 = vpop.f32.mrf.mxu0
  %4856 = vmatprep.mubr.bf16.mxu0 0
  %4857 = vmatmul.mubr.bf16.gmra.mxu0 %v4742
  %v4858 = vpop.f32.mrf.mxu0
  %v4859 = vadd.f32 0.0, %v4858
  %v4860 = vpop.f32.mrf.mxu0
  %v4861 = vpop.f32.mrf.mxu0
  %v4862 = vadd.f32 0.0, %v4861
  %v4863 = vpop.f32.mrf.mxu0
  %4864 = vmatprep.mubr.bf16.mxu0 0
  %4865 = vmatmul.mubr.bf16.gmra.mxu0 %v4745
  %v4866 = vpop.f32.mrf.mxu0
  %v4867 = vadd.f32 0.0, %v4866
  %v4868 = vpop.f32.mrf.mxu0
  %v4869 = vpop.f32.mrf.mxu0
  %v4870 = vadd.f32 0.0, %v4869
  %v4871 = vpop.f32.mrf.mxu0
  %4872 = vmatprep.mubr.bf16.mxu0 0
  %4873 = vmatmul.mubr.bf16.gmra.mxu0 %v4748
  %v4874 = vpop.f32.mrf.mxu0
  %v4875 = vadd.f32 0.0, %v4874
  %v4876 = vpop.f32.mrf.mxu0
  %v4877 = vpop.f32.mrf.mxu0
  %v4878 = vadd.f32 0.0, %v4877
  %v4879 = vpop.f32.mrf.mxu0
  %4880 = vmatprep.mubr.bf16.mxu0 0
  %4881 = vmatmul.mubr.bf16.gmra.mxu0 %v4751
  %v4882 = vpop.f32.mrf.mxu0
  %v4883 = vadd.f32 0.0, %v4882
  %v4884 = vpop.f32.mrf.mxu0
  %v4885 = vpop.f32.mrf.mxu0
  %v4886 = vadd.f32 0.0, %v4885
  %v4887 = vpop.f32.mrf.mxu0
  %4888 = vmatprep.mubr.bf16.mxu0 0
  %4889 = vmatmul.mubr.bf16.gmra.mxu0 %v4754
  %v4890 = vpop.f32.mrf.mxu0
  %v4891 = vadd.f32 0.0, %v4890
  %v4892 = vpop.f32.mrf.mxu0
  %v4893 = vpop.f32.mrf.mxu0
  %v4894 = vadd.f32 0.0, %v4893
  %v4895 = vpop.f32.mrf.mxu0
  %4896 = vmatprep.mubr.bf16.mxu0 0
  %4897 = vmatmul.mubr.bf16.gmra.mxu0 %v4757
  %v4898 = vpop.f32.mrf.mxu0
  %v4899 = vadd.f32 0.0, %v4898
  %v4900 = vpop.f32.mrf.mxu0
  %v4901 = vpop.f32.mrf.mxu0
  %v4902 = vadd.f32 0.0, %v4901
  %v4903 = vpop.f32.mrf.mxu0
  %4904 = vmatprep.mubr.bf16.mxu0 0
  %4905 = vmatmul.mubr.bf16.gmra.mxu0 %v4760
  %v4906 = vpop.f32.mrf.mxu0
  %v4907 = vadd.f32 0.0, %v4906
  %v4908 = vpop.f32.mrf.mxu0
  %v4909 = vpop.f32.mrf.mxu0
  %v4910 = vadd.f32 0.0, %v4909
  %v4911 = vpop.f32.mrf.mxu0
  %4912 = vmatprep.mubr.bf16.mxu0 0
  %4913 = vmatmul.mubr.bf16.gmra.mxu0 %v4763
  %v4914 = vpop.f32.mrf.mxu0
  %v4915 = vadd.f32 0.0, %v4914
  %v4916 = vpop.f32.mrf.mxu0
  %v4917 = vpop.f32.mrf.mxu0
  %v4918 = vadd.f32 0.0, %v4917
  %v4919 = vpop.f32.mrf.mxu0
  %4920 = vmatprep.mubr.bf16.mxu0 0
  %4921 = vmatmul.mubr.bf16.gmra.mxu0 %v4766
  %v4922 = vpop.f32.mrf.mxu0
  %v4923 = vadd.f32 0.0, %v4922
  %v4924 = vpop.f32.mrf.mxu0
  %v4925 = vpop.f32.mrf.mxu0
  %v4926 = vadd.f32 0.0, %v4925
  %v4927 = vpop.f32.mrf.mxu0
  %4928 = vdwg.mxu0
  %v4929 = vadd.f32 %v4561, %v4803
  %v4930 = vadd.f32 %v4564, %v4806
  %v4931 = vadd.f32 %v4569, %v4811
  %v4932 = vadd.f32 %v4572, %v4814
  %v4933 = vadd.f32 %v4577, %v4819
  %v4934 = vadd.f32 %v4580, %v4822
  %v4935 = vadd.f32 %v4585, %v4827
  %v4936 = vadd.f32 %v4588, %v4830
  %v4937 = vadd.f32 %v4593, %v4835
  %v4938 = vadd.f32 %v4596, %v4838
  %v4939 = vadd.f32 %v4601, %v4843
  %v4940 = vadd.f32 %v4604, %v4846
  %v4941 = vadd.f32 %v4609, %v4851
  %v4942 = vadd.f32 %v4612, %v4854
  %v4943 = vadd.f32 %v4617, %v4859
  %v4944 = vadd.f32 %v4620, %v4862
  %v4945 = vadd.f32 %v4625, %v4867
  %v4946 = vadd.f32 %v4628, %v4870
  %v4947 = vadd.f32 %v4633, %v4875
  %v4948 = vadd.f32 %v4636, %v4878
  %v4949 = vadd.f32 %v4641, %v4883
  %v4950 = vadd.f32 %v4644, %v4886
  %v4951 = vadd.f32 %v4649, %v4891
  %v4952 = vadd.f32 %v4652, %v4894
  %v4953 = vadd.f32 %v4657, %v4899
  %v4954 = vadd.f32 %v4660, %v4902
  %v4955 = vadd.f32 %v4665, %v4907
  %v4956 = vadd.f32 %v4668, %v4910
  %v4957 = vadd.f32 %v4673, %v4915
  %v4958 = vadd.f32 %v4676, %v4918
  %v4959 = vadd.f32 %v4681, %v4923
  %v4960 = vadd.f32 %v4684, %v4926
  %v4961 = vsel %vm2103, %v4931, %v4959
  %v4962 = vsel %vm2104, %v4932, %v4960
  %v4963 = vsel %vm2105, %v4933, %v4929
  %v4964 = vsel %vm2106, %v4934, %v4930
  %v4965 = vsel %vm2107, %v4935, %v4931
  %v4966 = vsel %vm2108, %v4936, %v4932
  %v4967 = vsel %vm2109, %v4937, %v4933
  %v4968 = vsel %vm2110, %v4938, %v4934
  %v4969 = vsel %vm2111, %v4939, %v4935
  %v4970 = vsel %vm2112, %v4940, %v4936
  %v4971 = vsel %vm2113, %v4941, %v4937
  %v4972 = vsel %vm2114, %v4942, %v4938
  %v4973 = vsel %vm2115, %v4943, %v4939
  %v4974 = vsel %vm2116, %v4944, %v4940
  %v4975 = vsel %vm2117, %v4945, %v4941
  %v4976 = vsel %vm2118, %v4946, %v4942
  %v4977 = vsel %vm2119, %v4947, %v4943
  %v4978 = vsel %vm2120, %v4948, %v4944
  %v4979 = vsel %vm2121, %v4949, %v4945
  %v4980 = vsel %vm2122, %v4950, %v4946
  %v4981 = vsel %vm2123, %v4951, %v4947
  %v4982 = vsel %vm2124, %v4952, %v4948
  %v4983 = vsel %vm2125, %v4953, %v4949
  %v4984 = vsel %vm2126, %v4954, %v4950
  %v4985 = vsel %vm2127, %v4955, %v4951
  %v4986 = vsel %vm2128, %v4956, %v4952
  %v4987 = vsel %vm2129, %v4957, %v4953
  %v4988 = vsel %vm2130, %v4958, %v4954
  %v4989 = vsel %vm2131, %v4959, %v4955
  %v4990 = vsel %vm2132, %v4960, %v4956
  %v4991 = vsel %vm2133, %v4929, %v4957
  %v4992 = vsel %vm2134, %v4930, %v4958
  %s4993 = scalar_lea.vmem %s2, 384
  %v4994 = vld [vmem:[%s4993] sm:$0xf]
  %v4995 = vld [vmem:[%s4993 + $0x4] sm:$0xf]
  %v4996 = vld [vmem:[%s4993 + $0x8] sm:$0xf]
  %v4997 = vld [vmem:[%s4993 + $0xc] sm:$0xf]
  %v4998 = vld [vmem:[%s4993 + $0x10] sm:$0xf]
  %v4999 = vld [vmem:[%s4993 + $0x14] sm:$0xf]
  %v5000 = vld [vmem:[%s4993 + $0x18] sm:$0xf]
  %v5001 = vld [vmem:[%s4993 + $0x1c] sm:$0xf]
  %s5002 = scalar_lea.vmem %s2, 416
  %v5003 = vld [vmem:[%s5002] sm:$0xf]
  %v5004 = vld [vmem:[%s5002 + $0x4] sm:$0xf]
  %v5005 = vld [vmem:[%s5002 + $0x8] sm:$0xf]
  %v5006 = vld [vmem:[%s5002 + $0xc] sm:$0xf]
  %v5007 = vld [vmem:[%s5002 + $0x10] sm:$0xf]
  %v5008 = vld [vmem:[%s5002 + $0x14] sm:$0xf]
  %v5009 = vld [vmem:[%s5002 + $0x18] sm:$0xf]
  %v5010 = vld [vmem:[%s5002 + $0x1c] sm:$0xf]
  %v5019 = vunpack.c.l.b16 %v5003
  %v5020 = vunpack.c.l.b16 %v5004
  %v5021 = vunpack.c.l.b16 %v5005
  %v5022 = vunpack.c.l.b16 %v5006
  %v5023 = vunpack.c.l.b16 %v5007
  %v5024 = vunpack.c.l.b16 %v5008
  %v5025 = vunpack.c.l.b16 %v5009
  %v5026 = vunpack.c.l.b16 %v5010
  %v5027 = vpack.c.b16 %v5020, %v5019
  %v5028 = vpack.c.b16 %v5022, %v5021
  %v5029 = vpack.c.b16 %v5024, %v5023
  %v5030 = vpack.c.b16 %v5026, %v5025
  %5035 = vmatprep.subr.bf16.mxu0 0
  %5036 = vmatpush1.bf16.msra.mxu0 0
  %5037 = vmatprep.subr.bf16.mxu0 0
  %5038 = vmatpush1.bf16.msra.mxu0 0
  %5039 = vmatprep.subr.bf16.mxu0 0
  %5040 = vmatpush1.bf16.msra.mxu0 0
  %5041 = vmatprep.subr.bf16.mxu0 0
  %5042 = vmatpush1.bf16.msra.mxu0 0
  %5043 = vmatprep.subr.bf16.mxu0 0
  %5044 = vmatpush1.bf16.msra.mxu0 %v5030
  %5045 = vmatprep.subr.bf16.mxu0 0
  %5046 = vmatpush1.bf16.msra.mxu0 %v5029
  %5047 = vmatprep.subr.bf16.mxu0 0
  %5048 = vmatpush1.bf16.msra.mxu0 %v5028
  %5049 = vmatprep.subr.bf16.mxu0 0
  %5050 = vmatpush1.bf16.msra.mxu0 %v5027
  %5051 = vmatprep.subr.bf16.mxu0 0
  %5052 = vmatpush2.bf16.msra.mxu0 0
  %5053 = vmatprep.subr.bf16.mxu0 0
  %5054 = vmatpush2.bf16.msra.mxu0 0
  %5055 = vmatprep.subr.bf16.mxu0 0
  %5056 = vmatpush2.bf16.msra.mxu0 0
  %5057 = vmatprep.subr.bf16.mxu0 0
  %5058 = vmatpush2.bf16.msra.mxu0 0
  %5059 = vmatprep.subr.bf16.mxu0 0
  %5060 = vmatpush2.bf16.msra.mxu0 0
  %5061 = vmatprep.subr.bf16.mxu0 0
  %5062 = vmatpush2.bf16.msra.mxu0 0
  %5063 = vmatprep.subr.bf16.mxu0 0
  %5064 = vmatpush2.bf16.msra.mxu0 0
  %5065 = vmatprep.subr.bf16.mxu0 0
  %5066 = vmatpush2.bf16.msra.mxu0 0
  %5067 = vmatprep.mubr.bf16.mxu0 0
  %5068 = vmatmul.mubr.bf16.gmra.mxu0 %v4246
  %v5069 = vpop.f32.mrf.mxu0
  %v5070 = vadd.f32 0.0, %v5069
  %v5071 = vpop.f32.mrf.mxu0
  %v5072 = vpop.f32.mrf.mxu0
  %v5073 = vadd.f32 0.0, %v5072
  %v5074 = vpop.f32.mrf.mxu0
  %5075 = vmatprep.mubr.bf16.mxu0 0
  %5076 = vmatmul.mubr.bf16.gmra.mxu0 %v4249
  %v5077 = vpop.f32.mrf.mxu0
  %v5078 = vadd.f32 0.0, %v5077
  %v5079 = vpop.f32.mrf.mxu0
  %v5080 = vpop.f32.mrf.mxu0
  %v5081 = vadd.f32 0.0, %v5080
  %v5082 = vpop.f32.mrf.mxu0
  %5083 = vmatprep.mubr.bf16.mxu0 0
  %5084 = vmatmul.mubr.bf16.gmra.mxu0 %v4252
  %v5085 = vpop.f32.mrf.mxu0
  %v5086 = vadd.f32 0.0, %v5085
  %v5087 = vpop.f32.mrf.mxu0
  %v5088 = vpop.f32.mrf.mxu0
  %v5089 = vadd.f32 0.0, %v5088
  %v5090 = vpop.f32.mrf.mxu0
  %5091 = vmatprep.mubr.bf16.mxu0 0
  %5092 = vmatmul.mubr.bf16.gmra.mxu0 %v4255
  %v5093 = vpop.f32.mrf.mxu0
  %v5094 = vadd.f32 0.0, %v5093
  %v5095 = vpop.f32.mrf.mxu0
  %v5096 = vpop.f32.mrf.mxu0
  %v5097 = vadd.f32 0.0, %v5096
  %v5098 = vpop.f32.mrf.mxu0
  %5099 = vmatprep.mubr.bf16.mxu0 0
  %5100 = vmatmul.mubr.bf16.gmra.mxu0 %v4258
  %v5101 = vpop.f32.mrf.mxu0
  %v5102 = vadd.f32 0.0, %v5101
  %v5103 = vpop.f32.mrf.mxu0
  %v5104 = vpop.f32.mrf.mxu0
  %v5105 = vadd.f32 0.0, %v5104
  %v5106 = vpop.f32.mrf.mxu0
  %5107 = vmatprep.mubr.bf16.mxu0 0
  %5108 = vmatmul.mubr.bf16.gmra.mxu0 %v4261
  %v5109 = vpop.f32.mrf.mxu0
  %v5110 = vadd.f32 0.0, %v5109
  %v5111 = vpop.f32.mrf.mxu0
  %v5112 = vpop.f32.mrf.mxu0
  %v5113 = vadd.f32 0.0, %v5112
  %v5114 = vpop.f32.mrf.mxu0
  %5115 = vmatprep.mubr.bf16.mxu0 0
  %5116 = vmatmul.mubr.bf16.gmra.mxu0 %v4264
  %v5117 = vpop.f32.mrf.mxu0
  %v5118 = vadd.f32 0.0, %v5117
  %v5119 = vpop.f32.mrf.mxu0
  %v5120 = vpop.f32.mrf.mxu0
  %v5121 = vadd.f32 0.0, %v5120
  %v5122 = vpop.f32.mrf.mxu0
  %5123 = vmatprep.mubr.bf16.mxu0 0
  %5124 = vmatmul.mubr.bf16.gmra.mxu0 %v4267
  %v5125 = vpop.f32.mrf.mxu0
  %v5126 = vadd.f32 0.0, %v5125
  %v5127 = vpop.f32.mrf.mxu0
  %v5128 = vpop.f32.mrf.mxu0
  %v5129 = vadd.f32 0.0, %v5128
  %v5130 = vpop.f32.mrf.mxu0
  %5131 = vmatprep.mubr.bf16.mxu0 0
  %5132 = vmatmul.mubr.bf16.gmra.mxu0 %v4270
  %v5133 = vpop.f32.mrf.mxu0
  %v5134 = vadd.f32 0.0, %v5133
  %v5135 = vpop.f32.mrf.mxu0
  %v5136 = vpop.f32.mrf.mxu0
  %v5137 = vadd.f32 0.0, %v5136
  %v5138 = vpop.f32.mrf.mxu0
  %5139 = vmatprep.mubr.bf16.mxu0 0
  %5140 = vmatmul.mubr.bf16.gmra.mxu0 %v4273
  %v5141 = vpop.f32.mrf.mxu0
  %v5142 = vadd.f32 0.0, %v5141
  %v5143 = vpop.f32.mrf.mxu0
  %v5144 = vpop.f32.mrf.mxu0
  %v5145 = vadd.f32 0.0, %v5144
  %v5146 = vpop.f32.mrf.mxu0
  %5147 = vmatprep.mubr.bf16.mxu0 0
  %5148 = vmatmul.mubr.bf16.gmra.mxu0 %v4276
  %v5149 = vpop.f32.mrf.mxu0
  %v5150 = vadd.f32 0.0, %v5149
  %v5151 = vpop.f32.mrf.mxu0
  %v5152 = vpop.f32.mrf.mxu0
  %v5153 = vadd.f32 0.0, %v5152
  %v5154 = vpop.f32.mrf.mxu0
  %5155 = vmatprep.mubr.bf16.mxu0 0
  %5156 = vmatmul.mubr.bf16.gmra.mxu0 %v4279
  %v5157 = vpop.f32.mrf.mxu0
  %v5158 = vadd.f32 0.0, %v5157
  %v5159 = vpop.f32.mrf.mxu0
  %v5160 = vpop.f32.mrf.mxu0
  %v5161 = vadd.f32 0.0, %v5160
  %v5162 = vpop.f32.mrf.mxu0
  %5163 = vmatprep.mubr.bf16.mxu0 0
  %5164 = vmatmul.mubr.bf16.gmra.mxu0 %v4282
  %v5165 = vpop.f32.mrf.mxu0
  %v5166 = vadd.f32 0.0, %v5165
  %v5167 = vpop.f32.mrf.mxu0
  %v5168 = vpop.f32.mrf.mxu0
  %v5169 = vadd.f32 0.0, %v5168
  %v5170 = vpop.f32.mrf.mxu0
  %5171 = vmatprep.mubr.bf16.mxu0 0
  %5172 = vmatmul.mubr.bf16.gmra.mxu0 %v4285
  %v5173 = vpop.f32.mrf.mxu0
  %v5174 = vadd.f32 0.0, %v5173
  %v5175 = vpop.f32.mrf.mxu0
  %v5176 = vpop.f32.mrf.mxu0
  %v5177 = vadd.f32 0.0, %v5176
  %v5178 = vpop.f32.mrf.mxu0
  %5179 = vmatprep.mubr.bf16.mxu0 0
  %5180 = vmatmul.mubr.bf16.gmra.mxu0 %v4288
  %v5181 = vpop.f32.mrf.mxu0
  %v5182 = vadd.f32 0.0, %v5181
  %v5183 = vpop.f32.mrf.mxu0
  %v5184 = vpop.f32.mrf.mxu0
  %v5185 = vadd.f32 0.0, %v5184
  %v5186 = vpop.f32.mrf.mxu0
  %5187 = vmatprep.mubr.bf16.mxu0 0
  %5188 = vmatmul.mubr.bf16.gmra.mxu0 %v4291
  %v5189 = vpop.f32.mrf.mxu0
  %v5190 = vadd.f32 0.0, %v5189
  %v5191 = vpop.f32.mrf.mxu0
  %v5192 = vpop.f32.mrf.mxu0
  %v5193 = vadd.f32 0.0, %v5192
  %v5194 = vpop.f32.mrf.mxu0
  %5195 = vdwg.mxu0
  %v5204 = vunpack.c.l.b16 %v4994
  %v5205 = vunpack.c.l.b16 %v4995
  %v5206 = vunpack.c.l.b16 %v4996
  %v5207 = vunpack.c.l.b16 %v4997
  %v5208 = vunpack.c.l.b16 %v4998
  %v5209 = vunpack.c.l.b16 %v4999
  %v5210 = vunpack.c.l.b16 %v5000
  %v5211 = vunpack.c.l.b16 %v5001
  %v5212 = vpack.c.b16 %v5205, %v5204
  %v5213 = vpack.c.b16 %v5207, %v5206
  %v5214 = vpack.c.b16 %v5209, %v5208
  %v5215 = vpack.c.b16 %v5211, %v5210
  %5220 = vmatprep.subr.bf16.mxu0 0
  %5221 = vmatpush1.bf16.msra.mxu0 0
  %5222 = vmatprep.subr.bf16.mxu0 0
  %5223 = vmatpush1.bf16.msra.mxu0 0
  %5224 = vmatprep.subr.bf16.mxu0 0
  %5225 = vmatpush1.bf16.msra.mxu0 0
  %5226 = vmatprep.subr.bf16.mxu0 0
  %5227 = vmatpush1.bf16.msra.mxu0 0
  %5228 = vmatprep.subr.bf16.mxu0 0
  %5229 = vmatpush1.bf16.msra.mxu0 %v5215
  %5230 = vmatprep.subr.bf16.mxu0 0
  %5231 = vmatpush1.bf16.msra.mxu0 %v5214
  %5232 = vmatprep.subr.bf16.mxu0 0
  %5233 = vmatpush1.bf16.msra.mxu0 %v5213
  %5234 = vmatprep.subr.bf16.mxu0 0
  %5235 = vmatpush1.bf16.msra.mxu0 %v5212
  %5236 = vmatprep.subr.bf16.mxu0 0
  %5237 = vmatpush2.bf16.msra.mxu0 0
  %5238 = vmatprep.subr.bf16.mxu0 0
  %5239 = vmatpush2.bf16.msra.mxu0 0
  %5240 = vmatprep.subr.bf16.mxu0 0
  %5241 = vmatpush2.bf16.msra.mxu0 0
  %5242 = vmatprep.subr.bf16.mxu0 0
  %5243 = vmatpush2.bf16.msra.mxu0 0
  %5244 = vmatprep.subr.bf16.mxu0 0
  %5245 = vmatpush2.bf16.msra.mxu0 0
  %5246 = vmatprep.subr.bf16.mxu0 0
  %5247 = vmatpush2.bf16.msra.mxu0 0
  %5248 = vmatprep.subr.bf16.mxu0 0
  %5249 = vmatpush2.bf16.msra.mxu0 0
  %5250 = vmatprep.subr.bf16.mxu0 0
  %5251 = vmatpush2.bf16.msra.mxu0 0
  %5252 = vmatprep.mubr.bf16.mxu0 0
  %5253 = vmatmul.mubr.bf16.gmra.mxu0 %v4479
  %v5254 = vpop.f32.mrf.mxu0
  %v5255 = vadd.f32 %v5070, %v5254
  %v5256 = vpop.f32.mrf.mxu0
  %v5257 = vpop.f32.mrf.mxu0
  %v5258 = vadd.f32 %v5073, %v5257
  %v5259 = vpop.f32.mrf.mxu0
  %5260 = vmatprep.mubr.bf16.mxu0 0
  %5261 = vmatmul.mubr.bf16.gmra.mxu0 %v4482
  %v5262 = vpop.f32.mrf.mxu0
  %v5263 = vadd.f32 %v5078, %v5262
  %v5264 = vpop.f32.mrf.mxu0
  %v5265 = vpop.f32.mrf.mxu0
  %v5266 = vadd.f32 %v5081, %v5265
  %v5267 = vpop.f32.mrf.mxu0
  %5268 = vmatprep.mubr.bf16.mxu0 0
  %5269 = vmatmul.mubr.bf16.gmra.mxu0 %v4485
  %v5270 = vpop.f32.mrf.mxu0
  %v5271 = vadd.f32 %v5086, %v5270
  %v5272 = vpop.f32.mrf.mxu0
  %v5273 = vpop.f32.mrf.mxu0
  %v5274 = vadd.f32 %v5089, %v5273
  %v5275 = vpop.f32.mrf.mxu0
  %5276 = vmatprep.mubr.bf16.mxu0 0
  %5277 = vmatmul.mubr.bf16.gmra.mxu0 %v4488
  %v5278 = vpop.f32.mrf.mxu0
  %v5279 = vadd.f32 %v5094, %v5278
  %v5280 = vpop.f32.mrf.mxu0
  %v5281 = vpop.f32.mrf.mxu0
  %v5282 = vadd.f32 %v5097, %v5281
  %v5283 = vpop.f32.mrf.mxu0
  %5284 = vmatprep.mubr.bf16.mxu0 0
  %5285 = vmatmul.mubr.bf16.gmra.mxu0 %v4491
  %v5286 = vpop.f32.mrf.mxu0
  %v5287 = vadd.f32 %v5102, %v5286
  %v5288 = vpop.f32.mrf.mxu0
  %v5289 = vpop.f32.mrf.mxu0
  %v5290 = vadd.f32 %v5105, %v5289
  %v5291 = vpop.f32.mrf.mxu0
  %5292 = vmatprep.mubr.bf16.mxu0 0
  %5293 = vmatmul.mubr.bf16.gmra.mxu0 %v4494
  %v5294 = vpop.f32.mrf.mxu0
  %v5295 = vadd.f32 %v5110, %v5294
  %v5296 = vpop.f32.mrf.mxu0
  %v5297 = vpop.f32.mrf.mxu0
  %v5298 = vadd.f32 %v5113, %v5297
  %v5299 = vpop.f32.mrf.mxu0
  %5300 = vmatprep.mubr.bf16.mxu0 0
  %5301 = vmatmul.mubr.bf16.gmra.mxu0 %v4497
  %v5302 = vpop.f32.mrf.mxu0
  %v5303 = vadd.f32 %v5118, %v5302
  %v5304 = vpop.f32.mrf.mxu0
  %v5305 = vpop.f32.mrf.mxu0
  %v5306 = vadd.f32 %v5121, %v5305
  %v5307 = vpop.f32.mrf.mxu0
  %5308 = vmatprep.mubr.bf16.mxu0 0
  %5309 = vmatmul.mubr.bf16.gmra.mxu0 %v4500
  %v5310 = vpop.f32.mrf.mxu0
  %v5311 = vadd.f32 %v5126, %v5310
  %v5312 = vpop.f32.mrf.mxu0
  %v5313 = vpop.f32.mrf.mxu0
  %v5314 = vadd.f32 %v5129, %v5313
  %v5315 = vpop.f32.mrf.mxu0
  %5316 = vmatprep.mubr.bf16.mxu0 0
  %5317 = vmatmul.mubr.bf16.gmra.mxu0 %v4503
  %v5318 = vpop.f32.mrf.mxu0
  %v5319 = vadd.f32 %v5134, %v5318
  %v5320 = vpop.f32.mrf.mxu0
  %v5321 = vpop.f32.mrf.mxu0
  %v5322 = vadd.f32 %v5137, %v5321
  %v5323 = vpop.f32.mrf.mxu0
  %5324 = vmatprep.mubr.bf16.mxu0 0
  %5325 = vmatmul.mubr.bf16.gmra.mxu0 %v4506
  %v5326 = vpop.f32.mrf.mxu0
  %v5327 = vadd.f32 %v5142, %v5326
  %v5328 = vpop.f32.mrf.mxu0
  %v5329 = vpop.f32.mrf.mxu0
  %v5330 = vadd.f32 %v5145, %v5329
  %v5331 = vpop.f32.mrf.mxu0
  %5332 = vmatprep.mubr.bf16.mxu0 0
  %5333 = vmatmul.mubr.bf16.gmra.mxu0 %v4509
  %v5334 = vpop.f32.mrf.mxu0
  %v5335 = vadd.f32 %v5150, %v5334
  %v5336 = vpop.f32.mrf.mxu0
  %v5337 = vpop.f32.mrf.mxu0
  %v5338 = vadd.f32 %v5153, %v5337
  %v5339 = vpop.f32.mrf.mxu0
  %5340 = vmatprep.mubr.bf16.mxu0 0
  %5341 = vmatmul.mubr.bf16.gmra.mxu0 %v4512
  %v5342 = vpop.f32.mrf.mxu0
  %v5343 = vadd.f32 %v5158, %v5342
  %v5344 = vpop.f32.mrf.mxu0
  %v5345 = vpop.f32.mrf.mxu0
  %v5346 = vadd.f32 %v5161, %v5345
  %v5347 = vpop.f32.mrf.mxu0
  %5348 = vmatprep.mubr.bf16.mxu0 0
  %5349 = vmatmul.mubr.bf16.gmra.mxu0 %v4515
  %v5350 = vpop.f32.mrf.mxu0
  %v5351 = vadd.f32 %v5166, %v5350
  %v5352 = vpop.f32.mrf.mxu0
  %v5353 = vpop.f32.mrf.mxu0
  %v5354 = vadd.f32 %v5169, %v5353
  %v5355 = vpop.f32.mrf.mxu0
  %5356 = vmatprep.mubr.bf16.mxu0 0
  %5357 = vmatmul.mubr.bf16.gmra.mxu0 %v4518
  %v5358 = vpop.f32.mrf.mxu0
  %v5359 = vadd.f32 %v5174, %v5358
  %v5360 = vpop.f32.mrf.mxu0
  %v5361 = vpop.f32.mrf.mxu0
  %v5362 = vadd.f32 %v5177, %v5361
  %v5363 = vpop.f32.mrf.mxu0
  %5364 = vmatprep.mubr.bf16.mxu0 0
  %5365 = vmatmul.mubr.bf16.gmra.mxu0 %v4521
  %v5366 = vpop.f32.mrf.mxu0
  %v5367 = vadd.f32 %v5182, %v5366
  %v5368 = vpop.f32.mrf.mxu0
  %v5369 = vpop.f32.mrf.mxu0
  %v5370 = vadd.f32 %v5185, %v5369
  %v5371 = vpop.f32.mrf.mxu0
  %5372 = vmatprep.mubr.bf16.mxu0 0
  %5373 = vmatmul.mubr.bf16.gmra.mxu0 %v4524
  %v5374 = vpop.f32.mrf.mxu0
  %v5375 = vadd.f32 %v5190, %v5374
  %v5376 = vpop.f32.mrf.mxu0
  %v5377 = vpop.f32.mrf.mxu0
  %v5378 = vadd.f32 %v5193, %v5377
  %v5379 = vpop.f32.mrf.mxu0
  %5380 = vdwg.mxu0
  %s5381 = scalar_lea.vmem %s2, 448
  %v5382 = vld [vmem:[%s5381] sm:$0xf]
  %v5383 = vld [vmem:[%s5381 + $0x4] sm:$0xf]
  %v5384 = vld [vmem:[%s5381 + $0x8] sm:$0xf]
  %v5385 = vld [vmem:[%s5381 + $0xc] sm:$0xf]
  %v5386 = vld [vmem:[%s5381 + $0x10] sm:$0xf]
  %v5387 = vld [vmem:[%s5381 + $0x14] sm:$0xf]
  %v5388 = vld [vmem:[%s5381 + $0x18] sm:$0xf]
  %v5389 = vld [vmem:[%s5381 + $0x1c] sm:$0xf]
  %v5398 = vunpack.c.l.b16 %v5382
  %v5399 = vunpack.c.l.b16 %v5383
  %v5400 = vunpack.c.l.b16 %v5384
  %v5401 = vunpack.c.l.b16 %v5385
  %v5402 = vunpack.c.l.b16 %v5386
  %v5403 = vunpack.c.l.b16 %v5387
  %v5404 = vunpack.c.l.b16 %v5388
  %v5405 = vunpack.c.l.b16 %v5389
  %v5406 = vpack.c.b16 %v5399, %v5398
  %v5407 = vpack.c.b16 %v5401, %v5400
  %v5408 = vpack.c.b16 %v5403, %v5402
  %v5409 = vpack.c.b16 %v5405, %v5404
  %5414 = vmatprep.subr.bf16.mxu0 0
  %5415 = vmatpush1.bf16.msra.mxu0 0
  %5416 = vmatprep.subr.bf16.mxu0 0
  %5417 = vmatpush1.bf16.msra.mxu0 0
  %5418 = vmatprep.subr.bf16.mxu0 0
  %5419 = vmatpush1.bf16.msra.mxu0 0
  %5420 = vmatprep.subr.bf16.mxu0 0
  %5421 = vmatpush1.bf16.msra.mxu0 0
  %5422 = vmatprep.subr.bf16.mxu0 0
  %5423 = vmatpush1.bf16.msra.mxu0 %v5409
  %5424 = vmatprep.subr.bf16.mxu0 0
  %5425 = vmatpush1.bf16.msra.mxu0 %v5408
  %5426 = vmatprep.subr.bf16.mxu0 0
  %5427 = vmatpush1.bf16.msra.mxu0 %v5407
  %5428 = vmatprep.subr.bf16.mxu0 0
  %5429 = vmatpush1.bf16.msra.mxu0 %v5406
  %5430 = vmatprep.subr.bf16.mxu0 0
  %5431 = vmatpush2.bf16.msra.mxu0 0
  %5432 = vmatprep.subr.bf16.mxu0 0
  %5433 = vmatpush2.bf16.msra.mxu0 0
  %5434 = vmatprep.subr.bf16.mxu0 0
  %5435 = vmatpush2.bf16.msra.mxu0 0
  %5436 = vmatprep.subr.bf16.mxu0 0
  %5437 = vmatpush2.bf16.msra.mxu0 0
  %5438 = vmatprep.subr.bf16.mxu0 0
  %5439 = vmatpush2.bf16.msra.mxu0 0
  %5440 = vmatprep.subr.bf16.mxu0 0
  %5441 = vmatpush2.bf16.msra.mxu0 0
  %5442 = vmatprep.subr.bf16.mxu0 0
  %5443 = vmatpush2.bf16.msra.mxu0 0
  %5444 = vmatprep.subr.bf16.mxu0 0
  %5445 = vmatpush2.bf16.msra.mxu0 0
  %5446 = vmatprep.mubr.bf16.mxu0 0
  %5447 = vmatmul.mubr.bf16.gmra.mxu0 %v4721
  %v5448 = vpop.f32.mrf.mxu0
  %v5449 = vadd.f32 0.0, %v5448
  %v5450 = vpop.f32.mrf.mxu0
  %v5451 = vpop.f32.mrf.mxu0
  %v5452 = vadd.f32 0.0, %v5451
  %v5453 = vpop.f32.mrf.mxu0
  %5454 = vmatprep.mubr.bf16.mxu0 0
  %5455 = vmatmul.mubr.bf16.gmra.mxu0 %v4724
  %v5456 = vpop.f32.mrf.mxu0
  %v5457 = vadd.f32 0.0, %v5456
  %v5458 = vpop.f32.mrf.mxu0
  %v5459 = vpop.f32.mrf.mxu0
  %v5460 = vadd.f32 0.0, %v5459
  %v5461 = vpop.f32.mrf.mxu0
  %5462 = vmatprep.mubr.bf16.mxu0 0
  %5463 = vmatmul.mubr.bf16.gmra.mxu0 %v4727
  %v5464 = vpop.f32.mrf.mxu0
  %v5465 = vadd.f32 0.0, %v5464
  %v5466 = vpop.f32.mrf.mxu0
  %v5467 = vpop.f32.mrf.mxu0
  %v5468 = vadd.f32 0.0, %v5467
  %v5469 = vpop.f32.mrf.mxu0
  %5470 = vmatprep.mubr.bf16.mxu0 0
  %5471 = vmatmul.mubr.bf16.gmra.mxu0 %v4730
  %v5472 = vpop.f32.mrf.mxu0
  %v5473 = vadd.f32 0.0, %v5472
  %v5474 = vpop.f32.mrf.mxu0
  %v5475 = vpop.f32.mrf.mxu0
  %v5476 = vadd.f32 0.0, %v5475
  %v5477 = vpop.f32.mrf.mxu0
  %5478 = vmatprep.mubr.bf16.mxu0 0
  %5479 = vmatmul.mubr.bf16.gmra.mxu0 %v4733
  %v5480 = vpop.f32.mrf.mxu0
  %v5481 = vadd.f32 0.0, %v5480
  %v5482 = vpop.f32.mrf.mxu0
  %v5483 = vpop.f32.mrf.mxu0
  %v5484 = vadd.f32 0.0, %v5483
  %v5485 = vpop.f32.mrf.mxu0
  %5486 = vmatprep.mubr.bf16.mxu0 0
  %5487 = vmatmul.mubr.bf16.gmra.mxu0 %v4736
  %v5488 = vpop.f32.mrf.mxu0
  %v5489 = vadd.f32 0.0, %v5488
  %v5490 = vpop.f32.mrf.mxu0
  %v5491 = vpop.f32.mrf.mxu0
  %v5492 = vadd.f32 0.0, %v5491
  %v5493 = vpop.f32.mrf.mxu0
  %5494 = vmatprep.mubr.bf16.mxu0 0
  %5495 = vmatmul.mubr.bf16.gmra.mxu0 %v4739
  %v5496 = vpop.f32.mrf.mxu0
  %v5497 = vadd.f32 0.0, %v5496
  %v5498 = vpop.f32.mrf.mxu0
  %v5499 = vpop.f32.mrf.mxu0
  %v5500 = vadd.f32 0.0, %v5499
  %v5501 = vpop.f32.mrf.mxu0
  %5502 = vmatprep.mubr.bf16.mxu0 0
  %5503 = vmatmul.mubr.bf16.gmra.mxu0 %v4742
  %v5504 = vpop.f32.mrf.mxu0
  %v5505 = vadd.f32 0.0, %v5504
  %v5506 = vpop.f32.mrf.mxu0
  %v5507 = vpop.f32.mrf.mxu0
  %v5508 = vadd.f32 0.0, %v5507
  %v5509 = vpop.f32.mrf.mxu0
  %5510 = vmatprep.mubr.bf16.mxu0 0
  %5511 = vmatmul.mubr.bf16.gmra.mxu0 %v4745
  %v5512 = vpop.f32.mrf.mxu0
  %v5513 = vadd.f32 0.0, %v5512
  %v5514 = vpop.f32.mrf.mxu0
  %v5515 = vpop.f32.mrf.mxu0
  %v5516 = vadd.f32 0.0, %v5515
  %v5517 = vpop.f32.mrf.mxu0
  %5518 = vmatprep.mubr.bf16.mxu0 0
  %5519 = vmatmul.mubr.bf16.gmra.mxu0 %v4748
  %v5520 = vpop.f32.mrf.mxu0
  %v5521 = vadd.f32 0.0, %v5520
  %v5522 = vpop.f32.mrf.mxu0
  %v5523 = vpop.f32.mrf.mxu0
  %v5524 = vadd.f32 0.0, %v5523
  %v5525 = vpop.f32.mrf.mxu0
  %5526 = vmatprep.mubr.bf16.mxu0 0
  %5527 = vmatmul.mubr.bf16.gmra.mxu0 %v4751
  %v5528 = vpop.f32.mrf.mxu0
  %v5529 = vadd.f32 0.0, %v5528
  %v5530 = vpop.f32.mrf.mxu0
  %v5531 = vpop.f32.mrf.mxu0
  %v5532 = vadd.f32 0.0, %v5531
  %v5533 = vpop.f32.mrf.mxu0
  %5534 = vmatprep.mubr.bf16.mxu0 0
  %5535 = vmatmul.mubr.bf16.gmra.mxu0 %v4754
  %v5536 = vpop.f32.mrf.mxu0
  %v5537 = vadd.f32 0.0, %v5536
  %v5538 = vpop.f32.mrf.mxu0
  %v5539 = vpop.f32.mrf.mxu0
  %v5540 = vadd.f32 0.0, %v5539
  %v5541 = vpop.f32.mrf.mxu0
  %5542 = vmatprep.mubr.bf16.mxu0 0
  %5543 = vmatmul.mubr.bf16.gmra.mxu0 %v4757
  %v5544 = vpop.f32.mrf.mxu0
  %v5545 = vadd.f32 0.0, %v5544
  %v5546 = vpop.f32.mrf.mxu0
  %v5547 = vpop.f32.mrf.mxu0
  %v5548 = vadd.f32 0.0, %v5547
  %v5549 = vpop.f32.mrf.mxu0
  %5550 = vmatprep.mubr.bf16.mxu0 0
  %5551 = vmatmul.mubr.bf16.gmra.mxu0 %v4760
  %v5552 = vpop.f32.mrf.mxu0
  %v5553 = vadd.f32 0.0, %v5552
  %v5554 = vpop.f32.mrf.mxu0
  %v5555 = vpop.f32.mrf.mxu0
  %v5556 = vadd.f32 0.0, %v5555
  %v5557 = vpop.f32.mrf.mxu0
  %5558 = vmatprep.mubr.bf16.mxu0 0
  %5559 = vmatmul.mubr.bf16.gmra.mxu0 %v4763
  %v5560 = vpop.f32.mrf.mxu0
  %v5561 = vadd.f32 0.0, %v5560
  %v5562 = vpop.f32.mrf.mxu0
  %v5563 = vpop.f32.mrf.mxu0
  %v5564 = vadd.f32 0.0, %v5563
  %v5565 = vpop.f32.mrf.mxu0
  %5566 = vmatprep.mubr.bf16.mxu0 0
  %5567 = vmatmul.mubr.bf16.gmra.mxu0 %v4766
  %v5568 = vpop.f32.mrf.mxu0
  %v5569 = vadd.f32 0.0, %v5568
  %v5570 = vpop.f32.mrf.mxu0
  %v5571 = vpop.f32.mrf.mxu0
  %v5572 = vadd.f32 0.0, %v5571
  %v5573 = vpop.f32.mrf.mxu0
  %5574 = vdwg.mxu0
  %v5575 = vadd.f32 %v5255, %v5449
  %v5576 = vadd.f32 %v5258, %v5452
  %v5577 = vadd.f32 %v5263, %v5457
  %v5578 = vadd.f32 %v5266, %v5460
  %v5579 = vadd.f32 %v5271, %v5465
  %v5580 = vadd.f32 %v5274, %v5468
  %v5581 = vadd.f32 %v5279, %v5473
  %v5582 = vadd.f32 %v5282, %v5476
  %v5583 = vadd.f32 %v5287, %v5481
  %v5584 = vadd.f32 %v5290, %v5484
  %v5585 = vadd.f32 %v5295, %v5489
  %v5586 = vadd.f32 %v5298, %v5492
  %v5587 = vadd.f32 %v5303, %v5497
  %v5588 = vadd.f32 %v5306, %v5500
  %v5589 = vadd.f32 %v5311, %v5505
  %v5590 = vadd.f32 %v5314, %v5508
  %v5591 = vadd.f32 %v5319, %v5513
  %v5592 = vadd.f32 %v5322, %v5516
  %v5593 = vadd.f32 %v5327, %v5521
  %v5594 = vadd.f32 %v5330, %v5524
  %v5595 = vadd.f32 %v5335, %v5529
  %v5596 = vadd.f32 %v5338, %v5532
  %v5597 = vadd.f32 %v5343, %v5537
  %v5598 = vadd.f32 %v5346, %v5540
  %v5599 = vadd.f32 %v5351, %v5545
  %v5600 = vadd.f32 %v5354, %v5548
  %v5601 = vadd.f32 %v5359, %v5553
  %v5602 = vadd.f32 %v5362, %v5556
  %v5603 = vadd.f32 %v5367, %v5561
  %v5604 = vadd.f32 %v5370, %v5564
  %v5605 = vadd.f32 %v5375, %v5569
  %v5606 = vadd.f32 %v5378, %v5572
  %v5607 = vadd.f32 %v4961, %v5575
  %v5608 = vadd.f32 %v4962, %v5576
  %v5609 = vadd.f32 %v4963, %v5577
  %v5610 = vadd.f32 %v4964, %v5578
  %v5611 = vadd.f32 %v4965, %v5579
  %v5612 = vadd.f32 %v4966, %v5580
  %v5613 = vadd.f32 %v4967, %v5581
  %v5614 = vadd.f32 %v4968, %v5582
  %v5615 = vadd.f32 %v4969, %v5583
  %v5616 = vadd.f32 %v4970, %v5584
  %v5617 = vadd.f32 %v4971, %v5585
  %v5618 = vadd.f32 %v4972, %v5586
  %v5619 = vadd.f32 %v4973, %v5587
  %v5620 = vadd.f32 %v4974, %v5588
  %v5621 = vadd.f32 %v4975, %v5589
  %v5622 = vadd.f32 %v4976, %v5590
  %v5623 = vadd.f32 %v4977, %v5591
  %v5624 = vadd.f32 %v4978, %v5592
  %v5625 = vadd.f32 %v4979, %v5593
  %v5626 = vadd.f32 %v4980, %v5594
  %v5627 = vadd.f32 %v4981, %v5595
  %v5628 = vadd.f32 %v4982, %v5596
  %v5629 = vadd.f32 %v4983, %v5597
  %v5630 = vadd.f32 %v4984, %v5598
  %v5631 = vadd.f32 %v4985, %v5599
  %v5632 = vadd.f32 %v4986, %v5600
  %v5633 = vadd.f32 %v4987, %v5601
  %v5634 = vadd.f32 %v4988, %v5602
  %v5635 = vadd.f32 %v4989, %v5603
  %v5636 = vadd.f32 %v4990, %v5604
  %v5637 = vadd.f32 %v4991, %v5605
  %v5638 = vadd.f32 %v4992, %v5606
  %s5639 = scalar_lea.vmem %s2, 480
  %v5640 = vld [vmem:[%s5639] sm:$0xf]
  %v5641 = vld [vmem:[%s5639 + $0x4] sm:$0xf]
  %v5642 = vld [vmem:[%s5639 + $0x8] sm:$0xf]
  %v5643 = vld [vmem:[%s5639 + $0xc] sm:$0xf]
  %v5644 = vld [vmem:[%s5639 + $0x10] sm:$0xf]
  %v5645 = vld [vmem:[%s5639 + $0x14] sm:$0xf]
  %v5646 = vld [vmem:[%s5639 + $0x18] sm:$0xf]
  %v5647 = vld [vmem:[%s5639 + $0x1c] sm:$0xf]
  %s5648 = scalar_lea.vmem %s2, 512
  %v5649 = vld [vmem:[%s5648] sm:$0xf]
  %v5650 = vld [vmem:[%s5648 + $0x4] sm:$0xf]
  %v5651 = vld [vmem:[%s5648 + $0x8] sm:$0xf]
  %v5652 = vld [vmem:[%s5648 + $0xc] sm:$0xf]
  %v5653 = vld [vmem:[%s5648 + $0x10] sm:$0xf]
  %v5654 = vld [vmem:[%s5648 + $0x14] sm:$0xf]
  %v5655 = vld [vmem:[%s5648 + $0x18] sm:$0xf]
  %v5656 = vld [vmem:[%s5648 + $0x1c] sm:$0xf]
  %v5665 = vunpack.c.l.b16 %v5649
  %v5666 = vunpack.c.l.b16 %v5650
  %v5667 = vunpack.c.l.b16 %v5651
  %v5668 = vunpack.c.l.b16 %v5652
  %v5669 = vunpack.c.l.b16 %v5653
  %v5670 = vunpack.c.l.b16 %v5654
  %v5671 = vunpack.c.l.b16 %v5655
  %v5672 = vunpack.c.l.b16 %v5656
  %v5673 = vpack.c.b16 %v5666, %v5665
  %v5674 = vpack.c.b16 %v5668, %v5667
  %v5675 = vpack.c.b16 %v5670, %v5669
  %v5676 = vpack.c.b16 %v5672, %v5671
  %5681 = vmatprep.subr.bf16.mxu0 0
  %5682 = vmatpush1.bf16.msra.mxu0 0
  %5683 = vmatprep.subr.bf16.mxu0 0
  %5684 = vmatpush1.bf16.msra.mxu0 0
  %5685 = vmatprep.subr.bf16.mxu0 0
  %5686 = vmatpush1.bf16.msra.mxu0 0
  %5687 = vmatprep.subr.bf16.mxu0 0
  %5688 = vmatpush1.bf16.msra.mxu0 0
  %5689 = vmatprep.subr.bf16.mxu0 0
  %5690 = vmatpush1.bf16.msra.mxu0 %v5676
  %5691 = vmatprep.subr.bf16.mxu0 0
  %5692 = vmatpush1.bf16.msra.mxu0 %v5675
  %5693 = vmatprep.subr.bf16.mxu0 0
  %5694 = vmatpush1.bf16.msra.mxu0 %v5674
  %5695 = vmatprep.subr.bf16.mxu0 0
  %5696 = vmatpush1.bf16.msra.mxu0 %v5673
  %5697 = vmatprep.subr.bf16.mxu0 0
  %5698 = vmatpush2.bf16.msra.mxu0 0
  %5699 = vmatprep.subr.bf16.mxu0 0
  %5700 = vmatpush2.bf16.msra.mxu0 0
  %5701 = vmatprep.subr.bf16.mxu0 0
  %5702 = vmatpush2.bf16.msra.mxu0 0
  %5703 = vmatprep.subr.bf16.mxu0 0
  %5704 = vmatpush2.bf16.msra.mxu0 0
  %5705 = vmatprep.subr.bf16.mxu0 0
  %5706 = vmatpush2.bf16.msra.mxu0 0
  %5707 = vmatprep.subr.bf16.mxu0 0
  %5708 = vmatpush2.bf16.msra.mxu0 0
  %5709 = vmatprep.subr.bf16.mxu0 0
  %5710 = vmatpush2.bf16.msra.mxu0 0
  %5711 = vmatprep.subr.bf16.mxu0 0
  %5712 = vmatpush2.bf16.msra.mxu0 0
  %5713 = vmatprep.mubr.bf16.mxu0 0
  %5714 = vmatmul.mubr.bf16.gmra.mxu0 %v4246
  %v5715 = vpop.f32.mrf.mxu0
  %v5716 = vadd.f32 0.0, %v5715
  %v5717 = vpop.f32.mrf.mxu0
  %v5718 = vpop.f32.mrf.mxu0
  %v5719 = vadd.f32 0.0, %v5718
  %v5720 = vpop.f32.mrf.mxu0
  %5721 = vmatprep.mubr.bf16.mxu0 0
  %5722 = vmatmul.mubr.bf16.gmra.mxu0 %v4249
  %v5723 = vpop.f32.mrf.mxu0
  %v5724 = vadd.f32 0.0, %v5723
  %v5725 = vpop.f32.mrf.mxu0
  %v5726 = vpop.f32.mrf.mxu0
  %v5727 = vadd.f32 0.0, %v5726
  %v5728 = vpop.f32.mrf.mxu0
  %5729 = vmatprep.mubr.bf16.mxu0 0
  %5730 = vmatmul.mubr.bf16.gmra.mxu0 %v4252
  %v5731 = vpop.f32.mrf.mxu0
  %v5732 = vadd.f32 0.0, %v5731
  %v5733 = vpop.f32.mrf.mxu0
  %v5734 = vpop.f32.mrf.mxu0
  %v5735 = vadd.f32 0.0, %v5734
  %v5736 = vpop.f32.mrf.mxu0
  %5737 = vmatprep.mubr.bf16.mxu0 0
  %5738 = vmatmul.mubr.bf16.gmra.mxu0 %v4255
  %v5739 = vpop.f32.mrf.mxu0
  %v5740 = vadd.f32 0.0, %v5739
  %v5741 = vpop.f32.mrf.mxu0
  %v5742 = vpop.f32.mrf.mxu0
  %v5743 = vadd.f32 0.0, %v5742
  %v5744 = vpop.f32.mrf.mxu0
  %5745 = vmatprep.mubr.bf16.mxu0 0
  %5746 = vmatmul.mubr.bf16.gmra.mxu0 %v4258
  %v5747 = vpop.f32.mrf.mxu0
  %v5748 = vadd.f32 0.0, %v5747
  %v5749 = vpop.f32.mrf.mxu0
  %v5750 = vpop.f32.mrf.mxu0
  %v5751 = vadd.f32 0.0, %v5750
  %v5752 = vpop.f32.mrf.mxu0
  %5753 = vmatprep.mubr.bf16.mxu0 0
  %5754 = vmatmul.mubr.bf16.gmra.mxu0 %v4261
  %v5755 = vpop.f32.mrf.mxu0
  %v5756 = vadd.f32 0.0, %v5755
  %v5757 = vpop.f32.mrf.mxu0
  %v5758 = vpop.f32.mrf.mxu0
  %v5759 = vadd.f32 0.0, %v5758
  %v5760 = vpop.f32.mrf.mxu0
  %5761 = vmatprep.mubr.bf16.mxu0 0
  %5762 = vmatmul.mubr.bf16.gmra.mxu0 %v4264
  %v5763 = vpop.f32.mrf.mxu0
  %v5764 = vadd.f32 0.0, %v5763
  %v5765 = vpop.f32.mrf.mxu0
  %v5766 = vpop.f32.mrf.mxu0
  %v5767 = vadd.f32 0.0, %v5766
  %v5768 = vpop.f32.mrf.mxu0
  %5769 = vmatprep.mubr.bf16.mxu0 0
  %5770 = vmatmul.mubr.bf16.gmra.mxu0 %v4267
  %v5771 = vpop.f32.mrf.mxu0
  %v5772 = vadd.f32 0.0, %v5771
  %v5773 = vpop.f32.mrf.mxu0
  %v5774 = vpop.f32.mrf.mxu0
  %v5775 = vadd.f32 0.0, %v5774
  %v5776 = vpop.f32.mrf.mxu0
  %5777 = vmatprep.mubr.bf16.mxu0 0
  %5778 = vmatmul.mubr.bf16.gmra.mxu0 %v4270
  %v5779 = vpop.f32.mrf.mxu0
  %v5780 = vadd.f32 0.0, %v5779
  %v5781 = vpop.f32.mrf.mxu0
  %v5782 = vpop.f32.mrf.mxu0
  %v5783 = vadd.f32 0.0, %v5782
  %v5784 = vpop.f32.mrf.mxu0
  %5785 = vmatprep.mubr.bf16.mxu0 0
  %5786 = vmatmul.mubr.bf16.gmra.mxu0 %v4273
  %v5787 = vpop.f32.mrf.mxu0
  %v5788 = vadd.f32 0.0, %v5787
  %v5789 = vpop.f32.mrf.mxu0
  %v5790 = vpop.f32.mrf.mxu0
  %v5791 = vadd.f32 0.0, %v5790
  %v5792 = vpop.f32.mrf.mxu0
  %5793 = vmatprep.mubr.bf16.mxu0 0
  %5794 = vmatmul.mubr.bf16.gmra.mxu0 %v4276
  %v5795 = vpop.f32.mrf.mxu0
  %v5796 = vadd.f32 0.0, %v5795
  %v5797 = vpop.f32.mrf.mxu0
  %v5798 = vpop.f32.mrf.mxu0
  %v5799 = vadd.f32 0.0, %v5798
  %v5800 = vpop.f32.mrf.mxu0
  %5801 = vmatprep.mubr.bf16.mxu0 0
  %5802 = vmatmul.mubr.bf16.gmra.mxu0 %v4279
  %v5803 = vpop.f32.mrf.mxu0
  %v5804 = vadd.f32 0.0, %v5803
  %v5805 = vpop.f32.mrf.mxu0
  %v5806 = vpop.f32.mrf.mxu0
  %v5807 = vadd.f32 0.0, %v5806
  %v5808 = vpop.f32.mrf.mxu0
  %5809 = vmatprep.mubr.bf16.mxu0 0
  %5810 = vmatmul.mubr.bf16.gmra.mxu0 %v4282
  %v5811 = vpop.f32.mrf.mxu0
  %v5812 = vadd.f32 0.0, %v5811
  %v5813 = vpop.f32.mrf.mxu0
  %v5814 = vpop.f32.mrf.mxu0
  %v5815 = vadd.f32 0.0, %v5814
  %v5816 = vpop.f32.mrf.mxu0
  %5817 = vmatprep.mubr.bf16.mxu0 0
  %5818 = vmatmul.mubr.bf16.gmra.mxu0 %v4285
  %v5819 = vpop.f32.mrf.mxu0
  %v5820 = vadd.f32 0.0, %v5819
  %v5821 = vpop.f32.mrf.mxu0
  %v5822 = vpop.f32.mrf.mxu0
  %v5823 = vadd.f32 0.0, %v5822
  %v5824 = vpop.f32.mrf.mxu0
  %5825 = vmatprep.mubr.bf16.mxu0 0
  %5826 = vmatmul.mubr.bf16.gmra.mxu0 %v4288
  %v5827 = vpop.f32.mrf.mxu0
  %v5828 = vadd.f32 0.0, %v5827
  %v5829 = vpop.f32.mrf.mxu0
  %v5830 = vpop.f32.mrf.mxu0
  %v5831 = vadd.f32 0.0, %v5830
  %v5832 = vpop.f32.mrf.mxu0
  %5833 = vmatprep.mubr.bf16.mxu0 0
  %5834 = vmatmul.mubr.bf16.gmra.mxu0 %v4291
  %v5835 = vpop.f32.mrf.mxu0
  %v5836 = vadd.f32 0.0, %v5835
  %v5837 = vpop.f32.mrf.mxu0
  %v5838 = vpop.f32.mrf.mxu0
  %v5839 = vadd.f32 0.0, %v5838
  %v5840 = vpop.f32.mrf.mxu0
  %5841 = vdwg.mxu0
  %v5850 = vunpack.c.l.b16 %v5640
  %v5851 = vunpack.c.l.b16 %v5641
  %v5852 = vunpack.c.l.b16 %v5642
  %v5853 = vunpack.c.l.b16 %v5643
  %v5854 = vunpack.c.l.b16 %v5644
  %v5855 = vunpack.c.l.b16 %v5645
  %v5856 = vunpack.c.l.b16 %v5646
  %v5857 = vunpack.c.l.b16 %v5647
  %v5858 = vpack.c.b16 %v5851, %v5850
  %v5859 = vpack.c.b16 %v5853, %v5852
  %v5860 = vpack.c.b16 %v5855, %v5854
  %v5861 = vpack.c.b16 %v5857, %v5856
  %5866 = vmatprep.subr.bf16.mxu0 0
  %5867 = vmatpush1.bf16.msra.mxu0 0
  %5868 = vmatprep.subr.bf16.mxu0 0
  %5869 = vmatpush1.bf16.msra.mxu0 0
  %5870 = vmatprep.subr.bf16.mxu0 0
  %5871 = vmatpush1.bf16.msra.mxu0 0
  %5872 = vmatprep.subr.bf16.mxu0 0
  %5873 = vmatpush1.bf16.msra.mxu0 0
  %5874 = vmatprep.subr.bf16.mxu0 0
  %5875 = vmatpush1.bf16.msra.mxu0 %v5861
  %5876 = vmatprep.subr.bf16.mxu0 0
  %5877 = vmatpush1.bf16.msra.mxu0 %v5860
  %5878 = vmatprep.subr.bf16.mxu0 0
  %5879 = vmatpush1.bf16.msra.mxu0 %v5859
  %5880 = vmatprep.subr.bf16.mxu0 0
  %5881 = vmatpush1.bf16.msra.mxu0 %v5858
  %5882 = vmatprep.subr.bf16.mxu0 0
  %5883 = vmatpush2.bf16.msra.mxu0 0
  %5884 = vmatprep.subr.bf16.mxu0 0
  %5885 = vmatpush2.bf16.msra.mxu0 0
  %5886 = vmatprep.subr.bf16.mxu0 0
  %5887 = vmatpush2.bf16.msra.mxu0 0
  %5888 = vmatprep.subr.bf16.mxu0 0
  %5889 = vmatpush2.bf16.msra.mxu0 0
  %5890 = vmatprep.subr.bf16.mxu0 0
  %5891 = vmatpush2.bf16.msra.mxu0 0
  %5892 = vmatprep.subr.bf16.mxu0 0
  %5893 = vmatpush2.bf16.msra.mxu0 0
  %5894 = vmatprep.subr.bf16.mxu0 0
  %5895 = vmatpush2.bf16.msra.mxu0 0
  %5896 = vmatprep.subr.bf16.mxu0 0
  %5897 = vmatpush2.bf16.msra.mxu0 0
  %5898 = vmatprep.mubr.bf16.mxu0 0
  %5899 = vmatmul.mubr.bf16.gmra.mxu0 %v4479
  %v5900 = vpop.f32.mrf.mxu0
  %v5901 = vadd.f32 %v5716, %v5900
  %v5902 = vpop.f32.mrf.mxu0
  %v5903 = vpop.f32.mrf.mxu0
  %v5904 = vadd.f32 %v5719, %v5903
  %v5905 = vpop.f32.mrf.mxu0
  %5906 = vmatprep.mubr.bf16.mxu0 0
  %5907 = vmatmul.mubr.bf16.gmra.mxu0 %v4482
  %v5908 = vpop.f32.mrf.mxu0
  %v5909 = vadd.f32 %v5724, %v5908
  %v5910 = vpop.f32.mrf.mxu0
  %v5911 = vpop.f32.mrf.mxu0
  %v5912 = vadd.f32 %v5727, %v5911
  %v5913 = vpop.f32.mrf.mxu0
  %5914 = vmatprep.mubr.bf16.mxu0 0
  %5915 = vmatmul.mubr.bf16.gmra.mxu0 %v4485
  %v5916 = vpop.f32.mrf.mxu0
  %v5917 = vadd.f32 %v5732, %v5916
  %v5918 = vpop.f32.mrf.mxu0
  %v5919 = vpop.f32.mrf.mxu0
  %v5920 = vadd.f32 %v5735, %v5919
  %v5921 = vpop.f32.mrf.mxu0
  %5922 = vmatprep.mubr.bf16.mxu0 0
  %5923 = vmatmul.mubr.bf16.gmra.mxu0 %v4488
  %v5924 = vpop.f32.mrf.mxu0
  %v5925 = vadd.f32 %v5740, %v5924
  %v5926 = vpop.f32.mrf.mxu0
  %v5927 = vpop.f32.mrf.mxu0
  %v5928 = vadd.f32 %v5743, %v5927
  %v5929 = vpop.f32.mrf.mxu0
  %5930 = vmatprep.mubr.bf16.mxu0 0
  %5931 = vmatmul.mubr.bf16.gmra.mxu0 %v4491
  %v5932 = vpop.f32.mrf.mxu0
  %v5933 = vadd.f32 %v5748, %v5932
  %v5934 = vpop.f32.mrf.mxu0
  %v5935 = vpop.f32.mrf.mxu0
  %v5936 = vadd.f32 %v5751, %v5935
  %v5937 = vpop.f32.mrf.mxu0
  %5938 = vmatprep.mubr.bf16.mxu0 0
  %5939 = vmatmul.mubr.bf16.gmra.mxu0 %v4494
  %v5940 = vpop.f32.mrf.mxu0
  %v5941 = vadd.f32 %v5756, %v5940
  %v5942 = vpop.f32.mrf.mxu0
  %v5943 = vpop.f32.mrf.mxu0
  %v5944 = vadd.f32 %v5759, %v5943
  %v5945 = vpop.f32.mrf.mxu0
  %5946 = vmatprep.mubr.bf16.mxu0 0
  %5947 = vmatmul.mubr.bf16.gmra.mxu0 %v4497
  %v5948 = vpop.f32.mrf.mxu0
  %v5949 = vadd.f32 %v5764, %v5948
  %v5950 = vpop.f32.mrf.mxu0
  %v5951 = vpop.f32.mrf.mxu0
  %v5952 = vadd.f32 %v5767, %v5951
  %v5953 = vpop.f32.mrf.mxu0
  %5954 = vmatprep.mubr.bf16.mxu0 0
  %5955 = vmatmul.mubr.bf16.gmra.mxu0 %v4500
  %v5956 = vpop.f32.mrf.mxu0
  %v5957 = vadd.f32 %v5772, %v5956
  %v5958 = vpop.f32.mrf.mxu0
  %v5959 = vpop.f32.mrf.mxu0
  %v5960 = vadd.f32 %v5775, %v5959
  %v5961 = vpop.f32.mrf.mxu0
  %5962 = vmatprep.mubr.bf16.mxu0 0
  %5963 = vmatmul.mubr.bf16.gmra.mxu0 %v4503
  %v5964 = vpop.f32.mrf.mxu0
  %v5965 = vadd.f32 %v5780, %v5964
  %v5966 = vpop.f32.mrf.mxu0
  %v5967 = vpop.f32.mrf.mxu0
  %v5968 = vadd.f32 %v5783, %v5967
  %v5969 = vpop.f32.mrf.mxu0
  %5970 = vmatprep.mubr.bf16.mxu0 0
  %5971 = vmatmul.mubr.bf16.gmra.mxu0 %v4506
  %v5972 = vpop.f32.mrf.mxu0
  %v5973 = vadd.f32 %v5788, %v5972
  %v5974 = vpop.f32.mrf.mxu0
  %v5975 = vpop.f32.mrf.mxu0
  %v5976 = vadd.f32 %v5791, %v5975
  %v5977 = vpop.f32.mrf.mxu0
  %5978 = vmatprep.mubr.bf16.mxu0 0
  %5979 = vmatmul.mubr.bf16.gmra.mxu0 %v4509
  %v5980 = vpop.f32.mrf.mxu0
  %v5981 = vadd.f32 %v5796, %v5980
  %v5982 = vpop.f32.mrf.mxu0
  %v5983 = vpop.f32.mrf.mxu0
  %v5984 = vadd.f32 %v5799, %v5983
  %v5985 = vpop.f32.mrf.mxu0
  %5986 = vmatprep.mubr.bf16.mxu0 0
  %5987 = vmatmul.mubr.bf16.gmra.mxu0 %v4512
  %v5988 = vpop.f32.mrf.mxu0
  %v5989 = vadd.f32 %v5804, %v5988
  %v5990 = vpop.f32.mrf.mxu0
  %v5991 = vpop.f32.mrf.mxu0
  %v5992 = vadd.f32 %v5807, %v5991
  %v5993 = vpop.f32.mrf.mxu0
  %5994 = vmatprep.mubr.bf16.mxu0 0
  %5995 = vmatmul.mubr.bf16.gmra.mxu0 %v4515
  %v5996 = vpop.f32.mrf.mxu0
  %v5997 = vadd.f32 %v5812, %v5996
  %v5998 = vpop.f32.mrf.mxu0
  %v5999 = vpop.f32.mrf.mxu0
  %v6000 = vadd.f32 %v5815, %v5999
  %v6001 = vpop.f32.mrf.mxu0
  %6002 = vmatprep.mubr.bf16.mxu0 0
  %6003 = vmatmul.mubr.bf16.gmra.mxu0 %v4518
  %v6004 = vpop.f32.mrf.mxu0
  %v6005 = vadd.f32 %v5820, %v6004
  %v6006 = vpop.f32.mrf.mxu0
  %v6007 = vpop.f32.mrf.mxu0
  %v6008 = vadd.f32 %v5823, %v6007
  %v6009 = vpop.f32.mrf.mxu0
  %6010 = vmatprep.mubr.bf16.mxu0 0
  %6011 = vmatmul.mubr.bf16.gmra.mxu0 %v4521
  %v6012 = vpop.f32.mrf.mxu0
  %v6013 = vadd.f32 %v5828, %v6012
  %v6014 = vpop.f32.mrf.mxu0
  %v6015 = vpop.f32.mrf.mxu0
  %v6016 = vadd.f32 %v5831, %v6015
  %v6017 = vpop.f32.mrf.mxu0
  %6018 = vmatprep.mubr.bf16.mxu0 0
  %6019 = vmatmul.mubr.bf16.gmra.mxu0 %v4524
  %v6020 = vpop.f32.mrf.mxu0
  %v6021 = vadd.f32 %v5836, %v6020
  %v6022 = vpop.f32.mrf.mxu0
  %v6023 = vpop.f32.mrf.mxu0
  %v6024 = vadd.f32 %v5839, %v6023
  %v6025 = vpop.f32.mrf.mxu0
  %6026 = vdwg.mxu0
  %s6027 = scalar_lea.vmem %s2, 544
  %v6028 = vld [vmem:[%s6027] sm:$0xf]
  %v6029 = vld [vmem:[%s6027 + $0x4] sm:$0xf]
  %v6030 = vld [vmem:[%s6027 + $0x8] sm:$0xf]
  %v6031 = vld [vmem:[%s6027 + $0xc] sm:$0xf]
  %v6032 = vld [vmem:[%s6027 + $0x10] sm:$0xf]
  %v6033 = vld [vmem:[%s6027 + $0x14] sm:$0xf]
  %v6034 = vld [vmem:[%s6027 + $0x18] sm:$0xf]
  %v6035 = vld [vmem:[%s6027 + $0x1c] sm:$0xf]
  %v6044 = vunpack.c.l.b16 %v6028
  %v6045 = vunpack.c.l.b16 %v6029
  %v6046 = vunpack.c.l.b16 %v6030
  %v6047 = vunpack.c.l.b16 %v6031
  %v6048 = vunpack.c.l.b16 %v6032
  %v6049 = vunpack.c.l.b16 %v6033
  %v6050 = vunpack.c.l.b16 %v6034
  %v6051 = vunpack.c.l.b16 %v6035
  %v6052 = vpack.c.b16 %v6045, %v6044
  %v6053 = vpack.c.b16 %v6047, %v6046
  %v6054 = vpack.c.b16 %v6049, %v6048
  %v6055 = vpack.c.b16 %v6051, %v6050
  %6060 = vmatprep.subr.bf16.mxu0 0
  %6061 = vmatpush1.bf16.msra.mxu0 0
  %6062 = vmatprep.subr.bf16.mxu0 0
  %6063 = vmatpush1.bf16.msra.mxu0 0
  %6064 = vmatprep.subr.bf16.mxu0 0
  %6065 = vmatpush1.bf16.msra.mxu0 0
  %6066 = vmatprep.subr.bf16.mxu0 0
  %6067 = vmatpush1.bf16.msra.mxu0 0
  %6068 = vmatprep.subr.bf16.mxu0 0
  %6069 = vmatpush1.bf16.msra.mxu0 %v6055
  %6070 = vmatprep.subr.bf16.mxu0 0
  %6071 = vmatpush1.bf16.msra.mxu0 %v6054
  %6072 = vmatprep.subr.bf16.mxu0 0
  %6073 = vmatpush1.bf16.msra.mxu0 %v6053
  %6074 = vmatprep.subr.bf16.mxu0 0
  %6075 = vmatpush1.bf16.msra.mxu0 %v6052
  %6076 = vmatprep.subr.bf16.mxu0 0
  %6077 = vmatpush2.bf16.msra.mxu0 0
  %6078 = vmatprep.subr.bf16.mxu0 0
  %6079 = vmatpush2.bf16.msra.mxu0 0
  %6080 = vmatprep.subr.bf16.mxu0 0
  %6081 = vmatpush2.bf16.msra.mxu0 0
  %6082 = vmatprep.subr.bf16.mxu0 0
  %6083 = vmatpush2.bf16.msra.mxu0 0
  %6084 = vmatprep.subr.bf16.mxu0 0
  %6085 = vmatpush2.bf16.msra.mxu0 0
  %6086 = vmatprep.subr.bf16.mxu0 0
  %6087 = vmatpush2.bf16.msra.mxu0 0
  %6088 = vmatprep.subr.bf16.mxu0 0
  %6089 = vmatpush2.bf16.msra.mxu0 0
  %6090 = vmatprep.subr.bf16.mxu0 0
  %6091 = vmatpush2.bf16.msra.mxu0 0
  %6092 = vmatprep.mubr.bf16.mxu0 0
  %6093 = vmatmul.mubr.bf16.gmra.mxu0 %v4721
  %v6094 = vpop.f32.mrf.mxu0
  %v6095 = vadd.f32 0.0, %v6094
  %v6096 = vpop.f32.mrf.mxu0
  %v6097 = vpop.f32.mrf.mxu0
  %v6098 = vadd.f32 0.0, %v6097
  %v6099 = vpop.f32.mrf.mxu0
  %6100 = vmatprep.mubr.bf16.mxu0 0
  %6101 = vmatmul.mubr.bf16.gmra.mxu0 %v4724
  %v6102 = vpop.f32.mrf.mxu0
  %v6103 = vadd.f32 0.0, %v6102
  %v6104 = vpop.f32.mrf.mxu0
  %v6105 = vpop.f32.mrf.mxu0
  %v6106 = vadd.f32 0.0, %v6105
  %v6107 = vpop.f32.mrf.mxu0
  %6108 = vmatprep.mubr.bf16.mxu0 0
  %6109 = vmatmul.mubr.bf16.gmra.mxu0 %v4727
  %v6110 = vpop.f32.mrf.mxu0
  %v6111 = vadd.f32 0.0, %v6110
  %v6112 = vpop.f32.mrf.mxu0
  %v6113 = vpop.f32.mrf.mxu0
  %v6114 = vadd.f32 0.0, %v6113
  %v6115 = vpop.f32.mrf.mxu0
  %6116 = vmatprep.mubr.bf16.mxu0 0
  %6117 = vmatmul.mubr.bf16.gmra.mxu0 %v4730
  %v6118 = vpop.f32.mrf.mxu0
  %v6119 = vadd.f32 0.0, %v6118
  %v6120 = vpop.f32.mrf.mxu0
  %v6121 = vpop.f32.mrf.mxu0
  %v6122 = vadd.f32 0.0, %v6121
  %v6123 = vpop.f32.mrf.mxu0
  %6124 = vmatprep.mubr.bf16.mxu0 0
  %6125 = vmatmul.mubr.bf16.gmra.mxu0 %v4733
  %v6126 = vpop.f32.mrf.mxu0
  %v6127 = vadd.f32 0.0, %v6126
  %v6128 = vpop.f32.mrf.mxu0
  %v6129 = vpop.f32.mrf.mxu0
  %v6130 = vadd.f32 0.0, %v6129
  %v6131 = vpop.f32.mrf.mxu0
  %6132 = vmatprep.mubr.bf16.mxu0 0
  %6133 = vmatmul.mubr.bf16.gmra.mxu0 %v4736
  %v6134 = vpop.f32.mrf.mxu0
  %v6135 = vadd.f32 0.0, %v6134
  %v6136 = vpop.f32.mrf.mxu0
  %v6137 = vpop.f32.mrf.mxu0
  %v6138 = vadd.f32 0.0, %v6137
  %v6139 = vpop.f32.mrf.mxu0
  %6140 = vmatprep.mubr.bf16.mxu0 0
  %6141 = vmatmul.mubr.bf16.gmra.mxu0 %v4739
  %v6142 = vpop.f32.mrf.mxu0
  %v6143 = vadd.f32 0.0, %v6142
  %v6144 = vpop.f32.mrf.mxu0
  %v6145 = vpop.f32.mrf.mxu0
  %v6146 = vadd.f32 0.0, %v6145
  %v6147 = vpop.f32.mrf.mxu0
  %6148 = vmatprep.mubr.bf16.mxu0 0
  %6149 = vmatmul.mubr.bf16.gmra.mxu0 %v4742
  %v6150 = vpop.f32.mrf.mxu0
  %v6151 = vadd.f32 0.0, %v6150
  %v6152 = vpop.f32.mrf.mxu0
  %v6153 = vpop.f32.mrf.mxu0
  %v6154 = vadd.f32 0.0, %v6153
  %v6155 = vpop.f32.mrf.mxu0
  %6156 = vmatprep.mubr.bf16.mxu0 0
  %6157 = vmatmul.mubr.bf16.gmra.mxu0 %v4745
  %v6158 = vpop.f32.mrf.mxu0
  %v6159 = vadd.f32 0.0, %v6158
  %v6160 = vpop.f32.mrf.mxu0
  %v6161 = vpop.f32.mrf.mxu0
  %v6162 = vadd.f32 0.0, %v6161
  %v6163 = vpop.f32.mrf.mxu0
  %6164 = vmatprep.mubr.bf16.mxu0 0
  %6165 = vmatmul.mubr.bf16.gmra.mxu0 %v4748
  %v6166 = vpop.f32.mrf.mxu0
  %v6167 = vadd.f32 0.0, %v6166
  %v6168 = vpop.f32.mrf.mxu0
  %v6169 = vpop.f32.mrf.mxu0
  %v6170 = vadd.f32 0.0, %v6169
  %v6171 = vpop.f32.mrf.mxu0
  %6172 = vmatprep.mubr.bf16.mxu0 0
  %6173 = vmatmul.mubr.bf16.gmra.mxu0 %v4751
  %v6174 = vpop.f32.mrf.mxu0
  %v6175 = vadd.f32 0.0, %v6174
  %v6176 = vpop.f32.mrf.mxu0
  %v6177 = vpop.f32.mrf.mxu0
  %v6178 = vadd.f32 0.0, %v6177
  %v6179 = vpop.f32.mrf.mxu0
  %6180 = vmatprep.mubr.bf16.mxu0 0
  %6181 = vmatmul.mubr.bf16.gmra.mxu0 %v4754
  %v6182 = vpop.f32.mrf.mxu0
  %v6183 = vadd.f32 0.0, %v6182
  %v6184 = vpop.f32.mrf.mxu0
  %v6185 = vpop.f32.mrf.mxu0
  %v6186 = vadd.f32 0.0, %v6185
  %v6187 = vpop.f32.mrf.mxu0
  %6188 = vmatprep.mubr.bf16.mxu0 0
  %6189 = vmatmul.mubr.bf16.gmra.mxu0 %v4757
  %v6190 = vpop.f32.mrf.mxu0
  %v6191 = vadd.f32 0.0, %v6190
  %v6192 = vpop.f32.mrf.mxu0
  %v6193 = vpop.f32.mrf.mxu0
  %v6194 = vadd.f32 0.0, %v6193
  %v6195 = vpop.f32.mrf.mxu0
  %6196 = vmatprep.mubr.bf16.mxu0 0
  %6197 = vmatmul.mubr.bf16.gmra.mxu0 %v4760
  %v6198 = vpop.f32.mrf.mxu0
  %v6199 = vadd.f32 0.0, %v6198
  %v6200 = vpop.f32.mrf.mxu0
  %v6201 = vpop.f32.mrf.mxu0
  %v6202 = vadd.f32 0.0, %v6201
  %v6203 = vpop.f32.mrf.mxu0
  %6204 = vmatprep.mubr.bf16.mxu0 0
  %6205 = vmatmul.mubr.bf16.gmra.mxu0 %v4763
  %v6206 = vpop.f32.mrf.mxu0
  %v6207 = vadd.f32 0.0, %v6206
  %v6208 = vpop.f32.mrf.mxu0
  %v6209 = vpop.f32.mrf.mxu0
  %v6210 = vadd.f32 0.0, %v6209
  %v6211 = vpop.f32.mrf.mxu0
  %6212 = vmatprep.mubr.bf16.mxu0 0
  %6213 = vmatmul.mubr.bf16.gmra.mxu0 %v4766
  %v6214 = vpop.f32.mrf.mxu0
  %v6215 = vadd.f32 0.0, %v6214
  %v6216 = vpop.f32.mrf.mxu0
  %v6217 = vpop.f32.mrf.mxu0
  %v6218 = vadd.f32 0.0, %v6217
  %v6219 = vpop.f32.mrf.mxu0
  %6220 = vdwg.mxu0
  %v6221 = vadd.f32 %v5901, %v6095
  %v6222 = vadd.f32 %v5904, %v6098
  %v6223 = vadd.f32 %v5909, %v6103
  %v6224 = vadd.f32 %v5912, %v6106
  %v6225 = vadd.f32 %v5917, %v6111
  %v6226 = vadd.f32 %v5920, %v6114
  %v6227 = vadd.f32 %v5925, %v6119
  %v6228 = vadd.f32 %v5928, %v6122
  %v6229 = vadd.f32 %v5933, %v6127
  %v6230 = vadd.f32 %v5936, %v6130
  %v6231 = vadd.f32 %v5941, %v6135
  %v6232 = vadd.f32 %v5944, %v6138
  %v6233 = vadd.f32 %v5949, %v6143
  %v6234 = vadd.f32 %v5952, %v6146
  %v6235 = vadd.f32 %v5957, %v6151
  %v6236 = vadd.f32 %v5960, %v6154
  %v6237 = vadd.f32 %v5965, %v6159
  %v6238 = vadd.f32 %v5968, %v6162
  %v6239 = vadd.f32 %v5973, %v6167
  %v6240 = vadd.f32 %v5976, %v6170
  %v6241 = vadd.f32 %v5981, %v6175
  %v6242 = vadd.f32 %v5984, %v6178
  %v6243 = vadd.f32 %v5989, %v6183
  %v6244 = vadd.f32 %v5992, %v6186
  %v6245 = vadd.f32 %v5997, %v6191
  %v6246 = vadd.f32 %v6000, %v6194
  %v6247 = vadd.f32 %v6005, %v6199
  %v6248 = vadd.f32 %v6008, %v6202
  %v6249 = vadd.f32 %v6013, %v6207
  %v6250 = vadd.f32 %v6016, %v6210
  %v6251 = vadd.f32 %v6021, %v6215
  %v6252 = vadd.f32 %v6024, %v6218
  %v6253 = vsel %vm3459, %v6251, %v6223
  %v6254 = vsel %vm3460, %v6252, %v6224
  %v6255 = vsel %vm3461, %v6221, %v6225
  %v6256 = vsel %vm3462, %v6222, %v6226
  %v6257 = vsel %vm3463, %v6223, %v6227
  %v6258 = vsel %vm3464, %v6224, %v6228
  %v6259 = vsel %vm3465, %v6225, %v6229
  %v6260 = vsel %vm3466, %v6226, %v6230
  %v6261 = vsel %vm3467, %v6227, %v6231
  %v6262 = vsel %vm3468, %v6228, %v6232
  %v6263 = vsel %vm3469, %v6229, %v6233
  %v6264 = vsel %vm3470, %v6230, %v6234
  %v6265 = vsel %vm3471, %v6231, %v6235
  %v6266 = vsel %vm3472, %v6232, %v6236
  %v6267 = vsel %vm3473, %v6233, %v6237
  %v6268 = vsel %vm3474, %v6234, %v6238
  %v6269 = vsel %vm3475, %v6235, %v6239
  %v6270 = vsel %vm3476, %v6236, %v6240
  %v6271 = vsel %vm3477, %v6237, %v6241
  %v6272 = vsel %vm3478, %v6238, %v6242
  %v6273 = vsel %vm3479, %v6239, %v6243
  %v6274 = vsel %vm3480, %v6240, %v6244
  %v6275 = vsel %vm3481, %v6241, %v6245
  %v6276 = vsel %vm3482, %v6242, %v6246
  %v6277 = vsel %vm3483, %v6243, %v6247
  %v6278 = vsel %vm3484, %v6244, %v6248
  %v6279 = vsel %vm3485, %v6245, %v6249
  %v6280 = vsel %vm3486, %v6246, %v6250
  %v6281 = vsel %vm3487, %v6247, %v6251
  %v6282 = vsel %vm3488, %v6248, %v6252
  %v6283 = vsel %vm3489, %v6249, %v6221
  %v6284 = vsel %vm3490, %v6250, %v6222
  %v6285 = vadd.f32 %v5607, %v6253
  %v6286 = vadd.f32 %v5608, %v6254
  %v6287 = vadd.f32 %v5609, %v6255
  %v6288 = vadd.f32 %v5610, %v6256
  %v6289 = vadd.f32 %v5611, %v6257
  %v6290 = vadd.f32 %v5612, %v6258
  %v6291 = vadd.f32 %v5613, %v6259
  %v6292 = vadd.f32 %v5614, %v6260
  %v6293 = vadd.f32 %v5615, %v6261
  %v6294 = vadd.f32 %v5616, %v6262
  %v6295 = vadd.f32 %v5617, %v6263
  %v6296 = vadd.f32 %v5618, %v6264
  %v6297 = vadd.f32 %v5619, %v6265
  %v6298 = vadd.f32 %v5620, %v6266
  %v6299 = vadd.f32 %v5621, %v6267
  %v6300 = vadd.f32 %v5622, %v6268
  %v6301 = vadd.f32 %v5623, %v6269
  %v6302 = vadd.f32 %v5624, %v6270
  %v6303 = vadd.f32 %v5625, %v6271
  %v6304 = vadd.f32 %v5626, %v6272
  %v6305 = vadd.f32 %v5627, %v6273
  %v6306 = vadd.f32 %v5628, %v6274
  %v6307 = vadd.f32 %v5629, %v6275
  %v6308 = vadd.f32 %v5630, %v6276
  %v6309 = vadd.f32 %v5631, %v6277
  %v6310 = vadd.f32 %v5632, %v6278
  %v6311 = vadd.f32 %v5633, %v6279
  %v6312 = vadd.f32 %v5634, %v6280
  %v6313 = vadd.f32 %v5635, %v6281
  %v6314 = vadd.f32 %v5636, %v6282
  %v6315 = vadd.f32 %v5637, %v6283
  %v6316 = vadd.f32 %v5638, %v6284
  %v6317 = vld [vmem:[%s5 + $0x2] sm:$0x1]
  %v6318 = vlaneseq
  %v6319 = vshrl.u32 %v6318, 7
  %v6320 = vsub.s32 0, %v6319
  %v6321 = vrot.slane %v6317, %v6320
  %v6322 = vadd.f32 %v6285, %v6321
  %v6323 = vadd.f32 %v6286, %v6321
  %v6324 = vadd.f32 %v6287, %v6321
  %v6325 = vadd.f32 %v6288, %v6321
  %v6326 = vadd.f32 %v6289, %v6321
  %v6327 = vadd.f32 %v6290, %v6321
  %v6328 = vadd.f32 %v6291, %v6321
  %v6329 = vadd.f32 %v6292, %v6321
  %v6330 = vadd.f32 %v6293, %v6321
  %v6331 = vadd.f32 %v6294, %v6321
  %v6332 = vadd.f32 %v6295, %v6321
  %v6333 = vadd.f32 %v6296, %v6321
  %v6334 = vadd.f32 %v6297, %v6321
  %v6335 = vadd.f32 %v6298, %v6321
  %v6336 = vadd.f32 %v6299, %v6321
  %v6337 = vadd.f32 %v6300, %v6321
  %v6338 = vadd.f32 %v6301, %v6321
  %v6339 = vadd.f32 %v6302, %v6321
  %v6340 = vadd.f32 %v6303, %v6321
  %v6341 = vadd.f32 %v6304, %v6321
  %v6342 = vadd.f32 %v6305, %v6321
  %v6343 = vadd.f32 %v6306, %v6321
  %v6344 = vadd.f32 %v6307, %v6321
  %v6345 = vadd.f32 %v6308, %v6321
  %v6346 = vadd.f32 %v6309, %v6321
  %v6347 = vadd.f32 %v6310, %v6321
  %v6348 = vadd.f32 %v6311, %v6321
  %v6349 = vadd.f32 %v6312, %v6321
  %v6350 = vadd.f32 %v6313, %v6321
  %v6351 = vadd.f32 %v6314, %v6321
  %v6352 = vadd.f32 %v6315, %v6321
  %v6353 = vadd.f32 %v6316, %v6321
  %v6354 = vsel %vm571, %v6322, 0.0
  %v6355 = vsel %vm571, %v6323, 0.0
  %v6356 = vadd.f32 %v6354, %v6355
  %v6357 = vsel %vm571, %v6324, 0.0
  %v6358 = vadd.f32 %v6356, %v6357
  %v6359 = vsel %vm571, %v6325, 0.0
  %v6360 = vadd.f32 %v6358, %v6359
  %v6361 = vsel %vm571, %v6326, 0.0
  %v6362 = vadd.f32 %v6360, %v6361
  %v6363 = vsel %vm571, %v6327, 0.0
  %v6364 = vadd.f32 %v6362, %v6363
  %v6365 = vsel %vm571, %v6328, 0.0
  %v6366 = vadd.f32 %v6364, %v6365
  %v6367 = vsel %vm571, %v6329, 0.0
  %v6368 = vadd.f32 %v6366, %v6367
  %v6369 = vsel %vm571, %v6330, 0.0
  %v6370 = vadd.f32 %v6368, %v6369
  %v6371 = vsel %vm571, %v6331, 0.0
  %v6372 = vadd.f32 %v6370, %v6371
  %v6373 = vsel %vm571, %v6332, 0.0
  %v6374 = vadd.f32 %v6372, %v6373
  %v6375 = vsel %vm571, %v6333, 0.0
  %v6376 = vadd.f32 %v6374, %v6375
  %v6377 = vsel %vm571, %v6334, 0.0
  %v6378 = vadd.f32 %v6376, %v6377
  %v6379 = vsel %vm571, %v6335, 0.0
  %v6380 = vadd.f32 %v6378, %v6379
  %v6381 = vsel %vm571, %v6336, 0.0
  %v6382 = vadd.f32 %v6380, %v6381
  %v6383 = vsel %vm571, %v6337, 0.0
  %v6384 = vadd.f32 %v6382, %v6383
  %v6385 = vsel %vm571, %v6338, 0.0
  %v6386 = vadd.f32 %v6384, %v6385
  %v6387 = vsel %vm571, %v6339, 0.0
  %v6388 = vadd.f32 %v6386, %v6387
  %v6389 = vsel %vm571, %v6340, 0.0
  %v6390 = vadd.f32 %v6388, %v6389
  %v6391 = vsel %vm571, %v6341, 0.0
  %v6392 = vadd.f32 %v6390, %v6391
  %v6393 = vsel %vm571, %v6342, 0.0
  %v6394 = vadd.f32 %v6392, %v6393
  %v6395 = vsel %vm571, %v6343, 0.0
  %v6396 = vadd.f32 %v6394, %v6395
  %v6397 = vsel %vm571, %v6344, 0.0
  %v6398 = vadd.f32 %v6396, %v6397
  %v6399 = vsel %vm571, %v6345, 0.0
  %v6400 = vadd.f32 %v6398, %v6399
  %v6401 = vsel %vm571, %v6346, 0.0
  %v6402 = vadd.f32 %v6400, %v6401
  %v6403 = vsel %vm571, %v6347, 0.0
  %v6404 = vadd.f32 %v6402, %v6403
  %v6405 = vsel %vm571, %v6348, 0.0
  %v6406 = vadd.f32 %v6404, %v6405
  %v6407 = vsel %vm571, %v6349, 0.0
  %v6408 = vadd.f32 %v6406, %v6407
  %v6409 = vsel %vm571, %v6350, 0.0
  %v6410 = vadd.f32 %v6408, %v6409
  %v6411 = vsel %vm571, %v6351, 0.0
  %v6412 = vadd.f32 %v6410, %v6411
  %v6413 = vsel %vm571, %v6352, 0.0
  %v6414 = vadd.f32 %v6412, %v6413
  %v6415 = vsel %vm571, %v6353, 0.0
  %v6416 = vadd.f32 %v6414, %v6415
  %v6417 = vrot.slane %v6416, 4
  %v6418 = vadd.f32 %v6416, %v6417
  %v6419 = vrot.slane %v6418, 2
  %v6420 = vadd.f32 %v6418, %v6419
  %v6421 = vrot.slane %v6420, 1
  %v6422 = vadd.f32 %v6420, %v6421
  %v6423 = vmul.f32 %v6322, %v6322
  %v6424 = vmul.f32 %v6323, %v6323
  %v6425 = vmul.f32 %v6324, %v6324
  %v6426 = vmul.f32 %v6325, %v6325
  %v6427 = vmul.f32 %v6326, %v6326
  %v6428 = vmul.f32 %v6327, %v6327
  %v6429 = vmul.f32 %v6328, %v6328
  %v6430 = vmul.f32 %v6329, %v6329
  %v6431 = vmul.f32 %v6330, %v6330
  %v6432 = vmul.f32 %v6331, %v6331
  %v6433 = vmul.f32 %v6332, %v6332
  %v6434 = vmul.f32 %v6333, %v6333
  %v6435 = vmul.f32 %v6334, %v6334
  %v6436 = vmul.f32 %v6335, %v6335
  %v6437 = vmul.f32 %v6336, %v6336
  %v6438 = vmul.f32 %v6337, %v6337
  %v6439 = vmul.f32 %v6338, %v6338
  %v6440 = vmul.f32 %v6339, %v6339
  %v6441 = vmul.f32 %v6340, %v6340
  %v6442 = vmul.f32 %v6341, %v6341
  %v6443 = vmul.f32 %v6342, %v6342
  %v6444 = vmul.f32 %v6343, %v6343
  %v6445 = vmul.f32 %v6344, %v6344
  %v6446 = vmul.f32 %v6345, %v6345
  %v6447 = vmul.f32 %v6346, %v6346
  %v6448 = vmul.f32 %v6347, %v6347
  %v6449 = vmul.f32 %v6348, %v6348
  %v6450 = vmul.f32 %v6349, %v6349
  %v6451 = vmul.f32 %v6350, %v6350
  %v6452 = vmul.f32 %v6351, %v6351
  %v6453 = vmul.f32 %v6352, %v6352
  %v6454 = vmul.f32 %v6353, %v6353
  %v6455 = vsel %vm571, %v6423, 0.0
  %v6456 = vsel %vm571, %v6424, 0.0
  %v6457 = vadd.f32 %v6455, %v6456
  %v6458 = vsel %vm571, %v6425, 0.0
  %v6459 = vadd.f32 %v6457, %v6458
  %v6460 = vsel %vm571, %v6426, 0.0
  %v6461 = vadd.f32 %v6459, %v6460
  %v6462 = vsel %vm571, %v6427, 0.0
  %v6463 = vadd.f32 %v6461, %v6462
  %v6464 = vsel %vm571, %v6428, 0.0
  %v6465 = vadd.f32 %v6463, %v6464
  %v6466 = vsel %vm571, %v6429, 0.0
  %v6467 = vadd.f32 %v6465, %v6466
  %v6468 = vsel %vm571, %v6430, 0.0
  %v6469 = vadd.f32 %v6467, %v6468
  %v6470 = vsel %vm571, %v6431, 0.0
  %v6471 = vadd.f32 %v6469, %v6470
  %v6472 = vsel %vm571, %v6432, 0.0
  %v6473 = vadd.f32 %v6471, %v6472
  %v6474 = vsel %vm571, %v6433, 0.0
  %v6475 = vadd.f32 %v6473, %v6474
  %v6476 = vsel %vm571, %v6434, 0.0
  %v6477 = vadd.f32 %v6475, %v6476
  %v6478 = vsel %vm571, %v6435, 0.0
  %v6479 = vadd.f32 %v6477, %v6478
  %v6480 = vsel %vm571, %v6436, 0.0
  %v6481 = vadd.f32 %v6479, %v6480
  %v6482 = vsel %vm571, %v6437, 0.0
  %v6483 = vadd.f32 %v6481, %v6482
  %v6484 = vsel %vm571, %v6438, 0.0
  %v6485 = vadd.f32 %v6483, %v6484
  %v6486 = vsel %vm571, %v6439, 0.0
  %v6487 = vadd.f32 %v6485, %v6486
  %v6488 = vsel %vm571, %v6440, 0.0
  %v6489 = vadd.f32 %v6487, %v6488
  %v6490 = vsel %vm571, %v6441, 0.0
  %v6491 = vadd.f32 %v6489, %v6490
  %v6492 = vsel %vm571, %v6442, 0.0
  %v6493 = vadd.f32 %v6491, %v6492
  %v6494 = vsel %vm571, %v6443, 0.0
  %v6495 = vadd.f32 %v6493, %v6494
  %v6496 = vsel %vm571, %v6444, 0.0
  %v6497 = vadd.f32 %v6495, %v6496
  %v6498 = vsel %vm571, %v6445, 0.0
  %v6499 = vadd.f32 %v6497, %v6498
  %v6500 = vsel %vm571, %v6446, 0.0
  %v6501 = vadd.f32 %v6499, %v6500
  %v6502 = vsel %vm571, %v6447, 0.0
  %v6503 = vadd.f32 %v6501, %v6502
  %v6504 = vsel %vm571, %v6448, 0.0
  %v6505 = vadd.f32 %v6503, %v6504
  %v6506 = vsel %vm571, %v6449, 0.0
  %v6507 = vadd.f32 %v6505, %v6506
  %v6508 = vsel %vm571, %v6450, 0.0
  %v6509 = vadd.f32 %v6507, %v6508
  %v6510 = vsel %vm571, %v6451, 0.0
  %v6511 = vadd.f32 %v6509, %v6510
  %v6512 = vsel %vm571, %v6452, 0.0
  %v6513 = vadd.f32 %v6511, %v6512
  %v6514 = vsel %vm571, %v6453, 0.0
  %v6515 = vadd.f32 %v6513, %v6514
  %v6516 = vsel %vm571, %v6454, 0.0
  %v6517 = vadd.f32 %v6515, %v6516
  %v6518 = vrot.slane %v6517, 4
  %v6519 = vadd.f32 %v6517, %v6518
  %v6520 = vrot.slane %v6519, 2
  %v6521 = vadd.f32 %v6519, %v6520
  %v6522 = vrot.slane %v6521, 1
  %v6523 = vadd.f32 %v6521, %v6522
  %6524 = vrot.lane.b32.xlu0 %v6422, 64
  %v6525 = vpop.permute.xlu0 %6524
  %v6526 = vsel %vm742, %v6525, %v6422
  %6527 = vrot.lane.b32.xlu0 %v6526, 64
  %v6528 = vpop.permute.xlu0 %6527
  %v6529 = vsel %vm742, %v6528, %v6422
  %6531 = vrot.lane.b32.xlu0 %v6529, 96
  %v6532 = vpop.permute.xlu0 %6531
  %v6534 = vadd.f32 %v6422, %v6532
  %6535 = vrot.lane.b32.xlu0 %v6523, 64
  %v6536 = vpop.permute.xlu0 %6535
  %v6537 = vsel %vm742, %v6536, %v6523
  %6538 = vrot.lane.b32.xlu0 %v6537, 64
  %v6539 = vpop.permute.xlu0 %6538
  %v6540 = vsel %vm742, %v6539, %v6523
  %6542 = vrot.lane.b32.xlu0 %v6540, 96
  %v6543 = vpop.permute.xlu0 %6542
  %v6545 = vadd.f32 %v6523, %v6543
  %v6546 = vmul.f32 %v6534, 0.001953125
  %v6547 = vmul.f32 %v6545, 0.001953125
  %v6548 = vmul.f32 %v6546, %v6546
  %v6549 = vsub.f32 %v6547, %v6548
  %v6550 = vld [vmem:[%s6 + $0x2] sm:$0x1]
  %v6551 = vadd.f32 %v6549, 1e-05
  %v6552 = vrsqrt.pop %v6551
  %v6553 = vmul.f32 %v6550, %v6552
  %v6554 = vld [vmem:[%s7 + $0x2] sm:$0x1]
  %v6555 = vmul.f32 %v6546, %v6553
  %v6556 = vsub.f32 %v6554, %v6555
  %v6557 = vlaneseq
  %v6558 = vshrl.u32 %v6557, 7
  %v6559 = vsub.s32 0, %v6558
  %v6560 = vrot.slane %v6553, %v6559
  %v6561 = vmul.f32 %v6322, %v6560
  %v6562 = vmul.f32 %v6323, %v6560
  %v6563 = vmul.f32 %v6324, %v6560
  %v6564 = vmul.f32 %v6325, %v6560
  %v6565 = vmul.f32 %v6326, %v6560
  %v6566 = vmul.f32 %v6327, %v6560
  %v6567 = vmul.f32 %v6328, %v6560
  %v6568 = vmul.f32 %v6329, %v6560
  %v6569 = vmul.f32 %v6330, %v6560
  %v6570 = vmul.f32 %v6331, %v6560
  %v6571 = vmul.f32 %v6332, %v6560
  %v6572 = vmul.f32 %v6333, %v6560
  %v6573 = vmul.f32 %v6334, %v6560
  %v6574 = vmul.f32 %v6335, %v6560
  %v6575 = vmul.f32 %v6336, %v6560
  %v6576 = vmul.f32 %v6337, %v6560
  %v6577 = vmul.f32 %v6338, %v6560
  %v6578 = vmul.f32 %v6339, %v6560
  %v6579 = vmul.f32 %v6340, %v6560
  %v6580 = vmul.f32 %v6341, %v6560
  %v6581 = vmul.f32 %v6342, %v6560
  %v6582 = vmul.f32 %v6343, %v6560
  %v6583 = vmul.f32 %v6344, %v6560
  %v6584 = vmul.f32 %v6345, %v6560
  %v6585 = vmul.f32 %v6346, %v6560
  %v6586 = vmul.f32 %v6347, %v6560
  %v6587 = vmul.f32 %v6348, %v6560
  %v6588 = vmul.f32 %v6349, %v6560
  %v6589 = vmul.f32 %v6350, %v6560
  %v6590 = vmul.f32 %v6351, %v6560
  %v6591 = vmul.f32 %v6352, %v6560
  %v6592 = vmul.f32 %v6353, %v6560
  %v6593 = vlaneseq
  %v6594 = vshrl.u32 %v6593, 7
  %v6595 = vsub.s32 0, %v6594
  %v6596 = vrot.slane %v6556, %v6595
  %v6597 = vadd.f32 %v6561, %v6596
  %v6598 = vadd.f32 %v6562, %v6596
  %v6599 = vadd.f32 %v6563, %v6596
  %v6600 = vadd.f32 %v6564, %v6596
  %v6601 = vadd.f32 %v6565, %v6596
  %v6602 = vadd.f32 %v6566, %v6596
  %v6603 = vadd.f32 %v6567, %v6596
  %v6604 = vadd.f32 %v6568, %v6596
  %v6605 = vadd.f32 %v6569, %v6596
  %v6606 = vadd.f32 %v6570, %v6596
  %v6607 = vadd.f32 %v6571, %v6596
  %v6608 = vadd.f32 %v6572, %v6596
  %v6609 = vadd.f32 %v6573, %v6596
  %v6610 = vadd.f32 %v6574, %v6596
  %v6611 = vadd.f32 %v6575, %v6596
  %v6612 = vadd.f32 %v6576, %v6596
  %v6613 = vadd.f32 %v6577, %v6596
  %v6614 = vadd.f32 %v6578, %v6596
  %v6615 = vadd.f32 %v6579, %v6596
  %v6616 = vadd.f32 %v6580, %v6596
  %v6617 = vadd.f32 %v6581, %v6596
  %v6618 = vadd.f32 %v6582, %v6596
  %v6619 = vadd.f32 %v6583, %v6596
  %v6620 = vadd.f32 %v6584, %v6596
  %v6621 = vadd.f32 %v6585, %v6596
  %v6622 = vadd.f32 %v6586, %v6596
  %v6623 = vadd.f32 %v6587, %v6596
  %v6624 = vadd.f32 %v6588, %v6596
  %v6625 = vadd.f32 %v6589, %v6596
  %v6626 = vadd.f32 %v6590, %v6596
  %v6627 = vadd.f32 %v6591, %v6596
  %v6628 = vadd.f32 %v6592, %v6596
  %vm6629 = vcmp.ge.f32.partialorder %v6597, 0.0
  %vm6630 = vcmp.ge.f32.partialorder %v6598, 0.0
  %vm6631 = vcmp.ge.f32.partialorder %v6599, 0.0
  %vm6632 = vcmp.ge.f32.partialorder %v6600, 0.0
  %vm6633 = vcmp.ge.f32.partialorder %v6601, 0.0
  %vm6634 = vcmp.ge.f32.partialorder %v6602, 0.0
  %vm6635 = vcmp.ge.f32.partialorder %v6603, 0.0
  %vm6636 = vcmp.ge.f32.partialorder %v6604, 0.0
  %vm6637 = vcmp.ge.f32.partialorder %v6605, 0.0
  %vm6638 = vcmp.ge.f32.partialorder %v6606, 0.0
  %vm6639 = vcmp.ge.f32.partialorder %v6607, 0.0
  %vm6640 = vcmp.ge.f32.partialorder %v6608, 0.0
  %vm6641 = vcmp.ge.f32.partialorder %v6609, 0.0
  %vm6642 = vcmp.ge.f32.partialorder %v6610, 0.0
  %vm6643 = vcmp.ge.f32.partialorder %v6611, 0.0
  %vm6644 = vcmp.ge.f32.partialorder %v6612, 0.0
  %vm6645 = vcmp.ge.f32.partialorder %v6613, 0.0
  %vm6646 = vcmp.ge.f32.partialorder %v6614, 0.0
  %vm6647 = vcmp.ge.f32.partialorder %v6615, 0.0
  %vm6648 = vcmp.ge.f32.partialorder %v6616, 0.0
  %vm6649 = vcmp.ge.f32.partialorder %v6617, 0.0
  %vm6650 = vcmp.ge.f32.partialorder %v6618, 0.0
  %vm6651 = vcmp.ge.f32.partialorder %v6619, 0.0
  %vm6652 = vcmp.ge.f32.partialorder %v6620, 0.0
  %vm6653 = vcmp.ge.f32.partialorder %v6621, 0.0
  %vm6654 = vcmp.ge.f32.partialorder %v6622, 0.0
  %vm6655 = vcmp.ge.f32.partialorder %v6623, 0.0
  %vm6656 = vcmp.ge.f32.partialorder %v6624, 0.0
  %vm6657 = vcmp.ge.f32.partialorder %v6625, 0.0
  %vm6658 = vcmp.ge.f32.partialorder %v6626, 0.0
  %vm6659 = vcmp.ge.f32.partialorder %v6627, 0.0
  %vm6660 = vcmp.ge.f32.partialorder %v6628, 0.0
  %v6661 = vmul.f32 %v6597, 0.2
  %v6662 = vmul.f32 %v6598, 0.2
  %v6663 = vmul.f32 %v6599, 0.2
  %v6664 = vmul.f32 %v6600, 0.2
  %v6665 = vmul.f32 %v6601, 0.2
  %v6666 = vmul.f32 %v6602, 0.2
  %v6667 = vmul.f32 %v6603, 0.2
  %v6668 = vmul.f32 %v6604, 0.2
  %v6669 = vmul.f32 %v6605, 0.2
  %v6670 = vmul.f32 %v6606, 0.2
  %v6671 = vmul.f32 %v6607, 0.2
  %v6672 = vmul.f32 %v6608, 0.2
  %v6673 = vmul.f32 %v6609, 0.2
  %v6674 = vmul.f32 %v6610, 0.2
  %v6675 = vmul.f32 %v6611, 0.2
  %v6676 = vmul.f32 %v6612, 0.2
  %v6677 = vmul.f32 %v6613, 0.2
  %v6678 = vmul.f32 %v6614, 0.2
  %v6679 = vmul.f32 %v6615, 0.2
  %v6680 = vmul.f32 %v6616, 0.2
  %v6681 = vmul.f32 %v6617, 0.2
  %v6682 = vmul.f32 %v6618, 0.2
  %v6683 = vmul.f32 %v6619, 0.2
  %v6684 = vmul.f32 %v6620, 0.2
  %v6685 = vmul.f32 %v6621, 0.2
  %v6686 = vmul.f32 %v6622, 0.2
  %v6687 = vmul.f32 %v6623, 0.2
  %v6688 = vmul.f32 %v6624, 0.2
  %v6689 = vmul.f32 %v6625, 0.2
  %v6690 = vmul.f32 %v6626, 0.2
  %v6691 = vmul.f32 %v6627, 0.2
  %v6692 = vmul.f32 %v6628, 0.2
  %v6693 = vsel %vm6629, %v6597, %v6661
  %v6694 = vsel %vm6630, %v6598, %v6662
  %v6695 = vsel %vm6631, %v6599, %v6663
  %v6696 = vsel %vm6632, %v6600, %v6664
  %v6697 = vsel %vm6633, %v6601, %v6665
  %v6698 = vsel %vm6634, %v6602, %v6666
  %v6699 = vsel %vm6635, %v6603, %v6667
  %v6700 = vsel %vm6636, %v6604, %v6668
  %v6701 = vsel %vm6637, %v6605, %v6669
  %v6702 = vsel %vm6638, %v6606, %v6670
  %v6703 = vsel %vm6639, %v6607, %v6671
  %v6704 = vsel %vm6640, %v6608, %v6672
  %v6705 = vsel %vm6641, %v6609, %v6673
  %v6706 = vsel %vm6642, %v6610, %v6674
  %v6707 = vsel %vm6643, %v6611, %v6675
  %v6708 = vsel %vm6644, %v6612, %v6676
  %v6709 = vsel %vm6645, %v6613, %v6677
  %v6710 = vsel %vm6646, %v6614, %v6678
  %v6711 = vsel %vm6647, %v6615, %v6679
  %v6712 = vsel %vm6648, %v6616, %v6680
  %v6713 = vsel %vm6649, %v6617, %v6681
  %v6714 = vsel %vm6650, %v6618, %v6682
  %v6715 = vsel %vm6651, %v6619, %v6683
  %v6716 = vsel %vm6652, %v6620, %v6684
  %v6717 = vsel %vm6653, %v6621, %v6685
  %v6718 = vsel %vm6654, %v6622, %v6686
  %v6719 = vsel %vm6655, %v6623, %v6687
  %v6720 = vsel %vm6656, %v6624, %v6688
  %v6721 = vsel %vm6657, %v6625, %v6689
  %v6722 = vsel %vm6658, %v6626, %v6690
  %v6723 = vsel %vm6659, %v6627, %v6691
  %v6724 = vsel %vm6660, %v6628, %v6692
  %v6725 = vrot.slane %v6693, 7
  %v6726 = vrot.slane %v6694, 7
  %v6727 = vrot.slane %v6695, 7
  %v6728 = vrot.slane %v6696, 7
  %v6729 = vrot.slane %v6697, 7
  %v6730 = vrot.slane %v6698, 7
  %v6731 = vrot.slane %v6699, 7
  %v6732 = vrot.slane %v6700, 7
  %v6733 = vrot.slane %v6701, 7
  %v6734 = vrot.slane %v6702, 7
  %v6735 = vrot.slane %v6703, 7
  %v6736 = vrot.slane %v6704, 7
  %v6737 = vrot.slane %v6705, 7
  %v6738 = vrot.slane %v6706, 7
  %v6739 = vrot.slane %v6707, 7
  %v6740 = vrot.slane %v6708, 7
  %v6741 = vrot.slane %v6709, 7
  %v6742 = vrot.slane %v6710, 7
  %v6743 = vrot.slane %v6711, 7
  %v6744 = vrot.slane %v6712, 7
  %v6745 = vrot.slane %v6713, 7
  %v6746 = vrot.slane %v6714, 7
  %v6747 = vrot.slane %v6715, 7
  %v6748 = vrot.slane %v6716, 7
  %v6749 = vrot.slane %v6717, 7
  %v6750 = vrot.slane %v6718, 7
  %v6751 = vrot.slane %v6719, 7
  %v6752 = vrot.slane %v6720, 7
  %v6753 = vrot.slane %v6721, 7
  %v6754 = vrot.slane %v6722, 7
  %v6755 = vrot.slane %v6723, 7
  %v6756 = vrot.slane %v6724, 7
  %v6757 = vsel %vm976, %v6755, %v6756
  %v6758 = vsel %vm976, %v6754, %v6755
  %v6759 = vsel %vm976, %v6753, %v6754
  %v6760 = vsel %vm976, %v6752, %v6753
  %v6761 = vsel %vm976, %v6751, %v6752
  %v6762 = vsel %vm976, %v6750, %v6751
  %v6763 = vsel %vm976, %v6749, %v6750
  %v6764 = vsel %vm976, %v6748, %v6749
  %v6765 = vsel %vm976, %v6747, %v6748
  %v6766 = vsel %vm976, %v6746, %v6747
  %v6767 = vsel %vm976, %v6745, %v6746
  %v6768 = vsel %vm976, %v6744, %v6745
  %v6769 = vsel %vm976, %v6743, %v6744
  %v6770 = vsel %vm976, %v6742, %v6743
  %v6771 = vsel %vm976, %v6741, %v6742
  %v6772 = vsel %vm976, %v6740, %v6741
  %v6773 = vsel %vm976, %v6739, %v6740
  %v6774 = vsel %vm976, %v6738, %v6739
  %v6775 = vsel %vm976, %v6737, %v6738
  %v6776 = vsel %vm976, %v6736, %v6737
  %v6777 = vsel %vm976, %v6735, %v6736
  %v6778 = vsel %vm976, %v6734, %v6735
  %v6779 = vsel %vm976, %v6733, %v6734
  %v6780 = vsel %vm976, %v6732, %v6733
  %v6781 = vsel %vm976, %v6731, %v6732
  %v6782 = vsel %vm976, %v6730, %v6731
  %v6783 = vsel %vm976, %v6729, %v6730
  %v6784 = vsel %vm976, %v6728, %v6729
  %v6785 = vsel %vm976, %v6727, %v6728
  %v6786 = vsel %vm976, %v6726, %v6727
  %v6787 = vsel %vm976, %v6725, %v6726
  %v6788 = vsel %vm976, %v6756, %v6725
  %v6789 = vrot.slane %v6693, 1
  %v6790 = vrot.slane %v6694, 1
  %v6791 = vrot.slane %v6695, 1
  %v6792 = vrot.slane %v6696, 1
  %v6793 = vrot.slane %v6697, 1
  %v6794 = vrot.slane %v6698, 1
  %v6795 = vrot.slane %v6699, 1
  %v6796 = vrot.slane %v6700, 1
  %v6797 = vrot.slane %v6701, 1
  %v6798 = vrot.slane %v6702, 1
  %v6799 = vrot.slane %v6703, 1
  %v6800 = vrot.slane %v6704, 1
  %v6801 = vrot.slane %v6705, 1
  %v6802 = vrot.slane %v6706, 1
  %v6803 = vrot.slane %v6707, 1
  %v6804 = vrot.slane %v6708, 1
  %v6805 = vrot.slane %v6709, 1
  %v6806 = vrot.slane %v6710, 1
  %v6807 = vrot.slane %v6711, 1
  %v6808 = vrot.slane %v6712, 1
  %v6809 = vrot.slane %v6713, 1
  %v6810 = vrot.slane %v6714, 1
  %v6811 = vrot.slane %v6715, 1
  %v6812 = vrot.slane %v6716, 1
  %v6813 = vrot.slane %v6717, 1
  %v6814 = vrot.slane %v6718, 1
  %v6815 = vrot.slane %v6719, 1
  %v6816 = vrot.slane %v6720, 1
  %v6817 = vrot.slane %v6721, 1
  %v6818 = vrot.slane %v6722, 1
  %v6819 = vrot.slane %v6723, 1
  %v6820 = vrot.slane %v6724, 1
  %v6821 = vsel %vm1041, %v6819, %v6820
  %v6822 = vsel %vm1041, %v6818, %v6819
  %v6823 = vsel %vm1041, %v6817, %v6818
  %v6824 = vsel %vm1041, %v6816, %v6817
  %v6825 = vsel %vm1041, %v6815, %v6816
  %v6826 = vsel %vm1041, %v6814, %v6815
  %v6827 = vsel %vm1041, %v6813, %v6814
  %v6828 = vsel %vm1041, %v6812, %v6813
  %v6829 = vsel %vm1041, %v6811, %v6812
  %v6830 = vsel %vm1041, %v6810, %v6811
  %v6831 = vsel %vm1041, %v6809, %v6810
  %v6832 = vsel %vm1041, %v6808, %v6809
  %v6833 = vsel %vm1041, %v6807, %v6808
  %v6834 = vsel %vm1041, %v6806, %v6807
  %v6835 = vsel %vm1041, %v6805, %v6806
  %v6836 = vsel %vm1041, %v6804, %v6805
  %v6837 = vsel %vm1041, %v6803, %v6804
  %v6838 = vsel %vm1041, %v6802, %v6803
  %v6839 = vsel %vm1041, %v6801, %v6802
  %v6840 = vsel %vm1041, %v6800, %v6801
  %v6841 = vsel %vm1041, %v6799, %v6800
  %v6842 = vsel %vm1041, %v6798, %v6799
  %v6843 = vsel %vm1041, %v6797, %v6798
  %v6844 = vsel %vm1041, %v6796, %v6797
  %v6845 = vsel %vm1041, %v6795, %v6796
  %v6846 = vsel %vm1041, %v6794, %v6795
  %v6847 = vsel %vm1041, %v6793, %v6794
  %v6848 = vsel %vm1041, %v6792, %v6793
  %v6849 = vsel %vm1041, %v6791, %v6792
  %v6850 = vsel %vm1041, %v6790, %v6791
  %v6851 = vsel %vm1041, %v6789, %v6790
  %v6852 = vsel %vm1041, %v6820, %v6789
  %v6853 = vsel %vm1106, %v6851, %v6788
  %v6854 = vsel %vm1107, %v6850, %v6787
  %v6855 = vsel %vm1108, %v6849, %v6786
  %v6856 = vsel %vm1109, %v6848, %v6785
  %v6857 = vsel %vm1110, %v6847, %v6784
  %v6858 = vsel %vm1111, %v6846, %v6783
  %v6859 = vsel %vm1112, %v6845, %v6782
  %v6860 = vsel %vm1113, %v6844, %v6781
  %v6861 = vsel %vm1114, %v6843, %v6780
  %v6862 = vsel %vm1115, %v6842, %v6779
  %v6863 = vsel %vm1116, %v6841, %v6778
  %v6864 = vsel %vm1117, %v6840, %v6777
  %v6865 = vsel %vm1118, %v6839, %v6776
  %v6866 = vsel %vm1119, %v6838, %v6775
  %v6867 = vsel %vm1120, %v6837, %v6774
  %v6868 = vsel %vm1121, %v6836, %v6773
  %v6869 = vsel %vm1122, %v6835, %v6772
  %v6870 = vsel %vm1123, %v6834, %v6771
  %v6871 = vsel %vm1124, %v6833, %v6770
  %v6872 = vsel %vm1125, %v6832, %v6769
  %v6873 = vsel %vm1126, %v6831, %v6768
  %v6874 = vsel %vm1127, %v6830, %v6767
  %v6875 = vsel %vm1128, %v6829, %v6766
  %v6876 = vsel %vm1129, %v6828, %v6765
  %v6877 = vsel %vm1130, %v6827, %v6764
  %v6878 = vsel %vm1131, %v6826, %v6763
  %v6879 = vsel %vm1132, %v6825, %v6762
  %v6880 = vsel %vm1133, %v6824, %v6761
  %v6881 = vsel %vm1134, %v6823, %v6760
  %v6882 = vsel %vm1135, %v6822, %v6759
  %v6883 = vsel %vm1136, %v6821, %v6758
  %v6884 = vsel %vm1137, %v6852, %v6757
  %v6885 = vsel %vm1202, %v6788, %v6851
  %v6886 = vsel %vm1203, %v6787, %v6850
  %v6887 = vsel %vm1204, %v6786, %v6849
  %v6888 = vsel %vm1205, %v6785, %v6848
  %v6889 = vsel %vm1206, %v6784, %v6847
  %v6890 = vsel %vm1207, %v6783, %v6846
  %v6891 = vsel %vm1208, %v6782, %v6845
  %v6892 = vsel %vm1209, %v6781, %v6844
  %v6893 = vsel %vm1210, %v6780, %v6843
  %v6894 = vsel %vm1211, %v6779, %v6842
  %v6895 = vsel %vm1212, %v6778, %v6841
  %v6896 = vsel %vm1213, %v6777, %v6840
  %v6897 = vsel %vm1214, %v6776, %v6839
  %v6898 = vsel %vm1215, %v6775, %v6838
  %v6899 = vsel %vm1216, %v6774, %v6837
  %v6900 = vsel %vm1217, %v6773, %v6836
  %v6901 = vsel %vm1218, %v6772, %v6835
  %v6902 = vsel %vm1219, %v6771, %v6834
  %v6903 = vsel %vm1220, %v6770, %v6833
  %v6904 = vsel %vm1221, %v6769, %v6832
  %v6905 = vsel %vm1222, %v6768, %v6831
  %v6906 = vsel %vm1223, %v6767, %v6830
  %v6907 = vsel %vm1224, %v6766, %v6829
  %v6908 = vsel %vm1225, %v6765, %v6828
  %v6909 = vsel %vm1226, %v6764, %v6827
  %v6910 = vsel %vm1227, %v6763, %v6826
  %v6911 = vsel %vm1228, %v6762, %v6825
  %v6912 = vsel %vm1229, %v6761, %v6824
  %v6913 = vsel %vm1230, %v6760, %v6823
  %v6914 = vsel %vm1231, %v6759, %v6822
  %v6915 = vsel %vm1232, %v6758, %v6821
  %v6916 = vsel %vm1233, %v6757, %v6852
  %v6917 = vpack.c.bf16 %v6854, %v6853
  %v6918 = vpack.c.bf16 %v6856, %v6855
  %v6919 = vpack.c.bf16 %v6858, %v6857
  %v6920 = vpack.c.bf16 %v6860, %v6859
  %v6921 = vpack.c.bf16 %v6862, %v6861
  %v6922 = vpack.c.bf16 %v6864, %v6863
  %v6923 = vpack.c.bf16 %v6866, %v6865
  %v6924 = vpack.c.bf16 %v6868, %v6867
  %v6925 = vpack.c.bf16 %v6870, %v6869
  %v6926 = vpack.c.bf16 %v6872, %v6871
  %v6927 = vpack.c.bf16 %v6874, %v6873
  %v6928 = vpack.c.bf16 %v6876, %v6875
  %v6929 = vpack.c.bf16 %v6878, %v6877
  %v6930 = vpack.c.bf16 %v6880, %v6879
  %v6931 = vpack.c.bf16 %v6882, %v6881
  %v6932 = vpack.c.bf16 %v6884, %v6883
  %v6933 = vpack.c.bf16 %v6694, %v6693
  %v6934 = vpack.c.bf16 %v6696, %v6695
  %v6935 = vpack.c.bf16 %v6698, %v6697
  %v6936 = vpack.c.bf16 %v6700, %v6699
  %v6937 = vpack.c.bf16 %v6702, %v6701
  %v6938 = vpack.c.bf16 %v6704, %v6703
  %v6939 = vpack.c.bf16 %v6706, %v6705
  %v6940 = vpack.c.bf16 %v6708, %v6707
  %v6941 = vpack.c.bf16 %v6710, %v6709
  %v6942 = vpack.c.bf16 %v6712, %v6711
  %v6943 = vpack.c.bf16 %v6714, %v6713
  %v6944 = vpack.c.bf16 %v6716, %v6715
  %v6945 = vpack.c.bf16 %v6718, %v6717
  %v6946 = vpack.c.bf16 %v6720, %v6719
  %v6947 = vpack.c.bf16 %v6722, %v6721
  %v6948 = vpack.c.bf16 %v6724, %v6723
  %v6949 = vpack.c.bf16 %v6886, %v6885
  %v6950 = vpack.c.bf16 %v6888, %v6887
  %v6951 = vpack.c.bf16 %v6890, %v6889
  %v6952 = vpack.c.bf16 %v6892, %v6891
  %v6953 = vpack.c.bf16 %v6894, %v6893
  %v6954 = vpack.c.bf16 %v6896, %v6895
  %v6955 = vpack.c.bf16 %v6898, %v6897
  %v6956 = vpack.c.bf16 %v6900, %v6899
  %v6957 = vpack.c.bf16 %v6902, %v6901
  %v6958 = vpack.c.bf16 %v6904, %v6903
  %v6959 = vpack.c.bf16 %v6906, %v6905
  %v6960 = vpack.c.bf16 %v6908, %v6907
  %v6961 = vpack.c.bf16 %v6910, %v6909
  %v6962 = vpack.c.bf16 %v6912, %v6911
  %v6963 = vpack.c.bf16 %v6914, %v6913
  %v6964 = vpack.c.bf16 %v6916, %v6915
  %s6965 = scalar_lea.vmem %s2, 576
  %v6966 = vld [vmem:[%s6965] sm:$0xf]
  %v6967 = vld [vmem:[%s6965 + $0x4] sm:$0xf]
  %v6968 = vld [vmem:[%s6965 + $0x8] sm:$0xf]
  %v6969 = vld [vmem:[%s6965 + $0xc] sm:$0xf]
  %v6970 = vld [vmem:[%s6965 + $0x10] sm:$0xf]
  %v6971 = vld [vmem:[%s6965 + $0x14] sm:$0xf]
  %v6972 = vld [vmem:[%s6965 + $0x18] sm:$0xf]
  %v6973 = vld [vmem:[%s6965 + $0x1c] sm:$0xf]
  %s6974 = scalar_lea.vmem %s2, 608
  %v6975 = vld [vmem:[%s6974] sm:$0xf]
  %v6976 = vld [vmem:[%s6974 + $0x4] sm:$0xf]
  %v6977 = vld [vmem:[%s6974 + $0x8] sm:$0xf]
  %v6978 = vld [vmem:[%s6974 + $0xc] sm:$0xf]
  %v6979 = vld [vmem:[%s6974 + $0x10] sm:$0xf]
  %v6980 = vld [vmem:[%s6974 + $0x14] sm:$0xf]
  %v6981 = vld [vmem:[%s6974 + $0x18] sm:$0xf]
  %v6982 = vld [vmem:[%s6974 + $0x1c] sm:$0xf]
  %v6991 = vunpack.c.l.b16 %v6975
  %v6992 = vunpack.c.l.b16 %v6976
  %v6993 = vunpack.c.l.b16 %v6977
  %v6994 = vunpack.c.l.b16 %v6978
  %v6995 = vunpack.c.l.b16 %v6979
  %v6996 = vunpack.c.l.b16 %v6980
  %v6997 = vunpack.c.l.b16 %v6981
  %v6998 = vunpack.c.l.b16 %v6982
  %v6999 = vpack.c.b16 %v6992, %v6991
  %v7000 = vpack.c.b16 %v6994, %v6993
  %v7001 = vpack.c.b16 %v6996, %v6995
  %v7002 = vpack.c.b16 %v6998, %v6997
  %v7008 = vsel %vm571, %v6933, 0
  %v7011 = vsel %vm571, %v6934, 0
  %v7014 = vsel %vm571, %v6935, 0
  %v7017 = vsel %vm571, %v6936, 0
  %v7020 = vsel %vm571, %v6937, 0
  %v7023 = vsel %vm571, %v6938, 0
  %v7026 = vsel %vm571, %v6939, 0
  %v7029 = vsel %vm571, %v6940, 0
  %v7032 = vsel %vm571, %v6941, 0
  %v7035 = vsel %vm571, %v6942, 0
  %v7038 = vsel %vm571, %v6943, 0
  %v7041 = vsel %vm571, %v6944, 0
  %v7044 = vsel %vm571, %v6945, 0
  %v7047 = vsel %vm571, %v6946, 0
  %v7050 = vsel %vm571, %v6947, 0
  %v7053 = vsel %vm571, %v6948, 0
  %7055 = vmatprep.subr.bf16.mxu0 0
  %7056 = vmatpush1.bf16.msra.mxu0 0
  %7057 = vmatprep.subr.bf16.mxu0 0
  %7058 = vmatpush1.bf16.msra.mxu0 0
  %7059 = vmatprep.subr.bf16.mxu0 0
  %7060 = vmatpush1.bf16.msra.mxu0 0
  %7061 = vmatprep.subr.bf16.mxu0 0
  %7062 = vmatpush1.bf16.msra.mxu0 0
  %7063 = vmatprep.subr.bf16.mxu0 0
  %7064 = vmatpush1.bf16.msra.mxu0 %v7002
  %7065 = vmatprep.subr.bf16.mxu0 0
  %7066 = vmatpush1.bf16.msra.mxu0 %v7001
  %7067 = vmatprep.subr.bf16.mxu0 0
  %7068 = vmatpush1.bf16.msra.mxu0 %v7000
  %7069 = vmatprep.subr.bf16.mxu0 0
  %7070 = vmatpush1.bf16.msra.mxu0 %v6999
  %7071 = vmatprep.subr.bf16.mxu0 0
  %7072 = vmatpush2.bf16.msra.mxu0 0
  %7073 = vmatprep.subr.bf16.mxu0 0
  %7074 = vmatpush2.bf16.msra.mxu0 0
  %7075 = vmatprep.subr.bf16.mxu0 0
  %7076 = vmatpush2.bf16.msra.mxu0 0
  %7077 = vmatprep.subr.bf16.mxu0 0
  %7078 = vmatpush2.bf16.msra.mxu0 0
  %7079 = vmatprep.subr.bf16.mxu0 0
  %7080 = vmatpush2.bf16.msra.mxu0 0
  %7081 = vmatprep.subr.bf16.mxu0 0
  %7082 = vmatpush2.bf16.msra.mxu0 0
  %7083 = vmatprep.subr.bf16.mxu0 0
  %7084 = vmatpush2.bf16.msra.mxu0 0
  %7085 = vmatprep.subr.bf16.mxu0 0
  %7086 = vmatpush2.bf16.msra.mxu0 0
  %7087 = vmatprep.mubr.bf16.mxu0 0
  %7088 = vmatmul.mubr.bf16.gmra.mxu0 %v7008
  %v7089 = vpop.f32.mrf.mxu0
  %v7090 = vadd.f32 0.0, %v7089
  %v7091 = vpop.f32.mrf.mxu0
  %v7092 = vpop.f32.mrf.mxu0
  %v7093 = vadd.f32 0.0, %v7092
  %v7094 = vpop.f32.mrf.mxu0
  %7095 = vmatprep.mubr.bf16.mxu0 0
  %7096 = vmatmul.mubr.bf16.gmra.mxu0 %v7011
  %v7097 = vpop.f32.mrf.mxu0
  %v7098 = vadd.f32 0.0, %v7097
  %v7099 = vpop.f32.mrf.mxu0
  %v7100 = vpop.f32.mrf.mxu0
  %v7101 = vadd.f32 0.0, %v7100
  %v7102 = vpop.f32.mrf.mxu0
  %7103 = vmatprep.mubr.bf16.mxu0 0
  %7104 = vmatmul.mubr.bf16.gmra.mxu0 %v7014
  %v7105 = vpop.f32.mrf.mxu0
  %v7106 = vadd.f32 0.0, %v7105
  %v7107 = vpop.f32.mrf.mxu0
  %v7108 = vpop.f32.mrf.mxu0
  %v7109 = vadd.f32 0.0, %v7108
  %v7110 = vpop.f32.mrf.mxu0
  %7111 = vmatprep.mubr.bf16.mxu0 0
  %7112 = vmatmul.mubr.bf16.gmra.mxu0 %v7017
  %v7113 = vpop.f32.mrf.mxu0
  %v7114 = vadd.f32 0.0, %v7113
  %v7115 = vpop.f32.mrf.mxu0
  %v7116 = vpop.f32.mrf.mxu0
  %v7117 = vadd.f32 0.0, %v7116
  %v7118 = vpop.f32.mrf.mxu0
  %7119 = vmatprep.mubr.bf16.mxu0 0
  %7120 = vmatmul.mubr.bf16.gmra.mxu0 %v7020
  %v7121 = vpop.f32.mrf.mxu0
  %v7122 = vadd.f32 0.0, %v7121
  %v7123 = vpop.f32.mrf.mxu0
  %v7124 = vpop.f32.mrf.mxu0
  %v7125 = vadd.f32 0.0, %v7124
  %v7126 = vpop.f32.mrf.mxu0
  %7127 = vmatprep.mubr.bf16.mxu0 0
  %7128 = vmatmul.mubr.bf16.gmra.mxu0 %v7023
  %v7129 = vpop.f32.mrf.mxu0
  %v7130 = vadd.f32 0.0, %v7129
  %v7131 = vpop.f32.mrf.mxu0
  %v7132 = vpop.f32.mrf.mxu0
  %v7133 = vadd.f32 0.0, %v7132
  %v7134 = vpop.f32.mrf.mxu0
  %7135 = vmatprep.mubr.bf16.mxu0 0
  %7136 = vmatmul.mubr.bf16.gmra.mxu0 %v7026
  %v7137 = vpop.f32.mrf.mxu0
  %v7138 = vadd.f32 0.0, %v7137
  %v7139 = vpop.f32.mrf.mxu0
  %v7140 = vpop.f32.mrf.mxu0
  %v7141 = vadd.f32 0.0, %v7140
  %v7142 = vpop.f32.mrf.mxu0
  %7143 = vmatprep.mubr.bf16.mxu0 0
  %7144 = vmatmul.mubr.bf16.gmra.mxu0 %v7029
  %v7145 = vpop.f32.mrf.mxu0
  %v7146 = vadd.f32 0.0, %v7145
  %v7147 = vpop.f32.mrf.mxu0
  %v7148 = vpop.f32.mrf.mxu0
  %v7149 = vadd.f32 0.0, %v7148
  %v7150 = vpop.f32.mrf.mxu0
  %7151 = vmatprep.mubr.bf16.mxu0 0
  %7152 = vmatmul.mubr.bf16.gmra.mxu0 %v7032
  %v7153 = vpop.f32.mrf.mxu0
  %v7154 = vadd.f32 0.0, %v7153
  %v7155 = vpop.f32.mrf.mxu0
  %v7156 = vpop.f32.mrf.mxu0
  %v7157 = vadd.f32 0.0, %v7156
  %v7158 = vpop.f32.mrf.mxu0
  %7159 = vmatprep.mubr.bf16.mxu0 0
  %7160 = vmatmul.mubr.bf16.gmra.mxu0 %v7035
  %v7161 = vpop.f32.mrf.mxu0
  %v7162 = vadd.f32 0.0, %v7161
  %v7163 = vpop.f32.mrf.mxu0
  %v7164 = vpop.f32.mrf.mxu0
  %v7165 = vadd.f32 0.0, %v7164
  %v7166 = vpop.f32.mrf.mxu0
  %7167 = vmatprep.mubr.bf16.mxu0 0
  %7168 = vmatmul.mubr.bf16.gmra.mxu0 %v7038
  %v7169 = vpop.f32.mrf.mxu0
  %v7170 = vadd.f32 0.0, %v7169
  %v7171 = vpop.f32.mrf.mxu0
  %v7172 = vpop.f32.mrf.mxu0
  %v7173 = vadd.f32 0.0, %v7172
  %v7174 = vpop.f32.mrf.mxu0
  %7175 = vmatprep.mubr.bf16.mxu0 0
  %7176 = vmatmul.mubr.bf16.gmra.mxu0 %v7041
  %v7177 = vpop.f32.mrf.mxu0
  %v7178 = vadd.f32 0.0, %v7177
  %v7179 = vpop.f32.mrf.mxu0
  %v7180 = vpop.f32.mrf.mxu0
  %v7181 = vadd.f32 0.0, %v7180
  %v7182 = vpop.f32.mrf.mxu0
  %7183 = vmatprep.mubr.bf16.mxu0 0
  %7184 = vmatmul.mubr.bf16.gmra.mxu0 %v7044
  %v7185 = vpop.f32.mrf.mxu0
  %v7186 = vadd.f32 0.0, %v7185
  %v7187 = vpop.f32.mrf.mxu0
  %v7188 = vpop.f32.mrf.mxu0
  %v7189 = vadd.f32 0.0, %v7188
  %v7190 = vpop.f32.mrf.mxu0
  %7191 = vmatprep.mubr.bf16.mxu0 0
  %7192 = vmatmul.mubr.bf16.gmra.mxu0 %v7047
  %v7193 = vpop.f32.mrf.mxu0
  %v7194 = vadd.f32 0.0, %v7193
  %v7195 = vpop.f32.mrf.mxu0
  %v7196 = vpop.f32.mrf.mxu0
  %v7197 = vadd.f32 0.0, %v7196
  %v7198 = vpop.f32.mrf.mxu0
  %7199 = vmatprep.mubr.bf16.mxu0 0
  %7200 = vmatmul.mubr.bf16.gmra.mxu0 %v7050
  %v7201 = vpop.f32.mrf.mxu0
  %v7202 = vadd.f32 0.0, %v7201
  %v7203 = vpop.f32.mrf.mxu0
  %v7204 = vpop.f32.mrf.mxu0
  %v7205 = vadd.f32 0.0, %v7204
  %v7206 = vpop.f32.mrf.mxu0
  %7207 = vmatprep.mubr.bf16.mxu0 0
  %7208 = vmatmul.mubr.bf16.gmra.mxu0 %v7053
  %v7209 = vpop.f32.mrf.mxu0
  %v7210 = vadd.f32 0.0, %v7209
  %v7211 = vpop.f32.mrf.mxu0
  %v7212 = vpop.f32.mrf.mxu0
  %v7213 = vadd.f32 0.0, %v7212
  %v7214 = vpop.f32.mrf.mxu0
  %7215 = vdwg.mxu0
  %v7224 = vunpack.c.l.b16 %v6966
  %v7225 = vunpack.c.l.b16 %v6967
  %v7226 = vunpack.c.l.b16 %v6968
  %v7227 = vunpack.c.l.b16 %v6969
  %v7228 = vunpack.c.l.b16 %v6970
  %v7229 = vunpack.c.l.b16 %v6971
  %v7230 = vunpack.c.l.b16 %v6972
  %v7231 = vunpack.c.l.b16 %v6973
  %v7232 = vpack.c.b16 %v7225, %v7224
  %v7233 = vpack.c.b16 %v7227, %v7226
  %v7234 = vpack.c.b16 %v7229, %v7228
  %v7235 = vpack.c.b16 %v7231, %v7230
  %v7241 = vsel %vm571, %v6917, 0
  %v7244 = vsel %vm571, %v6918, 0
  %v7247 = vsel %vm571, %v6919, 0
  %v7250 = vsel %vm571, %v6920, 0
  %v7253 = vsel %vm571, %v6921, 0
  %v7256 = vsel %vm571, %v6922, 0
  %v7259 = vsel %vm571, %v6923, 0
  %v7262 = vsel %vm571, %v6924, 0
  %v7265 = vsel %vm571, %v6925, 0
  %v7268 = vsel %vm571, %v6926, 0
  %v7271 = vsel %vm571, %v6927, 0
  %v7274 = vsel %vm571, %v6928, 0
  %v7277 = vsel %vm571, %v6929, 0
  %v7280 = vsel %vm571, %v6930, 0
  %v7283 = vsel %vm571, %v6931, 0
  %v7286 = vsel %vm571, %v6932, 0
  %7288 = vmatprep.subr.bf16.mxu0 0
  %7289 = vmatpush1.bf16.msra.mxu0 0
  %7290 = vmatprep.subr.bf16.mxu0 0
  %7291 = vmatpush1.bf16.msra.mxu0 0
  %7292 = vmatprep.subr.bf16.mxu0 0
  %7293 = vmatpush1.bf16.msra.mxu0 0
  %7294 = vmatprep.subr.bf16.mxu0 0
  %7295 = vmatpush1.bf16.msra.mxu0 0
  %7296 = vmatprep.subr.bf16.mxu0 0
  %7297 = vmatpush1.bf16.msra.mxu0 %v7235
  %7298 = vmatprep.subr.bf16.mxu0 0
  %7299 = vmatpush1.bf16.msra.mxu0 %v7234
  %7300 = vmatprep.subr.bf16.mxu0 0
  %7301 = vmatpush1.bf16.msra.mxu0 %v7233
  %7302 = vmatprep.subr.bf16.mxu0 0
  %7303 = vmatpush1.bf16.msra.mxu0 %v7232
  %7304 = vmatprep.subr.bf16.mxu0 0
  %7305 = vmatpush2.bf16.msra.mxu0 0
  %7306 = vmatprep.subr.bf16.mxu0 0
  %7307 = vmatpush2.bf16.msra.mxu0 0
  %7308 = vmatprep.subr.bf16.mxu0 0
  %7309 = vmatpush2.bf16.msra.mxu0 0
  %7310 = vmatprep.subr.bf16.mxu0 0
  %7311 = vmatpush2.bf16.msra.mxu0 0
  %7312 = vmatprep.subr.bf16.mxu0 0
  %7313 = vmatpush2.bf16.msra.mxu0 0
  %7314 = vmatprep.subr.bf16.mxu0 0
  %7315 = vmatpush2.bf16.msra.mxu0 0
  %7316 = vmatprep.subr.bf16.mxu0 0
  %7317 = vmatpush2.bf16.msra.mxu0 0
  %7318 = vmatprep.subr.bf16.mxu0 0
  %7319 = vmatpush2.bf16.msra.mxu0 0
  %7320 = vmatprep.mubr.bf16.mxu0 0
  %7321 = vmatmul.mubr.bf16.gmra.mxu0 %v7241
  %v7322 = vpop.f32.mrf.mxu0
  %v7323 = vadd.f32 %v7090, %v7322
  %v7324 = vpop.f32.mrf.mxu0
  %v7325 = vpop.f32.mrf.mxu0
  %v7326 = vadd.f32 %v7093, %v7325
  %v7327 = vpop.f32.mrf.mxu0
  %7328 = vmatprep.mubr.bf16.mxu0 0
  %7329 = vmatmul.mubr.bf16.gmra.mxu0 %v7244
  %v7330 = vpop.f32.mrf.mxu0
  %v7331 = vadd.f32 %v7098, %v7330
  %v7332 = vpop.f32.mrf.mxu0
  %v7333 = vpop.f32.mrf.mxu0
  %v7334 = vadd.f32 %v7101, %v7333
  %v7335 = vpop.f32.mrf.mxu0
  %7336 = vmatprep.mubr.bf16.mxu0 0
  %7337 = vmatmul.mubr.bf16.gmra.mxu0 %v7247
  %v7338 = vpop.f32.mrf.mxu0
  %v7339 = vadd.f32 %v7106, %v7338
  %v7340 = vpop.f32.mrf.mxu0
  %v7341 = vpop.f32.mrf.mxu0
  %v7342 = vadd.f32 %v7109, %v7341
  %v7343 = vpop.f32.mrf.mxu0
  %7344 = vmatprep.mubr.bf16.mxu0 0
  %7345 = vmatmul.mubr.bf16.gmra.mxu0 %v7250
  %v7346 = vpop.f32.mrf.mxu0
  %v7347 = vadd.f32 %v7114, %v7346
  %v7348 = vpop.f32.mrf.mxu0
  %v7349 = vpop.f32.mrf.mxu0
  %v7350 = vadd.f32 %v7117, %v7349
  %v7351 = vpop.f32.mrf.mxu0
  %7352 = vmatprep.mubr.bf16.mxu0 0
  %7353 = vmatmul.mubr.bf16.gmra.mxu0 %v7253
  %v7354 = vpop.f32.mrf.mxu0
  %v7355 = vadd.f32 %v7122, %v7354
  %v7356 = vpop.f32.mrf.mxu0
  %v7357 = vpop.f32.mrf.mxu0
  %v7358 = vadd.f32 %v7125, %v7357
  %v7359 = vpop.f32.mrf.mxu0
  %7360 = vmatprep.mubr.bf16.mxu0 0
  %7361 = vmatmul.mubr.bf16.gmra.mxu0 %v7256
  %v7362 = vpop.f32.mrf.mxu0
  %v7363 = vadd.f32 %v7130, %v7362
  %v7364 = vpop.f32.mrf.mxu0
  %v7365 = vpop.f32.mrf.mxu0
  %v7366 = vadd.f32 %v7133, %v7365
  %v7367 = vpop.f32.mrf.mxu0
  %7368 = vmatprep.mubr.bf16.mxu0 0
  %7369 = vmatmul.mubr.bf16.gmra.mxu0 %v7259
  %v7370 = vpop.f32.mrf.mxu0
  %v7371 = vadd.f32 %v7138, %v7370
  %v7372 = vpop.f32.mrf.mxu0
  %v7373 = vpop.f32.mrf.mxu0
  %v7374 = vadd.f32 %v7141, %v7373
  %v7375 = vpop.f32.mrf.mxu0
  %7376 = vmatprep.mubr.bf16.mxu0 0
  %7377 = vmatmul.mubr.bf16.gmra.mxu0 %v7262
  %v7378 = vpop.f32.mrf.mxu0
  %v7379 = vadd.f32 %v7146, %v7378
  %v7380 = vpop.f32.mrf.mxu0
  %v7381 = vpop.f32.mrf.mxu0
  %v7382 = vadd.f32 %v7149, %v7381
  %v7383 = vpop.f32.mrf.mxu0
  %7384 = vmatprep.mubr.bf16.mxu0 0
  %7385 = vmatmul.mubr.bf16.gmra.mxu0 %v7265
  %v7386 = vpop.f32.mrf.mxu0
  %v7387 = vadd.f32 %v7154, %v7386
  %v7388 = vpop.f32.mrf.mxu0
  %v7389 = vpop.f32.mrf.mxu0
  %v7390 = vadd.f32 %v7157, %v7389
  %v7391 = vpop.f32.mrf.mxu0
  %7392 = vmatprep.mubr.bf16.mxu0 0
  %7393 = vmatmul.mubr.bf16.gmra.mxu0 %v7268
  %v7394 = vpop.f32.mrf.mxu0
  %v7395 = vadd.f32 %v7162, %v7394
  %v7396 = vpop.f32.mrf.mxu0
  %v7397 = vpop.f32.mrf.mxu0
  %v7398 = vadd.f32 %v7165, %v7397
  %v7399 = vpop.f32.mrf.mxu0
  %7400 = vmatprep.mubr.bf16.mxu0 0
  %7401 = vmatmul.mubr.bf16.gmra.mxu0 %v7271
  %v7402 = vpop.f32.mrf.mxu0
  %v7403 = vadd.f32 %v7170, %v7402
  %v7404 = vpop.f32.mrf.mxu0
  %v7405 = vpop.f32.mrf.mxu0
  %v7406 = vadd.f32 %v7173, %v7405
  %v7407 = vpop.f32.mrf.mxu0
  %7408 = vmatprep.mubr.bf16.mxu0 0
  %7409 = vmatmul.mubr.bf16.gmra.mxu0 %v7274
  %v7410 = vpop.f32.mrf.mxu0
  %v7411 = vadd.f32 %v7178, %v7410
  %v7412 = vpop.f32.mrf.mxu0
  %v7413 = vpop.f32.mrf.mxu0
  %v7414 = vadd.f32 %v7181, %v7413
  %v7415 = vpop.f32.mrf.mxu0
  %7416 = vmatprep.mubr.bf16.mxu0 0
  %7417 = vmatmul.mubr.bf16.gmra.mxu0 %v7277
  %v7418 = vpop.f32.mrf.mxu0
  %v7419 = vadd.f32 %v7186, %v7418
  %v7420 = vpop.f32.mrf.mxu0
  %v7421 = vpop.f32.mrf.mxu0
  %v7422 = vadd.f32 %v7189, %v7421
  %v7423 = vpop.f32.mrf.mxu0
  %7424 = vmatprep.mubr.bf16.mxu0 0
  %7425 = vmatmul.mubr.bf16.gmra.mxu0 %v7280
  %v7426 = vpop.f32.mrf.mxu0
  %v7427 = vadd.f32 %v7194, %v7426
  %v7428 = vpop.f32.mrf.mxu0
  %v7429 = vpop.f32.mrf.mxu0
  %v7430 = vadd.f32 %v7197, %v7429
  %v7431 = vpop.f32.mrf.mxu0
  %7432 = vmatprep.mubr.bf16.mxu0 0
  %7433 = vmatmul.mubr.bf16.gmra.mxu0 %v7283
  %v7434 = vpop.f32.mrf.mxu0
  %v7435 = vadd.f32 %v7202, %v7434
  %v7436 = vpop.f32.mrf.mxu0
  %v7437 = vpop.f32.mrf.mxu0
  %v7438 = vadd.f32 %v7205, %v7437
  %v7439 = vpop.f32.mrf.mxu0
  %7440 = vmatprep.mubr.bf16.mxu0 0
  %7441 = vmatmul.mubr.bf16.gmra.mxu0 %v7286
  %v7442 = vpop.f32.mrf.mxu0
  %v7443 = vadd.f32 %v7210, %v7442
  %v7444 = vpop.f32.mrf.mxu0
  %v7445 = vpop.f32.mrf.mxu0
  %v7446 = vadd.f32 %v7213, %v7445
  %v7447 = vpop.f32.mrf.mxu0
  %7448 = vdwg.mxu0
  %s7449 = scalar_lea.vmem %s2, 640
  %v7450 = vld [vmem:[%s7449] sm:$0xf]
  %v7451 = vld [vmem:[%s7449 + $0x4] sm:$0xf]
  %v7452 = vld [vmem:[%s7449 + $0x8] sm:$0xf]
  %v7453 = vld [vmem:[%s7449 + $0xc] sm:$0xf]
  %v7454 = vld [vmem:[%s7449 + $0x10] sm:$0xf]
  %v7455 = vld [vmem:[%s7449 + $0x14] sm:$0xf]
  %v7456 = vld [vmem:[%s7449 + $0x18] sm:$0xf]
  %v7457 = vld [vmem:[%s7449 + $0x1c] sm:$0xf]
  %v7466 = vunpack.c.l.b16 %v7450
  %v7467 = vunpack.c.l.b16 %v7451
  %v7468 = vunpack.c.l.b16 %v7452
  %v7469 = vunpack.c.l.b16 %v7453
  %v7470 = vunpack.c.l.b16 %v7454
  %v7471 = vunpack.c.l.b16 %v7455
  %v7472 = vunpack.c.l.b16 %v7456
  %v7473 = vunpack.c.l.b16 %v7457
  %v7474 = vpack.c.b16 %v7467, %v7466
  %v7475 = vpack.c.b16 %v7469, %v7468
  %v7476 = vpack.c.b16 %v7471, %v7470
  %v7477 = vpack.c.b16 %v7473, %v7472
  %v7483 = vsel %vm571, %v6949, 0
  %v7486 = vsel %vm571, %v6950, 0
  %v7489 = vsel %vm571, %v6951, 0
  %v7492 = vsel %vm571, %v6952, 0
  %v7495 = vsel %vm571, %v6953, 0
  %v7498 = vsel %vm571, %v6954, 0
  %v7501 = vsel %vm571, %v6955, 0
  %v7504 = vsel %vm571, %v6956, 0
  %v7507 = vsel %vm571, %v6957, 0
  %v7510 = vsel %vm571, %v6958, 0
  %v7513 = vsel %vm571, %v6959, 0
  %v7516 = vsel %vm571, %v6960, 0
  %v7519 = vsel %vm571, %v6961, 0
  %v7522 = vsel %vm571, %v6962, 0
  %v7525 = vsel %vm571, %v6963, 0
  %v7528 = vsel %vm571, %v6964, 0
  %7530 = vmatprep.subr.bf16.mxu0 0
  %7531 = vmatpush1.bf16.msra.mxu0 0
  %7532 = vmatprep.subr.bf16.mxu0 0
  %7533 = vmatpush1.bf16.msra.mxu0 0
  %7534 = vmatprep.subr.bf16.mxu0 0
  %7535 = vmatpush1.bf16.msra.mxu0 0
  %7536 = vmatprep.subr.bf16.mxu0 0
  %7537 = vmatpush1.bf16.msra.mxu0 0
  %7538 = vmatprep.subr.bf16.mxu0 0
  %7539 = vmatpush1.bf16.msra.mxu0 %v7477
  %7540 = vmatprep.subr.bf16.mxu0 0
  %7541 = vmatpush1.bf16.msra.mxu0 %v7476
  %7542 = vmatprep.subr.bf16.mxu0 0
  %7543 = vmatpush1.bf16.msra.mxu0 %v7475
  %7544 = vmatprep.subr.bf16.mxu0 0
  %7545 = vmatpush1.bf16.msra.mxu0 %v7474
  %7546 = vmatprep.subr.bf16.mxu0 0
  %7547 = vmatpush2.bf16.msra.mxu0 0
  %7548 = vmatprep.subr.bf16.mxu0 0
  %7549 = vmatpush2.bf16.msra.mxu0 0
  %7550 = vmatprep.subr.bf16.mxu0 0
  %7551 = vmatpush2.bf16.msra.mxu0 0
  %7552 = vmatprep.subr.bf16.mxu0 0
  %7553 = vmatpush2.bf16.msra.mxu0 0
  %7554 = vmatprep.subr.bf16.mxu0 0
  %7555 = vmatpush2.bf16.msra.mxu0 0
  %7556 = vmatprep.subr.bf16.mxu0 0
  %7557 = vmatpush2.bf16.msra.mxu0 0
  %7558 = vmatprep.subr.bf16.mxu0 0
  %7559 = vmatpush2.bf16.msra.mxu0 0
  %7560 = vmatprep.subr.bf16.mxu0 0
  %7561 = vmatpush2.bf16.msra.mxu0 0
  %7562 = vmatprep.mubr.bf16.mxu0 0
  %7563 = vmatmul.mubr.bf16.gmra.mxu0 %v7483
  %v7564 = vpop.f32.mrf.mxu0
  %v7565 = vadd.f32 0.0, %v7564
  %v7566 = vpop.f32.mrf.mxu0
  %v7567 = vpop.f32.mrf.mxu0
  %v7568 = vadd.f32 0.0, %v7567
  %v7569 = vpop.f32.mrf.mxu0
  %7570 = vmatprep.mubr.bf16.mxu0 0
  %7571 = vmatmul.mubr.bf16.gmra.mxu0 %v7486
  %v7572 = vpop.f32.mrf.mxu0
  %v7573 = vadd.f32 0.0, %v7572
  %v7574 = vpop.f32.mrf.mxu0
  %v7575 = vpop.f32.mrf.mxu0
  %v7576 = vadd.f32 0.0, %v7575
  %v7577 = vpop.f32.mrf.mxu0
  %7578 = vmatprep.mubr.bf16.mxu0 0
  %7579 = vmatmul.mubr.bf16.gmra.mxu0 %v7489
  %v7580 = vpop.f32.mrf.mxu0
  %v7581 = vadd.f32 0.0, %v7580
  %v7582 = vpop.f32.mrf.mxu0
  %v7583 = vpop.f32.mrf.mxu0
  %v7584 = vadd.f32 0.0, %v7583
  %v7585 = vpop.f32.mrf.mxu0
  %7586 = vmatprep.mubr.bf16.mxu0 0
  %7587 = vmatmul.mubr.bf16.gmra.mxu0 %v7492
  %v7588 = vpop.f32.mrf.mxu0
  %v7589 = vadd.f32 0.0, %v7588
  %v7590 = vpop.f32.mrf.mxu0
  %v7591 = vpop.f32.mrf.mxu0
  %v7592 = vadd.f32 0.0, %v7591
  %v7593 = vpop.f32.mrf.mxu0
  %7594 = vmatprep.mubr.bf16.mxu0 0
  %7595 = vmatmul.mubr.bf16.gmra.mxu0 %v7495
  %v7596 = vpop.f32.mrf.mxu0
  %v7597 = vadd.f32 0.0, %v7596
  %v7598 = vpop.f32.mrf.mxu0
  %v7599 = vpop.f32.mrf.mxu0
  %v7600 = vadd.f32 0.0, %v7599
  %v7601 = vpop.f32.mrf.mxu0
  %7602 = vmatprep.mubr.bf16.mxu0 0
  %7603 = vmatmul.mubr.bf16.gmra.mxu0 %v7498
  %v7604 = vpop.f32.mrf.mxu0
  %v7605 = vadd.f32 0.0, %v7604
  %v7606 = vpop.f32.mrf.mxu0
  %v7607 = vpop.f32.mrf.mxu0
  %v7608 = vadd.f32 0.0, %v7607
  %v7609 = vpop.f32.mrf.mxu0
  %7610 = vmatprep.mubr.bf16.mxu0 0
  %7611 = vmatmul.mubr.bf16.gmra.mxu0 %v7501
  %v7612 = vpop.f32.mrf.mxu0
  %v7613 = vadd.f32 0.0, %v7612
  %v7614 = vpop.f32.mrf.mxu0
  %v7615 = vpop.f32.mrf.mxu0
  %v7616 = vadd.f32 0.0, %v7615
  %v7617 = vpop.f32.mrf.mxu0
  %7618 = vmatprep.mubr.bf16.mxu0 0
  %7619 = vmatmul.mubr.bf16.gmra.mxu0 %v7504
  %v7620 = vpop.f32.mrf.mxu0
  %v7621 = vadd.f32 0.0, %v7620
  %v7622 = vpop.f32.mrf.mxu0
  %v7623 = vpop.f32.mrf.mxu0
  %v7624 = vadd.f32 0.0, %v7623
  %v7625 = vpop.f32.mrf.mxu0
  %7626 = vmatprep.mubr.bf16.mxu0 0
  %7627 = vmatmul.mubr.bf16.gmra.mxu0 %v7507
  %v7628 = vpop.f32.mrf.mxu0
  %v7629 = vadd.f32 0.0, %v7628
  %v7630 = vpop.f32.mrf.mxu0
  %v7631 = vpop.f32.mrf.mxu0
  %v7632 = vadd.f32 0.0, %v7631
  %v7633 = vpop.f32.mrf.mxu0
  %7634 = vmatprep.mubr.bf16.mxu0 0
  %7635 = vmatmul.mubr.bf16.gmra.mxu0 %v7510
  %v7636 = vpop.f32.mrf.mxu0
  %v7637 = vadd.f32 0.0, %v7636
  %v7638 = vpop.f32.mrf.mxu0
  %v7639 = vpop.f32.mrf.mxu0
  %v7640 = vadd.f32 0.0, %v7639
  %v7641 = vpop.f32.mrf.mxu0
  %7642 = vmatprep.mubr.bf16.mxu0 0
  %7643 = vmatmul.mubr.bf16.gmra.mxu0 %v7513
  %v7644 = vpop.f32.mrf.mxu0
  %v7645 = vadd.f32 0.0, %v7644
  %v7646 = vpop.f32.mrf.mxu0
  %v7647 = vpop.f32.mrf.mxu0
  %v7648 = vadd.f32 0.0, %v7647
  %v7649 = vpop.f32.mrf.mxu0
  %7650 = vmatprep.mubr.bf16.mxu0 0
  %7651 = vmatmul.mubr.bf16.gmra.mxu0 %v7516
  %v7652 = vpop.f32.mrf.mxu0
  %v7653 = vadd.f32 0.0, %v7652
  %v7654 = vpop.f32.mrf.mxu0
  %v7655 = vpop.f32.mrf.mxu0
  %v7656 = vadd.f32 0.0, %v7655
  %v7657 = vpop.f32.mrf.mxu0
  %7658 = vmatprep.mubr.bf16.mxu0 0
  %7659 = vmatmul.mubr.bf16.gmra.mxu0 %v7519
  %v7660 = vpop.f32.mrf.mxu0
  %v7661 = vadd.f32 0.0, %v7660
  %v7662 = vpop.f32.mrf.mxu0
  %v7663 = vpop.f32.mrf.mxu0
  %v7664 = vadd.f32 0.0, %v7663
  %v7665 = vpop.f32.mrf.mxu0
  %7666 = vmatprep.mubr.bf16.mxu0 0
  %7667 = vmatmul.mubr.bf16.gmra.mxu0 %v7522
  %v7668 = vpop.f32.mrf.mxu0
  %v7669 = vadd.f32 0.0, %v7668
  %v7670 = vpop.f32.mrf.mxu0
  %v7671 = vpop.f32.mrf.mxu0
  %v7672 = vadd.f32 0.0, %v7671
  %v7673 = vpop.f32.mrf.mxu0
  %7674 = vmatprep.mubr.bf16.mxu0 0
  %7675 = vmatmul.mubr.bf16.gmra.mxu0 %v7525
  %v7676 = vpop.f32.mrf.mxu0
  %v7677 = vadd.f32 0.0, %v7676
  %v7678 = vpop.f32.mrf.mxu0
  %v7679 = vpop.f32.mrf.mxu0
  %v7680 = vadd.f32 0.0, %v7679
  %v7681 = vpop.f32.mrf.mxu0
  %7682 = vmatprep.mubr.bf16.mxu0 0
  %7683 = vmatmul.mubr.bf16.gmra.mxu0 %v7528
  %v7684 = vpop.f32.mrf.mxu0
  %v7685 = vadd.f32 0.0, %v7684
  %v7686 = vpop.f32.mrf.mxu0
  %v7687 = vpop.f32.mrf.mxu0
  %v7688 = vadd.f32 0.0, %v7687
  %v7689 = vpop.f32.mrf.mxu0
  %7690 = vdwg.mxu0
  %v7691 = vadd.f32 %v7323, %v7565
  %v7692 = vadd.f32 %v7326, %v7568
  %v7693 = vadd.f32 %v7331, %v7573
  %v7694 = vadd.f32 %v7334, %v7576
  %v7695 = vadd.f32 %v7339, %v7581
  %v7696 = vadd.f32 %v7342, %v7584
  %v7697 = vadd.f32 %v7347, %v7589
  %v7698 = vadd.f32 %v7350, %v7592
  %v7699 = vadd.f32 %v7355, %v7597
  %v7700 = vadd.f32 %v7358, %v7600
  %v7701 = vadd.f32 %v7363, %v7605
  %v7702 = vadd.f32 %v7366, %v7608
  %v7703 = vadd.f32 %v7371, %v7613
  %v7704 = vadd.f32 %v7374, %v7616
  %v7705 = vadd.f32 %v7379, %v7621
  %v7706 = vadd.f32 %v7382, %v7624
  %v7707 = vadd.f32 %v7387, %v7629
  %v7708 = vadd.f32 %v7390, %v7632
  %v7709 = vadd.f32 %v7395, %v7637
  %v7710 = vadd.f32 %v7398, %v7640
  %v7711 = vadd.f32 %v7403, %v7645
  %v7712 = vadd.f32 %v7406, %v7648
  %v7713 = vadd.f32 %v7411, %v7653
  %v7714 = vadd.f32 %v7414, %v7656
  %v7715 = vadd.f32 %v7419, %v7661
  %v7716 = vadd.f32 %v7422, %v7664
  %v7717 = vadd.f32 %v7427, %v7669
  %v7718 = vadd.f32 %v7430, %v7672
  %v7719 = vadd.f32 %v7435, %v7677
  %v7720 = vadd.f32 %v7438, %v7680
  %v7721 = vadd.f32 %v7443, %v7685
  %v7722 = vadd.f32 %v7446, %v7688
  %v7723 = vsel %vm2103, %v7693, %v7721
  %v7724 = vsel %vm2104, %v7694, %v7722
  %v7725 = vsel %vm2105, %v7695, %v7691
  %v7726 = vsel %vm2106, %v7696, %v7692
  %v7727 = vsel %vm2107, %v7697, %v7693
  %v7728 = vsel %vm2108, %v7698, %v7694
  %v7729 = vsel %vm2109, %v7699, %v7695
  %v7730 = vsel %vm2110, %v7700, %v7696
  %v7731 = vsel %vm2111, %v7701, %v7697
  %v7732 = vsel %vm2112, %v7702, %v7698
  %v7733 = vsel %vm2113, %v7703, %v7699
  %v7734 = vsel %vm2114, %v7704, %v7700
  %v7735 = vsel %vm2115, %v7705, %v7701
  %v7736 = vsel %vm2116, %v7706, %v7702
  %v7737 = vsel %vm2117, %v7707, %v7703
  %v7738 = vsel %vm2118, %v7708, %v7704
  %v7739 = vsel %vm2119, %v7709, %v7705
  %v7740 = vsel %vm2120, %v7710, %v7706
  %v7741 = vsel %vm2121, %v7711, %v7707
  %v7742 = vsel %vm2122, %v7712, %v7708
  %v7743 = vsel %vm2123, %v7713, %v7709
  %v7744 = vsel %vm2124, %v7714, %v7710
  %v7745 = vsel %vm2125, %v7715, %v7711
  %v7746 = vsel %vm2126, %v7716, %v7712
  %v7747 = vsel %vm2127, %v7717, %v7713
  %v7748 = vsel %vm2128, %v7718, %v7714
  %v7749 = vsel %vm2129, %v7719, %v7715
  %v7750 = vsel %vm2130, %v7720, %v7716
  %v7751 = vsel %vm2131, %v7721, %v7717
  %v7752 = vsel %vm2132, %v7722, %v7718
  %v7753 = vsel %vm2133, %v7691, %v7719
  %v7754 = vsel %vm2134, %v7692, %v7720
  %s7755 = scalar_lea.vmem %s2, 672
  %v7756 = vld [vmem:[%s7755] sm:$0xf]
  %v7757 = vld [vmem:[%s7755 + $0x4] sm:$0xf]
  %v7758 = vld [vmem:[%s7755 + $0x8] sm:$0xf]
  %v7759 = vld [vmem:[%s7755 + $0xc] sm:$0xf]
  %v7760 = vld [vmem:[%s7755 + $0x10] sm:$0xf]
  %v7761 = vld [vmem:[%s7755 + $0x14] sm:$0xf]
  %v7762 = vld [vmem:[%s7755 + $0x18] sm:$0xf]
  %v7763 = vld [vmem:[%s7755 + $0x1c] sm:$0xf]
  %s7764 = scalar_lea.vmem %s2, 704
  %v7765 = vld [vmem:[%s7764] sm:$0xf]
  %v7766 = vld [vmem:[%s7764 + $0x4] sm:$0xf]
  %v7767 = vld [vmem:[%s7764 + $0x8] sm:$0xf]
  %v7768 = vld [vmem:[%s7764 + $0xc] sm:$0xf]
  %v7769 = vld [vmem:[%s7764 + $0x10] sm:$0xf]
  %v7770 = vld [vmem:[%s7764 + $0x14] sm:$0xf]
  %v7771 = vld [vmem:[%s7764 + $0x18] sm:$0xf]
  %v7772 = vld [vmem:[%s7764 + $0x1c] sm:$0xf]
  %v7781 = vunpack.c.l.b16 %v7765
  %v7782 = vunpack.c.l.b16 %v7766
  %v7783 = vunpack.c.l.b16 %v7767
  %v7784 = vunpack.c.l.b16 %v7768
  %v7785 = vunpack.c.l.b16 %v7769
  %v7786 = vunpack.c.l.b16 %v7770
  %v7787 = vunpack.c.l.b16 %v7771
  %v7788 = vunpack.c.l.b16 %v7772
  %v7789 = vpack.c.b16 %v7782, %v7781
  %v7790 = vpack.c.b16 %v7784, %v7783
  %v7791 = vpack.c.b16 %v7786, %v7785
  %v7792 = vpack.c.b16 %v7788, %v7787
  %7797 = vmatprep.subr.bf16.mxu0 0
  %7798 = vmatpush1.bf16.msra.mxu0 0
  %7799 = vmatprep.subr.bf16.mxu0 0
  %7800 = vmatpush1.bf16.msra.mxu0 0
  %7801 = vmatprep.subr.bf16.mxu0 0
  %7802 = vmatpush1.bf16.msra.mxu0 0
  %7803 = vmatprep.subr.bf16.mxu0 0
  %7804 = vmatpush1.bf16.msra.mxu0 0
  %7805 = vmatprep.subr.bf16.mxu0 0
  %7806 = vmatpush1.bf16.msra.mxu0 %v7792
  %7807 = vmatprep.subr.bf16.mxu0 0
  %7808 = vmatpush1.bf16.msra.mxu0 %v7791
  %7809 = vmatprep.subr.bf16.mxu0 0
  %7810 = vmatpush1.bf16.msra.mxu0 %v7790
  %7811 = vmatprep.subr.bf16.mxu0 0
  %7812 = vmatpush1.bf16.msra.mxu0 %v7789
  %7813 = vmatprep.subr.bf16.mxu0 0
  %7814 = vmatpush2.bf16.msra.mxu0 0
  %7815 = vmatprep.subr.bf16.mxu0 0
  %7816 = vmatpush2.bf16.msra.mxu0 0
  %7817 = vmatprep.subr.bf16.mxu0 0
  %7818 = vmatpush2.bf16.msra.mxu0 0
  %7819 = vmatprep.subr.bf16.mxu0 0
  %7820 = vmatpush2.bf16.msra.mxu0 0
  %7821 = vmatprep.subr.bf16.mxu0 0
  %7822 = vmatpush2.bf16.msra.mxu0 0
  %7823 = vmatprep.subr.bf16.mxu0 0
  %7824 = vmatpush2.bf16.msra.mxu0 0
  %7825 = vmatprep.subr.bf16.mxu0 0
  %7826 = vmatpush2.bf16.msra.mxu0 0
  %7827 = vmatprep.subr.bf16.mxu0 0
  %7828 = vmatpush2.bf16.msra.mxu0 0
  %7829 = vmatprep.mubr.bf16.mxu0 0
  %7830 = vmatmul.mubr.bf16.gmra.mxu0 %v7008
  %v7831 = vpop.f32.mrf.mxu0
  %v7832 = vadd.f32 0.0, %v7831
  %v7833 = vpop.f32.mrf.mxu0
  %v7834 = vpop.f32.mrf.mxu0
  %v7835 = vadd.f32 0.0, %v7834
  %v7836 = vpop.f32.mrf.mxu0
  %7837 = vmatprep.mubr.bf16.mxu0 0
  %7838 = vmatmul.mubr.bf16.gmra.mxu0 %v7011
  %v7839 = vpop.f32.mrf.mxu0
  %v7840 = vadd.f32 0.0, %v7839
  %v7841 = vpop.f32.mrf.mxu0
  %v7842 = vpop.f32.mrf.mxu0
  %v7843 = vadd.f32 0.0, %v7842
  %v7844 = vpop.f32.mrf.mxu0
  %7845 = vmatprep.mubr.bf16.mxu0 0
  %7846 = vmatmul.mubr.bf16.gmra.mxu0 %v7014
  %v7847 = vpop.f32.mrf.mxu0
  %v7848 = vadd.f32 0.0, %v7847
  %v7849 = vpop.f32.mrf.mxu0
  %v7850 = vpop.f32.mrf.mxu0
  %v7851 = vadd.f32 0.0, %v7850
  %v7852 = vpop.f32.mrf.mxu0
  %7853 = vmatprep.mubr.bf16.mxu0 0
  %7854 = vmatmul.mubr.bf16.gmra.mxu0 %v7017
  %v7855 = vpop.f32.mrf.mxu0
  %v7856 = vadd.f32 0.0, %v7855
  %v7857 = vpop.f32.mrf.mxu0
  %v7858 = vpop.f32.mrf.mxu0
  %v7859 = vadd.f32 0.0, %v7858
  %v7860 = vpop.f32.mrf.mxu0
  %7861 = vmatprep.mubr.bf16.mxu0 0
  %7862 = vmatmul.mubr.bf16.gmra.mxu0 %v7020
  %v7863 = vpop.f32.mrf.mxu0
  %v7864 = vadd.f32 0.0, %v7863
  %v7865 = vpop.f32.mrf.mxu0
  %v7866 = vpop.f32.mrf.mxu0
  %v7867 = vadd.f32 0.0, %v7866
  %v7868 = vpop.f32.mrf.mxu0
  %7869 = vmatprep.mubr.bf16.mxu0 0
  %7870 = vmatmul.mubr.bf16.gmra.mxu0 %v7023
  %v7871 = vpop.f32.mrf.mxu0
  %v7872 = vadd.f32 0.0, %v7871
  %v7873 = vpop.f32.mrf.mxu0
  %v7874 = vpop.f32.mrf.mxu0
  %v7875 = vadd.f32 0.0, %v7874
  %v7876 = vpop.f32.mrf.mxu0
  %7877 = vmatprep.mubr.bf16.mxu0 0
  %7878 = vmatmul.mubr.bf16.gmra.mxu0 %v7026
  %v7879 = vpop.f32.mrf.mxu0
  %v7880 = vadd.f32 0.0, %v7879
  %v7881 = vpop.f32.mrf.mxu0
  %v7882 = vpop.f32.mrf.mxu0
  %v7883 = vadd.f32 0.0, %v7882
  %v7884 = vpop.f32.mrf.mxu0
  %7885 = vmatprep.mubr.bf16.mxu0 0
  %7886 = vmatmul.mubr.bf16.gmra.mxu0 %v7029
  %v7887 = vpop.f32.mrf.mxu0
  %v7888 = vadd.f32 0.0, %v7887
  %v7889 = vpop.f32.mrf.mxu0
  %v7890 = vpop.f32.mrf.mxu0
  %v7891 = vadd.f32 0.0, %v7890
  %v7892 = vpop.f32.mrf.mxu0
  %7893 = vmatprep.mubr.bf16.mxu0 0
  %7894 = vmatmul.mubr.bf16.gmra.mxu0 %v7032
  %v7895 = vpop.f32.mrf.mxu0
  %v7896 = vadd.f32 0.0, %v7895
  %v7897 = vpop.f32.mrf.mxu0
  %v7898 = vpop.f32.mrf.mxu0
  %v7899 = vadd.f32 0.0, %v7898
  %v7900 = vpop.f32.mrf.mxu0
  %7901 = vmatprep.mubr.bf16.mxu0 0
  %7902 = vmatmul.mubr.bf16.gmra.mxu0 %v7035
  %v7903 = vpop.f32.mrf.mxu0
  %v7904 = vadd.f32 0.0, %v7903
  %v7905 = vpop.f32.mrf.mxu0
  %v7906 = vpop.f32.mrf.mxu0
  %v7907 = vadd.f32 0.0, %v7906
  %v7908 = vpop.f32.mrf.mxu0
  %7909 = vmatprep.mubr.bf16.mxu0 0
  %7910 = vmatmul.mubr.bf16.gmra.mxu0 %v7038
  %v7911 = vpop.f32.mrf.mxu0
  %v7912 = vadd.f32 0.0, %v7911
  %v7913 = vpop.f32.mrf.mxu0
  %v7914 = vpop.f32.mrf.mxu0
  %v7915 = vadd.f32 0.0, %v7914
  %v7916 = vpop.f32.mrf.mxu0
  %7917 = vmatprep.mubr.bf16.mxu0 0
  %7918 = vmatmul.mubr.bf16.gmra.mxu0 %v7041
  %v7919 = vpop.f32.mrf.mxu0
  %v7920 = vadd.f32 0.0, %v7919
  %v7921 = vpop.f32.mrf.mxu0
  %v7922 = vpop.f32.mrf.mxu0
  %v7923 = vadd.f32 0.0, %v7922
  %v7924 = vpop.f32.mrf.mxu0
  %7925 = vmatprep.mubr.bf16.mxu0 0
  %7926 = vmatmul.mubr.bf16.gmra.mxu0 %v7044
  %v7927 = vpop.f32.mrf.mxu0
  %v7928 = vadd.f32 0.0, %v7927
  %v7929 = vpop.f32.mrf.mxu0
  %v7930 = vpop.f32.mrf.mxu0
  %v7931 = vadd.f32 0.0, %v7930
  %v7932 = vpop.f32.mrf.mxu0
  %7933 = vmatprep.mubr.bf16.mxu0 0
  %7934 = vmatmul.mubr.bf16.gmra.mxu0 %v7047
  %v7935 = vpop.f32.mrf.mxu0
  %v7936 = vadd.f32 0.0, %v7935
  %v7937 = vpop.f32.mrf.mxu0
  %v7938 = vpop.f32.mrf.mxu0
  %v7939 = vadd.f32 0.0, %v7938
  %v7940 = vpop.f32.mrf.mxu0
  %7941 = vmatprep.mubr.bf16.mxu0 0
  %7942 = vmatmul.mubr.bf16.gmra.mxu0 %v7050
  %v7943 = vpop.f32.mrf.mxu0
  %v7944 = vadd.f32 0.0, %v7943
  %v7945 = vpop.f32.mrf.mxu0
  %v7946 = vpop.f32.mrf.mxu0
  %v7947 = vadd.f32 0.0, %v7946
  %v7948 = vpop.f32.mrf.mxu0
  %7949 = vmatprep.mubr.bf16.mxu0 0
  %7950 = vmatmul.mubr.bf16.gmra.mxu0 %v7053
  %v7951 = vpop.f32.mrf.mxu0
  %v7952 = vadd.f32 0.0, %v7951
  %v7953 = vpop.f32.mrf.mxu0
  %v7954 = vpop.f32.mrf.mxu0
  %v7955 = vadd.f32 0.0, %v7954
  %v7956 = vpop.f32.mrf.mxu0
  %7957 = vdwg.mxu0
  %v7966 = vunpack.c.l.b16 %v7756
  %v7967 = vunpack.c.l.b16 %v7757
  %v7968 = vunpack.c.l.b16 %v7758
  %v7969 = vunpack.c.l.b16 %v7759
  %v7970 = vunpack.c.l.b16 %v7760
  %v7971 = vunpack.c.l.b16 %v7761
  %v7972 = vunpack.c.l.b16 %v7762
  %v7973 = vunpack.c.l.b16 %v7763
  %v7974 = vpack.c.b16 %v7967, %v7966
  %v7975 = vpack.c.b16 %v7969, %v7968
  %v7976 = vpack.c.b16 %v7971, %v7970
  %v7977 = vpack.c.b16 %v7973, %v7972
  %7982 = vmatprep.subr.bf16.mxu0 0
  %7983 = vmatpush1.bf16.msra.mxu0 0
  %7984 = vmatprep.subr.bf16.mxu0 0
  %7985 = vmatpush1.bf16.msra.mxu0 0
  %7986 = vmatprep.subr.bf16.mxu0 0
  %7987 = vmatpush1.bf16.msra.mxu0 0
  %7988 = vmatprep.subr.bf16.mxu0 0
  %7989 = vmatpush1.bf16.msra.mxu0 0
  %7990 = vmatprep.subr.bf16.mxu0 0
  %7991 = vmatpush1.bf16.msra.mxu0 %v7977
  %7992 = vmatprep.subr.bf16.mxu0 0
  %7993 = vmatpush1.bf16.msra.mxu0 %v7976
  %7994 = vmatprep.subr.bf16.mxu0 0
  %7995 = vmatpush1.bf16.msra.mxu0 %v7975
  %7996 = vmatprep.subr.bf16.mxu0 0
  %7997 = vmatpush1.bf16.msra.mxu0 %v7974
  %7998 = vmatprep.subr.bf16.mxu0 0
  %7999 = vmatpush2.bf16.msra.mxu0 0
  %8000 = vmatprep.subr.bf16.mxu0 0
  %8001 = vmatpush2.bf16.msra.mxu0 0
  %8002 = vmatprep.subr.bf16.mxu0 0
  %8003 = vmatpush2.bf16.msra.mxu0 0
  %8004 = vmatprep.subr.bf16.mxu0 0
  %8005 = vmatpush2.bf16.msra.mxu0 0
  %8006 = vmatprep.subr.bf16.mxu0 0
  %8007 = vmatpush2.bf16.msra.mxu0 0
  %8008 = vmatprep.subr.bf16.mxu0 0
  %8009 = vmatpush2.bf16.msra.mxu0 0
  %8010 = vmatprep.subr.bf16.mxu0 0
  %8011 = vmatpush2.bf16.msra.mxu0 0
  %8012 = vmatprep.subr.bf16.mxu0 0
  %8013 = vmatpush2.bf16.msra.mxu0 0
  %8014 = vmatprep.mubr.bf16.mxu0 0
  %8015 = vmatmul.mubr.bf16.gmra.mxu0 %v7241
  %v8016 = vpop.f32.mrf.mxu0
  %v8017 = vadd.f32 %v7832, %v8016
  %v8018 = vpop.f32.mrf.mxu0
  %v8019 = vpop.f32.mrf.mxu0
  %v8020 = vadd.f32 %v7835, %v8019
  %v8021 = vpop.f32.mrf.mxu0
  %8022 = vmatprep.mubr.bf16.mxu0 0
  %8023 = vmatmul.mubr.bf16.gmra.mxu0 %v7244
  %v8024 = vpop.f32.mrf.mxu0
  %v8025 = vadd.f32 %v7840, %v8024
  %v8026 = vpop.f32.mrf.mxu0
  %v8027 = vpop.f32.mrf.mxu0
  %v8028 = vadd.f32 %v7843, %v8027
  %v8029 = vpop.f32.mrf.mxu0
  %8030 = vmatprep.mubr.bf16.mxu0 0
  %8031 = vmatmul.mubr.bf16.gmra.mxu0 %v7247
  %v8032 = vpop.f32.mrf.mxu0
  %v8033 = vadd.f32 %v7848, %v8032
  %v8034 = vpop.f32.mrf.mxu0
  %v8035 = vpop.f32.mrf.mxu0
  %v8036 = vadd.f32 %v7851, %v8035
  %v8037 = vpop.f32.mrf.mxu0
  %8038 = vmatprep.mubr.bf16.mxu0 0
  %8039 = vmatmul.mubr.bf16.gmra.mxu0 %v7250
  %v8040 = vpop.f32.mrf.mxu0
  %v8041 = vadd.f32 %v7856, %v8040
  %v8042 = vpop.f32.mrf.mxu0
  %v8043 = vpop.f32.mrf.mxu0
  %v8044 = vadd.f32 %v7859, %v8043
  %v8045 = vpop.f32.mrf.mxu0
  %8046 = vmatprep.mubr.bf16.mxu0 0
  %8047 = vmatmul.mubr.bf16.gmra.mxu0 %v7253
  %v8048 = vpop.f32.mrf.mxu0
  %v8049 = vadd.f32 %v7864, %v8048
  %v8050 = vpop.f32.mrf.mxu0
  %v8051 = vpop.f32.mrf.mxu0
  %v8052 = vadd.f32 %v7867, %v8051
  %v8053 = vpop.f32.mrf.mxu0
  %8054 = vmatprep.mubr.bf16.mxu0 0
  %8055 = vmatmul.mubr.bf16.gmra.mxu0 %v7256
  %v8056 = vpop.f32.mrf.mxu0
  %v8057 = vadd.f32 %v7872, %v8056
  %v8058 = vpop.f32.mrf.mxu0
  %v8059 = vpop.f32.mrf.mxu0
  %v8060 = vadd.f32 %v7875, %v8059
  %v8061 = vpop.f32.mrf.mxu0
  %8062 = vmatprep.mubr.bf16.mxu0 0
  %8063 = vmatmul.mubr.bf16.gmra.mxu0 %v7259
  %v8064 = vpop.f32.mrf.mxu0
  %v8065 = vadd.f32 %v7880, %v8064
  %v8066 = vpop.f32.mrf.mxu0
  %v8067 = vpop.f32.mrf.mxu0
  %v8068 = vadd.f32 %v7883, %v8067
  %v8069 = vpop.f32.mrf.mxu0
  %8070 = vmatprep.mubr.bf16.mxu0 0
  %8071 = vmatmul.mubr.bf16.gmra.mxu0 %v7262
  %v8072 = vpop.f32.mrf.mxu0
  %v8073 = vadd.f32 %v7888, %v8072
  %v8074 = vpop.f32.mrf.mxu0
  %v8075 = vpop.f32.mrf.mxu0
  %v8076 = vadd.f32 %v7891, %v8075
  %v8077 = vpop.f32.mrf.mxu0
  %8078 = vmatprep.mubr.bf16.mxu0 0
  %8079 = vmatmul.mubr.bf16.gmra.mxu0 %v7265
  %v8080 = vpop.f32.mrf.mxu0
  %v8081 = vadd.f32 %v7896, %v8080
  %v8082 = vpop.f32.mrf.mxu0
  %v8083 = vpop.f32.mrf.mxu0
  %v8084 = vadd.f32 %v7899, %v8083
  %v8085 = vpop.f32.mrf.mxu0
  %8086 = vmatprep.mubr.bf16.mxu0 0
  %8087 = vmatmul.mubr.bf16.gmra.mxu0 %v7268
  %v8088 = vpop.f32.mrf.mxu0
  %v8089 = vadd.f32 %v7904, %v8088
  %v8090 = vpop.f32.mrf.mxu0
  %v8091 = vpop.f32.mrf.mxu0
  %v8092 = vadd.f32 %v7907, %v8091
  %v8093 = vpop.f32.mrf.mxu0
  %8094 = vmatprep.mubr.bf16.mxu0 0
  %8095 = vmatmul.mubr.bf16.gmra.mxu0 %v7271
  %v8096 = vpop.f32.mrf.mxu0
  %v8097 = vadd.f32 %v7912, %v8096
  %v8098 = vpop.f32.mrf.mxu0
  %v8099 = vpop.f32.mrf.mxu0
  %v8100 = vadd.f32 %v7915, %v8099
  %v8101 = vpop.f32.mrf.mxu0
  %8102 = vmatprep.mubr.bf16.mxu0 0
  %8103 = vmatmul.mubr.bf16.gmra.mxu0 %v7274
  %v8104 = vpop.f32.mrf.mxu0
  %v8105 = vadd.f32 %v7920, %v8104
  %v8106 = vpop.f32.mrf.mxu0
  %v8107 = vpop.f32.mrf.mxu0
  %v8108 = vadd.f32 %v7923, %v8107
  %v8109 = vpop.f32.mrf.mxu0
  %8110 = vmatprep.mubr.bf16.mxu0 0
  %8111 = vmatmul.mubr.bf16.gmra.mxu0 %v7277
  %v8112 = vpop.f32.mrf.mxu0
  %v8113 = vadd.f32 %v7928, %v8112
  %v8114 = vpop.f32.mrf.mxu0
  %v8115 = vpop.f32.mrf.mxu0
  %v8116 = vadd.f32 %v7931, %v8115
  %v8117 = vpop.f32.mrf.mxu0
  %8118 = vmatprep.mubr.bf16.mxu0 0
  %8119 = vmatmul.mubr.bf16.gmra.mxu0 %v7280
  %v8120 = vpop.f32.mrf.mxu0
  %v8121 = vadd.f32 %v7936, %v8120
  %v8122 = vpop.f32.mrf.mxu0
  %v8123 = vpop.f32.mrf.mxu0
  %v8124 = vadd.f32 %v7939, %v8123
  %v8125 = vpop.f32.mrf.mxu0
  %8126 = vmatprep.mubr.bf16.mxu0 0
  %8127 = vmatmul.mubr.bf16.gmra.mxu0 %v7283
  %v8128 = vpop.f32.mrf.mxu0
  %v8129 = vadd.f32 %v7944, %v8128
  %v8130 = vpop.f32.mrf.mxu0
  %v8131 = vpop.f32.mrf.mxu0
  %v8132 = vadd.f32 %v7947, %v8131
  %v8133 = vpop.f32.mrf.mxu0
  %8134 = vmatprep.mubr.bf16.mxu0 0
  %8135 = vmatmul.mubr.bf16.gmra.mxu0 %v7286
  %v8136 = vpop.f32.mrf.mxu0
  %v8137 = vadd.f32 %v7952, %v8136
  %v8138 = vpop.f32.mrf.mxu0
  %v8139 = vpop.f32.mrf.mxu0
  %v8140 = vadd.f32 %v7955, %v8139
  %v8141 = vpop.f32.mrf.mxu0
  %8142 = vdwg.mxu0
  %s8143 = scalar_lea.vmem %s2, 736
  %v8144 = vld [vmem:[%s8143] sm:$0xf]
  %v8145 = vld [vmem:[%s8143 + $0x4] sm:$0xf]
  %v8146 = vld [vmem:[%s8143 + $0x8] sm:$0xf]
  %v8147 = vld [vmem:[%s8143 + $0xc] sm:$0xf]
  %v8148 = vld [vmem:[%s8143 + $0x10] sm:$0xf]
  %v8149 = vld [vmem:[%s8143 + $0x14] sm:$0xf]
  %v8150 = vld [vmem:[%s8143 + $0x18] sm:$0xf]
  %v8151 = vld [vmem:[%s8143 + $0x1c] sm:$0xf]
  %v8160 = vunpack.c.l.b16 %v8144
  %v8161 = vunpack.c.l.b16 %v8145
  %v8162 = vunpack.c.l.b16 %v8146
  %v8163 = vunpack.c.l.b16 %v8147
  %v8164 = vunpack.c.l.b16 %v8148
  %v8165 = vunpack.c.l.b16 %v8149
  %v8166 = vunpack.c.l.b16 %v8150
  %v8167 = vunpack.c.l.b16 %v8151
  %v8168 = vpack.c.b16 %v8161, %v8160
  %v8169 = vpack.c.b16 %v8163, %v8162
  %v8170 = vpack.c.b16 %v8165, %v8164
  %v8171 = vpack.c.b16 %v8167, %v8166
  %8176 = vmatprep.subr.bf16.mxu0 0
  %8177 = vmatpush1.bf16.msra.mxu0 0
  %8178 = vmatprep.subr.bf16.mxu0 0
  %8179 = vmatpush1.bf16.msra.mxu0 0
  %8180 = vmatprep.subr.bf16.mxu0 0
  %8181 = vmatpush1.bf16.msra.mxu0 0
  %8182 = vmatprep.subr.bf16.mxu0 0
  %8183 = vmatpush1.bf16.msra.mxu0 0
  %8184 = vmatprep.subr.bf16.mxu0 0
  %8185 = vmatpush1.bf16.msra.mxu0 %v8171
  %8186 = vmatprep.subr.bf16.mxu0 0
  %8187 = vmatpush1.bf16.msra.mxu0 %v8170
  %8188 = vmatprep.subr.bf16.mxu0 0
  %8189 = vmatpush1.bf16.msra.mxu0 %v8169
  %8190 = vmatprep.subr.bf16.mxu0 0
  %8191 = vmatpush1.bf16.msra.mxu0 %v8168
  %8192 = vmatprep.subr.bf16.mxu0 0
  %8193 = vmatpush2.bf16.msra.mxu0 0
  %8194 = vmatprep.subr.bf16.mxu0 0
  %8195 = vmatpush2.bf16.msra.mxu0 0
  %8196 = vmatprep.subr.bf16.mxu0 0
  %8197 = vmatpush2.bf16.msra.mxu0 0
  %8198 = vmatprep.subr.bf16.mxu0 0
  %8199 = vmatpush2.bf16.msra.mxu0 0
  %8200 = vmatprep.subr.bf16.mxu0 0
  %8201 = vmatpush2.bf16.msra.mxu0 0
  %8202 = vmatprep.subr.bf16.mxu0 0
  %8203 = vmatpush2.bf16.msra.mxu0 0
  %8204 = vmatprep.subr.bf16.mxu0 0
  %8205 = vmatpush2.bf16.msra.mxu0 0
  %8206 = vmatprep.subr.bf16.mxu0 0
  %8207 = vmatpush2.bf16.msra.mxu0 0
  %8208 = vmatprep.mubr.bf16.mxu0 0
  %8209 = vmatmul.mubr.bf16.gmra.mxu0 %v7483
  %v8210 = vpop.f32.mrf.mxu0
  %v8211 = vadd.f32 0.0, %v8210
  %v8212 = vpop.f32.mrf.mxu0
  %v8213 = vpop.f32.mrf.mxu0
  %v8214 = vadd.f32 0.0, %v8213
  %v8215 = vpop.f32.mrf.mxu0
  %8216 = vmatprep.mubr.bf16.mxu0 0
  %8217 = vmatmul.mubr.bf16.gmra.mxu0 %v7486
  %v8218 = vpop.f32.mrf.mxu0
  %v8219 = vadd.f32 0.0, %v8218
  %v8220 = vpop.f32.mrf.mxu0
  %v8221 = vpop.f32.mrf.mxu0
  %v8222 = vadd.f32 0.0, %v8221
  %v8223 = vpop.f32.mrf.mxu0
  %8224 = vmatprep.mubr.bf16.mxu0 0
  %8225 = vmatmul.mubr.bf16.gmra.mxu0 %v7489
  %v8226 = vpop.f32.mrf.mxu0
  %v8227 = vadd.f32 0.0, %v8226
  %v8228 = vpop.f32.mrf.mxu0
  %v8229 = vpop.f32.mrf.mxu0
  %v8230 = vadd.f32 0.0, %v8229
  %v8231 = vpop.f32.mrf.mxu0
  %8232 = vmatprep.mubr.bf16.mxu0 0
  %8233 = vmatmul.mubr.bf16.gmra.mxu0 %v7492
  %v8234 = vpop.f32.mrf.mxu0
  %v8235 = vadd.f32 0.0, %v8234
  %v8236 = vpop.f32.mrf.mxu0
  %v8237 = vpop.f32.mrf.mxu0
  %v8238 = vadd.f32 0.0, %v8237
  %v8239 = vpop.f32.mrf.mxu0
  %8240 = vmatprep.mubr.bf16.mxu0 0
  %8241 = vmatmul.mubr.bf16.gmra.mxu0 %v7495
  %v8242 = vpop.f32.mrf.mxu0
  %v8243 = vadd.f32 0.0, %v8242
  %v8244 = vpop.f32.mrf.mxu0
  %v8245 = vpop.f32.mrf.mxu0
  %v8246 = vadd.f32 0.0, %v8245
  %v8247 = vpop.f32.mrf.mxu0
  %8248 = vmatprep.mubr.bf16.mxu0 0
  %8249 = vmatmul.mubr.bf16.gmra.mxu0 %v7498
  %v8250 = vpop.f32.mrf.mxu0
  %v8251 = vadd.f32 0.0, %v8250
  %v8252 = vpop.f32.mrf.mxu0
  %v8253 = vpop.f32.mrf.mxu0
  %v8254 = vadd.f32 0.0, %v8253
  %v8255 = vpop.f32.mrf.mxu0
  %8256 = vmatprep.mubr.bf16.mxu0 0
  %8257 = vmatmul.mubr.bf16.gmra.mxu0 %v7501
  %v8258 = vpop.f32.mrf.mxu0
  %v8259 = vadd.f32 0.0, %v8258
  %v8260 = vpop.f32.mrf.mxu0
  %v8261 = vpop.f32.mrf.mxu0
  %v8262 = vadd.f32 0.0, %v8261
  %v8263 = vpop.f32.mrf.mxu0
  %8264 = vmatprep.mubr.bf16.mxu0 0
  %8265 = vmatmul.mubr.bf16.gmra.mxu0 %v7504
  %v8266 = vpop.f32.mrf.mxu0
  %v8267 = vadd.f32 0.0, %v8266
  %v8268 = vpop.f32.mrf.mxu0
  %v8269 = vpop.f32.mrf.mxu0
  %v8270 = vadd.f32 0.0, %v8269
  %v8271 = vpop.f32.mrf.mxu0
  %8272 = vmatprep.mubr.bf16.mxu0 0
  %8273 = vmatmul.mubr.bf16.gmra.mxu0 %v7507
  %v8274 = vpop.f32.mrf.mxu0
  %v8275 = vadd.f32 0.0, %v8274
  %v8276 = vpop.f32.mrf.mxu0
  %v8277 = vpop.f32.mrf.mxu0
  %v8278 = vadd.f32 0.0, %v8277
  %v8279 = vpop.f32.mrf.mxu0
  %8280 = vmatprep.mubr.bf16.mxu0 0
  %8281 = vmatmul.mubr.bf16.gmra.mxu0 %v7510
  %v8282 = vpop.f32.mrf.mxu0
  %v8283 = vadd.f32 0.0, %v8282
  %v8284 = vpop.f32.mrf.mxu0
  %v8285 = vpop.f32.mrf.mxu0
  %v8286 = vadd.f32 0.0, %v8285
  %v8287 = vpop.f32.mrf.mxu0
  %8288 = vmatprep.mubr.bf16.mxu0 0
  %8289 = vmatmul.mubr.bf16.gmra.mxu0 %v7513
  %v8290 = vpop.f32.mrf.mxu0
  %v8291 = vadd.f32 0.0, %v8290
  %v8292 = vpop.f32.mrf.mxu0
  %v8293 = vpop.f32.mrf.mxu0
  %v8294 = vadd.f32 0.0, %v8293
  %v8295 = vpop.f32.mrf.mxu0
  %8296 = vmatprep.mubr.bf16.mxu0 0
  %8297 = vmatmul.mubr.bf16.gmra.mxu0 %v7516
  %v8298 = vpop.f32.mrf.mxu0
  %v8299 = vadd.f32 0.0, %v8298
  %v8300 = vpop.f32.mrf.mxu0
  %v8301 = vpop.f32.mrf.mxu0
  %v8302 = vadd.f32 0.0, %v8301
  %v8303 = vpop.f32.mrf.mxu0
  %8304 = vmatprep.mubr.bf16.mxu0 0
  %8305 = vmatmul.mubr.bf16.gmra.mxu0 %v7519
  %v8306 = vpop.f32.mrf.mxu0
  %v8307 = vadd.f32 0.0, %v8306
  %v8308 = vpop.f32.mrf.mxu0
  %v8309 = vpop.f32.mrf.mxu0
  %v8310 = vadd.f32 0.0, %v8309
  %v8311 = vpop.f32.mrf.mxu0
  %8312 = vmatprep.mubr.bf16.mxu0 0
  %8313 = vmatmul.mubr.bf16.gmra.mxu0 %v7522
  %v8314 = vpop.f32.mrf.mxu0
  %v8315 = vadd.f32 0.0, %v8314
  %v8316 = vpop.f32.mrf.mxu0
  %v8317 = vpop.f32.mrf.mxu0
  %v8318 = vadd.f32 0.0, %v8317
  %v8319 = vpop.f32.mrf.mxu0
  %8320 = vmatprep.mubr.bf16.mxu0 0
  %8321 = vmatmul.mubr.bf16.gmra.mxu0 %v7525
  %v8322 = vpop.f32.mrf.mxu0
  %v8323 = vadd.f32 0.0, %v8322
  %v8324 = vpop.f32.mrf.mxu0
  %v8325 = vpop.f32.mrf.mxu0
  %v8326 = vadd.f32 0.0, %v8325
  %v8327 = vpop.f32.mrf.mxu0
  %8328 = vmatprep.mubr.bf16.mxu0 0
  %8329 = vmatmul.mubr.bf16.gmra.mxu0 %v7528
  %v8330 = vpop.f32.mrf.mxu0
  %v8331 = vadd.f32 0.0, %v8330
  %v8332 = vpop.f32.mrf.mxu0
  %v8333 = vpop.f32.mrf.mxu0
  %v8334 = vadd.f32 0.0, %v8333
  %v8335 = vpop.f32.mrf.mxu0
  %8336 = vdwg.mxu0
  %v8337 = vadd.f32 %v8017, %v8211
  %v8338 = vadd.f32 %v8020, %v8214
  %v8339 = vadd.f32 %v8025, %v8219
  %v8340 = vadd.f32 %v8028, %v8222
  %v8341 = vadd.f32 %v8033, %v8227
  %v8342 = vadd.f32 %v8036, %v8230
  %v8343 = vadd.f32 %v8041, %v8235
  %v8344 = vadd.f32 %v8044, %v8238
  %v8345 = vadd.f32 %v8049, %v8243
  %v8346 = vadd.f32 %v8052, %v8246
  %v8347 = vadd.f32 %v8057, %v8251
  %v8348 = vadd.f32 %v8060, %v8254
  %v8349 = vadd.f32 %v8065, %v8259
  %v8350 = vadd.f32 %v8068, %v8262
  %v8351 = vadd.f32 %v8073, %v8267
  %v8352 = vadd.f32 %v8076, %v8270
  %v8353 = vadd.f32 %v8081, %v8275
  %v8354 = vadd.f32 %v8084, %v8278
  %v8355 = vadd.f32 %v8089, %v8283
  %v8356 = vadd.f32 %v8092, %v8286
  %v8357 = vadd.f32 %v8097, %v8291
  %v8358 = vadd.f32 %v8100, %v8294
  %v8359 = vadd.f32 %v8105, %v8299
  %v8360 = vadd.f32 %v8108, %v8302
  %v8361 = vadd.f32 %v8113, %v8307
  %v8362 = vadd.f32 %v8116, %v8310
  %v8363 = vadd.f32 %v8121, %v8315
  %v8364 = vadd.f32 %v8124, %v8318
  %v8365 = vadd.f32 %v8129, %v8323
  %v8366 = vadd.f32 %v8132, %v8326
  %v8367 = vadd.f32 %v8137, %v8331
  %v8368 = vadd.f32 %v8140, %v8334
  %v8369 = vadd.f32 %v7723, %v8337
  %v8370 = vadd.f32 %v7724, %v8338
  %v8371 = vadd.f32 %v7725, %v8339
  %v8372 = vadd.f32 %v7726, %v8340
  %v8373 = vadd.f32 %v7727, %v8341
  %v8374 = vadd.f32 %v7728, %v8342
  %v8375 = vadd.f32 %v7729, %v8343
  %v8376 = vadd.f32 %v7730, %v8344
  %v8377 = vadd.f32 %v7731, %v8345
  %v8378 = vadd.f32 %v7732, %v8346
  %v8379 = vadd.f32 %v7733, %v8347
  %v8380 = vadd.f32 %v7734, %v8348
  %v8381 = vadd.f32 %v7735, %v8349
  %v8382 = vadd.f32 %v7736, %v8350
  %v8383 = vadd.f32 %v7737, %v8351
  %v8384 = vadd.f32 %v7738, %v8352
  %v8385 = vadd.f32 %v7739, %v8353
  %v8386 = vadd.f32 %v7740, %v8354
  %v8387 = vadd.f32 %v7741, %v8355
  %v8388 = vadd.f32 %v7742, %v8356
  %v8389 = vadd.f32 %v7743, %v8357
  %v8390 = vadd.f32 %v7744, %v8358
  %v8391 = vadd.f32 %v7745, %v8359
  %v8392 = vadd.f32 %v7746, %v8360
  %v8393 = vadd.f32 %v7747, %v8361
  %v8394 = vadd.f32 %v7748, %v8362
  %v8395 = vadd.f32 %v7749, %v8363
  %v8396 = vadd.f32 %v7750, %v8364
  %v8397 = vadd.f32 %v7751, %v8365
  %v8398 = vadd.f32 %v7752, %v8366
  %v8399 = vadd.f32 %v7753, %v8367
  %v8400 = vadd.f32 %v7754, %v8368
  %s8401 = scalar_lea.vmem %s2, 768
  %v8402 = vld [vmem:[%s8401] sm:$0xf]
  %v8403 = vld [vmem:[%s8401 + $0x4] sm:$0xf]
  %v8404 = vld [vmem:[%s8401 + $0x8] sm:$0xf]
  %v8405 = vld [vmem:[%s8401 + $0xc] sm:$0xf]
  %v8406 = vld [vmem:[%s8401 + $0x10] sm:$0xf]
  %v8407 = vld [vmem:[%s8401 + $0x14] sm:$0xf]
  %v8408 = vld [vmem:[%s8401 + $0x18] sm:$0xf]
  %v8409 = vld [vmem:[%s8401 + $0x1c] sm:$0xf]
  %s8410 = scalar_lea.vmem %s2, 800
  %v8411 = vld [vmem:[%s8410] sm:$0xf]
  %v8412 = vld [vmem:[%s8410 + $0x4] sm:$0xf]
  %v8413 = vld [vmem:[%s8410 + $0x8] sm:$0xf]
  %v8414 = vld [vmem:[%s8410 + $0xc] sm:$0xf]
  %v8415 = vld [vmem:[%s8410 + $0x10] sm:$0xf]
  %v8416 = vld [vmem:[%s8410 + $0x14] sm:$0xf]
  %v8417 = vld [vmem:[%s8410 + $0x18] sm:$0xf]
  %v8418 = vld [vmem:[%s8410 + $0x1c] sm:$0xf]
  %v8427 = vunpack.c.l.b16 %v8411
  %v8428 = vunpack.c.l.b16 %v8412
  %v8429 = vunpack.c.l.b16 %v8413
  %v8430 = vunpack.c.l.b16 %v8414
  %v8431 = vunpack.c.l.b16 %v8415
  %v8432 = vunpack.c.l.b16 %v8416
  %v8433 = vunpack.c.l.b16 %v8417
  %v8434 = vunpack.c.l.b16 %v8418
  %v8435 = vpack.c.b16 %v8428, %v8427
  %v8436 = vpack.c.b16 %v8430, %v8429
  %v8437 = vpack.c.b16 %v8432, %v8431
  %v8438 = vpack.c.b16 %v8434, %v8433
  %8443 = vmatprep.subr.bf16.mxu0 0
  %8444 = vmatpush1.bf16.msra.mxu0 0
  %8445 = vmatprep.subr.bf16.mxu0 0
  %8446 = vmatpush1.bf16.msra.mxu0 0
  %8447 = vmatprep.subr.bf16.mxu0 0
  %8448 = vmatpush1.bf16.msra.mxu0 0
  %8449 = vmatprep.subr.bf16.mxu0 0
  %8450 = vmatpush1.bf16.msra.mxu0 0
  %8451 = vmatprep.subr.bf16.mxu0 0
  %8452 = vmatpush1.bf16.msra.mxu0 %v8438
  %8453 = vmatprep.subr.bf16.mxu0 0
  %8454 = vmatpush1.bf16.msra.mxu0 %v8437
  %8455 = vmatprep.subr.bf16.mxu0 0
  %8456 = vmatpush1.bf16.msra.mxu0 %v8436
  %8457 = vmatprep.subr.bf16.mxu0 0
  %8458 = vmatpush1.bf16.msra.mxu0 %v8435
  %8459 = vmatprep.subr.bf16.mxu0 0
  %8460 = vmatpush2.bf16.msra.mxu0 0
  %8461 = vmatprep.subr.bf16.mxu0 0
  %8462 = vmatpush2.bf16.msra.mxu0 0
  %8463 = vmatprep.subr.bf16.mxu0 0
  %8464 = vmatpush2.bf16.msra.mxu0 0
  %8465 = vmatprep.subr.bf16.mxu0 0
  %8466 = vmatpush2.bf16.msra.mxu0 0
  %8467 = vmatprep.subr.bf16.mxu0 0
  %8468 = vmatpush2.bf16.msra.mxu0 0
  %8469 = vmatprep.subr.bf16.mxu0 0
  %8470 = vmatpush2.bf16.msra.mxu0 0
  %8471 = vmatprep.subr.bf16.mxu0 0
  %8472 = vmatpush2.bf16.msra.mxu0 0
  %8473 = vmatprep.subr.bf16.mxu0 0
  %8474 = vmatpush2.bf16.msra.mxu0 0
  %8475 = vmatprep.mubr.bf16.mxu0 0
  %8476 = vmatmul.mubr.bf16.gmra.mxu0 %v7008
  %v8477 = vpop.f32.mrf.mxu0
  %v8478 = vadd.f32 0.0, %v8477
  %v8479 = vpop.f32.mrf.mxu0
  %v8480 = vpop.f32.mrf.mxu0
  %v8481 = vadd.f32 0.0, %v8480
  %v8482 = vpop.f32.mrf.mxu0
  %8483 = vmatprep.mubr.bf16.mxu0 0
  %8484 = vmatmul.mubr.bf16.gmra.mxu0 %v7011
  %v8485 = vpop.f32.mrf.mxu0
  %v8486 = vadd.f32 0.0, %v8485
  %v8487 = vpop.f32.mrf.mxu0
  %v8488 = vpop.f32.mrf.mxu0
  %v8489 = vadd.f32 0.0, %v8488
  %v8490 = vpop.f32.mrf.mxu0
  %8491 = vmatprep.mubr.bf16.mxu0 0
  %8492 = vmatmul.mubr.bf16.gmra.mxu0 %v7014
  %v8493 = vpop.f32.mrf.mxu0
  %v8494 = vadd.f32 0.0, %v8493
  %v8495 = vpop.f32.mrf.mxu0
  %v8496 = vpop.f32.mrf.mxu0
  %v8497 = vadd.f32 0.0, %v8496
  %v8498 = vpop.f32.mrf.mxu0
  %8499 = vmatprep.mubr.bf16.mxu0 0
  %8500 = vmatmul.mubr.bf16.gmra.mxu0 %v7017
  %v8501 = vpop.f32.mrf.mxu0
  %v8502 = vadd.f32 0.0, %v8501
  %v8503 = vpop.f32.mrf.mxu0
  %v8504 = vpop.f32.mrf.mxu0
  %v8505 = vadd.f32 0.0, %v8504
  %v8506 = vpop.f32.mrf.mxu0
  %8507 = vmatprep.mubr.bf16.mxu0 0
  %8508 = vmatmul.mubr.bf16.gmra.mxu0 %v7020
  %v8509 = vpop.f32.mrf.mxu0
  %v8510 = vadd.f32 0.0, %v8509
  %v8511 = vpop.f32.mrf.mxu0
  %v8512 = vpop.f32.mrf.mxu0
  %v8513 = vadd.f32 0.0, %v8512
  %v8514 = vpop.f32.mrf.mxu0
  %8515 = vmatprep.mubr.bf16.mxu0 0
  %8516 = vmatmul.mubr.bf16.gmra.mxu0 %v7023
  %v8517 = vpop.f32.mrf.mxu0
  %v8518 = vadd.f32 0.0, %v8517
  %v8519 = vpop.f32.mrf.mxu0
  %v8520 = vpop.f32.mrf.mxu0
  %v8521 = vadd.f32 0.0, %v8520
  %v8522 = vpop.f32.mrf.mxu0
  %8523 = vmatprep.mubr.bf16.mxu0 0
  %8524 = vmatmul.mubr.bf16.gmra.mxu0 %v7026
  %v8525 = vpop.f32.mrf.mxu0
  %v8526 = vadd.f32 0.0, %v8525
  %v8527 = vpop.f32.mrf.mxu0
  %v8528 = vpop.f32.mrf.mxu0
  %v8529 = vadd.f32 0.0, %v8528
  %v8530 = vpop.f32.mrf.mxu0
  %8531 = vmatprep.mubr.bf16.mxu0 0
  %8532 = vmatmul.mubr.bf16.gmra.mxu0 %v7029
  %v8533 = vpop.f32.mrf.mxu0
  %v8534 = vadd.f32 0.0, %v8533
  %v8535 = vpop.f32.mrf.mxu0
  %v8536 = vpop.f32.mrf.mxu0
  %v8537 = vadd.f32 0.0, %v8536
  %v8538 = vpop.f32.mrf.mxu0
  %8539 = vmatprep.mubr.bf16.mxu0 0
  %8540 = vmatmul.mubr.bf16.gmra.mxu0 %v7032
  %v8541 = vpop.f32.mrf.mxu0
  %v8542 = vadd.f32 0.0, %v8541
  %v8543 = vpop.f32.mrf.mxu0
  %v8544 = vpop.f32.mrf.mxu0
  %v8545 = vadd.f32 0.0, %v8544
  %v8546 = vpop.f32.mrf.mxu0
  %8547 = vmatprep.mubr.bf16.mxu0 0
  %8548 = vmatmul.mubr.bf16.gmra.mxu0 %v7035
  %v8549 = vpop.f32.mrf.mxu0
  %v8550 = vadd.f32 0.0, %v8549
  %v8551 = vpop.f32.mrf.mxu0
  %v8552 = vpop.f32.mrf.mxu0
  %v8553 = vadd.f32 0.0, %v8552
  %v8554 = vpop.f32.mrf.mxu0
  %8555 = vmatprep.mubr.bf16.mxu0 0
  %8556 = vmatmul.mubr.bf16.gmra.mxu0 %v7038
  %v8557 = vpop.f32.mrf.mxu0
  %v8558 = vadd.f32 0.0, %v8557
  %v8559 = vpop.f32.mrf.mxu0
  %v8560 = vpop.f32.mrf.mxu0
  %v8561 = vadd.f32 0.0, %v8560
  %v8562 = vpop.f32.mrf.mxu0
  %8563 = vmatprep.mubr.bf16.mxu0 0
  %8564 = vmatmul.mubr.bf16.gmra.mxu0 %v7041
  %v8565 = vpop.f32.mrf.mxu0
  %v8566 = vadd.f32 0.0, %v8565
  %v8567 = vpop.f32.mrf.mxu0
  %v8568 = vpop.f32.mrf.mxu0
  %v8569 = vadd.f32 0.0, %v8568
  %v8570 = vpop.f32.mrf.mxu0
  %8571 = vmatprep.mubr.bf16.mxu0 0
  %8572 = vmatmul.mubr.bf16.gmra.mxu0 %v7044
  %v8573 = vpop.f32.mrf.mxu0
  %v8574 = vadd.f32 0.0, %v8573
  %v8575 = vpop.f32.mrf.mxu0
  %v8576 = vpop.f32.mrf.mxu0
  %v8577 = vadd.f32 0.0, %v8576
  %v8578 = vpop.f32.mrf.mxu0
  %8579 = vmatprep.mubr.bf16.mxu0 0
  %8580 = vmatmul.mubr.bf16.gmra.mxu0 %v7047
  %v8581 = vpop.f32.mrf.mxu0
  %v8582 = vadd.f32 0.0, %v8581
  %v8583 = vpop.f32.mrf.mxu0
  %v8584 = vpop.f32.mrf.mxu0
  %v8585 = vadd.f32 0.0, %v8584
  %v8586 = vpop.f32.mrf.mxu0
  %8587 = vmatprep.mubr.bf16.mxu0 0
  %8588 = vmatmul.mubr.bf16.gmra.mxu0 %v7050
  %v8589 = vpop.f32.mrf.mxu0
  %v8590 = vadd.f32 0.0, %v8589
  %v8591 = vpop.f32.mrf.mxu0
  %v8592 = vpop.f32.mrf.mxu0
  %v8593 = vadd.f32 0.0, %v8592
  %v8594 = vpop.f32.mrf.mxu0
  %8595 = vmatprep.mubr.bf16.mxu0 0
  %8596 = vmatmul.mubr.bf16.gmra.mxu0 %v7053
  %v8597 = vpop.f32.mrf.mxu0
  %v8598 = vadd.f32 0.0, %v8597
  %v8599 = vpop.f32.mrf.mxu0
  %v8600 = vpop.f32.mrf.mxu0
  %v8601 = vadd.f32 0.0, %v8600
  %v8602 = vpop.f32.mrf.mxu0
  %8603 = vdwg.mxu0
  %v8612 = vunpack.c.l.b16 %v8402
  %v8613 = vunpack.c.l.b16 %v8403
  %v8614 = vunpack.c.l.b16 %v8404
  %v8615 = vunpack.c.l.b16 %v8405
  %v8616 = vunpack.c.l.b16 %v8406
  %v8617 = vunpack.c.l.b16 %v8407
  %v8618 = vunpack.c.l.b16 %v8408
  %v8619 = vunpack.c.l.b16 %v8409
  %v8620 = vpack.c.b16 %v8613, %v8612
  %v8621 = vpack.c.b16 %v8615, %v8614
  %v8622 = vpack.c.b16 %v8617, %v8616
  %v8623 = vpack.c.b16 %v8619, %v8618
  %8628 = vmatprep.subr.bf16.mxu0 0
  %8629 = vmatpush1.bf16.msra.mxu0 0
  %8630 = vmatprep.subr.bf16.mxu0 0
  %8631 = vmatpush1.bf16.msra.mxu0 0
  %8632 = vmatprep.subr.bf16.mxu0 0
  %8633 = vmatpush1.bf16.msra.mxu0 0
  %8634 = vmatprep.subr.bf16.mxu0 0
  %8635 = vmatpush1.bf16.msra.mxu0 0
  %8636 = vmatprep.subr.bf16.mxu0 0
  %8637 = vmatpush1.bf16.msra.mxu0 %v8623
  %8638 = vmatprep.subr.bf16.mxu0 0
  %8639 = vmatpush1.bf16.msra.mxu0 %v8622
  %8640 = vmatprep.subr.bf16.mxu0 0
  %8641 = vmatpush1.bf16.msra.mxu0 %v8621
  %8642 = vmatprep.subr.bf16.mxu0 0
  %8643 = vmatpush1.bf16.msra.mxu0 %v8620
  %8644 = vmatprep.subr.bf16.mxu0 0
  %8645 = vmatpush2.bf16.msra.mxu0 0
  %8646 = vmatprep.subr.bf16.mxu0 0
  %8647 = vmatpush2.bf16.msra.mxu0 0
  %8648 = vmatprep.subr.bf16.mxu0 0
  %8649 = vmatpush2.bf16.msra.mxu0 0
  %8650 = vmatprep.subr.bf16.mxu0 0
  %8651 = vmatpush2.bf16.msra.mxu0 0
  %8652 = vmatprep.subr.bf16.mxu0 0
  %8653 = vmatpush2.bf16.msra.mxu0 0
  %8654 = vmatprep.subr.bf16.mxu0 0
  %8655 = vmatpush2.bf16.msra.mxu0 0
  %8656 = vmatprep.subr.bf16.mxu0 0
  %8657 = vmatpush2.bf16.msra.mxu0 0
  %8658 = vmatprep.subr.bf16.mxu0 0
  %8659 = vmatpush2.bf16.msra.mxu0 0
  %8660 = vmatprep.mubr.bf16.mxu0 0
  %8661 = vmatmul.mubr.bf16.gmra.mxu0 %v7241
  %v8662 = vpop.f32.mrf.mxu0
  %v8663 = vadd.f32 %v8478, %v8662
  %v8664 = vpop.f32.mrf.mxu0
  %v8665 = vpop.f32.mrf.mxu0
  %v8666 = vadd.f32 %v8481, %v8665
  %v8667 = vpop.f32.mrf.mxu0
  %8668 = vmatprep.mubr.bf16.mxu0 0
  %8669 = vmatmul.mubr.bf16.gmra.mxu0 %v7244
  %v8670 = vpop.f32.mrf.mxu0
  %v8671 = vadd.f32 %v8486, %v8670
  %v8672 = vpop.f32.mrf.mxu0
  %v8673 = vpop.f32.mrf.mxu0
  %v8674 = vadd.f32 %v8489, %v8673
  %v8675 = vpop.f32.mrf.mxu0
  %8676 = vmatprep.mubr.bf16.mxu0 0
  %8677 = vmatmul.mubr.bf16.gmra.mxu0 %v7247
  %v8678 = vpop.f32.mrf.mxu0
  %v8679 = vadd.f32 %v8494, %v8678
  %v8680 = vpop.f32.mrf.mxu0
  %v8681 = vpop.f32.mrf.mxu0
  %v8682 = vadd.f32 %v8497, %v8681
  %v8683 = vpop.f32.mrf.mxu0
  %8684 = vmatprep.mubr.bf16.mxu0 0
  %8685 = vmatmul.mubr.bf16.gmra.mxu0 %v7250
  %v8686 = vpop.f32.mrf.mxu0
  %v8687 = vadd.f32 %v8502, %v8686
  %v8688 = vpop.f32.mrf.mxu0
  %v8689 = vpop.f32.mrf.mxu0
  %v8690 = vadd.f32 %v8505, %v8689
  %v8691 = vpop.f32.mrf.mxu0
  %8692 = vmatprep.mubr.bf16.mxu0 0
  %8693 = vmatmul.mubr.bf16.gmra.mxu0 %v7253
  %v8694 = vpop.f32.mrf.mxu0
  %v8695 = vadd.f32 %v8510, %v8694
  %v8696 = vpop.f32.mrf.mxu0
  %v8697 = vpop.f32.mrf.mxu0
  %v8698 = vadd.f32 %v8513, %v8697
  %v8699 = vpop.f32.mrf.mxu0
  %8700 = vmatprep.mubr.bf16.mxu0 0
  %8701 = vmatmul.mubr.bf16.gmra.mxu0 %v7256
  %v8702 = vpop.f32.mrf.mxu0
  %v8703 = vadd.f32 %v8518, %v8702
  %v8704 = vpop.f32.mrf.mxu0
  %v8705 = vpop.f32.mrf.mxu0
  %v8706 = vadd.f32 %v8521, %v8705
  %v8707 = vpop.f32.mrf.mxu0
  %8708 = vmatprep.mubr.bf16.mxu0 0
  %8709 = vmatmul.mubr.bf16.gmra.mxu0 %v7259
  %v8710 = vpop.f32.mrf.mxu0
  %v8711 = vadd.f32 %v8526, %v8710
  %v8712 = vpop.f32.mrf.mxu0
  %v8713 = vpop.f32.mrf.mxu0
  %v8714 = vadd.f32 %v8529, %v8713
  %v8715 = vpop.f32.mrf.mxu0
  %8716 = vmatprep.mubr.bf16.mxu0 0
  %8717 = vmatmul.mubr.bf16.gmra.mxu0 %v7262
  %v8718 = vpop.f32.mrf.mxu0
  %v8719 = vadd.f32 %v8534, %v8718
  %v8720 = vpop.f32.mrf.mxu0
  %v8721 = vpop.f32.mrf.mxu0
  %v8722 = vadd.f32 %v8537, %v8721
  %v8723 = vpop.f32.mrf.mxu0
  %8724 = vmatprep.mubr.bf16.mxu0 0
  %8725 = vmatmul.mubr.bf16.gmra.mxu0 %v7265
  %v8726 = vpop.f32.mrf.mxu0
  %v8727 = vadd.f32 %v8542, %v8726
  %v8728 = vpop.f32.mrf.mxu0
  %v8729 = vpop.f32.mrf.mxu0
  %v8730 = vadd.f32 %v8545, %v8729
  %v8731 = vpop.f32.mrf.mxu0
  %8732 = vmatprep.mubr.bf16.mxu0 0
  %8733 = vmatmul.mubr.bf16.gmra.mxu0 %v7268
  %v8734 = vpop.f32.mrf.mxu0
  %v8735 = vadd.f32 %v8550, %v8734
  %v8736 = vpop.f32.mrf.mxu0
  %v8737 = vpop.f32.mrf.mxu0
  %v8738 = vadd.f32 %v8553, %v8737
  %v8739 = vpop.f32.mrf.mxu0
  %8740 = vmatprep.mubr.bf16.mxu0 0
  %8741 = vmatmul.mubr.bf16.gmra.mxu0 %v7271
  %v8742 = vpop.f32.mrf.mxu0
  %v8743 = vadd.f32 %v8558, %v8742
  %v8744 = vpop.f32.mrf.mxu0
  %v8745 = vpop.f32.mrf.mxu0
  %v8746 = vadd.f32 %v8561, %v8745
  %v8747 = vpop.f32.mrf.mxu0
  %8748 = vmatprep.mubr.bf16.mxu0 0
  %8749 = vmatmul.mubr.bf16.gmra.mxu0 %v7274
  %v8750 = vpop.f32.mrf.mxu0
  %v8751 = vadd.f32 %v8566, %v8750
  %v8752 = vpop.f32.mrf.mxu0
  %v8753 = vpop.f32.mrf.mxu0
  %v8754 = vadd.f32 %v8569, %v8753
  %v8755 = vpop.f32.mrf.mxu0
  %8756 = vmatprep.mubr.bf16.mxu0 0
  %8757 = vmatmul.mubr.bf16.gmra.mxu0 %v7277
  %v8758 = vpop.f32.mrf.mxu0
  %v8759 = vadd.f32 %v8574, %v8758
  %v8760 = vpop.f32.mrf.mxu0
  %v8761 = vpop.f32.mrf.mxu0
  %v8762 = vadd.f32 %v8577, %v8761
  %v8763 = vpop.f32.mrf.mxu0
  %8764 = vmatprep.mubr.bf16.mxu0 0
  %8765 = vmatmul.mubr.bf16.gmra.mxu0 %v7280
  %v8766 = vpop.f32.mrf.mxu0
  %v8767 = vadd.f32 %v8582, %v8766
  %v8768 = vpop.f32.mrf.mxu0
  %v8769 = vpop.f32.mrf.mxu0
  %v8770 = vadd.f32 %v8585, %v8769
  %v8771 = vpop.f32.mrf.mxu0
  %8772 = vmatprep.mubr.bf16.mxu0 0
  %8773 = vmatmul.mubr.bf16.gmra.mxu0 %v7283
  %v8774 = vpop.f32.mrf.mxu0
  %v8775 = vadd.f32 %v8590, %v8774
  %v8776 = vpop.f32.mrf.mxu0
  %v8777 = vpop.f32.mrf.mxu0
  %v8778 = vadd.f32 %v8593, %v8777
  %v8779 = vpop.f32.mrf.mxu0
  %8780 = vmatprep.mubr.bf16.mxu0 0
  %8781 = vmatmul.mubr.bf16.gmra.mxu0 %v7286
  %v8782 = vpop.f32.mrf.mxu0
  %v8783 = vadd.f32 %v8598, %v8782
  %v8784 = vpop.f32.mrf.mxu0
  %v8785 = vpop.f32.mrf.mxu0
  %v8786 = vadd.f32 %v8601, %v8785
  %v8787 = vpop.f32.mrf.mxu0
  %8788 = vdwg.mxu0
  %s8789 = scalar_lea.vmem %s2, 832
  %v8790 = vld [vmem:[%s8789] sm:$0xf]
  %v8791 = vld [vmem:[%s8789 + $0x4] sm:$0xf]
  %v8792 = vld [vmem:[%s8789 + $0x8] sm:$0xf]
  %v8793 = vld [vmem:[%s8789 + $0xc] sm:$0xf]
  %v8794 = vld [vmem:[%s8789 + $0x10] sm:$0xf]
  %v8795 = vld [vmem:[%s8789 + $0x14] sm:$0xf]
  %v8796 = vld [vmem:[%s8789 + $0x18] sm:$0xf]
  %v8797 = vld [vmem:[%s8789 + $0x1c] sm:$0xf]
  %v8806 = vunpack.c.l.b16 %v8790
  %v8807 = vunpack.c.l.b16 %v8791
  %v8808 = vunpack.c.l.b16 %v8792
  %v8809 = vunpack.c.l.b16 %v8793
  %v8810 = vunpack.c.l.b16 %v8794
  %v8811 = vunpack.c.l.b16 %v8795
  %v8812 = vunpack.c.l.b16 %v8796
  %v8813 = vunpack.c.l.b16 %v8797
  %v8814 = vpack.c.b16 %v8807, %v8806
  %v8815 = vpack.c.b16 %v8809, %v8808
  %v8816 = vpack.c.b16 %v8811, %v8810
  %v8817 = vpack.c.b16 %v8813, %v8812
  %8822 = vmatprep.subr.bf16.mxu0 0
  %8823 = vmatpush1.bf16.msra.mxu0 0
  %8824 = vmatprep.subr.bf16.mxu0 0
  %8825 = vmatpush1.bf16.msra.mxu0 0
  %8826 = vmatprep.subr.bf16.mxu0 0
  %8827 = vmatpush1.bf16.msra.mxu0 0
  %8828 = vmatprep.subr.bf16.mxu0 0
  %8829 = vmatpush1.bf16.msra.mxu0 0
  %8830 = vmatprep.subr.bf16.mxu0 0
  %8831 = vmatpush1.bf16.msra.mxu0 %v8817
  %8832 = vmatprep.subr.bf16.mxu0 0
  %8833 = vmatpush1.bf16.msra.mxu0 %v8816
  %8834 = vmatprep.subr.bf16.mxu0 0
  %8835 = vmatpush1.bf16.msra.mxu0 %v8815
  %8836 = vmatprep.subr.bf16.mxu0 0
  %8837 = vmatpush1.bf16.msra.mxu0 %v8814
  %8838 = vmatprep.subr.bf16.mxu0 0
  %8839 = vmatpush2.bf16.msra.mxu0 0
  %8840 = vmatprep.subr.bf16.mxu0 0
  %8841 = vmatpush2.bf16.msra.mxu0 0
  %8842 = vmatprep.subr.bf16.mxu0 0
  %8843 = vmatpush2.bf16.msra.mxu0 0
  %8844 = vmatprep.subr.bf16.mxu0 0
  %8845 = vmatpush2.bf16.msra.mxu0 0
  %8846 = vmatprep.subr.bf16.mxu0 0
  %8847 = vmatpush2.bf16.msra.mxu0 0
  %8848 = vmatprep.subr.bf16.mxu0 0
  %8849 = vmatpush2.bf16.msra.mxu0 0
  %8850 = vmatprep.subr.bf16.mxu0 0
  %8851 = vmatpush2.bf16.msra.mxu0 0
  %8852 = vmatprep.subr.bf16.mxu0 0
  %8853 = vmatpush2.bf16.msra.mxu0 0
  %8854 = vmatprep.mubr.bf16.mxu0 0
  %8855 = vmatmul.mubr.bf16.gmra.mxu0 %v7483
  %v8856 = vpop.f32.mrf.mxu0
  %v8857 = vadd.f32 0.0, %v8856
  %v8858 = vpop.f32.mrf.mxu0
  %v8859 = vpop.f32.mrf.mxu0
  %v8860 = vadd.f32 0.0, %v8859
  %v8861 = vpop.f32.mrf.mxu0
  %8862 = vmatprep.mubr.bf16.mxu0 0
  %8863 = vmatmul.mubr.bf16.gmra.mxu0 %v7486
  %v8864 = vpop.f32.mrf.mxu0
  %v8865 = vadd.f32 0.0, %v8864
  %v8866 = vpop.f32.mrf.mxu0
  %v8867 = vpop.f32.mrf.mxu0
  %v8868 = vadd.f32 0.0, %v8867
  %v8869 = vpop.f32.mrf.mxu0
  %8870 = vmatprep.mubr.bf16.mxu0 0
  %8871 = vmatmul.mubr.bf16.gmra.mxu0 %v7489
  %v8872 = vpop.f32.mrf.mxu0
  %v8873 = vadd.f32 0.0, %v8872
  %v8874 = vpop.f32.mrf.mxu0
  %v8875 = vpop.f32.mrf.mxu0
  %v8876 = vadd.f32 0.0, %v8875
  %v8877 = vpop.f32.mrf.mxu0
  %8878 = vmatprep.mubr.bf16.mxu0 0
  %8879 = vmatmul.mubr.bf16.gmra.mxu0 %v7492
  %v8880 = vpop.f32.mrf.mxu0
  %v8881 = vadd.f32 0.0, %v8880
  %v8882 = vpop.f32.mrf.mxu0
  %v8883 = vpop.f32.mrf.mxu0
  %v8884 = vadd.f32 0.0, %v8883
  %v8885 = vpop.f32.mrf.mxu0
  %8886 = vmatprep.mubr.bf16.mxu0 0
  %8887 = vmatmul.mubr.bf16.gmra.mxu0 %v7495
  %v8888 = vpop.f32.mrf.mxu0
  %v8889 = vadd.f32 0.0, %v8888
  %v8890 = vpop.f32.mrf.mxu0
  %v8891 = vpop.f32.mrf.mxu0
  %v8892 = vadd.f32 0.0, %v8891
  %v8893 = vpop.f32.mrf.mxu0
  %8894 = vmatprep.mubr.bf16.mxu0 0
  %8895 = vmatmul.mubr.bf16.gmra.mxu0 %v7498
  %v8896 = vpop.f32.mrf.mxu0
  %v8897 = vadd.f32 0.0, %v8896
  %v8898 = vpop.f32.mrf.mxu0
  %v8899 = vpop.f32.mrf.mxu0
  %v8900 = vadd.f32 0.0, %v8899
  %v8901 = vpop.f32.mrf.mxu0
  %8902 = vmatprep.mubr.bf16.mxu0 0
  %8903 = vmatmul.mubr.bf16.gmra.mxu0 %v7501
  %v8904 = vpop.f32.mrf.mxu0
  %v8905 = vadd.f32 0.0, %v8904
  %v8906 = vpop.f32.mrf.mxu0
  %v8907 = vpop.f32.mrf.mxu0
  %v8908 = vadd.f32 0.0, %v8907
  %v8909 = vpop.f32.mrf.mxu0
  %8910 = vmatprep.mubr.bf16.mxu0 0
  %8911 = vmatmul.mubr.bf16.gmra.mxu0 %v7504
  %v8912 = vpop.f32.mrf.mxu0
  %v8913 = vadd.f32 0.0, %v8912
  %v8914 = vpop.f32.mrf.mxu0
  %v8915 = vpop.f32.mrf.mxu0
  %v8916 = vadd.f32 0.0, %v8915
  %v8917 = vpop.f32.mrf.mxu0
  %8918 = vmatprep.mubr.bf16.mxu0 0
  %8919 = vmatmul.mubr.bf16.gmra.mxu0 %v7507
  %v8920 = vpop.f32.mrf.mxu0
  %v8921 = vadd.f32 0.0, %v8920
  %v8922 = vpop.f32.mrf.mxu0
  %v8923 = vpop.f32.mrf.mxu0
  %v8924 = vadd.f32 0.0, %v8923
  %v8925 = vpop.f32.mrf.mxu0
  %8926 = vmatprep.mubr.bf16.mxu0 0
  %8927 = vmatmul.mubr.bf16.gmra.mxu0 %v7510
  %v8928 = vpop.f32.mrf.mxu0
  %v8929 = vadd.f32 0.0, %v8928
  %v8930 = vpop.f32.mrf.mxu0
  %v8931 = vpop.f32.mrf.mxu0
  %v8932 = vadd.f32 0.0, %v8931
  %v8933 = vpop.f32.mrf.mxu0
  %8934 = vmatprep.mubr.bf16.mxu0 0
  %8935 = vmatmul.mubr.bf16.gmra.mxu0 %v7513
  %v8936 = vpop.f32.mrf.mxu0
  %v8937 = vadd.f32 0.0, %v8936
  %v8938 = vpop.f32.mrf.mxu0
  %v8939 = vpop.f32.mrf.mxu0
  %v8940 = vadd.f32 0.0, %v8939
  %v8941 = vpop.f32.mrf.mxu0
  %8942 = vmatprep.mubr.bf16.mxu0 0
  %8943 = vmatmul.mubr.bf16.gmra.mxu0 %v7516
  %v8944 = vpop.f32.mrf.mxu0
  %v8945 = vadd.f32 0.0, %v8944
  %v8946 = vpop.f32.mrf.mxu0
  %v8947 = vpop.f32.mrf.mxu0
  %v8948 = vadd.f32 0.0, %v8947
  %v8949 = vpop.f32.mrf.mxu0
  %8950 = vmatprep.mubr.bf16.mxu0 0
  %8951 = vmatmul.mubr.bf16.gmra.mxu0 %v7519
  %v8952 = vpop.f32.mrf.mxu0
  %v8953 = vadd.f32 0.0, %v8952
  %v8954 = vpop.f32.mrf.mxu0
  %v8955 = vpop.f32.mrf.mxu0
  %v8956 = vadd.f32 0.0, %v8955
  %v8957 = vpop.f32.mrf.mxu0
  %8958 = vmatprep.mubr.bf16.mxu0 0
  %8959 = vmatmul.mubr.bf16.gmra.mxu0 %v7522
  %v8960 = vpop.f32.mrf.mxu0
  %v8961 = vadd.f32 0.0, %v8960
  %v8962 = vpop.f32.mrf.mxu0
  %v8963 = vpop.f32.mrf.mxu0
  %v8964 = vadd.f32 0.0, %v8963
  %v8965 = vpop.f32.mrf.mxu0
  %8966 = vmatprep.mubr.bf16.mxu0 0
  %8967 = vmatmul.mubr.bf16.gmra.mxu0 %v7525
  %v8968 = vpop.f32.mrf.mxu0
  %v8969 = vadd.f32 0.0, %v8968
  %v8970 = vpop.f32.mrf.mxu0
  %v8971 = vpop.f32.mrf.mxu0
  %v8972 = vadd.f32 0.0, %v8971
  %v8973 = vpop.f32.mrf.mxu0
  %8974 = vmatprep.mubr.bf16.mxu0 0
  %8975 = vmatmul.mubr.bf16.gmra.mxu0 %v7528
  %v8976 = vpop.f32.mrf.mxu0
  %v8977 = vadd.f32 0.0, %v8976
  %v8978 = vpop.f32.mrf.mxu0
  %v8979 = vpop.f32.mrf.mxu0
  %v8980 = vadd.f32 0.0, %v8979
  %v8981 = vpop.f32.mrf.mxu0
  %8982 = vdwg.mxu0
  %v8983 = vadd.f32 %v8663, %v8857
  %v8984 = vadd.f32 %v8666, %v8860
  %v8985 = vadd.f32 %v8671, %v8865
  %v8986 = vadd.f32 %v8674, %v8868
  %v8987 = vadd.f32 %v8679, %v8873
  %v8988 = vadd.f32 %v8682, %v8876
  %v8989 = vadd.f32 %v8687, %v8881
  %v8990 = vadd.f32 %v8690, %v8884
  %v8991 = vadd.f32 %v8695, %v8889
  %v8992 = vadd.f32 %v8698, %v8892
  %v8993 = vadd.f32 %v8703, %v8897
  %v8994 = vadd.f32 %v8706, %v8900
  %v8995 = vadd.f32 %v8711, %v8905
  %v8996 = vadd.f32 %v8714, %v8908
  %v8997 = vadd.f32 %v8719, %v8913
  %v8998 = vadd.f32 %v8722, %v8916
  %v8999 = vadd.f32 %v8727, %v8921
  %v9000 = vadd.f32 %v8730, %v8924
  %v9001 = vadd.f32 %v8735, %v8929
  %v9002 = vadd.f32 %v8738, %v8932
  %v9003 = vadd.f32 %v8743, %v8937
  %v9004 = vadd.f32 %v8746, %v8940
  %v9005 = vadd.f32 %v8751, %v8945
  %v9006 = vadd.f32 %v8754, %v8948
  %v9007 = vadd.f32 %v8759, %v8953
  %v9008 = vadd.f32 %v8762, %v8956
  %v9009 = vadd.f32 %v8767, %v8961
  %v9010 = vadd.f32 %v8770, %v8964
  %v9011 = vadd.f32 %v8775, %v8969
  %v9012 = vadd.f32 %v8778, %v8972
  %v9013 = vadd.f32 %v8783, %v8977
  %v9014 = vadd.f32 %v8786, %v8980
  %v9015 = vsel %vm3459, %v9013, %v8985
  %v9016 = vsel %vm3460, %v9014, %v8986
  %v9017 = vsel %vm3461, %v8983, %v8987
  %v9018 = vsel %vm3462, %v8984, %v8988
  %v9019 = vsel %vm3463, %v8985, %v8989
  %v9020 = vsel %vm3464, %v8986, %v8990
  %v9021 = vsel %vm3465, %v8987, %v8991
  %v9022 = vsel %vm3466, %v8988, %v8992
  %v9023 = vsel %vm3467, %v8989, %v8993
  %v9024 = vsel %vm3468, %v8990, %v8994
  %v9025 = vsel %vm3469, %v8991, %v8995
  %v9026 = vsel %vm3470, %v8992, %v8996
  %v9027 = vsel %vm3471, %v8993, %v8997
  %v9028 = vsel %vm3472, %v8994, %v8998
  %v9029 = vsel %vm3473, %v8995, %v8999
  %v9030 = vsel %vm3474, %v8996, %v9000
  %v9031 = vsel %vm3475, %v8997, %v9001
  %v9032 = vsel %vm3476, %v8998, %v9002
  %v9033 = vsel %vm3477, %v8999, %v9003
  %v9034 = vsel %vm3478, %v9000, %v9004
  %v9035 = vsel %vm3479, %v9001, %v9005
  %v9036 = vsel %vm3480, %v9002, %v9006
  %v9037 = vsel %vm3481, %v9003, %v9007
  %v9038 = vsel %vm3482, %v9004, %v9008
  %v9039 = vsel %vm3483, %v9005, %v9009
  %v9040 = vsel %vm3484, %v9006, %v9010
  %v9041 = vsel %vm3485, %v9007, %v9011
  %v9042 = vsel %vm3486, %v9008, %v9012
  %v9043 = vsel %vm3487, %v9009, %v9013
  %v9044 = vsel %vm3488, %v9010, %v9014
  %v9045 = vsel %vm3489, %v9011, %v8983
  %v9046 = vsel %vm3490, %v9012, %v8984
  %v9047 = vadd.f32 %v8369, %v9015
  %v9048 = vadd.f32 %v8370, %v9016
  %v9049 = vadd.f32 %v8371, %v9017
  %v9050 = vadd.f32 %v8372, %v9018
  %v9051 = vadd.f32 %v8373, %v9019
  %v9052 = vadd.f32 %v8374, %v9020
  %v9053 = vadd.f32 %v8375, %v9021
  %v9054 = vadd.f32 %v8376, %v9022
  %v9055 = vadd.f32 %v8377, %v9023
  %v9056 = vadd.f32 %v8378, %v9024
  %v9057 = vadd.f32 %v8379, %v9025
  %v9058 = vadd.f32 %v8380, %v9026
  %v9059 = vadd.f32 %v8381, %v9027
  %v9060 = vadd.f32 %v8382, %v9028
  %v9061 = vadd.f32 %v8383, %v9029
  %v9062 = vadd.f32 %v8384, %v9030
  %v9063 = vadd.f32 %v8385, %v9031
  %v9064 = vadd.f32 %v8386, %v9032
  %v9065 = vadd.f32 %v8387, %v9033
  %v9066 = vadd.f32 %v8388, %v9034
  %v9067 = vadd.f32 %v8389, %v9035
  %v9068 = vadd.f32 %v8390, %v9036
  %v9069 = vadd.f32 %v8391, %v9037
  %v9070 = vadd.f32 %v8392, %v9038
  %v9071 = vadd.f32 %v8393, %v9039
  %v9072 = vadd.f32 %v8394, %v9040
  %v9073 = vadd.f32 %v8395, %v9041
  %v9074 = vadd.f32 %v8396, %v9042
  %v9075 = vadd.f32 %v8397, %v9043
  %v9076 = vadd.f32 %v8398, %v9044
  %v9077 = vadd.f32 %v8399, %v9045
  %v9078 = vadd.f32 %v8400, %v9046
  %v9079 = vld [vmem:[%s5 + $0x3] sm:$0x1]
  %v9080 = vlaneseq
  %v9081 = vshrl.u32 %v9080, 7
  %v9082 = vsub.s32 0, %v9081
  %v9083 = vrot.slane %v9079, %v9082
  %v9084 = vadd.f32 %v9047, %v9083
  %v9085 = vadd.f32 %v9048, %v9083
  %v9086 = vadd.f32 %v9049, %v9083
  %v9087 = vadd.f32 %v9050, %v9083
  %v9088 = vadd.f32 %v9051, %v9083
  %v9089 = vadd.f32 %v9052, %v9083
  %v9090 = vadd.f32 %v9053, %v9083
  %v9091 = vadd.f32 %v9054, %v9083
  %v9092 = vadd.f32 %v9055, %v9083
  %v9093 = vadd.f32 %v9056, %v9083
  %v9094 = vadd.f32 %v9057, %v9083
  %v9095 = vadd.f32 %v9058, %v9083
  %v9096 = vadd.f32 %v9059, %v9083
  %v9097 = vadd.f32 %v9060, %v9083
  %v9098 = vadd.f32 %v9061, %v9083
  %v9099 = vadd.f32 %v9062, %v9083
  %v9100 = vadd.f32 %v9063, %v9083
  %v9101 = vadd.f32 %v9064, %v9083
  %v9102 = vadd.f32 %v9065, %v9083
  %v9103 = vadd.f32 %v9066, %v9083
  %v9104 = vadd.f32 %v9067, %v9083
  %v9105 = vadd.f32 %v9068, %v9083
  %v9106 = vadd.f32 %v9069, %v9083
  %v9107 = vadd.f32 %v9070, %v9083
  %v9108 = vadd.f32 %v9071, %v9083
  %v9109 = vadd.f32 %v9072, %v9083
  %v9110 = vadd.f32 %v9073, %v9083
  %v9111 = vadd.f32 %v9074, %v9083
  %v9112 = vadd.f32 %v9075, %v9083
  %v9113 = vadd.f32 %v9076, %v9083
  %v9114 = vadd.f32 %v9077, %v9083
  %v9115 = vadd.f32 %v9078, %v9083
  %v9116 = vsel %vm571, %v9084, 0.0
  %v9117 = vsel %vm571, %v9085, 0.0
  %v9118 = vadd.f32 %v9116, %v9117
  %v9119 = vsel %vm571, %v9086, 0.0
  %v9120 = vadd.f32 %v9118, %v9119
  %v9121 = vsel %vm571, %v9087, 0.0
  %v9122 = vadd.f32 %v9120, %v9121
  %v9123 = vsel %vm571, %v9088, 0.0
  %v9124 = vadd.f32 %v9122, %v9123
  %v9125 = vsel %vm571, %v9089, 0.0
  %v9126 = vadd.f32 %v9124, %v9125
  %v9127 = vsel %vm571, %v9090, 0.0
  %v9128 = vadd.f32 %v9126, %v9127
  %v9129 = vsel %vm571, %v9091, 0.0
  %v9130 = vadd.f32 %v9128, %v9129
  %v9131 = vsel %vm571, %v9092, 0.0
  %v9132 = vadd.f32 %v9130, %v9131
  %v9133 = vsel %vm571, %v9093, 0.0
  %v9134 = vadd.f32 %v9132, %v9133
  %v9135 = vsel %vm571, %v9094, 0.0
  %v9136 = vadd.f32 %v9134, %v9135
  %v9137 = vsel %vm571, %v9095, 0.0
  %v9138 = vadd.f32 %v9136, %v9137
  %v9139 = vsel %vm571, %v9096, 0.0
  %v9140 = vadd.f32 %v9138, %v9139
  %v9141 = vsel %vm571, %v9097, 0.0
  %v9142 = vadd.f32 %v9140, %v9141
  %v9143 = vsel %vm571, %v9098, 0.0
  %v9144 = vadd.f32 %v9142, %v9143
  %v9145 = vsel %vm571, %v9099, 0.0
  %v9146 = vadd.f32 %v9144, %v9145
  %v9147 = vsel %vm571, %v9100, 0.0
  %v9148 = vadd.f32 %v9146, %v9147
  %v9149 = vsel %vm571, %v9101, 0.0
  %v9150 = vadd.f32 %v9148, %v9149
  %v9151 = vsel %vm571, %v9102, 0.0
  %v9152 = vadd.f32 %v9150, %v9151
  %v9153 = vsel %vm571, %v9103, 0.0
  %v9154 = vadd.f32 %v9152, %v9153
  %v9155 = vsel %vm571, %v9104, 0.0
  %v9156 = vadd.f32 %v9154, %v9155
  %v9157 = vsel %vm571, %v9105, 0.0
  %v9158 = vadd.f32 %v9156, %v9157
  %v9159 = vsel %vm571, %v9106, 0.0
  %v9160 = vadd.f32 %v9158, %v9159
  %v9161 = vsel %vm571, %v9107, 0.0
  %v9162 = vadd.f32 %v9160, %v9161
  %v9163 = vsel %vm571, %v9108, 0.0
  %v9164 = vadd.f32 %v9162, %v9163
  %v9165 = vsel %vm571, %v9109, 0.0
  %v9166 = vadd.f32 %v9164, %v9165
  %v9167 = vsel %vm571, %v9110, 0.0
  %v9168 = vadd.f32 %v9166, %v9167
  %v9169 = vsel %vm571, %v9111, 0.0
  %v9170 = vadd.f32 %v9168, %v9169
  %v9171 = vsel %vm571, %v9112, 0.0
  %v9172 = vadd.f32 %v9170, %v9171
  %v9173 = vsel %vm571, %v9113, 0.0
  %v9174 = vadd.f32 %v9172, %v9173
  %v9175 = vsel %vm571, %v9114, 0.0
  %v9176 = vadd.f32 %v9174, %v9175
  %v9177 = vsel %vm571, %v9115, 0.0
  %v9178 = vadd.f32 %v9176, %v9177
  %v9179 = vrot.slane %v9178, 4
  %v9180 = vadd.f32 %v9178, %v9179
  %v9181 = vrot.slane %v9180, 2
  %v9182 = vadd.f32 %v9180, %v9181
  %v9183 = vrot.slane %v9182, 1
  %v9184 = vadd.f32 %v9182, %v9183
  %v9185 = vmul.f32 %v9084, %v9084
  %v9186 = vmul.f32 %v9085, %v9085
  %v9187 = vmul.f32 %v9086, %v9086
  %v9188 = vmul.f32 %v9087, %v9087
  %v9189 = vmul.f32 %v9088, %v9088
  %v9190 = vmul.f32 %v9089, %v9089
  %v9191 = vmul.f32 %v9090, %v9090
  %v9192 = vmul.f32 %v9091, %v9091
  %v9193 = vmul.f32 %v9092, %v9092
  %v9194 = vmul.f32 %v9093, %v9093
  %v9195 = vmul.f32 %v9094, %v9094
  %v9196 = vmul.f32 %v9095, %v9095
  %v9197 = vmul.f32 %v9096, %v9096
  %v9198 = vmul.f32 %v9097, %v9097
  %v9199 = vmul.f32 %v9098, %v9098
  %v9200 = vmul.f32 %v9099, %v9099
  %v9201 = vmul.f32 %v9100, %v9100
  %v9202 = vmul.f32 %v9101, %v9101
  %v9203 = vmul.f32 %v9102, %v9102
  %v9204 = vmul.f32 %v9103, %v9103
  %v9205 = vmul.f32 %v9104, %v9104
  %v9206 = vmul.f32 %v9105, %v9105
  %v9207 = vmul.f32 %v9106, %v9106
  %v9208 = vmul.f32 %v9107, %v9107
  %v9209 = vmul.f32 %v9108, %v9108
  %v9210 = vmul.f32 %v9109, %v9109
  %v9211 = vmul.f32 %v9110, %v9110
  %v9212 = vmul.f32 %v9111, %v9111
  %v9213 = vmul.f32 %v9112, %v9112
  %v9214 = vmul.f32 %v9113, %v9113
  %v9215 = vmul.f32 %v9114, %v9114
  %v9216 = vmul.f32 %v9115, %v9115
  %v9217 = vsel %vm571, %v9185, 0.0
  %v9218 = vsel %vm571, %v9186, 0.0
  %v9219 = vadd.f32 %v9217, %v9218
  %v9220 = vsel %vm571, %v9187, 0.0
  %v9221 = vadd.f32 %v9219, %v9220
  %v9222 = vsel %vm571, %v9188, 0.0
  %v9223 = vadd.f32 %v9221, %v9222
  %v9224 = vsel %vm571, %v9189, 0.0
  %v9225 = vadd.f32 %v9223, %v9224
  %v9226 = vsel %vm571, %v9190, 0.0
  %v9227 = vadd.f32 %v9225, %v9226
  %v9228 = vsel %vm571, %v9191, 0.0
  %v9229 = vadd.f32 %v9227, %v9228
  %v9230 = vsel %vm571, %v9192, 0.0
  %v9231 = vadd.f32 %v9229, %v9230
  %v9232 = vsel %vm571, %v9193, 0.0
  %v9233 = vadd.f32 %v9231, %v9232
  %v9234 = vsel %vm571, %v9194, 0.0
  %v9235 = vadd.f32 %v9233, %v9234
  %v9236 = vsel %vm571, %v9195, 0.0
  %v9237 = vadd.f32 %v9235, %v9236
  %v9238 = vsel %vm571, %v9196, 0.0
  %v9239 = vadd.f32 %v9237, %v9238
  %v9240 = vsel %vm571, %v9197, 0.0
  %v9241 = vadd.f32 %v9239, %v9240
  %v9242 = vsel %vm571, %v9198, 0.0
  %v9243 = vadd.f32 %v9241, %v9242
  %v9244 = vsel %vm571, %v9199, 0.0
  %v9245 = vadd.f32 %v9243, %v9244
  %v9246 = vsel %vm571, %v9200, 0.0
  %v9247 = vadd.f32 %v9245, %v9246
  %v9248 = vsel %vm571, %v9201, 0.0
  %v9249 = vadd.f32 %v9247, %v9248
  %v9250 = vsel %vm571, %v9202, 0.0
  %v9251 = vadd.f32 %v9249, %v9250
  %v9252 = vsel %vm571, %v9203, 0.0
  %v9253 = vadd.f32 %v9251, %v9252
  %v9254 = vsel %vm571, %v9204, 0.0
  %v9255 = vadd.f32 %v9253, %v9254
  %v9256 = vsel %vm571, %v9205, 0.0
  %v9257 = vadd.f32 %v9255, %v9256
  %v9258 = vsel %vm571, %v9206, 0.0
  %v9259 = vadd.f32 %v9257, %v9258
  %v9260 = vsel %vm571, %v9207, 0.0
  %v9261 = vadd.f32 %v9259, %v9260
  %v9262 = vsel %vm571, %v9208, 0.0
  %v9263 = vadd.f32 %v9261, %v9262
  %v9264 = vsel %vm571, %v9209, 0.0
  %v9265 = vadd.f32 %v9263, %v9264
  %v9266 = vsel %vm571, %v9210, 0.0
  %v9267 = vadd.f32 %v9265, %v9266
  %v9268 = vsel %vm571, %v9211, 0.0
  %v9269 = vadd.f32 %v9267, %v9268
  %v9270 = vsel %vm571, %v9212, 0.0
  %v9271 = vadd.f32 %v9269, %v9270
  %v9272 = vsel %vm571, %v9213, 0.0
  %v9273 = vadd.f32 %v9271, %v9272
  %v9274 = vsel %vm571, %v9214, 0.0
  %v9275 = vadd.f32 %v9273, %v9274
  %v9276 = vsel %vm571, %v9215, 0.0
  %v9277 = vadd.f32 %v9275, %v9276
  %v9278 = vsel %vm571, %v9216, 0.0
  %v9279 = vadd.f32 %v9277, %v9278
  %v9280 = vrot.slane %v9279, 4
  %v9281 = vadd.f32 %v9279, %v9280
  %v9282 = vrot.slane %v9281, 2
  %v9283 = vadd.f32 %v9281, %v9282
  %v9284 = vrot.slane %v9283, 1
  %v9285 = vadd.f32 %v9283, %v9284
  %9286 = vrot.lane.b32.xlu0 %v9184, 64
  %v9287 = vpop.permute.xlu0 %9286
  %v9288 = vsel %vm742, %v9287, %v9184
  %9289 = vrot.lane.b32.xlu0 %v9288, 64
  %v9290 = vpop.permute.xlu0 %9289
  %v9291 = vsel %vm742, %v9290, %v9184
  %9293 = vrot.lane.b32.xlu0 %v9291, 96
  %v9294 = vpop.permute.xlu0 %9293
  %v9296 = vadd.f32 %v9184, %v9294
  %9297 = vrot.lane.b32.xlu0 %v9285, 64
  %v9298 = vpop.permute.xlu0 %9297
  %v9299 = vsel %vm742, %v9298, %v9285
  %9300 = vrot.lane.b32.xlu0 %v9299, 64
  %v9301 = vpop.permute.xlu0 %9300
  %v9302 = vsel %vm742, %v9301, %v9285
  %9304 = vrot.lane.b32.xlu0 %v9302, 96
  %v9305 = vpop.permute.xlu0 %9304
  %v9307 = vadd.f32 %v9285, %v9305
  %v9308 = vmul.f32 %v9296, 0.001953125
  %v9309 = vmul.f32 %v9307, 0.001953125
  %v9310 = vmul.f32 %v9308, %v9308
  %v9311 = vsub.f32 %v9309, %v9310
  %v9312 = vld [vmem:[%s6 + $0x3] sm:$0x1]
  %v9313 = vadd.f32 %v9311, 1e-05
  %v9314 = vrsqrt.pop %v9313
  %v9315 = vmul.f32 %v9312, %v9314
  %v9316 = vld [vmem:[%s7 + $0x3] sm:$0x1]
  %v9317 = vmul.f32 %v9308, %v9315
  %v9318 = vsub.f32 %v9316, %v9317
  %v9319 = vlaneseq
  %v9320 = vshrl.u32 %v9319, 7
  %v9321 = vsub.s32 0, %v9320
  %v9322 = vrot.slane %v9315, %v9321
  %v9323 = vmul.f32 %v9084, %v9322
  %v9324 = vmul.f32 %v9085, %v9322
  %v9325 = vmul.f32 %v9086, %v9322
  %v9326 = vmul.f32 %v9087, %v9322
  %v9327 = vmul.f32 %v9088, %v9322
  %v9328 = vmul.f32 %v9089, %v9322
  %v9329 = vmul.f32 %v9090, %v9322
  %v9330 = vmul.f32 %v9091, %v9322
  %v9331 = vmul.f32 %v9092, %v9322
  %v9332 = vmul.f32 %v9093, %v9322
  %v9333 = vmul.f32 %v9094, %v9322
  %v9334 = vmul.f32 %v9095, %v9322
  %v9335 = vmul.f32 %v9096, %v9322
  %v9336 = vmul.f32 %v9097, %v9322
  %v9337 = vmul.f32 %v9098, %v9322
  %v9338 = vmul.f32 %v9099, %v9322
  %v9339 = vmul.f32 %v9100, %v9322
  %v9340 = vmul.f32 %v9101, %v9322
  %v9341 = vmul.f32 %v9102, %v9322
  %v9342 = vmul.f32 %v9103, %v9322
  %v9343 = vmul.f32 %v9104, %v9322
  %v9344 = vmul.f32 %v9105, %v9322
  %v9345 = vmul.f32 %v9106, %v9322
  %v9346 = vmul.f32 %v9107, %v9322
  %v9347 = vmul.f32 %v9108, %v9322
  %v9348 = vmul.f32 %v9109, %v9322
  %v9349 = vmul.f32 %v9110, %v9322
  %v9350 = vmul.f32 %v9111, %v9322
  %v9351 = vmul.f32 %v9112, %v9322
  %v9352 = vmul.f32 %v9113, %v9322
  %v9353 = vmul.f32 %v9114, %v9322
  %v9354 = vmul.f32 %v9115, %v9322
  %v9355 = vlaneseq
  %v9356 = vshrl.u32 %v9355, 7
  %v9357 = vsub.s32 0, %v9356
  %v9358 = vrot.slane %v9318, %v9357
  %v9359 = vadd.f32 %v9323, %v9358
  %v9360 = vadd.f32 %v9324, %v9358
  %v9361 = vadd.f32 %v9325, %v9358
  %v9362 = vadd.f32 %v9326, %v9358
  %v9363 = vadd.f32 %v9327, %v9358
  %v9364 = vadd.f32 %v9328, %v9358
  %v9365 = vadd.f32 %v9329, %v9358
  %v9366 = vadd.f32 %v9330, %v9358
  %v9367 = vadd.f32 %v9331, %v9358
  %v9368 = vadd.f32 %v9332, %v9358
  %v9369 = vadd.f32 %v9333, %v9358
  %v9370 = vadd.f32 %v9334, %v9358
  %v9371 = vadd.f32 %v9335, %v9358
  %v9372 = vadd.f32 %v9336, %v9358
  %v9373 = vadd.f32 %v9337, %v9358
  %v9374 = vadd.f32 %v9338, %v9358
  %v9375 = vadd.f32 %v9339, %v9358
  %v9376 = vadd.f32 %v9340, %v9358
  %v9377 = vadd.f32 %v9341, %v9358
  %v9378 = vadd.f32 %v9342, %v9358
  %v9379 = vadd.f32 %v9343, %v9358
  %v9380 = vadd.f32 %v9344, %v9358
  %v9381 = vadd.f32 %v9345, %v9358
  %v9382 = vadd.f32 %v9346, %v9358
  %v9383 = vadd.f32 %v9347, %v9358
  %v9384 = vadd.f32 %v9348, %v9358
  %v9385 = vadd.f32 %v9349, %v9358
  %v9386 = vadd.f32 %v9350, %v9358
  %v9387 = vadd.f32 %v9351, %v9358
  %v9388 = vadd.f32 %v9352, %v9358
  %v9389 = vadd.f32 %v9353, %v9358
  %v9390 = vadd.f32 %v9354, %v9358
  %vm9391 = vcmp.ge.f32.partialorder %v9359, 0.0
  %vm9392 = vcmp.ge.f32.partialorder %v9360, 0.0
  %vm9393 = vcmp.ge.f32.partialorder %v9361, 0.0
  %vm9394 = vcmp.ge.f32.partialorder %v9362, 0.0
  %vm9395 = vcmp.ge.f32.partialorder %v9363, 0.0
  %vm9396 = vcmp.ge.f32.partialorder %v9364, 0.0
  %vm9397 = vcmp.ge.f32.partialorder %v9365, 0.0
  %vm9398 = vcmp.ge.f32.partialorder %v9366, 0.0
  %vm9399 = vcmp.ge.f32.partialorder %v9367, 0.0
  %vm9400 = vcmp.ge.f32.partialorder %v9368, 0.0
  %vm9401 = vcmp.ge.f32.partialorder %v9369, 0.0
  %vm9402 = vcmp.ge.f32.partialorder %v9370, 0.0
  %vm9403 = vcmp.ge.f32.partialorder %v9371, 0.0
  %vm9404 = vcmp.ge.f32.partialorder %v9372, 0.0
  %vm9405 = vcmp.ge.f32.partialorder %v9373, 0.0
  %vm9406 = vcmp.ge.f32.partialorder %v9374, 0.0
  %vm9407 = vcmp.ge.f32.partialorder %v9375, 0.0
  %vm9408 = vcmp.ge.f32.partialorder %v9376, 0.0
  %vm9409 = vcmp.ge.f32.partialorder %v9377, 0.0
  %vm9410 = vcmp.ge.f32.partialorder %v9378, 0.0
  %vm9411 = vcmp.ge.f32.partialorder %v9379, 0.0
  %vm9412 = vcmp.ge.f32.partialorder %v9380, 0.0
  %vm9413 = vcmp.ge.f32.partialorder %v9381, 0.0
  %vm9414 = vcmp.ge.f32.partialorder %v9382, 0.0
  %vm9415 = vcmp.ge.f32.partialorder %v9383, 0.0
  %vm9416 = vcmp.ge.f32.partialorder %v9384, 0.0
  %vm9417 = vcmp.ge.f32.partialorder %v9385, 0.0
  %vm9418 = vcmp.ge.f32.partialorder %v9386, 0.0
  %vm9419 = vcmp.ge.f32.partialorder %v9387, 0.0
  %vm9420 = vcmp.ge.f32.partialorder %v9388, 0.0
  %vm9421 = vcmp.ge.f32.partialorder %v9389, 0.0
  %vm9422 = vcmp.ge.f32.partialorder %v9390, 0.0
  %v9423 = vmul.f32 %v9359, 0.2
  %v9424 = vmul.f32 %v9360, 0.2
  %v9425 = vmul.f32 %v9361, 0.2
  %v9426 = vmul.f32 %v9362, 0.2
  %v9427 = vmul.f32 %v9363, 0.2
  %v9428 = vmul.f32 %v9364, 0.2
  %v9429 = vmul.f32 %v9365, 0.2
  %v9430 = vmul.f32 %v9366, 0.2
  %v9431 = vmul.f32 %v9367, 0.2
  %v9432 = vmul.f32 %v9368, 0.2
  %v9433 = vmul.f32 %v9369, 0.2
  %v9434 = vmul.f32 %v9370, 0.2
  %v9435 = vmul.f32 %v9371, 0.2
  %v9436 = vmul.f32 %v9372, 0.2
  %v9437 = vmul.f32 %v9373, 0.2
  %v9438 = vmul.f32 %v9374, 0.2
  %v9439 = vmul.f32 %v9375, 0.2
  %v9440 = vmul.f32 %v9376, 0.2
  %v9441 = vmul.f32 %v9377, 0.2
  %v9442 = vmul.f32 %v9378, 0.2
  %v9443 = vmul.f32 %v9379, 0.2
  %v9444 = vmul.f32 %v9380, 0.2
  %v9445 = vmul.f32 %v9381, 0.2
  %v9446 = vmul.f32 %v9382, 0.2
  %v9447 = vmul.f32 %v9383, 0.2
  %v9448 = vmul.f32 %v9384, 0.2
  %v9449 = vmul.f32 %v9385, 0.2
  %v9450 = vmul.f32 %v9386, 0.2
  %v9451 = vmul.f32 %v9387, 0.2
  %v9452 = vmul.f32 %v9388, 0.2
  %v9453 = vmul.f32 %v9389, 0.2
  %v9454 = vmul.f32 %v9390, 0.2
  %v9455 = vsel %vm9391, %v9359, %v9423
  %v9456 = vsel %vm9392, %v9360, %v9424
  %v9457 = vsel %vm9393, %v9361, %v9425
  %v9458 = vsel %vm9394, %v9362, %v9426
  %v9459 = vsel %vm9395, %v9363, %v9427
  %v9460 = vsel %vm9396, %v9364, %v9428
  %v9461 = vsel %vm9397, %v9365, %v9429
  %v9462 = vsel %vm9398, %v9366, %v9430
  %v9463 = vsel %vm9399, %v9367, %v9431
  %v9464 = vsel %vm9400, %v9368, %v9432
  %v9465 = vsel %vm9401, %v9369, %v9433
  %v9466 = vsel %vm9402, %v9370, %v9434
  %v9467 = vsel %vm9403, %v9371, %v9435
  %v9468 = vsel %vm9404, %v9372, %v9436
  %v9469 = vsel %vm9405, %v9373, %v9437
  %v9470 = vsel %vm9406, %v9374, %v9438
  %v9471 = vsel %vm9407, %v9375, %v9439
  %v9472 = vsel %vm9408, %v9376, %v9440
  %v9473 = vsel %vm9409, %v9377, %v9441
  %v9474 = vsel %vm9410, %v9378, %v9442
  %v9475 = vsel %vm9411, %v9379, %v9443
  %v9476 = vsel %vm9412, %v9380, %v9444
  %v9477 = vsel %vm9413, %v9381, %v9445
  %v9478 = vsel %vm9414, %v9382, %v9446
  %v9479 = vsel %vm9415, %v9383, %v9447
  %v9480 = vsel %vm9416, %v9384, %v9448
  %v9481 = vsel %vm9417, %v9385, %v9449
  %v9482 = vsel %vm9418, %v9386, %v9450
  %v9483 = vsel %vm9419, %v9387, %v9451
  %v9484 = vsel %vm9420, %v9388, %v9452
  %v9485 = vsel %vm9421, %v9389, %v9453
  %v9486 = vsel %vm9422, %v9390, %v9454
  %v9487 = vpack.c.bf16 %v9456, %v9455
  %v9488 = vpack.c.bf16 %v9458, %v9457
  %v9489 = vpack.c.bf16 %v9460, %v9459
  %v9490 = vpack.c.bf16 %v9462, %v9461
  %v9491 = vpack.c.bf16 %v9464, %v9463
  %v9492 = vpack.c.bf16 %v9466, %v9465
  %v9493 = vpack.c.bf16 %v9468, %v9467
  %v9494 = vpack.c.bf16 %v9470, %v9469
  %v9495 = vpack.c.bf16 %v9472, %v9471
  %v9496 = vpack.c.bf16 %v9474, %v9473
  %v9497 = vpack.c.bf16 %v9476, %v9475
  %v9498 = vpack.c.bf16 %v9478, %v9477
  %v9499 = vpack.c.bf16 %v9480, %v9479
  %v9500 = vpack.c.bf16 %v9482, %v9481
  %v9501 = vpack.c.bf16 %v9484, %v9483
  %v9502 = vpack.c.bf16 %v9486, %v9485
  %v9503 = vld [vmem:[%s3] sm:$0xf]
  %v9504 = vld [vmem:[%s3 + $0x4] sm:$0xf]
  %v9505 = vld [vmem:[%s3 + $0x8] sm:$0x1]
  %v9509 = vunpack.c.l.b16 %v9503
  %v9510 = vunpack.c.l.b16 %v9504
  %v9511 = vunpack.c.l.b16 %v9505
  %v9512 = vpack.c.b16 %v9510, %v9509
  %v9513 = vpack.c.b16 %v9511, %v9511
  %v9515 = vsel %vm571, %v9512, 0
  %v9518 = vsel %vm571, %v9513, 0
  %v9521 = vsel %vm571, %v9487, 0
  %v9524 = vsel %vm571, %v9488, 0
  %v9527 = vsel %vm571, %v9489, 0
  %v9530 = vsel %vm571, %v9490, 0
  %v9533 = vsel %vm571, %v9491, 0
  %v9536 = vsel %vm571, %v9492, 0
  %v9539 = vsel %vm571, %v9493, 0
  %v9542 = vsel %vm571, %v9494, 0
  %v9545 = vsel %vm571, %v9495, 0
  %v9548 = vsel %vm571, %v9496, 0
  %v9551 = vsel %vm571, %v9497, 0
  %v9554 = vsel %vm571, %v9498, 0
  %v9557 = vsel %vm571, %v9499, 0
  %v9560 = vsel %vm571, %v9500, 0
  %v9563 = vsel %vm571, %v9501, 0
  %v9566 = vsel %vm571, %v9502, 0
  %9568 = vmatprep.subr.bf16.mxu0 0
  %9569 = vmatpush1.bf16.xpose.msra.mxu0 %v9542
  %9570 = vmatprep.subr.bf16.mxu0 0
  %9571 = vmatpush1.bf16.xpose.msra.mxu0 %v9539
  %9572 = vmatprep.subr.bf16.mxu0 0
  %9573 = vmatpush1.bf16.xpose.msra.mxu0 %v9536
  %9574 = vmatprep.subr.bf16.mxu0 0
  %9575 = vmatpush1.bf16.xpose.msra.mxu0 %v9533
  %9576 = vmatprep.subr.bf16.mxu0 0
  %9577 = vmatpush1.bf16.xpose.msra.mxu0 %v9530
  %9578 = vmatprep.subr.bf16.mxu0 0
  %9579 = vmatpush1.bf16.xpose.msra.mxu0 %v9527
  %9580 = vmatprep.subr.bf16.mxu0 0
  %9581 = vmatpush1.bf16.xpose.msra.mxu0 %v9524
  %9582 = vmatprep.subr.bf16.mxu0 0
  %9583 = vmatpush1.bf16.xpose.msra.mxu0 %v9521
  %9584 = vmatprep.subr.bf16.mxu0 0
  %9585 = vmatpush2.bf16.xpose.msra.mxu0 %v9566
  %9586 = vmatprep.subr.bf16.mxu0 0
  %9587 = vmatpush2.bf16.xpose.msra.mxu0 %v9563
  %9588 = vmatprep.subr.bf16.mxu0 0
  %9589 = vmatpush2.bf16.xpose.msra.mxu0 %v9560
  %9590 = vmatprep.subr.bf16.mxu0 0
  %9591 = vmatpush2.bf16.xpose.msra.mxu0 %v9557
  %9592 = vmatprep.subr.bf16.mxu0 0
  %9593 = vmatpush2.bf16.xpose.msra.mxu0 %v9554
  %9594 = vmatprep.subr.bf16.mxu0 0
  %9595 = vmatpush2.bf16.xpose.msra.mxu0 %v9551
  %9596 = vmatprep.subr.bf16.mxu0 0
  %9597 = vmatpush2.bf16.xpose.msra.mxu0 %v9548
  %9598 = vmatprep.subr.bf16.mxu0 0
  %9599 = vmatpush2.bf16.xpose.msra.mxu0 %v9545
  %9600 = vmatprep.mubr.bf16.mxu0 0
  %9601 = vmatmul.mubr.bf16.gmra.mxu0 %v9515
  %v9602 = vpop.f32.mrf.mxu0
  %v9603 = vadd.f32 0.0, %v9602
  %v9604 = vpop.f32.mrf.mxu0
  %v9605 = vadd.f32 0.0, %v9604
  %v9606 = vpop.f32.mrf.mxu0
  %v9607 = vadd.f32 0.0, %v9606
  %v9608 = vpop.f32.mrf.mxu0
  %v9609 = vadd.f32 0.0, %v9608
  %9610 = vmatprep.mubr.bf16.mxu0 0
  %9611 = vmatmul.mubr.bf16.gmra.mxu0 %v9518
  %v9612 = vpop.f32.mrf.mxu0
  %v9613 = vadd.f32 0.0, %v9612
  %v9614 = vpop.f32.mrf.mxu0
  %v9615 = vadd.f32 0.0, %v9614
  %v9616 = vpop.f32.mrf.mxu0
  %v9617 = vpop.f32.mrf.mxu0
  %9618 = vdwg.mxu0
  %v9619 = vpack.c.bf16 %v9603, %v9603
  %v9620 = vpack.c.bf16 %v9605, %v9605
  %v9621 = vld [vmem:[%s4] sm:$0xff]
  %v9622 = vld [vmem:[%s4 + $0x8] sm:$0xf]
  %v9623 = vld [vmem:[%s4 + $0xc] sm:$0xff]
  %v9624 = vld [vmem:[%s4 + $0x14] sm:$0xf]
  %v9625 = vld [vmem:[%s4 + $0x18] sm:$0xff]
  %v9626 = vld [vmem:[%s4 + $0x20] sm:$0xf]
  %v9627 = vld [vmem:[%s4 + $0x24] sm:$0xff]
  %v9628 = vld [vmem:[%s4 + $0x2c] sm:$0xf]
  %v9629 = vld [vmem:[%s4 + $0x30] sm:$0xff]
  %v9630 = vld [vmem:[%s4 + $0x38] sm:$0xf]
  %v9631 = vld [vmem:[%s4 + $0x3c] sm:$0xff]
  %v9632 = vld [vmem:[%s4 + $0x44] sm:$0xf]
  %v9633 = vld [vmem:[%s4 + $0x48] sm:$0xff]
  %v9634 = vld [vmem:[%s4 + $0x50] sm:$0xf]
  %v9635 = vld [vmem:[%s4 + $0x54] sm:$0xff]
  %v9636 = vld [vmem:[%s4 + $0x5c] sm:$0xf]
  %v9637 = vld [vmem:[%s4 + $0x60] sm:$0xff]
  %v9638 = vld [vmem:[%s4 + $0x68] sm:$0xf]
  %v9639 = vld [vmem:[%s4 + $0x6c] sm:$0xff]
  %v9640 = vld [vmem:[%s4 + $0x74] sm:$0xf]
  %v9641 = vld [vmem:[%s4 + $0x78] sm:$0xff]
  %v9642 = vld [vmem:[%s4 + $0x80] sm:$0xf]
  %v9643 = vld [vmem:[%s4 + $0x84] sm:$0xff]
  %v9644 = vld [vmem:[%s4 + $0x8c] sm:$0xf]
  %v9645 = vld [vmem:[%s4 + $0x90] sm:$0xff]
  %v9646 = vld [vmem:[%s4 + $0x98] sm:$0xf]
  %v9647 = vld [vmem:[%s4 + $0x9c] sm:$0xff]
  %v9648 = vld [vmem:[%s4 + $0xa4] sm:$0xf]
  %v9649 = vld [vmem:[%s4 + $0xa8] sm:$0xff]
  %v9650 = vld [vmem:[%s4 + $0xb0] sm:$0xf]
  %v9651 = vld [vmem:[%s4 + $0xb4] sm:$0xff]
  %v9652 = vld [vmem:[%s4 + $0xbc] sm:$0xf]
  %v9653 = vld [vmem:[%s4 + $0xc0] sm:$0xff]
  %v9654 = vld [vmem:[%s4 + $0xc8] sm:$0xf]
  %v9655 = vld [vmem:[%s4 + $0xcc] sm:$0xff]
  %v9656 = vld [vmem:[%s4 + $0xd4] sm:$0xf]
  %v9657 = vld [vmem:[%s4 + $0xd8] sm:$0xff]
  %v9658 = vld [vmem:[%s4 + $0xe0] sm:$0xf]
  %v9659 = vld [vmem:[%s4 + $0xe4] sm:$0xff]
  %v9660 = vld [vmem:[%s4 + $0xec] sm:$0xf]
  %v9661 = vld [vmem:[%s4 + $0xf0] sm:$0xff]
  %v9662 = vld [vmem:[%s4 + $0xf8] sm:$0xf]
  %v9663 = vld [vmem:[%s4 + $0xfc] sm:$0xff]
  %v9664 = vld [vmem:[%s4 + $0x104] sm:$0xf]
  %v9665 = vld [vmem:[%s4 + $0x108] sm:$0xff]
  %v9666 = vld [vmem:[%s4 + $0x110] sm:$0xf]
  %v9667 = vld [vmem:[%s4 + $0x114] sm:$0xff]
  %v9668 = vld [vmem:[%s4 + $0x11c] sm:$0xf]
  %v9669 = vld [vmem:[%s4 + $0x120] sm:$0xff]
  %v9670 = vld [vmem:[%s4 + $0x128] sm:$0xf]
  %v9671 = vld [vmem:[%s4 + $0x12c] sm:$0xff]
  %v9672 = vld [vmem:[%s4 + $0x134] sm:$0xf]
  %v9673 = vld [vmem:[%s4 + $0x138] sm:$0xff]
  %v9674 = vld [vmem:[%s4 + $0x140] sm:$0xf]
  %v9675 = vld [vmem:[%s4 + $0x144] sm:$0xff]
  %v9676 = vld [vmem:[%s4 + $0x14c] sm:$0xf]
  %v9677 = vld [vmem:[%s4 + $0x150] sm:$0xff]
  %v9678 = vld [vmem:[%s4 + $0x158] sm:$0xf]
  %v9679 = vld [vmem:[%s4 + $0x15c] sm:$0xff]
  %v9680 = vld [vmem:[%s4 + $0x164] sm:$0xf]
  %v9681 = vld [vmem:[%s4 + $0x168] sm:$0xff]
  %v9682 = vld [vmem:[%s4 + $0x170] sm:$0xf]
  %v9683 = vld [vmem:[%s4 + $0x174] sm:$0xff]
  %v9684 = vld [vmem:[%s4 + $0x17c] sm:$0xf]
  %s9685 = scalar_lea.vmem %s4, 384
  %v9686 = vld [vmem:[%s9685] sm:$0xff]
  %v9687 = vld [vmem:[%s9685 + $0x8] sm:$0xf]
  %v9688 = vld [vmem:[%s9685 + $0xc] sm:$0xff]
  %v9689 = vld [vmem:[%s9685 + $0x14] sm:$0xf]
  %v9690 = vld [vmem:[%s9685 + $0x18] sm:$0xff]
  %v9691 = vld [vmem:[%s9685 + $0x20] sm:$0xf]
  %v9692 = vld [vmem:[%s9685 + $0x24] sm:$0xff]
  %v9693 = vld [vmem:[%s9685 + $0x2c] sm:$0xf]
  %v9694 = vld [vmem:[%s9685 + $0x30] sm:$0xff]
  %v9695 = vld [vmem:[%s9685 + $0x38] sm:$0xf]
  %v9696 = vld [vmem:[%s9685 + $0x3c] sm:$0xff]
  %v9697 = vld [vmem:[%s9685 + $0x44] sm:$0xf]
  %v9698 = vld [vmem:[%s9685 + $0x48] sm:$0xff]
  %v9699 = vld [vmem:[%s9685 + $0x50] sm:$0xf]
  %v9700 = vld [vmem:[%s9685 + $0x54] sm:$0xff]
  %v9701 = vld [vmem:[%s9685 + $0x5c] sm:$0xf]
  %v9702 = vld [vmem:[%s9685 + $0x60] sm:$0xff]
  %v9703 = vld [vmem:[%s9685 + $0x68] sm:$0xf]
  %v9704 = vld [vmem:[%s9685 + $0x6c] sm:$0xff]
  %v9705 = vld [vmem:[%s9685 + $0x74] sm:$0xf]
  %v9706 = vld [vmem:[%s9685 + $0x78] sm:$0xff]
  %v9707 = vld [vmem:[%s9685 + $0x80] sm:$0xf]
  %v9708 = vld [vmem:[%s9685 + $0x84] sm:$0xff]
  %v9709 = vld [vmem:[%s9685 + $0x8c] sm:$0xf]
  %v9710 = vld [vmem:[%s9685 + $0x90] sm:$0xff]
  %v9711 = vld [vmem:[%s9685 + $0x98] sm:$0xf]
  %v9712 = vld [vmem:[%s9685 + $0x9c] sm:$0xff]
  %v9713 = vld [vmem:[%s9685 + $0xa4] sm:$0xf]
  %v9714 = vld [vmem:[%s9685 + $0xa8] sm:$0xff]
  %v9715 = vld [vmem:[%s9685 + $0xb0] sm:$0xf]
  %v9716 = vld [vmem:[%s9685 + $0xb4] sm:$0xff]
  %v9717 = vld [vmem:[%s9685 + $0xbc] sm:$0xf]
  %v9718 = vld [vmem:[%s9685 + $0xc0] sm:$0xff]
  %v9719 = vld [vmem:[%s9685 + $0xc8] sm:$0xf]
  %v9720 = vld [vmem:[%s9685 + $0xcc] sm:$0xff]
  %v9721 = vld [vmem:[%s9685 + $0xd4] sm:$0xf]
  %v9722 = vld [vmem:[%s9685 + $0xd8] sm:$0xff]
  %v9723 = vld [vmem:[%s9685 + $0xe0] sm:$0xf]
  %v9724 = vld [vmem:[%s9685 + $0xe4] sm:$0xff]
  %v9725 = vld [vmem:[%s9685 + $0xec] sm:$0xf]
  %v9726 = vld [vmem:[%s9685 + $0xf0] sm:$0xff]
  %v9727 = vld [vmem:[%s9685 + $0xf8] sm:$0xf]
  %v9728 = vld [vmem:[%s9685 + $0xfc] sm:$0xff]
  %v9729 = vld [vmem:[%s9685 + $0x104] sm:$0xf]
  %v9730 = vld [vmem:[%s9685 + $0x108] sm:$0xff]
  %v9731 = vld [vmem:[%s9685 + $0x110] sm:$0xf]
  %v9732 = vld [vmem:[%s9685 + $0x114] sm:$0xff]
  %v9733 = vld [vmem:[%s9685 + $0x11c] sm:$0xf]
  %v9734 = vld [vmem:[%s9685 + $0x120] sm:$0xff]
  %v9735 = vld [vmem:[%s9685 + $0x128] sm:$0xf]
  %v9736 = vld [vmem:[%s9685 + $0x12c] sm:$0xff]
  %v9737 = vld [vmem:[%s9685 + $0x134] sm:$0xf]
  %v9738 = vld [vmem:[%s9685 + $0x138] sm:$0xff]
  %v9739 = vld [vmem:[%s9685 + $0x140] sm:$0xf]
  %v9740 = vld [vmem:[%s9685 + $0x144] sm:$0xff]
  %v9741 = vld [vmem:[%s9685 + $0x14c] sm:$0xf]
  %v9742 = vld [vmem:[%s9685 + $0x150] sm:$0xff]
  %v9743 = vld [vmem:[%s9685 + $0x158] sm:$0xf]
  %v9744 = vld [vmem:[%s9685 + $0x15c] sm:$0xff]
  %v9745 = vld [vmem:[%s9685 + $0x164] sm:$0xf]
  %v9746 = vld [vmem:[%s9685 + $0x168] sm:$0xff]
  %v9747 = vld [vmem:[%s9685 + $0x170] sm:$0xf]
  %v9748 = vld [vmem:[%s9685 + $0x174] sm:$0xff]
  %v9749 = vld [vmem:[%s9685 + $0x17c] sm:$0xf]
  %v9752 = vrot.slane %v9619, 1
  %v9753 = vrot.slane %v9620, 1
  %v9820 = vunpack.c.l.b16 %v9686
  %v9821 = vunpack.c.h.b16 %v9686
  %v9822 = vunpack.c.l.b16 %v9687
  %v9823 = vunpack.c.l.b16 %v9688
  %v9824 = vunpack.c.h.b16 %v9688
  %v9825 = vunpack.c.l.b16 %v9689
  %v9826 = vunpack.c.l.b16 %v9690
  %v9827 = vunpack.c.h.b16 %v9690
  %v9828 = vunpack.c.l.b16 %v9691
  %v9829 = vunpack.c.l.b16 %v9692
  %v9830 = vunpack.c.h.b16 %v9692
  %v9831 = vunpack.c.l.b16 %v9693
  %v9832 = vunpack.c.l.b16 %v9694
  %v9833 = vunpack.c.h.b16 %v9694
  %v9834 = vunpack.c.l.b16 %v9695
  %v9835 = vunpack.c.l.b16 %v9696
  %v9836 = vunpack.c.h.b16 %v9696
  %v9837 = vunpack.c.l.b16 %v9697
  %v9838 = vunpack.c.l.b16 %v9698
  %v9839 = vunpack.c.h.b16 %v9698
  %v9840 = vunpack.c.l.b16 %v9699
  %v9841 = vunpack.c.l.b16 %v9700
  %v9842 = vunpack.c.h.b16 %v9700
  %v9843 = vunpack.c.l.b16 %v9701
  %v9844 = vunpack.c.l.b16 %v9702
  %v9845 = vunpack.c.h.b16 %v9702
  %v9846 = vunpack.c.l.b16 %v9703
  %v9847 = vunpack.c.l.b16 %v9704
  %v9848 = vunpack.c.h.b16 %v9704
  %v9849 = vunpack.c.l.b16 %v9705
  %v9850 = vunpack.c.l.b16 %v9706
  %v9851 = vunpack.c.h.b16 %v9706
  %v9852 = vunpack.c.l.b16 %v9707
  %v9853 = vunpack.c.l.b16 %v9708
  %v9854 = vunpack.c.h.b16 %v9708
  %v9855 = vunpack.c.l.b16 %v9709
  %v9856 = vunpack.c.l.b16 %v9710
  %v9857 = vunpack.c.h.b16 %v9710
  %v9858 = vunpack.c.l.b16 %v9711
  %v9859 = vunpack.c.l.b16 %v9712
  %v9860 = vunpack.c.h.b16 %v9712
  %v9861 = vunpack.c.l.b16 %v9713
  %v9862 = vunpack.c.l.b16 %v9714
  %v9863 = vunpack.c.h.b16 %v9714
  %v9864 = vunpack.c.l.b16 %v9715
  %v9865 = vunpack.c.l.b16 %v9716
  %v9866 = vunpack.c.h.b16 %v9716
  %v9867 = vunpack.c.l.b16 %v9717
  %v9868 = vunpack.c.l.b16 %v9718
  %v9869 = vunpack.c.h.b16 %v9718
  %v9870 = vunpack.c.l.b16 %v9719
  %v9871 = vunpack.c.l.b16 %v9720
  %v9872 = vunpack.c.h.b16 %v9720
  %v9873 = vunpack.c.l.b16 %v9721
  %v9874 = vunpack.c.l.b16 %v9722
  %v9875 = vunpack.c.h.b16 %v9722
  %v9876 = vunpack.c.l.b16 %v9723
  %v9877 = vunpack.c.l.b16 %v9724
  %v9878 = vunpack.c.h.b16 %v9724
  %v9879 = vunpack.c.l.b16 %v9725
  %v9880 = vunpack.c.l.b16 %v9726
  %v9881 = vunpack.c.h.b16 %v9726
  %v9882 = vunpack.c.l.b16 %v9727
  %v9883 = vunpack.c.l.b16 %v9728
  %v9884 = vunpack.c.h.b16 %v9728
  %v9885 = vunpack.c.l.b16 %v9729
  %v9886 = vunpack.c.l.b16 %v9730
  %v9887 = vunpack.c.h.b16 %v9730
  %v9888 = vunpack.c.l.b16 %v9731
  %v9889 = vunpack.c.l.b16 %v9732
  %v9890 = vunpack.c.h.b16 %v9732
  %v9891 = vunpack.c.l.b16 %v9733
  %v9892 = vunpack.c.l.b16 %v9734
  %v9893 = vunpack.c.h.b16 %v9734
  %v9894 = vunpack.c.l.b16 %v9735
  %v9895 = vunpack.c.l.b16 %v9736
  %v9896 = vunpack.c.h.b16 %v9736
  %v9897 = vunpack.c.l.b16 %v9737
  %v9898 = vunpack.c.l.b16 %v9738
  %v9899 = vunpack.c.h.b16 %v9738
  %v9900 = vunpack.c.l.b16 %v9739
  %v9901 = vunpack.c.l.b16 %v9740
  %v9902 = vunpack.c.h.b16 %v9740
  %v9903 = vunpack.c.l.b16 %v9741
  %v9904 = vunpack.c.l.b16 %v9742
  %v9905 = vunpack.c.h.b16 %v9742
  %v9906 = vunpack.c.l.b16 %v9743
  %v9907 = vunpack.c.l.b16 %v9744
  %v9908 = vunpack.c.h.b16 %v9744
  %v9909 = vunpack.c.l.b16 %v9745
  %v9910 = vunpack.c.l.b16 %v9746
  %v9911 = vunpack.c.h.b16 %v9746
  %v9912 = vunpack.c.l.b16 %v9747
  %v9913 = vunpack.c.l.b16 %v9748
  %v9914 = vunpack.c.h.b16 %v9748
  %v9915 = vunpack.c.l.b16 %v9749
  %v9916 = vpack.c.b16 %v9823, %v9820
  %v9917 = vpack.c.b16 %v9824, %v9821
  %v9918 = vpack.c.b16 %v9825, %v9822
  %v9919 = vpack.c.b16 %v9829, %v9826
  %v9920 = vpack.c.b16 %v9830, %v9827
  %v9921 = vpack.c.b16 %v9831, %v9828
  %v9922 = vpack.c.b16 %v9835, %v9832
  %v9923 = vpack.c.b16 %v9836, %v9833
  %v9924 = vpack.c.b16 %v9837, %v9834
  %v9925 = vpack.c.b16 %v9841, %v9838
  %v9926 = vpack.c.b16 %v9842, %v9839
  %v9927 = vpack.c.b16 %v9843, %v9840
  %v9928 = vpack.c.b16 %v9847, %v9844
  %v9929 = vpack.c.b16 %v9848, %v9845
  %v9930 = vpack.c.b16 %v9849, %v9846
  %v9931 = vpack.c.b16 %v9853, %v9850
  %v9932 = vpack.c.b16 %v9854, %v9851
  %v9933 = vpack.c.b16 %v9855, %v9852
  %v9934 = vpack.c.b16 %v9859, %v9856
  %v9935 = vpack.c.b16 %v9860, %v9857
  %v9936 = vpack.c.b16 %v9861, %v9858
  %v9937 = vpack.c.b16 %v9865, %v9862
  %v9938 = vpack.c.b16 %v9866, %v9863
  %v9939 = vpack.c.b16 %v9867, %v9864
  %v9940 = vpack.c.b16 %v9871, %v9868
  %v9941 = vpack.c.b16 %v9872, %v9869
  %v9942 = vpack.c.b16 %v9873, %v9870
  %v9943 = vpack.c.b16 %v9877, %v9874
  %v9944 = vpack.c.b16 %v9878, %v9875
  %v9945 = vpack.c.b16 %v9879, %v9876
  %v9946 = vpack.c.b16 %v9883, %v9880
  %v9947 = vpack.c.b16 %v9884, %v9881
  %v9948 = vpack.c.b16 %v9885, %v9882
  %v9949 = vpack.c.b16 %v9889, %v9886
  %v9950 = vpack.c.b16 %v9890, %v9887
  %v9951 = vpack.c.b16 %v9891, %v9888
  %v9952 = vpack.c.b16 %v9895, %v9892
  %v9953 = vpack.c.b16 %v9896, %v9893
  %v9954 = vpack.c.b16 %v9897, %v9894
  %v9955 = vpack.c.b16 %v9901, %v9898
  %v9956 = vpack.c.b16 %v9902, %v9899
  %v9957 = vpack.c.b16 %v9903, %v9900
  %v9958 = vpack.c.b16 %v9907, %v9904
  %v9959 = vpack.c.b16 %v9908, %v9905
  %v9960 = vpack.c.b16 %v9909, %v9906
  %v9961 = vpack.c.b16 %v9913, %v9910
  %v9962 = vpack.c.b16 %v9914, %v9911
  %v9963 = vpack.c.b16 %v9915, %v9912
  %10012 = vmatprep.subr.bf16.mxu0 %v9938
  %10013 = vmatpush1.bf16.msra.mxu0 %v9937
  %10014 = vmatprep.subr.bf16.mxu0 %v9935
  %10015 = vmatpush1.bf16.msra.mxu0 %v9934
  %10016 = vmatprep.subr.bf16.mxu0 %v9932
  %10017 = vmatpush1.bf16.msra.mxu0 %v9931
  %10018 = vmatprep.subr.bf16.mxu0 %v9929
  %10019 = vmatpush1.bf16.msra.mxu0 %v9928
  %10020 = vmatprep.subr.bf16.mxu0 %v9926
  %10021 = vmatpush1.bf16.msra.mxu0 %v9925
  %10022 = vmatprep.subr.bf16.mxu0 %v9923
  %10023 = vmatpush1.bf16.msra.mxu0 %v9922
  %10024 = vmatprep.subr.bf16.mxu0 %v9920
  %10025 = vmatpush1.bf16.msra.mxu0 %v9919
  %10026 = vmatprep.subr.bf16.mxu0 %v9917
  %10027 = vmatpush1.bf16.msra.mxu0 %v9916
  %10028 = vmatprep.subr.bf16.mxu0 %v9962
  %10029 = vmatpush2.bf16.msra.mxu0 %v9961
  %10030 = vmatprep.subr.bf16.mxu0 %v9959
  %10031 = vmatpush2.bf16.msra.mxu0 %v9958
  %10032 = vmatprep.subr.bf16.mxu0 %v9956
  %10033 = vmatpush2.bf16.msra.mxu0 %v9955
  %10034 = vmatprep.subr.bf16.mxu0 %v9953
  %10035 = vmatpush2.bf16.msra.mxu0 %v9952
  %10036 = vmatprep.subr.bf16.mxu0 %v9950
  %10037 = vmatpush2.bf16.msra.mxu0 %v9949
  %10038 = vmatprep.subr.bf16.mxu0 %v9947
  %10039 = vmatpush2.bf16.msra.mxu0 %v9946
  %10040 = vmatprep.subr.bf16.mxu0 %v9944
  %10041 = vmatpush2.bf16.msra.mxu0 %v9943
  %10042 = vmatprep.subr.bf16.mxu0 %v9941
  %10043 = vmatpush2.bf16.msra.mxu0 %v9940
  %10044 = vmatprep.mubr.bf16.mxu0 %v9753
  %10045 = vmatmul.mubr.bf16.gmra.mxu0 %v9752
  %v10046 = vpop.f32.mrf.mxu0
  %v10047 = vadd.f32 0.0, %v10046
  %v10048 = vpop.f32.mrf.mxu0
  %v10049 = vadd.f32 0.0, %v10048
  %v10050 = vpop.f32.mrf.mxu0
  %v10051 = vpop.f32.mrf.mxu0
  %10052 = vdwg.mxu0
  %10053 = vmatprep.subr.bf16.mxu0 0
  %10054 = vmatpush1.bf16.msra.mxu0 %v9939
  %10055 = vmatprep.subr.bf16.mxu0 0
  %10056 = vmatpush1.bf16.msra.mxu0 %v9936
  %10057 = vmatprep.subr.bf16.mxu0 0
  %10058 = vmatpush1.bf16.msra.mxu0 %v9933
  %10059 = vmatprep.subr.bf16.mxu0 0
  %10060 = vmatpush1.bf16.msra.mxu0 %v9930
  %10061 = vmatprep.subr.bf16.mxu0 0
  %10062 = vmatpush1.bf16.msra.mxu0 %v9927
  %10063 = vmatprep.subr.bf16.mxu0 0
  %10064 = vmatpush1.bf16.msra.mxu0 %v9924
  %10065 = vmatprep.subr.bf16.mxu0 0
  %10066 = vmatpush1.bf16.msra.mxu0 %v9921
  %10067 = vmatprep.subr.bf16.mxu0 0
  %10068 = vmatpush1.bf16.msra.mxu0 %v9918
  %10069 = vmatprep.subr.bf16.mxu0 0
  %10070 = vmatpush2.bf16.msra.mxu0 %v9963
  %10071 = vmatprep.subr.bf16.mxu0 0
  %10072 = vmatpush2.bf16.msra.mxu0 %v9960
  %10073 = vmatprep.subr.bf16.mxu0 0
  %10074 = vmatpush2.bf16.msra.mxu0 %v9957
  %10075 = vmatprep.subr.bf16.mxu0 0
  %10076 = vmatpush2.bf16.msra.mxu0 %v9954
  %10077 = vmatprep.subr.bf16.mxu0 0
  %10078 = vmatpush2.bf16.msra.mxu0 %v9951
  %10079 = vmatprep.subr.bf16.mxu0 0
  %10080 = vmatpush2.bf16.msra.mxu0 %v9948
  %10081 = vmatprep.subr.bf16.mxu0 0
  %10082 = vmatpush2.bf16.msra.mxu0 %v9945
  %10083 = vmatprep.subr.bf16.mxu0 0
  %10084 = vmatpush2.bf16.msra.mxu0 %v9942
  %10085 = vmatprep.mubr.bf16.mxu0 %v9753
  %10086 = vmatmul.mubr.bf16.gmra.mxu0 %v9752
  %v10087 = vpop.f32.mrf.mxu0
  %v10088 = vadd.f32 0.0, %v10087
  %v10089 = vpop.f32.mrf.mxu0
  %v10090 = vpop.f32.mrf.mxu0
  %v10091 = vpop.f32.mrf.mxu0
  %10092 = vdwg.mxu0
  %v10157 = vunpack.c.l.b16 %v9621
  %v10158 = vunpack.c.h.b16 %v9621
  %v10159 = vunpack.c.l.b16 %v9622
  %v10160 = vunpack.c.l.b16 %v9623
  %v10161 = vunpack.c.h.b16 %v9623
  %v10162 = vunpack.c.l.b16 %v9624
  %v10163 = vunpack.c.l.b16 %v9625
  %v10164 = vunpack.c.h.b16 %v9625
  %v10165 = vunpack.c.l.b16 %v9626
  %v10166 = vunpack.c.l.b16 %v9627
  %v10167 = vunpack.c.h.b16 %v9627
  %v10168 = vunpack.c.l.b16 %v9628
  %v10169 = vunpack.c.l.b16 %v9629
  %v10170 = vunpack.c.h.b16 %v9629
  %v10171 = vunpack.c.l.b16 %v9630
  %v10172 = vunpack.c.l.b16 %v9631
  %v10173 = vunpack.c.h.b16 %v9631
  %v10174 = vunpack.c.l.b16 %v9632
  %v10175 = vunpack.c.l.b16 %v9633
  %v10176 = vunpack.c.h.b16 %v9633
  %v10177 = vunpack.c.l.b16 %v9634
  %v10178 = vunpack.c.l.b16 %v9635
  %v10179 = vunpack.c.h.b16 %v9635
  %v10180 = vunpack.c.l.b16 %v9636
  %v10181 = vunpack.c.l.b16 %v9637
  %v10182 = vunpack.c.h.b16 %v9637
  %v10183 = vunpack.c.l.b16 %v9638
  %v10184 = vunpack.c.l.b16 %v9639
  %v10185 = vunpack.c.h.b16 %v9639
  %v10186 = vunpack.c.l.b16 %v9640
  %v10187 = vunpack.c.l.b16 %v9641
  %v10188 = vunpack.c.h.b16 %v9641
  %v10189 = vunpack.c.l.b16 %v9642
  %v10190 = vunpack.c.l.b16 %v9643
  %v10191 = vunpack.c.h.b16 %v9643
  %v10192 = vunpack.c.l.b16 %v9644
  %v10193 = vunpack.c.l.b16 %v9645
  %v10194 = vunpack.c.h.b16 %v9645
  %v10195 = vunpack.c.l.b16 %v9646
  %v10196 = vunpack.c.l.b16 %v9647
  %v10197 = vunpack.c.h.b16 %v9647
  %v10198 = vunpack.c.l.b16 %v9648
  %v10199 = vunpack.c.l.b16 %v9649
  %v10200 = vunpack.c.h.b16 %v9649
  %v10201 = vunpack.c.l.b16 %v9650
  %v10202 = vunpack.c.l.b16 %v9651
  %v10203 = vunpack.c.h.b16 %v9651
  %v10204 = vunpack.c.l.b16 %v9652
  %v10205 = vunpack.c.l.b16 %v9653
  %v10206 = vunpack.c.h.b16 %v9653
  %v10207 = vunpack.c.l.b16 %v9654
  %v10208 = vunpack.c.l.b16 %v9655
  %v10209 = vunpack.c.h.b16 %v9655
  %v10210 = vunpack.c.l.b16 %v9656
  %v10211 = vunpack.c.l.b16 %v9657
  %v10212 = vunpack.c.h.b16 %v9657
  %v10213 = vunpack.c.l.b16 %v9658
  %v10214 = vunpack.c.l.b16 %v9659
  %v10215 = vunpack.c.h.b16 %v9659
  %v10216 = vunpack.c.l.b16 %v9660
  %v10217 = vunpack.c.l.b16 %v9661
  %v10218 = vunpack.c.h.b16 %v9661
  %v10219 = vunpack.c.l.b16 %v9662
  %v10220 = vunpack.c.l.b16 %v9663
  %v10221 = vunpack.c.h.b16 %v9663
  %v10222 = vunpack.c.l.b16 %v9664
  %v10223 = vunpack.c.l.b16 %v9665
  %v10224 = vunpack.c.h.b16 %v9665
  %v10225 = vunpack.c.l.b16 %v9666
  %v10226 = vunpack.c.l.b16 %v9667
  %v10227 = vunpack.c.h.b16 %v9667
  %v10228 = vunpack.c.l.b16 %v9668
  %v10229 = vunpack.c.l.b16 %v9669
  %v10230 = vunpack.c.h.b16 %v9669
  %v10231 = vunpack.c.l.b16 %v9670
  %v10232 = vunpack.c.l.b16 %v9671
  %v10233 = vunpack.c.h.b16 %v9671
  %v10234 = vunpack.c.l.b16 %v9672
  %v10235 = vunpack.c.l.b16 %v9673
  %v10236 = vunpack.c.h.b16 %v9673
  %v10237 = vunpack.c.l.b16 %v9674
  %v10238 = vunpack.c.l.b16 %v9675
  %v10239 = vunpack.c.h.b16 %v9675
  %v10240 = vunpack.c.l.b16 %v9676
  %v10241 = vunpack.c.l.b16 %v9677
  %v10242 = vunpack.c.h.b16 %v9677
  %v10243 = vunpack.c.l.b16 %v9678
  %v10244 = vunpack.c.l.b16 %v9679
  %v10245 = vunpack.c.h.b16 %v9679
  %v10246 = vunpack.c.l.b16 %v9680
  %v10247 = vunpack.c.l.b16 %v9681
  %v10248 = vunpack.c.h.b16 %v9681
  %v10249 = vunpack.c.l.b16 %v9682
  %v10250 = vunpack.c.l.b16 %v9683
  %v10251 = vunpack.c.h.b16 %v9683
  %v10252 = vunpack.c.l.b16 %v9684
  %v10253 = vpack.c.b16 %v10160, %v10157
  %v10254 = vpack.c.b16 %v10161, %v10158
  %v10255 = vpack.c.b16 %v10162, %v10159
  %v10256 = vpack.c.b16 %v10166, %v10163
  %v10257 = vpack.c.b16 %v10167, %v10164
  %v10258 = vpack.c.b16 %v10168, %v10165
  %v10259 = vpack.c.b16 %v10172, %v10169
  %v10260 = vpack.c.b16 %v10173, %v10170
  %v10261 = vpack.c.b16 %v10174, %v10171
  %v10262 = vpack.c.b16 %v10178, %v10175
  %v10263 = vpack.c.b16 %v10179, %v10176
  %v10264 = vpack.c.b16 %v10180, %v10177
  %v10265 = vpack.c.b16 %v10184, %v10181
  %v10266 = vpack.c.b16 %v10185, %v10182
  %v10267 = vpack.c.b16 %v10186, %v10183
  %v10268 = vpack.c.b16 %v10190, %v10187
  %v10269 = vpack.c.b16 %v10191, %v10188
  %v10270 = vpack.c.b16 %v10192, %v10189
  %v10271 = vpack.c.b16 %v10196, %v10193
  %v10272 = vpack.c.b16 %v10197, %v10194
  %v10273 = vpack.c.b16 %v10198, %v10195
  %v10274 = vpack.c.b16 %v10202, %v10199
  %v10275 = vpack.c.b16 %v10203, %v10200
  %v10276 = vpack.c.b16 %v10204, %v10201
  %v10277 = vpack.c.b16 %v10208, %v10205
  %v10278 = vpack.c.b16 %v10209, %v10206
  %v10279 = vpack.c.b16 %v10210, %v10207
  %v10280 = vpack.c.b16 %v10214, %v10211
  %v10281 = vpack.c.b16 %v10215, %v10212
  %v10282 = vpack.c.b16 %v10216, %v10213
  %v10283 = vpack.c.b16 %v10220, %v10217
  %v10284 = vpack.c.b16 %v10221, %v10218
  %v10285 = vpack.c.b16 %v10222, %v10219
  %v10286 = vpack.c.b16 %v10226, %v10223
  %v10287 = vpack.c.b16 %v10227, %v10224
  %v10288 = vpack.c.b16 %v10228, %v10225
  %v10289 = vpack.c.b16 %v10232, %v10229
  %v10290 = vpack.c.b16 %v10233, %v10230
  %v10291 = vpack.c.b16 %v10234, %v10231
  %v10292 = vpack.c.b16 %v10238, %v10235
  %v10293 = vpack.c.b16 %v10239, %v10236
  %v10294 = vpack.c.b16 %v10240, %v10237
  %v10295 = vpack.c.b16 %v10244, %v10241
  %v10296 = vpack.c.b16 %v10245, %v10242
  %v10297 = vpack.c.b16 %v10246, %v10243
  %v10298 = vpack.c.b16 %v10250, %v10247
  %v10299 = vpack.c.b16 %v10251, %v10248
  %v10300 = vpack.c.b16 %v10252, %v10249
  %10349 = vmatprep.subr.bf16.mxu0 %v10275
  %10350 = vmatpush1.bf16.msra.mxu0 %v10274
  %10351 = vmatprep.subr.bf16.mxu0 %v10272
  %10352 = vmatpush1.bf16.msra.mxu0 %v10271
  %10353 = vmatprep.subr.bf16.mxu0 %v10269
  %10354 = vmatpush1.bf16.msra.mxu0 %v10268
  %10355 = vmatprep.subr.bf16.mxu0 %v10266
  %10356 = vmatpush1.bf16.msra.mxu0 %v10265
  %10357 = vmatprep.subr.bf16.mxu0 %v10263
  %10358 = vmatpush1.bf16.msra.mxu0 %v10262
  %10359 = vmatprep.subr.bf16.mxu0 %v10260
  %10360 = vmatpush1.bf16.msra.mxu0 %v10259
  %10361 = vmatprep.subr.bf16.mxu0 %v10257
  %10362 = vmatpush1.bf16.msra.mxu0 %v10256
  %10363 = vmatprep.subr.bf16.mxu0 %v10254
  %10364 = vmatpush1.bf16.msra.mxu0 %v10253
  %10365 = vmatprep.subr.bf16.mxu0 %v10299
  %10366 = vmatpush2.bf16.msra.mxu0 %v10298
  %10367 = vmatprep.subr.bf16.mxu0 %v10296
  %10368 = vmatpush2.bf16.msra.mxu0 %v10295
  %10369 = vmatprep.subr.bf16.mxu0 %v10293
  %10370 = vmatpush2.bf16.msra.mxu0 %v10292
  %10371 = vmatprep.subr.bf16.mxu0 %v10290
  %10372 = vmatpush2.bf16.msra.mxu0 %v10289
  %10373 = vmatprep.subr.bf16.mxu0 %v10287
  %10374 = vmatpush2.bf16.msra.mxu0 %v10286
  %10375 = vmatprep.subr.bf16.mxu0 %v10284
  %10376 = vmatpush2.bf16.msra.mxu0 %v10283
  %10377 = vmatprep.subr.bf16.mxu0 %v10281
  %10378 = vmatpush2.bf16.msra.mxu0 %v10280
  %10379 = vmatprep.subr.bf16.mxu0 %v10278
  %10380 = vmatpush2.bf16.msra.mxu0 %v10277
  %10381 = vmatprep.mubr.bf16.mxu0 %v9620
  %10382 = vmatmul.mubr.bf16.gmra.mxu0 %v9619
  %v10383 = vpop.f32.mrf.mxu0
  %v10384 = vadd.f32 %v10047, %v10383
  %v10385 = vpop.f32.mrf.mxu0
  %v10386 = vadd.f32 %v10049, %v10385
  %v10387 = vpop.f32.mrf.mxu0
  %v10388 = vpop.f32.mrf.mxu0
  %10389 = vdwg.mxu0
  %10390 = vmatprep.subr.bf16.mxu0 0
  %10391 = vmatpush1.bf16.msra.mxu0 %v10276
  %10392 = vmatprep.subr.bf16.mxu0 0
  %10393 = vmatpush1.bf16.msra.mxu0 %v10273
  %10394 = vmatprep.subr.bf16.mxu0 0
  %10395 = vmatpush1.bf16.msra.mxu0 %v10270
  %10396 = vmatprep.subr.bf16.mxu0 0
  %10397 = vmatpush1.bf16.msra.mxu0 %v10267
  %10398 = vmatprep.subr.bf16.mxu0 0
  %10399 = vmatpush1.bf16.msra.mxu0 %v10264
  %10400 = vmatprep.subr.bf16.mxu0 0
  %10401 = vmatpush1.bf16.msra.mxu0 %v10261
  %10402 = vmatprep.subr.bf16.mxu0 0
  %10403 = vmatpush1.bf16.msra.mxu0 %v10258
  %10404 = vmatprep.subr.bf16.mxu0 0
  %10405 = vmatpush1.bf16.msra.mxu0 %v10255
  %10406 = vmatprep.subr.bf16.mxu0 0
  %10407 = vmatpush2.bf16.msra.mxu0 %v10300
  %10408 = vmatprep.subr.bf16.mxu0 0
  %10409 = vmatpush2.bf16.msra.mxu0 %v10297
  %10410 = vmatprep.subr.bf16.mxu0 0
  %10411 = vmatpush2.bf16.msra.mxu0 %v10294
  %10412 = vmatprep.subr.bf16.mxu0 0
  %10413 = vmatpush2.bf16.msra.mxu0 %v10291
  %10414 = vmatprep.subr.bf16.mxu0 0
  %10415 = vmatpush2.bf16.msra.mxu0 %v10288
  %10416 = vmatprep.subr.bf16.mxu0 0
  %10417 = vmatpush2.bf16.msra.mxu0 %v10285
  %10418 = vmatprep.subr.bf16.mxu0 0
  %10419 = vmatpush2.bf16.msra.mxu0 %v10282
  %10420 = vmatprep.subr.bf16.mxu0 0
  %10421 = vmatpush2.bf16.msra.mxu0 %v10279
  %10422 = vmatprep.mubr.bf16.mxu0 %v9620
  %10423 = vmatmul.mubr.bf16.gmra.mxu0 %v9619
  %v10424 = vpop.f32.mrf.mxu0
  %v10425 = vadd.f32 %v10088, %v10424
  %v10426 = vpop.f32.mrf.mxu0
  %v10427 = vpop.f32.mrf.mxu0
  %v10428 = vpop.f32.mrf.mxu0
  %10429 = vdwg.mxu0
  %s10430 = scalar_lea.vmem %s4, 768
  %v10431 = vld [vmem:[%s10430] sm:$0xff]
  %v10432 = vld [vmem:[%s10430 + $0x8] sm:$0xf]
  %v10433 = vld [vmem:[%s10430 + $0xc] sm:$0xff]
  %v10434 = vld [vmem:[%s10430 + $0x14] sm:$0xf]
  %v10435 = vld [vmem:[%s10430 + $0x18] sm:$0xff]
  %v10436 = vld [vmem:[%s10430 + $0x20] sm:$0xf]
  %v10437 = vld [vmem:[%s10430 + $0x24] sm:$0xff]
  %v10438 = vld [vmem:[%s10430 + $0x2c] sm:$0xf]
  %v10439 = vld [vmem:[%s10430 + $0x30] sm:$0xff]
  %v10440 = vld [vmem:[%s10430 + $0x38] sm:$0xf]
  %v10441 = vld [vmem:[%s10430 + $0x3c] sm:$0xff]
  %v10442 = vld [vmem:[%s10430 + $0x44] sm:$0xf]
  %v10443 = vld [vmem:[%s10430 + $0x48] sm:$0xff]
  %v10444 = vld [vmem:[%s10430 + $0x50] sm:$0xf]
  %v10445 = vld [vmem:[%s10430 + $0x54] sm:$0xff]
  %v10446 = vld [vmem:[%s10430 + $0x5c] sm:$0xf]
  %v10447 = vld [vmem:[%s10430 + $0x60] sm:$0xff]
  %v10448 = vld [vmem:[%s10430 + $0x68] sm:$0xf]
  %v10449 = vld [vmem:[%s10430 + $0x6c] sm:$0xff]
  %v10450 = vld [vmem:[%s10430 + $0x74] sm:$0xf]
  %v10451 = vld [vmem:[%s10430 + $0x78] sm:$0xff]
  %v10452 = vld [vmem:[%s10430 + $0x80] sm:$0xf]
  %v10453 = vld [vmem:[%s10430 + $0x84] sm:$0xff]
  %v10454 = vld [vmem:[%s10430 + $0x8c] sm:$0xf]
  %v10455 = vld [vmem:[%s10430 + $0x90] sm:$0xff]
  %v10456 = vld [vmem:[%s10430 + $0x98] sm:$0xf]
  %v10457 = vld [vmem:[%s10430 + $0x9c] sm:$0xff]
  %v10458 = vld [vmem:[%s10430 + $0xa4] sm:$0xf]
  %v10459 = vld [vmem:[%s10430 + $0xa8] sm:$0xff]
  %v10460 = vld [vmem:[%s10430 + $0xb0] sm:$0xf]
  %v10461 = vld [vmem:[%s10430 + $0xb4] sm:$0xff]
  %v10462 = vld [vmem:[%s10430 + $0xbc] sm:$0xf]
  %v10463 = vld [vmem:[%s10430 + $0xc0] sm:$0xff]
  %v10464 = vld [vmem:[%s10430 + $0xc8] sm:$0xf]
  %v10465 = vld [vmem:[%s10430 + $0xcc] sm:$0xff]
  %v10466 = vld [vmem:[%s10430 + $0xd4] sm:$0xf]
  %v10467 = vld [vmem:[%s10430 + $0xd8] sm:$0xff]
  %v10468 = vld [vmem:[%s10430 + $0xe0] sm:$0xf]
  %v10469 = vld [vmem:[%s10430 + $0xe4] sm:$0xff]
  %v10470 = vld [vmem:[%s10430 + $0xec] sm:$0xf]
  %v10471 = vld [vmem:[%s10430 + $0xf0] sm:$0xff]
  %v10472 = vld [vmem:[%s10430 + $0xf8] sm:$0xf]
  %v10473 = vld [vmem:[%s10430 + $0xfc] sm:$0xff]
  %v10474 = vld [vmem:[%s10430 + $0x104] sm:$0xf]
  %v10475 = vld [vmem:[%s10430 + $0x108] sm:$0xff]
  %v10476 = vld [vmem:[%s10430 + $0x110] sm:$0xf]
  %v10477 = vld [vmem:[%s10430 + $0x114] sm:$0xff]
  %v10478 = vld [vmem:[%s10430 + $0x11c] sm:$0xf]
  %v10479 = vld [vmem:[%s10430 + $0x120] sm:$0xff]
  %v10480 = vld [vmem:[%s10430 + $0x128] sm:$0xf]
  %v10481 = vld [vmem:[%s10430 + $0x12c] sm:$0xff]
  %v10482 = vld [vmem:[%s10430 + $0x134] sm:$0xf]
  %v10483 = vld [vmem:[%s10430 + $0x138] sm:$0xff]
  %v10484 = vld [vmem:[%s10430 + $0x140] sm:$0xf]
  %v10485 = vld [vmem:[%s10430 + $0x144] sm:$0xff]
  %v10486 = vld [vmem:[%s10430 + $0x14c] sm:$0xf]
  %v10487 = vld [vmem:[%s10430 + $0x150] sm:$0xff]
  %v10488 = vld [vmem:[%s10430 + $0x158] sm:$0xf]
  %v10489 = vld [vmem:[%s10430 + $0x15c] sm:$0xff]
  %v10490 = vld [vmem:[%s10430 + $0x164] sm:$0xf]
  %v10491 = vld [vmem:[%s10430 + $0x168] sm:$0xff]
  %v10492 = vld [vmem:[%s10430 + $0x170] sm:$0xf]
  %v10493 = vld [vmem:[%s10430 + $0x174] sm:$0xff]
  %v10494 = vld [vmem:[%s10430 + $0x17c] sm:$0xf]
  %v10495 = vrot.slane %v9619, 2
  %v10496 = vrot.slane %v9620, 2
  %v10563 = vunpack.c.l.b16 %v10431
  %v10564 = vunpack.c.h.b16 %v10431
  %v10565 = vunpack.c.l.b16 %v10432
  %v10566 = vunpack.c.l.b16 %v10433
  %v10567 = vunpack.c.h.b16 %v10433
  %v10568 = vunpack.c.l.b16 %v10434
  %v10569 = vunpack.c.l.b16 %v10435
  %v10570 = vunpack.c.h.b16 %v10435
  %v10571 = vunpack.c.l.b16 %v10436
  %v10572 = vunpack.c.l.b16 %v10437
  %v10573 = vunpack.c.h.b16 %v10437
  %v10574 = vunpack.c.l.b16 %v10438
  %v10575 = vunpack.c.l.b16 %v10439
  %v10576 = vunpack.c.h.b16 %v10439
  %v10577 = vunpack.c.l.b16 %v10440
  %v10578 = vunpack.c.l.b16 %v10441
  %v10579 = vunpack.c.h.b16 %v10441
  %v10580 = vunpack.c.l.b16 %v10442
  %v10581 = vunpack.c.l.b16 %v10443
  %v10582 = vunpack.c.h.b16 %v10443
  %v10583 = vunpack.c.l.b16 %v10444
  %v10584 = vunpack.c.l.b16 %v10445
  %v10585 = vunpack.c.h.b16 %v10445
  %v10586 = vunpack.c.l.b16 %v10446
  %v10587 = vunpack.c.l.b16 %v10447
  %v10588 = vunpack.c.h.b16 %v10447
  %v10589 = vunpack.c.l.b16 %v10448
  %v10590 = vunpack.c.l.b16 %v10449
  %v10591 = vunpack.c.h.b16 %v10449
  %v10592 = vunpack.c.l.b16 %v10450
  %v10593 = vunpack.c.l.b16 %v10451
  %v10594 = vunpack.c.h.b16 %v10451
  %v10595 = vunpack.c.l.b16 %v10452
  %v10596 = vunpack.c.l.b16 %v10453
  %v10597 = vunpack.c.h.b16 %v10453
  %v10598 = vunpack.c.l.b16 %v10454
  %v10599 = vunpack.c.l.b16 %v10455
  %v10600 = vunpack.c.h.b16 %v10455
  %v10601 = vunpack.c.l.b16 %v10456
  %v10602 = vunpack.c.l.b16 %v10457
  %v10603 = vunpack.c.h.b16 %v10457
  %v10604 = vunpack.c.l.b16 %v10458
  %v10605 = vunpack.c.l.b16 %v10459
  %v10606 = vunpack.c.h.b16 %v10459
  %v10607 = vunpack.c.l.b16 %v10460
  %v10608 = vunpack.c.l.b16 %v10461
  %v10609 = vunpack.c.h.b16 %v10461
  %v10610 = vunpack.c.l.b16 %v10462
  %v10611 = vunpack.c.l.b16 %v10463
  %v10612 = vunpack.c.h.b16 %v10463
  %v10613 = vunpack.c.l.b16 %v10464
  %v10614 = vunpack.c.l.b16 %v10465
  %v10615 = vunpack.c.h.b16 %v10465
  %v10616 = vunpack.c.l.b16 %v10466
  %v10617 = vunpack.c.l.b16 %v10467
  %v10618 = vunpack.c.h.b16 %v10467
  %v10619 = vunpack.c.l.b16 %v10468
  %v10620 = vunpack.c.l.b16 %v10469
  %v10621 = vunpack.c.h.b16 %v10469
  %v10622 = vunpack.c.l.b16 %v10470
  %v10623 = vunpack.c.l.b16 %v10471
  %v10624 = vunpack.c.h.b16 %v10471
  %v10625 = vunpack.c.l.b16 %v10472
  %v10626 = vunpack.c.l.b16 %v10473
  %v10627 = vunpack.c.h.b16 %v10473
  %v10628 = vunpack.c.l.b16 %v10474
  %v10629 = vunpack.c.l.b16 %v10475
  %v10630 = vunpack.c.h.b16 %v10475
  %v10631 = vunpack.c.l.b16 %v10476
  %v10632 = vunpack.c.l.b16 %v10477
  %v10633 = vunpack.c.h.b16 %v10477
  %v10634 = vunpack.c.l.b16 %v10478
  %v10635 = vunpack.c.l.b16 %v10479
  %v10636 = vunpack.c.h.b16 %v10479
  %v10637 = vunpack.c.l.b16 %v10480
  %v10638 = vunpack.c.l.b16 %v10481
  %v10639 = vunpack.c.h.b16 %v10481
  %v10640 = vunpack.c.l.b16 %v10482
  %v10641 = vunpack.c.l.b16 %v10483
  %v10642 = vunpack.c.h.b16 %v10483
  %v10643 = vunpack.c.l.b16 %v10484
  %v10644 = vunpack.c.l.b16 %v10485
  %v10645 = vunpack.c.h.b16 %v10485
  %v10646 = vunpack.c.l.b16 %v10486
  %v10647 = vunpack.c.l.b16 %v10487
  %v10648 = vunpack.c.h.b16 %v10487
  %v10649 = vunpack.c.l.b16 %v10488
  %v10650 = vunpack.c.l.b16 %v10489
  %v10651 = vunpack.c.h.b16 %v10489
  %v10652 = vunpack.c.l.b16 %v10490
  %v10653 = vunpack.c.l.b16 %v10491
  %v10654 = vunpack.c.h.b16 %v10491
  %v10655 = vunpack.c.l.b16 %v10492
  %v10656 = vunpack.c.l.b16 %v10493
  %v10657 = vunpack.c.h.b16 %v10493
  %v10658 = vunpack.c.l.b16 %v10494
  %v10659 = vpack.c.b16 %v10566, %v10563
  %v10660 = vpack.c.b16 %v10567, %v10564
  %v10661 = vpack.c.b16 %v10568, %v10565
  %v10662 = vpack.c.b16 %v10572, %v10569
  %v10663 = vpack.c.b16 %v10573, %v10570
  %v10664 = vpack.c.b16 %v10574, %v10571
  %v10665 = vpack.c.b16 %v10578, %v10575
  %v10666 = vpack.c.b16 %v10579, %v10576
  %v10667 = vpack.c.b16 %v10580, %v10577
  %v10668 = vpack.c.b16 %v10584, %v10581
  %v10669 = vpack.c.b16 %v10585, %v10582
  %v10670 = vpack.c.b16 %v10586, %v10583
  %v10671 = vpack.c.b16 %v10590, %v10587
  %v10672 = vpack.c.b16 %v10591, %v10588
  %v10673 = vpack.c.b16 %v10592, %v10589
  %v10674 = vpack.c.b16 %v10596, %v10593
  %v10675 = vpack.c.b16 %v10597, %v10594
  %v10676 = vpack.c.b16 %v10598, %v10595
  %v10677 = vpack.c.b16 %v10602, %v10599
  %v10678 = vpack.c.b16 %v10603, %v10600
  %v10679 = vpack.c.b16 %v10604, %v10601
  %v10680 = vpack.c.b16 %v10608, %v10605
  %v10681 = vpack.c.b16 %v10609, %v10606
  %v10682 = vpack.c.b16 %v10610, %v10607
  %v10683 = vpack.c.b16 %v10614, %v10611
  %v10684 = vpack.c.b16 %v10615, %v10612
  %v10685 = vpack.c.b16 %v10616, %v10613
  %v10686 = vpack.c.b16 %v10620, %v10617
  %v10687 = vpack.c.b16 %v10621, %v10618
  %v10688 = vpack.c.b16 %v10622, %v10619
  %v10689 = vpack.c.b16 %v10626, %v10623
  %v10690 = vpack.c.b16 %v10627, %v10624
  %v10691 = vpack.c.b16 %v10628, %v10625
  %v10692 = vpack.c.b16 %v10632, %v10629
  %v10693 = vpack.c.b16 %v10633, %v10630
  %v10694 = vpack.c.b16 %v10634, %v10631
  %v10695 = vpack.c.b16 %v10638, %v10635
  %v10696 = vpack.c.b16 %v10639, %v10636
  %v10697 = vpack.c.b16 %v10640, %v10637
  %v10698 = vpack.c.b16 %v10644, %v10641
  %v10699 = vpack.c.b16 %v10645, %v10642
  %v10700 = vpack.c.b16 %v10646, %v10643
  %v10701 = vpack.c.b16 %v10650, %v10647
  %v10702 = vpack.c.b16 %v10651, %v10648
  %v10703 = vpack.c.b16 %v10652, %v10649
  %v10704 = vpack.c.b16 %v10656, %v10653
  %v10705 = vpack.c.b16 %v10657, %v10654
  %v10706 = vpack.c.b16 %v10658, %v10655
  %10755 = vmatprep.subr.bf16.mxu0 %v10681
  %10756 = vmatpush1.bf16.msra.mxu0 %v10680
  %10757 = vmatprep.subr.bf16.mxu0 %v10678
  %10758 = vmatpush1.bf16.msra.mxu0 %v10677
  %10759 = vmatprep.subr.bf16.mxu0 %v10675
  %10760 = vmatpush1.bf16.msra.mxu0 %v10674
  %10761 = vmatprep.subr.bf16.mxu0 %v10672
  %10762 = vmatpush1.bf16.msra.mxu0 %v10671
  %10763 = vmatprep.subr.bf16.mxu0 %v10669
  %10764 = vmatpush1.bf16.msra.mxu0 %v10668
  %10765 = vmatprep.subr.bf16.mxu0 %v10666
  %10766 = vmatpush1.bf16.msra.mxu0 %v10665
  %10767 = vmatprep.subr.bf16.mxu0 %v10663
  %10768 = vmatpush1.bf16.msra.mxu0 %v10662
  %10769 = vmatprep.subr.bf16.mxu0 %v10660
  %10770 = vmatpush1.bf16.msra.mxu0 %v10659
  %10771 = vmatprep.subr.bf16.mxu0 %v10705
  %10772 = vmatpush2.bf16.msra.mxu0 %v10704
  %10773 = vmatprep.subr.bf16.mxu0 %v10702
  %10774 = vmatpush2.bf16.msra.mxu0 %v10701
  %10775 = vmatprep.subr.bf16.mxu0 %v10699
  %10776 = vmatpush2.bf16.msra.mxu0 %v10698
  %10777 = vmatprep.subr.bf16.mxu0 %v10696
  %10778 = vmatpush2.bf16.msra.mxu0 %v10695
  %10779 = vmatprep.subr.bf16.mxu0 %v10693
  %10780 = vmatpush2.bf16.msra.mxu0 %v10692
  %10781 = vmatprep.subr.bf16.mxu0 %v10690
  %10782 = vmatpush2.bf16.msra.mxu0 %v10689
  %10783 = vmatprep.subr.bf16.mxu0 %v10687
  %10784 = vmatpush2.bf16.msra.mxu0 %v10686
  %10785 = vmatprep.subr.bf16.mxu0 %v10684
  %10786 = vmatpush2.bf16.msra.mxu0 %v10683
  %10787 = vmatprep.mubr.bf16.mxu0 %v10496
  %10788 = vmatmul.mubr.bf16.gmra.mxu0 %v10495
  %v10789 = vpop.f32.mrf.mxu0
  %v10790 = vadd.f32 0.0, %v10789
  %v10791 = vpop.f32.mrf.mxu0
  %v10792 = vadd.f32 0.0, %v10791
  %v10793 = vpop.f32.mrf.mxu0
  %v10794 = vpop.f32.mrf.mxu0
  %10795 = vdwg.mxu0
  %10796 = vmatprep.subr.bf16.mxu0 0
  %10797 = vmatpush1.bf16.msra.mxu0 %v10682
  %10798 = vmatprep.subr.bf16.mxu0 0
  %10799 = vmatpush1.bf16.msra.mxu0 %v10679
  %10800 = vmatprep.subr.bf16.mxu0 0
  %10801 = vmatpush1.bf16.msra.mxu0 %v10676
  %10802 = vmatprep.subr.bf16.mxu0 0
  %10803 = vmatpush1.bf16.msra.mxu0 %v10673
  %10804 = vmatprep.subr.bf16.mxu0 0
  %10805 = vmatpush1.bf16.msra.mxu0 %v10670
  %10806 = vmatprep.subr.bf16.mxu0 0
  %10807 = vmatpush1.bf16.msra.mxu0 %v10667
  %10808 = vmatprep.subr.bf16.mxu0 0
  %10809 = vmatpush1.bf16.msra.mxu0 %v10664
  %10810 = vmatprep.subr.bf16.mxu0 0
  %10811 = vmatpush1.bf16.msra.mxu0 %v10661
  %10812 = vmatprep.subr.bf16.mxu0 0
  %10813 = vmatpush2.bf16.msra.mxu0 %v10706
  %10814 = vmatprep.subr.bf16.mxu0 0
  %10815 = vmatpush2.bf16.msra.mxu0 %v10703
  %10816 = vmatprep.subr.bf16.mxu0 0
  %10817 = vmatpush2.bf16.msra.mxu0 %v10700
  %10818 = vmatprep.subr.bf16.mxu0 0
  %10819 = vmatpush2.bf16.msra.mxu0 %v10697
  %10820 = vmatprep.subr.bf16.mxu0 0
  %10821 = vmatpush2.bf16.msra.mxu0 %v10694
  %10822 = vmatprep.subr.bf16.mxu0 0
  %10823 = vmatpush2.bf16.msra.mxu0 %v10691
  %10824 = vmatprep.subr.bf16.mxu0 0
  %10825 = vmatpush2.bf16.msra.mxu0 %v10688
  %10826 = vmatprep.subr.bf16.mxu0 0
  %10827 = vmatpush2.bf16.msra.mxu0 %v10685
  %10828 = vmatprep.mubr.bf16.mxu0 %v10496
  %10829 = vmatmul.mubr.bf16.gmra.mxu0 %v10495
  %v10830 = vpop.f32.mrf.mxu0
  %v10831 = vadd.f32 0.0, %v10830
  %v10832 = vpop.f32.mrf.mxu0
  %v10833 = vpop.f32.mrf.mxu0
  %v10834 = vpop.f32.mrf.mxu0
  %10835 = vdwg.mxu0
  %v10836 = vadd.f32 %v10384, %v10790
  %v10837 = vadd.f32 %v10386, %v10792
  %v10838 = vadd.f32 %v10425, %v10831
  %s10839 = scalar_lea.vmem %s4, 1152
  %v10840 = vld [vmem:[%s10839] sm:$0xff]
  %v10841 = vld [vmem:[%s10839 + $0x8] sm:$0xf]
  %v10842 = vld [vmem:[%s10839 + $0xc] sm:$0xff]
  %v10843 = vld [vmem:[%s10839 + $0x14] sm:$0xf]
  %v10844 = vld [vmem:[%s10839 + $0x18] sm:$0xff]
  %v10845 = vld [vmem:[%s10839 + $0x20] sm:$0xf]
  %v10846 = vld [vmem:[%s10839 + $0x24] sm:$0xff]
  %v10847 = vld [vmem:[%s10839 + $0x2c] sm:$0xf]
  %v10848 = vld [vmem:[%s10839 + $0x30] sm:$0xff]
  %v10849 = vld [vmem:[%s10839 + $0x38] sm:$0xf]
  %v10850 = vld [vmem:[%s10839 + $0x3c] sm:$0xff]
  %v10851 = vld [vmem:[%s10839 + $0x44] sm:$0xf]
  %v10852 = vld [vmem:[%s10839 + $0x48] sm:$0xff]
  %v10853 = vld [vmem:[%s10839 + $0x50] sm:$0xf]
  %v10854 = vld [vmem:[%s10839 + $0x54] sm:$0xff]
  %v10855 = vld [vmem:[%s10839 + $0x5c] sm:$0xf]
  %v10856 = vld [vmem:[%s10839 + $0x60] sm:$0xff]
  %v10857 = vld [vmem:[%s10839 + $0x68] sm:$0xf]
  %v10858 = vld [vmem:[%s10839 + $0x6c] sm:$0xff]
  %v10859 = vld [vmem:[%s10839 + $0x74] sm:$0xf]
  %v10860 = vld [vmem:[%s10839 + $0x78] sm:$0xff]
  %v10861 = vld [vmem:[%s10839 + $0x80] sm:$0xf]
  %v10862 = vld [vmem:[%s10839 + $0x84] sm:$0xff]
  %v10863 = vld [vmem:[%s10839 + $0x8c] sm:$0xf]
  %v10864 = vld [vmem:[%s10839 + $0x90] sm:$0xff]
  %v10865 = vld [vmem:[%s10839 + $0x98] sm:$0xf]
  %v10866 = vld [vmem:[%s10839 + $0x9c] sm:$0xff]
  %v10867 = vld [vmem:[%s10839 + $0xa4] sm:$0xf]
  %v10868 = vld [vmem:[%s10839 + $0xa8] sm:$0xff]
  %v10869 = vld [vmem:[%s10839 + $0xb0] sm:$0xf]
  %v10870 = vld [vmem:[%s10839 + $0xb4] sm:$0xff]
  %v10871 = vld [vmem:[%s10839 + $0xbc] sm:$0xf]
  %v10872 = vld [vmem:[%s10839 + $0xc0] sm:$0xff]
  %v10873 = vld [vmem:[%s10839 + $0xc8] sm:$0xf]
  %v10874 = vld [vmem:[%s10839 + $0xcc] sm:$0xff]
  %v10875 = vld [vmem:[%s10839 + $0xd4] sm:$0xf]
  %v10876 = vld [vmem:[%s10839 + $0xd8] sm:$0xff]
  %v10877 = vld [vmem:[%s10839 + $0xe0] sm:$0xf]
  %v10878 = vld [vmem:[%s10839 + $0xe4] sm:$0xff]
  %v10879 = vld [vmem:[%s10839 + $0xec] sm:$0xf]
  %v10880 = vld [vmem:[%s10839 + $0xf0] sm:$0xff]
  %v10881 = vld [vmem:[%s10839 + $0xf8] sm:$0xf]
  %v10882 = vld [vmem:[%s10839 + $0xfc] sm:$0xff]
  %v10883 = vld [vmem:[%s10839 + $0x104] sm:$0xf]
  %v10884 = vld [vmem:[%s10839 + $0x108] sm:$0xff]
  %v10885 = vld [vmem:[%s10839 + $0x110] sm:$0xf]
  %v10886 = vld [vmem:[%s10839 + $0x114] sm:$0xff]
  %v10887 = vld [vmem:[%s10839 + $0x11c] sm:$0xf]
  %v10888 = vld [vmem:[%s10839 + $0x120] sm:$0xff]
  %v10889 = vld [vmem:[%s10839 + $0x128] sm:$0xf]
  %v10890 = vld [vmem:[%s10839 + $0x12c] sm:$0xff]
  %v10891 = vld [vmem:[%s10839 + $0x134] sm:$0xf]
  %v10892 = vld [vmem:[%s10839 + $0x138] sm:$0xff]
  %v10893 = vld [vmem:[%s10839 + $0x140] sm:$0xf]
  %v10894 = vld [vmem:[%s10839 + $0x144] sm:$0xff]
  %v10895 = vld [vmem:[%s10839 + $0x14c] sm:$0xf]
  %v10896 = vld [vmem:[%s10839 + $0x150] sm:$0xff]
  %v10897 = vld [vmem:[%s10839 + $0x158] sm:$0xf]
  %v10898 = vld [vmem:[%s10839 + $0x15c] sm:$0xff]
  %v10899 = vld [vmem:[%s10839 + $0x164] sm:$0xf]
  %v10900 = vld [vmem:[%s10839 + $0x168] sm:$0xff]
  %v10901 = vld [vmem:[%s10839 + $0x170] sm:$0xf]
  %v10902 = vld [vmem:[%s10839 + $0x174] sm:$0xff]
  %v10903 = vld [vmem:[%s10839 + $0x17c] sm:$0xf]
  %v10904 = vrot.slane %v9619, 3
  %v10905 = vrot.slane %v9620, 3
  %v10972 = vunpack.c.l.b16 %v10840
  %v10973 = vunpack.c.h.b16 %v10840
  %v10974 = vunpack.c.l.b16 %v10841
  %v10975 = vunpack.c.l.b16 %v10842
  %v10976 = vunpack.c.h.b16 %v10842
  %v10977 = vunpack.c.l.b16 %v10843
  %v10978 = vunpack.c.l.b16 %v10844
  %v10979 = vunpack.c.h.b16 %v10844
  %v10980 = vunpack.c.l.b16 %v10845
  %v10981 = vunpack.c.l.b16 %v10846
  %v10982 = vunpack.c.h.b16 %v10846
  %v10983 = vunpack.c.l.b16 %v10847
  %v10984 = vunpack.c.l.b16 %v10848
  %v10985 = vunpack.c.h.b16 %v10848
  %v10986 = vunpack.c.l.b16 %v10849
  %v10987 = vunpack.c.l.b16 %v10850
  %v10988 = vunpack.c.h.b16 %v10850
  %v10989 = vunpack.c.l.b16 %v10851
  %v10990 = vunpack.c.l.b16 %v10852
  %v10991 = vunpack.c.h.b16 %v10852
  %v10992 = vunpack.c.l.b16 %v10853
  %v10993 = vunpack.c.l.b16 %v10854
  %v10994 = vunpack.c.h.b16 %v10854
  %v10995 = vunpack.c.l.b16 %v10855
  %v10996 = vunpack.c.l.b16 %v10856
  %v10997 = vunpack.c.h.b16 %v10856
  %v10998 = vunpack.c.l.b16 %v10857
  %v10999 = vunpack.c.l.b16 %v10858
  %v11000 = vunpack.c.h.b16 %v10858
  %v11001 = vunpack.c.l.b16 %v10859
  %v11002 = vunpack.c.l.b16 %v10860
  %v11003 = vunpack.c.h.b16 %v10860
  %v11004 = vunpack.c.l.b16 %v10861
  %v11005 = vunpack.c.l.b16 %v10862
  %v11006 = vunpack.c.h.b16 %v10862
  %v11007 = vunpack.c.l.b16 %v10863
  %v11008 = vunpack.c.l.b16 %v10864
  %v11009 = vunpack.c.h.b16 %v10864
  %v11010 = vunpack.c.l.b16 %v10865
  %v11011 = vunpack.c.l.b16 %v10866
  %v11012 = vunpack.c.h.b16 %v10866
  %v11013 = vunpack.c.l.b16 %v10867
  %v11014 = vunpack.c.l.b16 %v10868
  %v11015 = vunpack.c.h.b16 %v10868
  %v11016 = vunpack.c.l.b16 %v10869
  %v11017 = vunpack.c.l.b16 %v10870
  %v11018 = vunpack.c.h.b16 %v10870
  %v11019 = vunpack.c.l.b16 %v10871
  %v11020 = vunpack.c.l.b16 %v10872
  %v11021 = vunpack.c.h.b16 %v10872
  %v11022 = vunpack.c.l.b16 %v10873
  %v11023 = vunpack.c.l.b16 %v10874
  %v11024 = vunpack.c.h.b16 %v10874
  %v11025 = vunpack.c.l.b16 %v10875
  %v11026 = vunpack.c.l.b16 %v10876
  %v11027 = vunpack.c.h.b16 %v10876
  %v11028 = vunpack.c.l.b16 %v10877
  %v11029 = vunpack.c.l.b16 %v10878
  %v11030 = vunpack.c.h.b16 %v10878
  %v11031 = vunpack.c.l.b16 %v10879
  %v11032 = vunpack.c.l.b16 %v10880
  %v11033 = vunpack.c.h.b16 %v10880
  %v11034 = vunpack.c.l.b16 %v10881
  %v11035 = vunpack.c.l.b16 %v10882
  %v11036 = vunpack.c.h.b16 %v10882
  %v11037 = vunpack.c.l.b16 %v10883
  %v11038 = vunpack.c.l.b16 %v10884
  %v11039 = vunpack.c.h.b16 %v10884
  %v11040 = vunpack.c.l.b16 %v10885
  %v11041 = vunpack.c.l.b16 %v10886
  %v11042 = vunpack.c.h.b16 %v10886
  %v11043 = vunpack.c.l.b16 %v10887
  %v11044 = vunpack.c.l.b16 %v10888
  %v11045 = vunpack.c.h.b16 %v10888
  %v11046 = vunpack.c.l.b16 %v10889
  %v11047 = vunpack.c.l.b16 %v10890
  %v11048 = vunpack.c.h.b16 %v10890
  %v11049 = vunpack.c.l.b16 %v10891
  %v11050 = vunpack.c.l.b16 %v10892
  %v11051 = vunpack.c.h.b16 %v10892
  %v11052 = vunpack.c.l.b16 %v10893
  %v11053 = vunpack.c.l.b16 %v10894
  %v11054 = vunpack.c.h.b16 %v10894
  %v11055 = vunpack.c.l.b16 %v10895
  %v11056 = vunpack.c.l.b16 %v10896
  %v11057 = vunpack.c.h.b16 %v10896
  %v11058 = vunpack.c.l.b16 %v10897
  %v11059 = vunpack.c.l.b16 %v10898
  %v11060 = vunpack.c.h.b16 %v10898
  %v11061 = vunpack.c.l.b16 %v10899
  %v11062 = vunpack.c.l.b16 %v10900
  %v11063 = vunpack.c.h.b16 %v10900
  %v11064 = vunpack.c.l.b16 %v10901
  %v11065 = vunpack.c.l.b16 %v10902
  %v11066 = vunpack.c.h.b16 %v10902
  %v11067 = vunpack.c.l.b16 %v10903
  %v11068 = vpack.c.b16 %v10975, %v10972
  %v11069 = vpack.c.b16 %v10976, %v10973
  %v11070 = vpack.c.b16 %v10977, %v10974
  %v11071 = vpack.c.b16 %v10981, %v10978
  %v11072 = vpack.c.b16 %v10982, %v10979
  %v11073 = vpack.c.b16 %v10983, %v10980
  %v11074 = vpack.c.b16 %v10987, %v10984
  %v11075 = vpack.c.b16 %v10988, %v10985
  %v11076 = vpack.c.b16 %v10989, %v10986
  %v11077 = vpack.c.b16 %v10993, %v10990
  %v11078 = vpack.c.b16 %v10994, %v10991
  %v11079 = vpack.c.b16 %v10995, %v10992
  %v11080 = vpack.c.b16 %v10999, %v10996
  %v11081 = vpack.c.b16 %v11000, %v10997
  %v11082 = vpack.c.b16 %v11001, %v10998
  %v11083 = vpack.c.b16 %v11005, %v11002
  %v11084 = vpack.c.b16 %v11006, %v11003
  %v11085 = vpack.c.b16 %v11007, %v11004
  %v11086 = vpack.c.b16 %v11011, %v11008
  %v11087 = vpack.c.b16 %v11012, %v11009
  %v11088 = vpack.c.b16 %v11013, %v11010
  %v11089 = vpack.c.b16 %v11017, %v11014
  %v11090 = vpack.c.b16 %v11018, %v11015
  %v11091 = vpack.c.b16 %v11019, %v11016
  %v11092 = vpack.c.b16 %v11023, %v11020
  %v11093 = vpack.c.b16 %v11024, %v11021
  %v11094 = vpack.c.b16 %v11025, %v11022
  %v11095 = vpack.c.b16 %v11029, %v11026
  %v11096 = vpack.c.b16 %v11030, %v11027
  %v11097 = vpack.c.b16 %v11031, %v11028
  %v11098 = vpack.c.b16 %v11035, %v11032
  %v11099 = vpack.c.b16 %v11036, %v11033
  %v11100 = vpack.c.b16 %v11037, %v11034
  %v11101 = vpack.c.b16 %v11041, %v11038
  %v11102 = vpack.c.b16 %v11042, %v11039
  %v11103 = vpack.c.b16 %v11043, %v11040
  %v11104 = vpack.c.b16 %v11047, %v11044
  %v11105 = vpack.c.b16 %v11048, %v11045
  %v11106 = vpack.c.b16 %v11049, %v11046
  %v11107 = vpack.c.b16 %v11053, %v11050
  %v11108 = vpack.c.b16 %v11054, %v11051
  %v11109 = vpack.c.b16 %v11055, %v11052
  %v11110 = vpack.c.b16 %v11059, %v11056
  %v11111 = vpack.c.b16 %v11060, %v11057
  %v11112 = vpack.c.b16 %v11061, %v11058
  %v11113 = vpack.c.b16 %v11065, %v11062
  %v11114 = vpack.c.b16 %v11066, %v11063
  %v11115 = vpack.c.b16 %v11067, %v11064
  %11164 = vmatprep.subr.bf16.mxu0 %v11090
  %11165 = vmatpush1.bf16.msra.mxu0 %v11089
  %11166 = vmatprep.subr.bf16.mxu0 %v11087
  %11167 = vmatpush1.bf16.msra.mxu0 %v11086
  %11168 = vmatprep.subr.bf16.mxu0 %v11084
  %11169 = vmatpush1.bf16.msra.mxu0 %v11083
  %11170 = vmatprep.subr.bf16.mxu0 %v11081
  %11171 = vmatpush1.bf16.msra.mxu0 %v11080
  %11172 = vmatprep.subr.bf16.mxu0 %v11078
  %11173 = vmatpush1.bf16.msra.mxu0 %v11077
  %11174 = vmatprep.subr.bf16.mxu0 %v11075
  %11175 = vmatpush1.bf16.msra.mxu0 %v11074
  %11176 = vmatprep.subr.bf16.mxu0 %v11072
  %11177 = vmatpush1.bf16.msra.mxu0 %v11071
  %11178 = vmatprep.subr.bf16.mxu0 %v11069
  %11179 = vmatpush1.bf16.msra.mxu0 %v11068
  %11180 = vmatprep.subr.bf16.mxu0 %v11114
  %11181 = vmatpush2.bf16.msra.mxu0 %v11113
  %11182 = vmatprep.subr.bf16.mxu0 %v11111
  %11183 = vmatpush2.bf16.msra.mxu0 %v11110
  %11184 = vmatprep.subr.bf16.mxu0 %v11108
  %11185 = vmatpush2.bf16.msra.mxu0 %v11107
  %11186 = vmatprep.subr.bf16.mxu0 %v11105
  %11187 = vmatpush2.bf16.msra.mxu0 %v11104
  %11188 = vmatprep.subr.bf16.mxu0 %v11102
  %11189 = vmatpush2.bf16.msra.mxu0 %v11101
  %11190 = vmatprep.subr.bf16.mxu0 %v11099
  %11191 = vmatpush2.bf16.msra.mxu0 %v11098
  %11192 = vmatprep.subr.bf16.mxu0 %v11096
  %11193 = vmatpush2.bf16.msra.mxu0 %v11095
  %11194 = vmatprep.subr.bf16.mxu0 %v11093
  %11195 = vmatpush2.bf16.msra.mxu0 %v11092
  %11196 = vmatprep.mubr.bf16.mxu0 %v10905
  %11197 = vmatmul.mubr.bf16.gmra.mxu0 %v10904
  %v11198 = vpop.f32.mrf.mxu0
  %v11199 = vadd.f32 0.0, %v11198
  %v11200 = vpop.f32.mrf.mxu0
  %v11201 = vadd.f32 0.0, %v11200
  %v11202 = vpop.f32.mrf.mxu0
  %v11203 = vpop.f32.mrf.mxu0
  %11204 = vdwg.mxu0
  %11205 = vmatprep.subr.bf16.mxu0 0
  %11206 = vmatpush1.bf16.msra.mxu0 %v11091
  %11207 = vmatprep.subr.bf16.mxu0 0
  %11208 = vmatpush1.bf16.msra.mxu0 %v11088
  %11209 = vmatprep.subr.bf16.mxu0 0
  %11210 = vmatpush1.bf16.msra.mxu0 %v11085
  %11211 = vmatprep.subr.bf16.mxu0 0
  %11212 = vmatpush1.bf16.msra.mxu0 %v11082
  %11213 = vmatprep.subr.bf16.mxu0 0
  %11214 = vmatpush1.bf16.msra.mxu0 %v11079
  %11215 = vmatprep.subr.bf16.mxu0 0
  %11216 = vmatpush1.bf16.msra.mxu0 %v11076
  %11217 = vmatprep.subr.bf16.mxu0 0
  %11218 = vmatpush1.bf16.msra.mxu0 %v11073
  %11219 = vmatprep.subr.bf16.mxu0 0
  %11220 = vmatpush1.bf16.msra.mxu0 %v11070
  %11221 = vmatprep.subr.bf16.mxu0 0
  %11222 = vmatpush2.bf16.msra.mxu0 %v11115
  %11223 = vmatprep.subr.bf16.mxu0 0
  %11224 = vmatpush2.bf16.msra.mxu0 %v11112
  %11225 = vmatprep.subr.bf16.mxu0 0
  %11226 = vmatpush2.bf16.msra.mxu0 %v11109
  %11227 = vmatprep.subr.bf16.mxu0 0
  %11228 = vmatpush2.bf16.msra.mxu0 %v11106
  %11229 = vmatprep.subr.bf16.mxu0 0
  %11230 = vmatpush2.bf16.msra.mxu0 %v11103
  %11231 = vmatprep.subr.bf16.mxu0 0
  %11232 = vmatpush2.bf16.msra.mxu0 %v11100
  %11233 = vmatprep.subr.bf16.mxu0 0
  %11234 = vmatpush2.bf16.msra.mxu0 %v11097
  %11235 = vmatprep.subr.bf16.mxu0 0
  %11236 = vmatpush2.bf16.msra.mxu0 %v11094
  %11237 = vmatprep.mubr.bf16.mxu0 %v10905
  %11238 = vmatmul.mubr.bf16.gmra.mxu0 %v10904
  %v11239 = vpop.f32.mrf.mxu0
  %v11240 = vadd.f32 0.0, %v11239
  %v11241 = vpop.f32.mrf.mxu0
  %v11242 = vpop.f32.mrf.mxu0
  %v11243 = vpop.f32.mrf.mxu0
  %11244 = vdwg.mxu0
  %v11245 = vadd.f32 %v10836, %v11199
  %v11246 = vadd.f32 %v10837, %v11201
  %v11247 = vadd.f32 %v10838, %v11240
  %v11248 = vpack.c.bf16 %v9607, %v9607
  %v11249 = vpack.c.bf16 %v9609, %v9609
  %s11250 = scalar_lea.vmem %s4, 1536
  %v11251 = vld [vmem:[%s11250] sm:$0xff]
  %v11252 = vld [vmem:[%s11250 + $0x8] sm:$0xf]
  %v11253 = vld [vmem:[%s11250 + $0xc] sm:$0xff]
  %v11254 = vld [vmem:[%s11250 + $0x14] sm:$0xf]
  %v11255 = vld [vmem:[%s11250 + $0x18] sm:$0xff]
  %v11256 = vld [vmem:[%s11250 + $0x20] sm:$0xf]
  %v11257 = vld [vmem:[%s11250 + $0x24] sm:$0xff]
  %v11258 = vld [vmem:[%s11250 + $0x2c] sm:$0xf]
  %v11259 = vld [vmem:[%s11250 + $0x30] sm:$0xff]
  %v11260 = vld [vmem:[%s11250 + $0x38] sm:$0xf]
  %v11261 = vld [vmem:[%s11250 + $0x3c] sm:$0xff]
  %v11262 = vld [vmem:[%s11250 + $0x44] sm:$0xf]
  %v11263 = vld [vmem:[%s11250 + $0x48] sm:$0xff]
  %v11264 = vld [vmem:[%s11250 + $0x50] sm:$0xf]
  %v11265 = vld [vmem:[%s11250 + $0x54] sm:$0xff]
  %v11266 = vld [vmem:[%s11250 + $0x5c] sm:$0xf]
  %v11267 = vld [vmem:[%s11250 + $0x60] sm:$0xff]
  %v11268 = vld [vmem:[%s11250 + $0x68] sm:$0xf]
  %v11269 = vld [vmem:[%s11250 + $0x6c] sm:$0xff]
  %v11270 = vld [vmem:[%s11250 + $0x74] sm:$0xf]
  %v11271 = vld [vmem:[%s11250 + $0x78] sm:$0xff]
  %v11272 = vld [vmem:[%s11250 + $0x80] sm:$0xf]
  %v11273 = vld [vmem:[%s11250 + $0x84] sm:$0xff]
  %v11274 = vld [vmem:[%s11250 + $0x8c] sm:$0xf]
  %v11275 = vld [vmem:[%s11250 + $0x90] sm:$0xff]
  %v11276 = vld [vmem:[%s11250 + $0x98] sm:$0xf]
  %v11277 = vld [vmem:[%s11250 + $0x9c] sm:$0xff]
  %v11278 = vld [vmem:[%s11250 + $0xa4] sm:$0xf]
  %v11279 = vld [vmem:[%s11250 + $0xa8] sm:$0xff]
  %v11280 = vld [vmem:[%s11250 + $0xb0] sm:$0xf]
  %v11281 = vld [vmem:[%s11250 + $0xb4] sm:$0xff]
  %v11282 = vld [vmem:[%s11250 + $0xbc] sm:$0xf]
  %v11283 = vld [vmem:[%s11250 + $0xc0] sm:$0xff]
  %v11284 = vld [vmem:[%s11250 + $0xc8] sm:$0xf]
  %v11285 = vld [vmem:[%s11250 + $0xcc] sm:$0xff]
  %v11286 = vld [vmem:[%s11250 + $0xd4] sm:$0xf]
  %v11287 = vld [vmem:[%s11250 + $0xd8] sm:$0xff]
  %v11288 = vld [vmem:[%s11250 + $0xe0] sm:$0xf]
  %v11289 = vld [vmem:[%s11250 + $0xe4] sm:$0xff]
  %v11290 = vld [vmem:[%s11250 + $0xec] sm:$0xf]
  %v11291 = vld [vmem:[%s11250 + $0xf0] sm:$0xff]
  %v11292 = vld [vmem:[%s11250 + $0xf8] sm:$0xf]
  %v11293 = vld [vmem:[%s11250 + $0xfc] sm:$0xff]
  %v11294 = vld [vmem:[%s11250 + $0x104] sm:$0xf]
  %v11295 = vld [vmem:[%s11250 + $0x108] sm:$0xff]
  %v11296 = vld [vmem:[%s11250 + $0x110] sm:$0xf]
  %v11297 = vld [vmem:[%s11250 + $0x114] sm:$0xff]
  %v11298 = vld [vmem:[%s11250 + $0x11c] sm:$0xf]
  %v11299 = vld [vmem:[%s11250 + $0x120] sm:$0xff]
  %v11300 = vld [vmem:[%s11250 + $0x128] sm:$0xf]
  %v11301 = vld [vmem:[%s11250 + $0x12c] sm:$0xff]
  %v11302 = vld [vmem:[%s11250 + $0x134] sm:$0xf]
  %v11303 = vld [vmem:[%s11250 + $0x138] sm:$0xff]
  %v11304 = vld [vmem:[%s11250 + $0x140] sm:$0xf]
  %v11305 = vld [vmem:[%s11250 + $0x144] sm:$0xff]
  %v11306 = vld [vmem:[%s11250 + $0x14c] sm:$0xf]
  %v11307 = vld [vmem:[%s11250 + $0x150] sm:$0xff]
  %v11308 = vld [vmem:[%s11250 + $0x158] sm:$0xf]
  %v11309 = vld [vmem:[%s11250 + $0x15c] sm:$0xff]
  %v11310 = vld [vmem:[%s11250 + $0x164] sm:$0xf]
  %v11311 = vld [vmem:[%s11250 + $0x168] sm:$0xff]
  %v11312 = vld [vmem:[%s11250 + $0x170] sm:$0xf]
  %v11313 = vld [vmem:[%s11250 + $0x174] sm:$0xff]
  %v11314 = vld [vmem:[%s11250 + $0x17c] sm:$0xf]
  %v11379 = vunpack.c.l.b16 %v11251
  %v11380 = vunpack.c.h.b16 %v11251
  %v11381 = vunpack.c.l.b16 %v11252
  %v11382 = vunpack.c.l.b16 %v11253
  %v11383 = vunpack.c.h.b16 %v11253
  %v11384 = vunpack.c.l.b16 %v11254
  %v11385 = vunpack.c.l.b16 %v11255
  %v11386 = vunpack.c.h.b16 %v11255
  %v11387 = vunpack.c.l.b16 %v11256
  %v11388 = vunpack.c.l.b16 %v11257
  %v11389 = vunpack.c.h.b16 %v11257
  %v11390 = vunpack.c.l.b16 %v11258
  %v11391 = vunpack.c.l.b16 %v11259
  %v11392 = vunpack.c.h.b16 %v11259
  %v11393 = vunpack.c.l.b16 %v11260
  %v11394 = vunpack.c.l.b16 %v11261
  %v11395 = vunpack.c.h.b16 %v11261
  %v11396 = vunpack.c.l.b16 %v11262
  %v11397 = vunpack.c.l.b16 %v11263
  %v11398 = vunpack.c.h.b16 %v11263
  %v11399 = vunpack.c.l.b16 %v11264
  %v11400 = vunpack.c.l.b16 %v11265
  %v11401 = vunpack.c.h.b16 %v11265
  %v11402 = vunpack.c.l.b16 %v11266
  %v11403 = vunpack.c.l.b16 %v11267
  %v11404 = vunpack.c.h.b16 %v11267
  %v11405 = vunpack.c.l.b16 %v11268
  %v11406 = vunpack.c.l.b16 %v11269
  %v11407 = vunpack.c.h.b16 %v11269
  %v11408 = vunpack.c.l.b16 %v11270
  %v11409 = vunpack.c.l.b16 %v11271
  %v11410 = vunpack.c.h.b16 %v11271
  %v11411 = vunpack.c.l.b16 %v11272
  %v11412 = vunpack.c.l.b16 %v11273
  %v11413 = vunpack.c.h.b16 %v11273
  %v11414 = vunpack.c.l.b16 %v11274
  %v11415 = vunpack.c.l.b16 %v11275
  %v11416 = vunpack.c.h.b16 %v11275
  %v11417 = vunpack.c.l.b16 %v11276
  %v11418 = vunpack.c.l.b16 %v11277
  %v11419 = vunpack.c.h.b16 %v11277
  %v11420 = vunpack.c.l.b16 %v11278
  %v11421 = vunpack.c.l.b16 %v11279
  %v11422 = vunpack.c.h.b16 %v11279
  %v11423 = vunpack.c.l.b16 %v11280
  %v11424 = vunpack.c.l.b16 %v11281
  %v11425 = vunpack.c.h.b16 %v11281
  %v11426 = vunpack.c.l.b16 %v11282
  %v11427 = vunpack.c.l.b16 %v11283
  %v11428 = vunpack.c.h.b16 %v11283
  %v11429 = vunpack.c.l.b16 %v11284
  %v11430 = vunpack.c.l.b16 %v11285
  %v11431 = vunpack.c.h.b16 %v11285
  %v11432 = vunpack.c.l.b16 %v11286
  %v11433 = vunpack.c.l.b16 %v11287
  %v11434 = vunpack.c.h.b16 %v11287
  %v11435 = vunpack.c.l.b16 %v11288
  %v11436 = vunpack.c.l.b16 %v11289
  %v11437 = vunpack.c.h.b16 %v11289
  %v11438 = vunpack.c.l.b16 %v11290
  %v11439 = vunpack.c.l.b16 %v11291
  %v11440 = vunpack.c.h.b16 %v11291
  %v11441 = vunpack.c.l.b16 %v11292
  %v11442 = vunpack.c.l.b16 %v11293
  %v11443 = vunpack.c.h.b16 %v11293
  %v11444 = vunpack.c.l.b16 %v11294
  %v11445 = vunpack.c.l.b16 %v11295
  %v11446 = vunpack.c.h.b16 %v11295
  %v11447 = vunpack.c.l.b16 %v11296
  %v11448 = vunpack.c.l.b16 %v11297
  %v11449 = vunpack.c.h.b16 %v11297
  %v11450 = vunpack.c.l.b16 %v11298
  %v11451 = vunpack.c.l.b16 %v11299
  %v11452 = vunpack.c.h.b16 %v11299
  %v11453 = vunpack.c.l.b16 %v11300
  %v11454 = vunpack.c.l.b16 %v11301
  %v11455 = vunpack.c.h.b16 %v11301
  %v11456 = vunpack.c.l.b16 %v11302
  %v11457 = vunpack.c.l.b16 %v11303
  %v11458 = vunpack.c.h.b16 %v11303
  %v11459 = vunpack.c.l.b16 %v11304
  %v11460 = vunpack.c.l.b16 %v11305
  %v11461 = vunpack.c.h.b16 %v11305
  %v11462 = vunpack.c.l.b16 %v11306
  %v11463 = vunpack.c.l.b16 %v11307
  %v11464 = vunpack.c.h.b16 %v11307
  %v11465 = vunpack.c.l.b16 %v11308
  %v11466 = vunpack.c.l.b16 %v11309
  %v11467 = vunpack.c.h.b16 %v11309
  %v11468 = vunpack.c.l.b16 %v11310
  %v11469 = vunpack.c.l.b16 %v11311
  %v11470 = vunpack.c.h.b16 %v11311
  %v11471 = vunpack.c.l.b16 %v11312
  %v11472 = vunpack.c.l.b16 %v11313
  %v11473 = vunpack.c.h.b16 %v11313
  %v11474 = vunpack.c.l.b16 %v11314
  %v11475 = vpack.c.b16 %v11382, %v11379
  %v11476 = vpack.c.b16 %v11383, %v11380
  %v11477 = vpack.c.b16 %v11384, %v11381
  %v11478 = vpack.c.b16 %v11388, %v11385
  %v11479 = vpack.c.b16 %v11389, %v11386
  %v11480 = vpack.c.b16 %v11390, %v11387
  %v11481 = vpack.c.b16 %v11394, %v11391
  %v11482 = vpack.c.b16 %v11395, %v11392
  %v11483 = vpack.c.b16 %v11396, %v11393
  %v11484 = vpack.c.b16 %v11400, %v11397
  %v11485 = vpack.c.b16 %v11401, %v11398
  %v11486 = vpack.c.b16 %v11402, %v11399
  %v11487 = vpack.c.b16 %v11406, %v11403
  %v11488 = vpack.c.b16 %v11407, %v11404
  %v11489 = vpack.c.b16 %v11408, %v11405
  %v11490 = vpack.c.b16 %v11412, %v11409
  %v11491 = vpack.c.b16 %v11413, %v11410
  %v11492 = vpack.c.b16 %v11414, %v11411
  %v11493 = vpack.c.b16 %v11418, %v11415
  %v11494 = vpack.c.b16 %v11419, %v11416
  %v11495 = vpack.c.b16 %v11420, %v11417
  %v11496 = vpack.c.b16 %v11424, %v11421
  %v11497 = vpack.c.b16 %v11425, %v11422
  %v11498 = vpack.c.b16 %v11426, %v11423
  %v11499 = vpack.c.b16 %v11430, %v11427
  %v11500 = vpack.c.b16 %v11431, %v11428
  %v11501 = vpack.c.b16 %v11432, %v11429
  %v11502 = vpack.c.b16 %v11436, %v11433
  %v11503 = vpack.c.b16 %v11437, %v11434
  %v11504 = vpack.c.b16 %v11438, %v11435
  %v11505 = vpack.c.b16 %v11442, %v11439
  %v11506 = vpack.c.b16 %v11443, %v11440
  %v11507 = vpack.c.b16 %v11444, %v11441
  %v11508 = vpack.c.b16 %v11448, %v11445
  %v11509 = vpack.c.b16 %v11449, %v11446
  %v11510 = vpack.c.b16 %v11450, %v11447
  %v11511 = vpack.c.b16 %v11454, %v11451
  %v11512 = vpack.c.b16 %v11455, %v11452
  %v11513 = vpack.c.b16 %v11456, %v11453
  %v11514 = vpack.c.b16 %v11460, %v11457
  %v11515 = vpack.c.b16 %v11461, %v11458
  %v11516 = vpack.c.b16 %v11462, %v11459
  %v11517 = vpack.c.b16 %v11466, %v11463
  %v11518 = vpack.c.b16 %v11467, %v11464
  %v11519 = vpack.c.b16 %v11468, %v11465
  %v11520 = vpack.c.b16 %v11472, %v11469
  %v11521 = vpack.c.b16 %v11473, %v11470
  %v11522 = vpack.c.b16 %v11474, %v11471
  %11571 = vmatprep.subr.bf16.mxu0 %v11497
  %11572 = vmatpush1.bf16.msra.mxu0 %v11496
  %11573 = vmatprep.subr.bf16.mxu0 %v11494
  %11574 = vmatpush1.bf16.msra.mxu0 %v11493
  %11575 = vmatprep.subr.bf16.mxu0 %v11491
  %11576 = vmatpush1.bf16.msra.mxu0 %v11490
  %11577 = vmatprep.subr.bf16.mxu0 %v11488
  %11578 = vmatpush1.bf16.msra.mxu0 %v11487
  %11579 = vmatprep.subr.bf16.mxu0 %v11485
  %11580 = vmatpush1.bf16.msra.mxu0 %v11484
  %11581 = vmatprep.subr.bf16.mxu0 %v11482
  %11582 = vmatpush1.bf16.msra.mxu0 %v11481
  %11583 = vmatprep.subr.bf16.mxu0 %v11479
  %11584 = vmatpush1.bf16.msra.mxu0 %v11478
  %11585 = vmatprep.subr.bf16.mxu0 %v11476
  %11586 = vmatpush1.bf16.msra.mxu0 %v11475
  %11587 = vmatprep.subr.bf16.mxu0 %v11521
  %11588 = vmatpush2.bf16.msra.mxu0 %v11520
  %11589 = vmatprep.subr.bf16.mxu0 %v11518
  %11590 = vmatpush2.bf16.msra.mxu0 %v11517
  %11591 = vmatprep.subr.bf16.mxu0 %v11515
  %11592 = vmatpush2.bf16.msra.mxu0 %v11514
  %11593 = vmatprep.subr.bf16.mxu0 %v11512
  %11594 = vmatpush2.bf16.msra.mxu0 %v11511
  %11595 = vmatprep.subr.bf16.mxu0 %v11509
  %11596 = vmatpush2.bf16.msra.mxu0 %v11508
  %11597 = vmatprep.subr.bf16.mxu0 %v11506
  %11598 = vmatpush2.bf16.msra.mxu0 %v11505
  %11599 = vmatprep.subr.bf16.mxu0 %v11503
  %11600 = vmatpush2.bf16.msra.mxu0 %v11502
  %11601 = vmatprep.subr.bf16.mxu0 %v11500
  %11602 = vmatpush2.bf16.msra.mxu0 %v11499
  %11603 = vmatprep.mubr.bf16.mxu0 %v11249
  %11604 = vmatmul.mubr.bf16.gmra.mxu0 %v11248
  %v11605 = vpop.f32.mrf.mxu0
  %v11606 = vadd.f32 0.0, %v11605
  %v11607 = vpop.f32.mrf.mxu0
  %v11608 = vadd.f32 0.0, %v11607
  %v11609 = vpop.f32.mrf.mxu0
  %v11610 = vpop.f32.mrf.mxu0
  %11611 = vdwg.mxu0
  %11612 = vmatprep.subr.bf16.mxu0 0
  %11613 = vmatpush1.bf16.msra.mxu0 %v11498
  %11614 = vmatprep.subr.bf16.mxu0 0
  %11615 = vmatpush1.bf16.msra.mxu0 %v11495
  %11616 = vmatprep.subr.bf16.mxu0 0
  %11617 = vmatpush1.bf16.msra.mxu0 %v11492
  %11618 = vmatprep.subr.bf16.mxu0 0
  %11619 = vmatpush1.bf16.msra.mxu0 %v11489
  %11620 = vmatprep.subr.bf16.mxu0 0
  %11621 = vmatpush1.bf16.msra.mxu0 %v11486
  %11622 = vmatprep.subr.bf16.mxu0 0
  %11623 = vmatpush1.bf16.msra.mxu0 %v11483
  %11624 = vmatprep.subr.bf16.mxu0 0
  %11625 = vmatpush1.bf16.msra.mxu0 %v11480
  %11626 = vmatprep.subr.bf16.mxu0 0
  %11627 = vmatpush1.bf16.msra.mxu0 %v11477
  %11628 = vmatprep.subr.bf16.mxu0 0
  %11629 = vmatpush2.bf16.msra.mxu0 %v11522
  %11630 = vmatprep.subr.bf16.mxu0 0
  %11631 = vmatpush2.bf16.msra.mxu0 %v11519
  %11632 = vmatprep.subr.bf16.mxu0 0
  %11633 = vmatpush2.bf16.msra.mxu0 %v11516
  %11634 = vmatprep.subr.bf16.mxu0 0
  %11635 = vmatpush2.bf16.msra.mxu0 %v11513
  %11636 = vmatprep.subr.bf16.mxu0 0
  %11637 = vmatpush2.bf16.msra.mxu0 %v11510
  %11638 = vmatprep.subr.bf16.mxu0 0
  %11639 = vmatpush2.bf16.msra.mxu0 %v11507
  %11640 = vmatprep.subr.bf16.mxu0 0
  %11641 = vmatpush2.bf16.msra.mxu0 %v11504
  %11642 = vmatprep.subr.bf16.mxu0 0
  %11643 = vmatpush2.bf16.msra.mxu0 %v11501
  %11644 = vmatprep.mubr.bf16.mxu0 %v11249
  %11645 = vmatmul.mubr.bf16.gmra.mxu0 %v11248
  %v11646 = vpop.f32.mrf.mxu0
  %v11647 = vadd.f32 0.0, %v11646
  %v11648 = vpop.f32.mrf.mxu0
  %v11649 = vpop.f32.mrf.mxu0
  %v11650 = vpop.f32.mrf.mxu0
  %11651 = vdwg.mxu0
  %v11652 = vadd.f32 %v11245, %v11606
  %v11653 = vadd.f32 %v11246, %v11608
  %v11654 = vadd.f32 %v11247, %v11647
  %s11655 = scalar_lea.vmem %s4, 1920
  %v11656 = vld [vmem:[%s11655] sm:$0xff]
  %v11657 = vld [vmem:[%s11655 + $0x8] sm:$0xf]
  %v11658 = vld [vmem:[%s11655 + $0xc] sm:$0xff]
  %v11659 = vld [vmem:[%s11655 + $0x14] sm:$0xf]
  %v11660 = vld [vmem:[%s11655 + $0x18] sm:$0xff]
  %v11661 = vld [vmem:[%s11655 + $0x20] sm:$0xf]
  %v11662 = vld [vmem:[%s11655 + $0x24] sm:$0xff]
  %v11663 = vld [vmem:[%s11655 + $0x2c] sm:$0xf]
  %v11664 = vld [vmem:[%s11655 + $0x30] sm:$0xff]
  %v11665 = vld [vmem:[%s11655 + $0x38] sm:$0xf]
  %v11666 = vld [vmem:[%s11655 + $0x3c] sm:$0xff]
  %v11667 = vld [vmem:[%s11655 + $0x44] sm:$0xf]
  %v11668 = vld [vmem:[%s11655 + $0x48] sm:$0xff]
  %v11669 = vld [vmem:[%s11655 + $0x50] sm:$0xf]
  %v11670 = vld [vmem:[%s11655 + $0x54] sm:$0xff]
  %v11671 = vld [vmem:[%s11655 + $0x5c] sm:$0xf]
  %v11672 = vld [vmem:[%s11655 + $0x60] sm:$0xff]
  %v11673 = vld [vmem:[%s11655 + $0x68] sm:$0xf]
  %v11674 = vld [vmem:[%s11655 + $0x6c] sm:$0xff]
  %v11675 = vld [vmem:[%s11655 + $0x74] sm:$0xf]
  %v11676 = vld [vmem:[%s11655 + $0x78] sm:$0xff]
  %v11677 = vld [vmem:[%s11655 + $0x80] sm:$0xf]
  %v11678 = vld [vmem:[%s11655 + $0x84] sm:$0xff]
  %v11679 = vld [vmem:[%s11655 + $0x8c] sm:$0xf]
  %v11680 = vld [vmem:[%s11655 + $0x90] sm:$0xff]
  %v11681 = vld [vmem:[%s11655 + $0x98] sm:$0xf]
  %v11682 = vld [vmem:[%s11655 + $0x9c] sm:$0xff]
  %v11683 = vld [vmem:[%s11655 + $0xa4] sm:$0xf]
  %v11684 = vld [vmem:[%s11655 + $0xa8] sm:$0xff]
  %v11685 = vld [vmem:[%s11655 + $0xb0] sm:$0xf]
  %v11686 = vld [vmem:[%s11655 + $0xb4] sm:$0xff]
  %v11687 = vld [vmem:[%s11655 + $0xbc] sm:$0xf]
  %v11688 = vld [vmem:[%s11655 + $0xc0] sm:$0xff]
  %v11689 = vld [vmem:[%s11655 + $0xc8] sm:$0xf]
  %v11690 = vld [vmem:[%s11655 + $0xcc] sm:$0xff]
  %v11691 = vld [vmem:[%s11655 + $0xd4] sm:$0xf]
  %v11692 = vld [vmem:[%s11655 + $0xd8] sm:$0xff]
  %v11693 = vld [vmem:[%s11655 + $0xe0] sm:$0xf]
  %v11694 = vld [vmem:[%s11655 + $0xe4] sm:$0xff]
  %v11695 = vld [vmem:[%s11655 + $0xec] sm:$0xf]
  %v11696 = vld [vmem:[%s11655 + $0xf0] sm:$0xff]
  %v11697 = vld [vmem:[%s11655 + $0xf8] sm:$0xf]
  %v11698 = vld [vmem:[%s11655 + $0xfc] sm:$0xff]
  %v11699 = vld [vmem:[%s11655 + $0x104] sm:$0xf]
  %v11700 = vld [vmem:[%s11655 + $0x108] sm:$0xff]
  %v11701 = vld [vmem:[%s11655 + $0x110] sm:$0xf]
  %v11702 = vld [vmem:[%s11655 + $0x114] sm:$0xff]
  %v11703 = vld [vmem:[%s11655 + $0x11c] sm:$0xf]
  %v11704 = vld [vmem:[%s11655 + $0x120] sm:$0xff]
  %v11705 = vld [vmem:[%s11655 + $0x128] sm:$0xf]
  %v11706 = vld [vmem:[%s11655 + $0x12c] sm:$0xff]
  %v11707 = vld [vmem:[%s11655 + $0x134] sm:$0xf]
  %v11708 = vld [vmem:[%s11655 + $0x138] sm:$0xff]
  %v11709 = vld [vmem:[%s11655 + $0x140] sm:$0xf]
  %v11710 = vld [vmem:[%s11655 + $0x144] sm:$0xff]
  %v11711 = vld [vmem:[%s11655 + $0x14c] sm:$0xf]
  %v11712 = vld [vmem:[%s11655 + $0x150] sm:$0xff]
  %v11713 = vld [vmem:[%s11655 + $0x158] sm:$0xf]
  %v11714 = vld [vmem:[%s11655 + $0x15c] sm:$0xff]
  %v11715 = vld [vmem:[%s11655 + $0x164] sm:$0xf]
  %v11716 = vld [vmem:[%s11655 + $0x168] sm:$0xff]
  %v11717 = vld [vmem:[%s11655 + $0x170] sm:$0xf]
  %v11718 = vld [vmem:[%s11655 + $0x174] sm:$0xff]
  %v11719 = vld [vmem:[%s11655 + $0x17c] sm:$0xf]
  %v11722 = vrot.slane %v11248, 1
  %v11723 = vrot.slane %v11249, 1
  %v11790 = vunpack.c.l.b16 %v11656
  %v11791 = vunpack.c.h.b16 %v11656
  %v11792 = vunpack.c.l.b16 %v11657
  %v11793 = vunpack.c.l.b16 %v11658
  %v11794 = vunpack.c.h.b16 %v11658
  %v11795 = vunpack.c.l.b16 %v11659
  %v11796 = vunpack.c.l.b16 %v11660
  %v11797 = vunpack.c.h.b16 %v11660
  %v11798 = vunpack.c.l.b16 %v11661
  %v11799 = vunpack.c.l.b16 %v11662
  %v11800 = vunpack.c.h.b16 %v11662
  %v11801 = vunpack.c.l.b16 %v11663
  %v11802 = vunpack.c.l.b16 %v11664
  %v11803 = vunpack.c.h.b16 %v11664
  %v11804 = vunpack.c.l.b16 %v11665
  %v11805 = vunpack.c.l.b16 %v11666
  %v11806 = vunpack.c.h.b16 %v11666
  %v11807 = vunpack.c.l.b16 %v11667
  %v11808 = vunpack.c.l.b16 %v11668
  %v11809 = vunpack.c.h.b16 %v11668
  %v11810 = vunpack.c.l.b16 %v11669
  %v11811 = vunpack.c.l.b16 %v11670
  %v11812 = vunpack.c.h.b16 %v11670
  %v11813 = vunpack.c.l.b16 %v11671
  %v11814 = vunpack.c.l.b16 %v11672
  %v11815 = vunpack.c.h.b16 %v11672
  %v11816 = vunpack.c.l.b16 %v11673
  %v11817 = vunpack.c.l.b16 %v11674
  %v11818 = vunpack.c.h.b16 %v11674
  %v11819 = vunpack.c.l.b16 %v11675
  %v11820 = vunpack.c.l.b16 %v11676
  %v11821 = vunpack.c.h.b16 %v11676
  %v11822 = vunpack.c.l.b16 %v11677
  %v11823 = vunpack.c.l.b16 %v11678
  %v11824 = vunpack.c.h.b16 %v11678
  %v11825 = vunpack.c.l.b16 %v11679
  %v11826 = vunpack.c.l.b16 %v11680
  %v11827 = vunpack.c.h.b16 %v11680
  %v11828 = vunpack.c.l.b16 %v11681
  %v11829 = vunpack.c.l.b16 %v11682
  %v11830 = vunpack.c.h.b16 %v11682
  %v11831 = vunpack.c.l.b16 %v11683
  %v11832 = vunpack.c.l.b16 %v11684
  %v11833 = vunpack.c.h.b16 %v11684
  %v11834 = vunpack.c.l.b16 %v11685
  %v11835 = vunpack.c.l.b16 %v11686
  %v11836 = vunpack.c.h.b16 %v11686
  %v11837 = vunpack.c.l.b16 %v11687
  %v11838 = vunpack.c.l.b16 %v11688
  %v11839 = vunpack.c.h.b16 %v11688
  %v11840 = vunpack.c.l.b16 %v11689
  %v11841 = vunpack.c.l.b16 %v11690
  %v11842 = vunpack.c.h.b16 %v11690
  %v11843 = vunpack.c.l.b16 %v11691
  %v11844 = vunpack.c.l.b16 %v11692
  %v11845 = vunpack.c.h.b16 %v11692
  %v11846 = vunpack.c.l.b16 %v11693
  %v11847 = vunpack.c.l.b16 %v11694
  %v11848 = vunpack.c.h.b16 %v11694
  %v11849 = vunpack.c.l.b16 %v11695
  %v11850 = vunpack.c.l.b16 %v11696
  %v11851 = vunpack.c.h.b16 %v11696
  %v11852 = vunpack.c.l.b16 %v11697
  %v11853 = vunpack.c.l.b16 %v11698
  %v11854 = vunpack.c.h.b16 %v11698
  %v11855 = vunpack.c.l.b16 %v11699
  %v11856 = vunpack.c.l.b16 %v11700
  %v11857 = vunpack.c.h.b16 %v11700
  %v11858 = vunpack.c.l.b16 %v11701
  %v11859 = vunpack.c.l.b16 %v11702
  %v11860 = vunpack.c.h.b16 %v11702
  %v11861 = vunpack.c.l.b16 %v11703
  %v11862 = vunpack.c.l.b16 %v11704
  %v11863 = vunpack.c.h.b16 %v11704
  %v11864 = vunpack.c.l.b16 %v11705
  %v11865 = vunpack.c.l.b16 %v11706
  %v11866 = vunpack.c.h.b16 %v11706
  %v11867 = vunpack.c.l.b16 %v11707
  %v11868 = vunpack.c.l.b16 %v11708
  %v11869 = vunpack.c.h.b16 %v11708
  %v11870 = vunpack.c.l.b16 %v11709
  %v11871 = vunpack.c.l.b16 %v11710
  %v11872 = vunpack.c.h.b16 %v11710
  %v11873 = vunpack.c.l.b16 %v11711
  %v11874 = vunpack.c.l.b16 %v11712
  %v11875 = vunpack.c.h.b16 %v11712
  %v11876 = vunpack.c.l.b16 %v11713
  %v11877 = vunpack.c.l.b16 %v11714
  %v11878 = vunpack.c.h.b16 %v11714
  %v11879 = vunpack.c.l.b16 %v11715
  %v11880 = vunpack.c.l.b16 %v11716
  %v11881 = vunpack.c.h.b16 %v11716
  %v11882 = vunpack.c.l.b16 %v11717
  %v11883 = vunpack.c.l.b16 %v11718
  %v11884 = vunpack.c.h.b16 %v11718
  %v11885 = vunpack.c.l.b16 %v11719
  %v11886 = vpack.c.b16 %v11793, %v11790
  %v11887 = vpack.c.b16 %v11794, %v11791
  %v11888 = vpack.c.b16 %v11795, %v11792
  %v11889 = vpack.c.b16 %v11799, %v11796
  %v11890 = vpack.c.b16 %v11800, %v11797
  %v11891 = vpack.c.b16 %v11801, %v11798
  %v11892 = vpack.c.b16 %v11805, %v11802
  %v11893 = vpack.c.b16 %v11806, %v11803
  %v11894 = vpack.c.b16 %v11807, %v11804
  %v11895 = vpack.c.b16 %v11811, %v11808
  %v11896 = vpack.c.b16 %v11812, %v11809
  %v11897 = vpack.c.b16 %v11813, %v11810
  %v11898 = vpack.c.b16 %v11817, %v11814
  %v11899 = vpack.c.b16 %v11818, %v11815
  %v11900 = vpack.c.b16 %v11819, %v11816
  %v11901 = vpack.c.b16 %v11823, %v11820
  %v11902 = vpack.c.b16 %v11824, %v11821
  %v11903 = vpack.c.b16 %v11825, %v11822
  %v11904 = vpack.c.b16 %v11829, %v11826
  %v11905 = vpack.c.b16 %v11830, %v11827
  %v11906 = vpack.c.b16 %v11831, %v11828
  %v11907 = vpack.c.b16 %v11835, %v11832
  %v11908 = vpack.c.b16 %v11836, %v11833
  %v11909 = vpack.c.b16 %v11837, %v11834
  %v11910 = vpack.c.b16 %v11841, %v11838
  %v11911 = vpack.c.b16 %v11842, %v11839
  %v11912 = vpack.c.b16 %v11843, %v11840
  %v11913 = vpack.c.b16 %v11847, %v11844
  %v11914 = vpack.c.b16 %v11848, %v11845
  %v11915 = vpack.c.b16 %v11849, %v11846
  %v11916 = vpack.c.b16 %v11853, %v11850
  %v11917 = vpack.c.b16 %v11854, %v11851
  %v11918 = vpack.c.b16 %v11855, %v11852
  %v11919 = vpack.c.b16 %v11859, %v11856
  %v11920 = vpack.c.b16 %v11860, %v11857
  %v11921 = vpack.c.b16 %v11861, %v11858
  %v11922 = vpack.c.b16 %v11865, %v11862
  %v11923 = vpack.c.b16 %v11866, %v11863
  %v11924 = vpack.c.b16 %v11867, %v11864
  %v11925 = vpack.c.b16 %v11871, %v11868
  %v11926 = vpack.c.b16 %v11872, %v11869
  %v11927 = vpack.c.b16 %v11873, %v11870
  %v11928 = vpack.c.b16 %v11877, %v11874
  %v11929 = vpack.c.b16 %v11878, %v11875
  %v11930 = vpack.c.b16 %v11879, %v11876
  %v11931 = vpack.c.b16 %v11883, %v11880
  %v11932 = vpack.c.b16 %v11884, %v11881
  %v11933 = vpack.c.b16 %v11885, %v11882
  %11982 = vmatprep.subr.bf16.mxu0 %v11908
  %11983 = vmatpush1.bf16.msra.mxu0 %v11907
  %11984 = vmatprep.subr.bf16.mxu0 %v11905
  %11985 = vmatpush1.bf16.msra.mxu0 %v11904
  %11986 = vmatprep.subr.bf16.mxu0 %v11902
  %11987 = vmatpush1.bf16.msra.mxu0 %v11901
  %11988 = vmatprep.subr.bf16.mxu0 %v11899
  %11989 = vmatpush1.bf16.msra.mxu0 %v11898
  %11990 = vmatprep.subr.bf16.mxu0 %v11896
  %11991 = vmatpush1.bf16.msra.mxu0 %v11895
  %11992 = vmatprep.subr.bf16.mxu0 %v11893
  %11993 = vmatpush1.bf16.msra.mxu0 %v11892
  %11994 = vmatprep.subr.bf16.mxu0 %v11890
  %11995 = vmatpush1.bf16.msra.mxu0 %v11889
  %11996 = vmatprep.subr.bf16.mxu0 %v11887
  %11997 = vmatpush1.bf16.msra.mxu0 %v11886
  %11998 = vmatprep.subr.bf16.mxu0 %v11932
  %11999 = vmatpush2.bf16.msra.mxu0 %v11931
  %12000 = vmatprep.subr.bf16.mxu0 %v11929
  %12001 = vmatpush2.bf16.msra.mxu0 %v11928
  %12002 = vmatprep.subr.bf16.mxu0 %v11926
  %12003 = vmatpush2.bf16.msra.mxu0 %v11925
  %12004 = vmatprep.subr.bf16.mxu0 %v11923
  %12005 = vmatpush2.bf16.msra.mxu0 %v11922
  %12006 = vmatprep.subr.bf16.mxu0 %v11920
  %12007 = vmatpush2.bf16.msra.mxu0 %v11919
  %12008 = vmatprep.subr.bf16.mxu0 %v11917
  %12009 = vmatpush2.bf16.msra.mxu0 %v11916
  %12010 = vmatprep.subr.bf16.mxu0 %v11914
  %12011 = vmatpush2.bf16.msra.mxu0 %v11913
  %12012 = vmatprep.subr.bf16.mxu0 %v11911
  %12013 = vmatpush2.bf16.msra.mxu0 %v11910
  %12014 = vmatprep.mubr.bf16.mxu0 %v11723
  %12015 = vmatmul.mubr.bf16.gmra.mxu0 %v11722
  %v12016 = vpop.f32.mrf.mxu0
  %v12017 = vadd.f32 0.0, %v12016
  %v12018 = vpop.f32.mrf.mxu0
  %v12019 = vadd.f32 0.0, %v12018
  %v12020 = vpop.f32.mrf.mxu0
  %v12021 = vpop.f32.mrf.mxu0
  %12022 = vdwg.mxu0
  %12023 = vmatprep.subr.bf16.mxu0 0
  %12024 = vmatpush1.bf16.msra.mxu0 %v11909
  %12025 = vmatprep.subr.bf16.mxu0 0
  %12026 = vmatpush1.bf16.msra.mxu0 %v11906
  %12027 = vmatprep.subr.bf16.mxu0 0
  %12028 = vmatpush1.bf16.msra.mxu0 %v11903
  %12029 = vmatprep.subr.bf16.mxu0 0
  %12030 = vmatpush1.bf16.msra.mxu0 %v11900
  %12031 = vmatprep.subr.bf16.mxu0 0
  %12032 = vmatpush1.bf16.msra.mxu0 %v11897
  %12033 = vmatprep.subr.bf16.mxu0 0
  %12034 = vmatpush1.bf16.msra.mxu0 %v11894
  %12035 = vmatprep.subr.bf16.mxu0 0
  %12036 = vmatpush1.bf16.msra.mxu0 %v11891
  %12037 = vmatprep.subr.bf16.mxu0 0
  %12038 = vmatpush1.bf16.msra.mxu0 %v11888
  %12039 = vmatprep.subr.bf16.mxu0 0
  %12040 = vmatpush2.bf16.msra.mxu0 %v11933
  %12041 = vmatprep.subr.bf16.mxu0 0
  %12042 = vmatpush2.bf16.msra.mxu0 %v11930
  %12043 = vmatprep.subr.bf16.mxu0 0
  %12044 = vmatpush2.bf16.msra.mxu0 %v11927
  %12045 = vmatprep.subr.bf16.mxu0 0
  %12046 = vmatpush2.bf16.msra.mxu0 %v11924
  %12047 = vmatprep.subr.bf16.mxu0 0
  %12048 = vmatpush2.bf16.msra.mxu0 %v11921
  %12049 = vmatprep.subr.bf16.mxu0 0
  %12050 = vmatpush2.bf16.msra.mxu0 %v11918
  %12051 = vmatprep.subr.bf16.mxu0 0
  %12052 = vmatpush2.bf16.msra.mxu0 %v11915
  %12053 = vmatprep.subr.bf16.mxu0 0
  %12054 = vmatpush2.bf16.msra.mxu0 %v11912
  %12055 = vmatprep.mubr.bf16.mxu0 %v11723
  %12056 = vmatmul.mubr.bf16.gmra.mxu0 %v11722
  %v12057 = vpop.f32.mrf.mxu0
  %v12058 = vadd.f32 0.0, %v12057
  %v12059 = vpop.f32.mrf.mxu0
  %v12060 = vpop.f32.mrf.mxu0
  %v12061 = vpop.f32.mrf.mxu0
  %12062 = vdwg.mxu0
  %v12063 = vadd.f32 %v11652, %v12017
  %v12064 = vadd.f32 %v11653, %v12019
  %v12065 = vadd.f32 %v11654, %v12058
  %s12066 = scalar_lea.vmem %s4, 2304
  %v12067 = vld [vmem:[%s12066] sm:$0xff]
  %v12068 = vld [vmem:[%s12066 + $0x8] sm:$0xf]
  %v12069 = vld [vmem:[%s12066 + $0xc] sm:$0xff]
  %v12070 = vld [vmem:[%s12066 + $0x14] sm:$0xf]
  %v12071 = vld [vmem:[%s12066 + $0x18] sm:$0xff]
  %v12072 = vld [vmem:[%s12066 + $0x20] sm:$0xf]
  %v12073 = vld [vmem:[%s12066 + $0x24] sm:$0xff]
  %v12074 = vld [vmem:[%s12066 + $0x2c] sm:$0xf]
  %v12075 = vld [vmem:[%s12066 + $0x30] sm:$0xff]
  %v12076 = vld [vmem:[%s12066 + $0x38] sm:$0xf]
  %v12077 = vld [vmem:[%s12066 + $0x3c] sm:$0xff]
  %v12078 = vld [vmem:[%s12066 + $0x44] sm:$0xf]
  %v12079 = vld [vmem:[%s12066 + $0x48] sm:$0xff]
  %v12080 = vld [vmem:[%s12066 + $0x50] sm:$0xf]
  %v12081 = vld [vmem:[%s12066 + $0x54] sm:$0xff]
  %v12082 = vld [vmem:[%s12066 + $0x5c] sm:$0xf]
  %v12083 = vld [vmem:[%s12066 + $0x60] sm:$0xff]
  %v12084 = vld [vmem:[%s12066 + $0x68] sm:$0xf]
  %v12085 = vld [vmem:[%s12066 + $0x6c] sm:$0xff]
  %v12086 = vld [vmem:[%s12066 + $0x74] sm:$0xf]
  %v12087 = vld [vmem:[%s12066 + $0x78] sm:$0xff]
  %v12088 = vld [vmem:[%s12066 + $0x80] sm:$0xf]
  %v12089 = vld [vmem:[%s12066 + $0x84] sm:$0xff]
  %v12090 = vld [vmem:[%s12066 + $0x8c] sm:$0xf]
  %v12091 = vld [vmem:[%s12066 + $0x90] sm:$0xff]
  %v12092 = vld [vmem:[%s12066 + $0x98] sm:$0xf]
  %v12093 = vld [vmem:[%s12066 + $0x9c] sm:$0xff]
  %v12094 = vld [vmem:[%s12066 + $0xa4] sm:$0xf]
  %v12095 = vld [vmem:[%s12066 + $0xa8] sm:$0xff]
  %v12096 = vld [vmem:[%s12066 + $0xb0] sm:$0xf]
  %v12097 = vld [vmem:[%s12066 + $0xb4] sm:$0xff]
  %v12098 = vld [vmem:[%s12066 + $0xbc] sm:$0xf]
  %v12099 = vld [vmem:[%s12066 + $0xc0] sm:$0xff]
  %v12100 = vld [vmem:[%s12066 + $0xc8] sm:$0xf]
  %v12101 = vld [vmem:[%s12066 + $0xcc] sm:$0xff]
  %v12102 = vld [vmem:[%s12066 + $0xd4] sm:$0xf]
  %v12103 = vld [vmem:[%s12066 + $0xd8] sm:$0xff]
  %v12104 = vld [vmem:[%s12066 + $0xe0] sm:$0xf]
  %v12105 = vld [vmem:[%s12066 + $0xe4] sm:$0xff]
  %v12106 = vld [vmem:[%s12066 + $0xec] sm:$0xf]
  %v12107 = vld [vmem:[%s12066 + $0xf0] sm:$0xff]
  %v12108 = vld [vmem:[%s12066 + $0xf8] sm:$0xf]
  %v12109 = vld [vmem:[%s12066 + $0xfc] sm:$0xff]
  %v12110 = vld [vmem:[%s12066 + $0x104] sm:$0xf]
  %v12111 = vld [vmem:[%s12066 + $0x108] sm:$0xff]
  %v12112 = vld [vmem:[%s12066 + $0x110] sm:$0xf]
  %v12113 = vld [vmem:[%s12066 + $0x114] sm:$0xff]
  %v12114 = vld [vmem:[%s12066 + $0x11c] sm:$0xf]
  %v12115 = vld [vmem:[%s12066 + $0x120] sm:$0xff]
  %v12116 = vld [vmem:[%s12066 + $0x128] sm:$0xf]
  %v12117 = vld [vmem:[%s12066 + $0x12c] sm:$0xff]
  %v12118 = vld [vmem:[%s12066 + $0x134] sm:$0xf]
  %v12119 = vld [vmem:[%s12066 + $0x138] sm:$0xff]
  %v12120 = vld [vmem:[%s12066 + $0x140] sm:$0xf]
  %v12121 = vld [vmem:[%s12066 + $0x144] sm:$0xff]
  %v12122 = vld [vmem:[%s12066 + $0x14c] sm:$0xf]
  %v12123 = vld [vmem:[%s12066 + $0x150] sm:$0xff]
  %v12124 = vld [vmem:[%s12066 + $0x158] sm:$0xf]
  %v12125 = vld [vmem:[%s12066 + $0x15c] sm:$0xff]
  %v12126 = vld [vmem:[%s12066 + $0x164] sm:$0xf]
  %v12127 = vld [vmem:[%s12066 + $0x168] sm:$0xff]
  %v12128 = vld [vmem:[%s12066 + $0x170] sm:$0xf]
  %v12129 = vld [vmem:[%s12066 + $0x174] sm:$0xff]
  %v12130 = vld [vmem:[%s12066 + $0x17c] sm:$0xf]
  %v12131 = vrot.slane %v11248, 2
  %v12132 = vrot.slane %v11249, 2
  %v12199 = vunpack.c.l.b16 %v12067
  %v12200 = vunpack.c.h.b16 %v12067
  %v12201 = vunpack.c.l.b16 %v12068
  %v12202 = vunpack.c.l.b16 %v12069
  %v12203 = vunpack.c.h.b16 %v12069
  %v12204 = vunpack.c.l.b16 %v12070
  %v12205 = vunpack.c.l.b16 %v12071
  %v12206 = vunpack.c.h.b16 %v12071
  %v12207 = vunpack.c.l.b16 %v12072
  %v12208 = vunpack.c.l.b16 %v12073
  %v12209 = vunpack.c.h.b16 %v12073
  %v12210 = vunpack.c.l.b16 %v12074
  %v12211 = vunpack.c.l.b16 %v12075
  %v12212 = vunpack.c.h.b16 %v12075
  %v12213 = vunpack.c.l.b16 %v12076
  %v12214 = vunpack.c.l.b16 %v12077
  %v12215 = vunpack.c.h.b16 %v12077
  %v12216 = vunpack.c.l.b16 %v12078
  %v12217 = vunpack.c.l.b16 %v12079
  %v12218 = vunpack.c.h.b16 %v12079
  %v12219 = vunpack.c.l.b16 %v12080
  %v12220 = vunpack.c.l.b16 %v12081
  %v12221 = vunpack.c.h.b16 %v12081
  %v12222 = vunpack.c.l.b16 %v12082
  %v12223 = vunpack.c.l.b16 %v12083
  %v12224 = vunpack.c.h.b16 %v12083
  %v12225 = vunpack.c.l.b16 %v12084
  %v12226 = vunpack.c.l.b16 %v12085
  %v12227 = vunpack.c.h.b16 %v12085
  %v12228 = vunpack.c.l.b16 %v12086
  %v12229 = vunpack.c.l.b16 %v12087
  %v12230 = vunpack.c.h.b16 %v12087
  %v12231 = vunpack.c.l.b16 %v12088
  %v12232 = vunpack.c.l.b16 %v12089
  %v12233 = vunpack.c.h.b16 %v12089
  %v12234 = vunpack.c.l.b16 %v12090
  %v12235 = vunpack.c.l.b16 %v12091
  %v12236 = vunpack.c.h.b16 %v12091
  %v12237 = vunpack.c.l.b16 %v12092
  %v12238 = vunpack.c.l.b16 %v12093
  %v12239 = vunpack.c.h.b16 %v12093
  %v12240 = vunpack.c.l.b16 %v12094
  %v12241 = vunpack.c.l.b16 %v12095
  %v12242 = vunpack.c.h.b16 %v12095
  %v12243 = vunpack.c.l.b16 %v12096
  %v12244 = vunpack.c.l.b16 %v12097
  %v12245 = vunpack.c.h.b16 %v12097
  %v12246 = vunpack.c.l.b16 %v12098
  %v12247 = vunpack.c.l.b16 %v12099
  %v12248 = vunpack.c.h.b16 %v12099
  %v12249 = vunpack.c.l.b16 %v12100
  %v12250 = vunpack.c.l.b16 %v12101
  %v12251 = vunpack.c.h.b16 %v12101
  %v12252 = vunpack.c.l.b16 %v12102
  %v12253 = vunpack.c.l.b16 %v12103
  %v12254 = vunpack.c.h.b16 %v12103
  %v12255 = vunpack.c.l.b16 %v12104
  %v12256 = vunpack.c.l.b16 %v12105
  %v12257 = vunpack.c.h.b16 %v12105
  %v12258 = vunpack.c.l.b16 %v12106
  %v12259 = vunpack.c.l.b16 %v12107
  %v12260 = vunpack.c.h.b16 %v12107
  %v12261 = vunpack.c.l.b16 %v12108
  %v12262 = vunpack.c.l.b16 %v12109
  %v12263 = vunpack.c.h.b16 %v12109
  %v12264 = vunpack.c.l.b16 %v12110
  %v12265 = vunpack.c.l.b16 %v12111
  %v12266 = vunpack.c.h.b16 %v12111
  %v12267 = vunpack.c.l.b16 %v12112
  %v12268 = vunpack.c.l.b16 %v12113
  %v12269 = vunpack.c.h.b16 %v12113
  %v12270 = vunpack.c.l.b16 %v12114
  %v12271 = vunpack.c.l.b16 %v12115
  %v12272 = vunpack.c.h.b16 %v12115
  %v12273 = vunpack.c.l.b16 %v12116
  %v12274 = vunpack.c.l.b16 %v12117
  %v12275 = vunpack.c.h.b16 %v12117
  %v12276 = vunpack.c.l.b16 %v12118
  %v12277 = vunpack.c.l.b16 %v12119
  %v12278 = vunpack.c.h.b16 %v12119
  %v12279 = vunpack.c.l.b16 %v12120
  %v12280 = vunpack.c.l.b16 %v12121
  %v12281 = vunpack.c.h.b16 %v12121
  %v12282 = vunpack.c.l.b16 %v12122
  %v12283 = vunpack.c.l.b16 %v12123
  %v12284 = vunpack.c.h.b16 %v12123
  %v12285 = vunpack.c.l.b16 %v12124
  %v12286 = vunpack.c.l.b16 %v12125
  %v12287 = vunpack.c.h.b16 %v12125
  %v12288 = vunpack.c.l.b16 %v12126
  %v12289 = vunpack.c.l.b16 %v12127
  %v12290 = vunpack.c.h.b16 %v12127
  %v12291 = vunpack.c.l.b16 %v12128
  %v12292 = vunpack.c.l.b16 %v12129
  %v12293 = vunpack.c.h.b16 %v12129
  %v12294 = vunpack.c.l.b16 %v12130
  %v12295 = vpack.c.b16 %v12202, %v12199
  %v12296 = vpack.c.b16 %v12203, %v12200
  %v12297 = vpack.c.b16 %v12204, %v12201
  %v12298 = vpack.c.b16 %v12208, %v12205
  %v12299 = vpack.c.b16 %v12209, %v12206
  %v12300 = vpack.c.b16 %v12210, %v12207
  %v12301 = vpack.c.b16 %v12214, %v12211
  %v12302 = vpack.c.b16 %v12215, %v12212
  %v12303 = vpack.c.b16 %v12216, %v12213
  %v12304 = vpack.c.b16 %v12220, %v12217
  %v12305 = vpack.c.b16 %v12221, %v12218
  %v12306 = vpack.c.b16 %v12222, %v12219
  %v12307 = vpack.c.b16 %v12226, %v12223
  %v12308 = vpack.c.b16 %v12227, %v12224
  %v12309 = vpack.c.b16 %v12228, %v12225
  %v12310 = vpack.c.b16 %v12232, %v12229
  %v12311 = vpack.c.b16 %v12233, %v12230
  %v12312 = vpack.c.b16 %v12234, %v12231
  %v12313 = vpack.c.b16 %v12238, %v12235
  %v12314 = vpack.c.b16 %v12239, %v12236
  %v12315 = vpack.c.b16 %v12240, %v12237
  %v12316 = vpack.c.b16 %v12244, %v12241
  %v12317 = vpack.c.b16 %v12245, %v12242
  %v12318 = vpack.c.b16 %v12246, %v12243
  %v12319 = vpack.c.b16 %v12250, %v12247
  %v12320 = vpack.c.b16 %v12251, %v12248
  %v12321 = vpack.c.b16 %v12252, %v12249
  %v12322 = vpack.c.b16 %v12256, %v12253
  %v12323 = vpack.c.b16 %v12257, %v12254
  %v12324 = vpack.c.b16 %v12258, %v12255
  %v12325 = vpack.c.b16 %v12262, %v12259
  %v12326 = vpack.c.b16 %v12263, %v12260
  %v12327 = vpack.c.b16 %v12264, %v12261
  %v12328 = vpack.c.b16 %v12268, %v12265
  %v12329 = vpack.c.b16 %v12269, %v12266
  %v12330 = vpack.c.b16 %v12270, %v12267
  %v12331 = vpack.c.b16 %v12274, %v12271
  %v12332 = vpack.c.b16 %v12275, %v12272
  %v12333 = vpack.c.b16 %v12276, %v12273
  %v12334 = vpack.c.b16 %v12280, %v12277
  %v12335 = vpack.c.b16 %v12281, %v12278
  %v12336 = vpack.c.b16 %v12282, %v12279
  %v12337 = vpack.c.b16 %v12286, %v12283
  %v12338 = vpack.c.b16 %v12287, %v12284
  %v12339 = vpack.c.b16 %v12288, %v12285
  %v12340 = vpack.c.b16 %v12292, %v12289
  %v12341 = vpack.c.b16 %v12293, %v12290
  %v12342 = vpack.c.b16 %v12294, %v12291
  %12391 = vmatprep.subr.bf16.mxu0 %v12317
  %12392 = vmatpush1.bf16.msra.mxu0 %v12316
  %12393 = vmatprep.subr.bf16.mxu0 %v12314
  %12394 = vmatpush1.bf16.msra.mxu0 %v12313
  %12395 = vmatprep.subr.bf16.mxu0 %v12311
  %12396 = vmatpush1.bf16.msra.mxu0 %v12310
  %12397 = vmatprep.subr.bf16.mxu0 %v12308
  %12398 = vmatpush1.bf16.msra.mxu0 %v12307
  %12399 = vmatprep.subr.bf16.mxu0 %v12305
  %12400 = vmatpush1.bf16.msra.mxu0 %v12304
  %12401 = vmatprep.subr.bf16.mxu0 %v12302
  %12402 = vmatpush1.bf16.msra.mxu0 %v12301
  %12403 = vmatprep.subr.bf16.mxu0 %v12299
  %12404 = vmatpush1.bf16.msra.mxu0 %v12298
  %12405 = vmatprep.subr.bf16.mxu0 %v12296
  %12406 = vmatpush1.bf16.msra.mxu0 %v12295
  %12407 = vmatprep.subr.bf16.mxu0 %v12341
  %12408 = vmatpush2.bf16.msra.mxu0 %v12340
  %12409 = vmatprep.subr.bf16.mxu0 %v12338
  %12410 = vmatpush2.bf16.msra.mxu0 %v12337
  %12411 = vmatprep.subr.bf16.mxu0 %v12335
  %12412 = vmatpush2.bf16.msra.mxu0 %v12334
  %12413 = vmatprep.subr.bf16.mxu0 %v12332
  %12414 = vmatpush2.bf16.msra.mxu0 %v12331
  %12415 = vmatprep.subr.bf16.mxu0 %v12329
  %12416 = vmatpush2.bf16.msra.mxu0 %v12328
  %12417 = vmatprep.subr.bf16.mxu0 %v12326
  %12418 = vmatpush2.bf16.msra.mxu0 %v12325
  %12419 = vmatprep.subr.bf16.mxu0 %v12323
  %12420 = vmatpush2.bf16.msra.mxu0 %v12322
  %12421 = vmatprep.subr.bf16.mxu0 %v12320
  %12422 = vmatpush2.bf16.msra.mxu0 %v12319
  %12423 = vmatprep.mubr.bf16.mxu0 %v12132
  %12424 = vmatmul.mubr.bf16.gmra.mxu0 %v12131
  %v12425 = vpop.f32.mrf.mxu0
  %v12426 = vadd.f32 0.0, %v12425
  %v12427 = vpop.f32.mrf.mxu0
  %v12428 = vadd.f32 0.0, %v12427
  %v12429 = vpop.f32.mrf.mxu0
  %v12430 = vpop.f32.mrf.mxu0
  %12431 = vdwg.mxu0
  %12432 = vmatprep.subr.bf16.mxu0 0
  %12433 = vmatpush1.bf16.msra.mxu0 %v12318
  %12434 = vmatprep.subr.bf16.mxu0 0
  %12435 = vmatpush1.bf16.msra.mxu0 %v12315
  %12436 = vmatprep.subr.bf16.mxu0 0
  %12437 = vmatpush1.bf16.msra.mxu0 %v12312
  %12438 = vmatprep.subr.bf16.mxu0 0
  %12439 = vmatpush1.bf16.msra.mxu0 %v12309
  %12440 = vmatprep.subr.bf16.mxu0 0
  %12441 = vmatpush1.bf16.msra.mxu0 %v12306
  %12442 = vmatprep.subr.bf16.mxu0 0
  %12443 = vmatpush1.bf16.msra.mxu0 %v12303
  %12444 = vmatprep.subr.bf16.mxu0 0
  %12445 = vmatpush1.bf16.msra.mxu0 %v12300
  %12446 = vmatprep.subr.bf16.mxu0 0
  %12447 = vmatpush1.bf16.msra.mxu0 %v12297
  %12448 = vmatprep.subr.bf16.mxu0 0
  %12449 = vmatpush2.bf16.msra.mxu0 %v12342
  %12450 = vmatprep.subr.bf16.mxu0 0
  %12451 = vmatpush2.bf16.msra.mxu0 %v12339
  %12452 = vmatprep.subr.bf16.mxu0 0
  %12453 = vmatpush2.bf16.msra.mxu0 %v12336
  %12454 = vmatprep.subr.bf16.mxu0 0
  %12455 = vmatpush2.bf16.msra.mxu0 %v12333
  %12456 = vmatprep.subr.bf16.mxu0 0
  %12457 = vmatpush2.bf16.msra.mxu0 %v12330
  %12458 = vmatprep.subr.bf16.mxu0 0
  %12459 = vmatpush2.bf16.msra.mxu0 %v12327
  %12460 = vmatprep.subr.bf16.mxu0 0
  %12461 = vmatpush2.bf16.msra.mxu0 %v12324
  %12462 = vmatprep.subr.bf16.mxu0 0
  %12463 = vmatpush2.bf16.msra.mxu0 %v12321
  %12464 = vmatprep.mubr.bf16.mxu0 %v12132
  %12465 = vmatmul.mubr.bf16.gmra.mxu0 %v12131
  %v12466 = vpop.f32.mrf.mxu0
  %v12467 = vadd.f32 0.0, %v12466
  %v12468 = vpop.f32.mrf.mxu0
  %v12469 = vpop.f32.mrf.mxu0
  %v12470 = vpop.f32.mrf.mxu0
  %12471 = vdwg.mxu0
  %v12472 = vadd.f32 %v12063, %v12426
  %v12473 = vadd.f32 %v12064, %v12428
  %v12474 = vadd.f32 %v12065, %v12467
  %s12475 = scalar_lea.vmem %s4, 2688
  %v12476 = vld [vmem:[%s12475] sm:$0xff]
  %v12477 = vld [vmem:[%s12475 + $0x8] sm:$0xf]
  %v12478 = vld [vmem:[%s12475 + $0xc] sm:$0xff]
  %v12479 = vld [vmem:[%s12475 + $0x14] sm:$0xf]
  %v12480 = vld [vmem:[%s12475 + $0x18] sm:$0xff]
  %v12481 = vld [vmem:[%s12475 + $0x20] sm:$0xf]
  %v12482 = vld [vmem:[%s12475 + $0x24] sm:$0xff]
  %v12483 = vld [vmem:[%s12475 + $0x2c] sm:$0xf]
  %v12484 = vld [vmem:[%s12475 + $0x30] sm:$0xff]
  %v12485 = vld [vmem:[%s12475 + $0x38] sm:$0xf]
  %v12486 = vld [vmem:[%s12475 + $0x3c] sm:$0xff]
  %v12487 = vld [vmem:[%s12475 + $0x44] sm:$0xf]
  %v12488 = vld [vmem:[%s12475 + $0x48] sm:$0xff]
  %v12489 = vld [vmem:[%s12475 + $0x50] sm:$0xf]
  %v12490 = vld [vmem:[%s12475 + $0x54] sm:$0xff]
  %v12491 = vld [vmem:[%s12475 + $0x5c] sm:$0xf]
  %v12492 = vld [vmem:[%s12475 + $0x60] sm:$0xff]
  %v12493 = vld [vmem:[%s12475 + $0x68] sm:$0xf]
  %v12494 = vld [vmem:[%s12475 + $0x6c] sm:$0xff]
  %v12495 = vld [vmem:[%s12475 + $0x74] sm:$0xf]
  %v12496 = vld [vmem:[%s12475 + $0x78] sm:$0xff]
  %v12497 = vld [vmem:[%s12475 + $0x80] sm:$0xf]
  %v12498 = vld [vmem:[%s12475 + $0x84] sm:$0xff]
  %v12499 = vld [vmem:[%s12475 + $0x8c] sm:$0xf]
  %v12500 = vld [vmem:[%s12475 + $0x90] sm:$0xff]
  %v12501 = vld [vmem:[%s12475 + $0x98] sm:$0xf]
  %v12502 = vld [vmem:[%s12475 + $0x9c] sm:$0xff]
  %v12503 = vld [vmem:[%s12475 + $0xa4] sm:$0xf]
  %v12504 = vld [vmem:[%s12475 + $0xa8] sm:$0xff]
  %v12505 = vld [vmem:[%s12475 + $0xb0] sm:$0xf]
  %v12506 = vld [vmem:[%s12475 + $0xb4] sm:$0xff]
  %v12507 = vld [vmem:[%s12475 + $0xbc] sm:$0xf]
  %v12508 = vld [vmem:[%s12475 + $0xc0] sm:$0xff]
  %v12509 = vld [vmem:[%s12475 + $0xc8] sm:$0xf]
  %v12510 = vld [vmem:[%s12475 + $0xcc] sm:$0xff]
  %v12511 = vld [vmem:[%s12475 + $0xd4] sm:$0xf]
  %v12512 = vld [vmem:[%s12475 + $0xd8] sm:$0xff]
  %v12513 = vld [vmem:[%s12475 + $0xe0] sm:$0xf]
  %v12514 = vld [vmem:[%s12475 + $0xe4] sm:$0xff]
  %v12515 = vld [vmem:[%s12475 + $0xec] sm:$0xf]
  %v12516 = vld [vmem:[%s12475 + $0xf0] sm:$0xff]
  %v12517 = vld [vmem:[%s12475 + $0xf8] sm:$0xf]
  %v12518 = vld [vmem:[%s12475 + $0xfc] sm:$0xff]
  %v12519 = vld [vmem:[%s12475 + $0x104] sm:$0xf]
  %v12520 = vld [vmem:[%s12475 + $0x108] sm:$0xff]
  %v12521 = vld [vmem:[%s12475 + $0x110] sm:$0xf]
  %v12522 = vld [vmem:[%s12475 + $0x114] sm:$0xff]
  %v12523 = vld [vmem:[%s12475 + $0x11c] sm:$0xf]
  %v12524 = vld [vmem:[%s12475 + $0x120] sm:$0xff]
  %v12525 = vld [vmem:[%s12475 + $0x128] sm:$0xf]
  %v12526 = vld [vmem:[%s12475 + $0x12c] sm:$0xff]
  %v12527 = vld [vmem:[%s12475 + $0x134] sm:$0xf]
  %v12528 = vld [vmem:[%s12475 + $0x138] sm:$0xff]
  %v12529 = vld [vmem:[%s12475 + $0x140] sm:$0xf]
  %v12530 = vld [vmem:[%s12475 + $0x144] sm:$0xff]
  %v12531 = vld [vmem:[%s12475 + $0x14c] sm:$0xf]
  %v12532 = vld [vmem:[%s12475 + $0x150] sm:$0xff]
  %v12533 = vld [vmem:[%s12475 + $0x158] sm:$0xf]
  %v12534 = vld [vmem:[%s12475 + $0x15c] sm:$0xff]
  %v12535 = vld [vmem:[%s12475 + $0x164] sm:$0xf]
  %v12536 = vld [vmem:[%s12475 + $0x168] sm:$0xff]
  %v12537 = vld [vmem:[%s12475 + $0x170] sm:$0xf]
  %v12538 = vld [vmem:[%s12475 + $0x174] sm:$0xff]
  %v12539 = vld [vmem:[%s12475 + $0x17c] sm:$0xf]
  %v12540 = vrot.slane %v11248, 3
  %v12541 = vrot.slane %v11249, 3
  %v12608 = vunpack.c.l.b16 %v12476
  %v12609 = vunpack.c.h.b16 %v12476
  %v12610 = vunpack.c.l.b16 %v12477
  %v12611 = vunpack.c.l.b16 %v12478
  %v12612 = vunpack.c.h.b16 %v12478
  %v12613 = vunpack.c.l.b16 %v12479
  %v12614 = vunpack.c.l.b16 %v12480
  %v12615 = vunpack.c.h.b16 %v12480
  %v12616 = vunpack.c.l.b16 %v12481
  %v12617 = vunpack.c.l.b16 %v12482
  %v12618 = vunpack.c.h.b16 %v12482
  %v12619 = vunpack.c.l.b16 %v12483
  %v12620 = vunpack.c.l.b16 %v12484
  %v12621 = vunpack.c.h.b16 %v12484
  %v12622 = vunpack.c.l.b16 %v12485
  %v12623 = vunpack.c.l.b16 %v12486
  %v12624 = vunpack.c.h.b16 %v12486
  %v12625 = vunpack.c.l.b16 %v12487
  %v12626 = vunpack.c.l.b16 %v12488
  %v12627 = vunpack.c.h.b16 %v12488
  %v12628 = vunpack.c.l.b16 %v12489
  %v12629 = vunpack.c.l.b16 %v12490
  %v12630 = vunpack.c.h.b16 %v12490
  %v12631 = vunpack.c.l.b16 %v12491
  %v12632 = vunpack.c.l.b16 %v12492
  %v12633 = vunpack.c.h.b16 %v12492
  %v12634 = vunpack.c.l.b16 %v12493
  %v12635 = vunpack.c.l.b16 %v12494
  %v12636 = vunpack.c.h.b16 %v12494
  %v12637 = vunpack.c.l.b16 %v12495
  %v12638 = vunpack.c.l.b16 %v12496
  %v12639 = vunpack.c.h.b16 %v12496
  %v12640 = vunpack.c.l.b16 %v12497
  %v12641 = vunpack.c.l.b16 %v12498
  %v12642 = vunpack.c.h.b16 %v12498
  %v12643 = vunpack.c.l.b16 %v12499
  %v12644 = vunpack.c.l.b16 %v12500
  %v12645 = vunpack.c.h.b16 %v12500
  %v12646 = vunpack.c.l.b16 %v12501
  %v12647 = vunpack.c.l.b16 %v12502
  %v12648 = vunpack.c.h.b16 %v12502
  %v12649 = vunpack.c.l.b16 %v12503
  %v12650 = vunpack.c.l.b16 %v12504
  %v12651 = vunpack.c.h.b16 %v12504
  %v12652 = vunpack.c.l.b16 %v12505
  %v12653 = vunpack.c.l.b16 %v12506
  %v12654 = vunpack.c.h.b16 %v12506
  %v12655 = vunpack.c.l.b16 %v12507
  %v12656 = vunpack.c.l.b16 %v12508
  %v12657 = vunpack.c.h.b16 %v12508
  %v12658 = vunpack.c.l.b16 %v12509
  %v12659 = vunpack.c.l.b16 %v12510
  %v12660 = vunpack.c.h.b16 %v12510
  %v12661 = vunpack.c.l.b16 %v12511
  %v12662 = vunpack.c.l.b16 %v12512
  %v12663 = vunpack.c.h.b16 %v12512
  %v12664 = vunpack.c.l.b16 %v12513
  %v12665 = vunpack.c.l.b16 %v12514
  %v12666 = vunpack.c.h.b16 %v12514
  %v12667 = vunpack.c.l.b16 %v12515
  %v12668 = vunpack.c.l.b16 %v12516
  %v12669 = vunpack.c.h.b16 %v12516
  %v12670 = vunpack.c.l.b16 %v12517
  %v12671 = vunpack.c.l.b16 %v12518
  %v12672 = vunpack.c.h.b16 %v12518
  %v12673 = vunpack.c.l.b16 %v12519
  %v12674 = vunpack.c.l.b16 %v12520
  %v12675 = vunpack.c.h.b16 %v12520
  %v12676 = vunpack.c.l.b16 %v12521
  %v12677 = vunpack.c.l.b16 %v12522
  %v12678 = vunpack.c.h.b16 %v12522
  %v12679 = vunpack.c.l.b16 %v12523
  %v12680 = vunpack.c.l.b16 %v12524
  %v12681 = vunpack.c.h.b16 %v12524
  %v12682 = vunpack.c.l.b16 %v12525
  %v12683 = vunpack.c.l.b16 %v12526
  %v12684 = vunpack.c.h.b16 %v12526
  %v12685 = vunpack.c.l.b16 %v12527
  %v12686 = vunpack.c.l.b16 %v12528
  %v12687 = vunpack.c.h.b16 %v12528
  %v12688 = vunpack.c.l.b16 %v12529
  %v12689 = vunpack.c.l.b16 %v12530
  %v12690 = vunpack.c.h.b16 %v12530
  %v12691 = vunpack.c.l.b16 %v12531
  %v12692 = vunpack.c.l.b16 %v12532
  %v12693 = vunpack.c.h.b16 %v12532
  %v12694 = vunpack.c.l.b16 %v12533
  %v12695 = vunpack.c.l.b16 %v12534
  %v12696 = vunpack.c.h.b16 %v12534
  %v12697 = vunpack.c.l.b16 %v12535
  %v12698 = vunpack.c.l.b16 %v12536
  %v12699 = vunpack.c.h.b16 %v12536
  %v12700 = vunpack.c.l.b16 %v12537
  %v12701 = vunpack.c.l.b16 %v12538
  %v12702 = vunpack.c.h.b16 %v12538
  %v12703 = vunpack.c.l.b16 %v12539
  %v12704 = vpack.c.b16 %v12611, %v12608
  %v12705 = vpack.c.b16 %v12612, %v12609
  %v12706 = vpack.c.b16 %v12613, %v12610
  %v12707 = vpack.c.b16 %v12617, %v12614
  %v12708 = vpack.c.b16 %v12618, %v12615
  %v12709 = vpack.c.b16 %v12619, %v12616
  %v12710 = vpack.c.b16 %v12623, %v12620
  %v12711 = vpack.c.b16 %v12624, %v12621
  %v12712 = vpack.c.b16 %v12625, %v12622
  %v12713 = vpack.c.b16 %v12629, %v12626
  %v12714 = vpack.c.b16 %v12630, %v12627
  %v12715 = vpack.c.b16 %v12631, %v12628
  %v12716 = vpack.c.b16 %v12635, %v12632
  %v12717 = vpack.c.b16 %v12636, %v12633
  %v12718 = vpack.c.b16 %v12637, %v12634
  %v12719 = vpack.c.b16 %v12641, %v12638
  %v12720 = vpack.c.b16 %v12642, %v12639
  %v12721 = vpack.c.b16 %v12643, %v12640
  %v12722 = vpack.c.b16 %v12647, %v12644
  %v12723 = vpack.c.b16 %v12648, %v12645
  %v12724 = vpack.c.b16 %v12649, %v12646
  %v12725 = vpack.c.b16 %v12653, %v12650
  %v12726 = vpack.c.b16 %v12654, %v12651
  %v12727 = vpack.c.b16 %v12655, %v12652
  %v12728 = vpack.c.b16 %v12659, %v12656
  %v12729 = vpack.c.b16 %v12660, %v12657
  %v12730 = vpack.c.b16 %v12661, %v12658
  %v12731 = vpack.c.b16 %v12665, %v12662
  %v12732 = vpack.c.b16 %v12666, %v12663
  %v12733 = vpack.c.b16 %v12667, %v12664
  %v12734 = vpack.c.b16 %v12671, %v12668
  %v12735 = vpack.c.b16 %v12672, %v12669
  %v12736 = vpack.c.b16 %v12673, %v12670
  %v12737 = vpack.c.b16 %v12677, %v12674
  %v12738 = vpack.c.b16 %v12678, %v12675
  %v12739 = vpack.c.b16 %v12679, %v12676
  %v12740 = vpack.c.b16 %v12683, %v12680
  %v12741 = vpack.c.b16 %v12684, %v12681
  %v12742 = vpack.c.b16 %v12685, %v12682
  %v12743 = vpack.c.b16 %v12689, %v12686
  %v12744 = vpack.c.b16 %v12690, %v12687
  %v12745 = vpack.c.b16 %v12691, %v12688
  %v12746 = vpack.c.b16 %v12695, %v12692
  %v12747 = vpack.c.b16 %v12696, %v12693
  %v12748 = vpack.c.b16 %v12697, %v12694
  %v12749 = vpack.c.b16 %v12701, %v12698
  %v12750 = vpack.c.b16 %v12702, %v12699
  %v12751 = vpack.c.b16 %v12703, %v12700
  %12800 = vmatprep.subr.bf16.mxu0 %v12726
  %12801 = vmatpush1.bf16.msra.mxu0 %v12725
  %12802 = vmatprep.subr.bf16.mxu0 %v12723
  %12803 = vmatpush1.bf16.msra.mxu0 %v12722
  %12804 = vmatprep.subr.bf16.mxu0 %v12720
  %12805 = vmatpush1.bf16.msra.mxu0 %v12719
  %12806 = vmatprep.subr.bf16.mxu0 %v12717
  %12807 = vmatpush1.bf16.msra.mxu0 %v12716
  %12808 = vmatprep.subr.bf16.mxu0 %v12714
  %12809 = vmatpush1.bf16.msra.mxu0 %v12713
  %12810 = vmatprep.subr.bf16.mxu0 %v12711
  %12811 = vmatpush1.bf16.msra.mxu0 %v12710
  %12812 = vmatprep.subr.bf16.mxu0 %v12708
  %12813 = vmatpush1.bf16.msra.mxu0 %v12707
  %12814 = vmatprep.subr.bf16.mxu0 %v12705
  %12815 = vmatpush1.bf16.msra.mxu0 %v12704
  %12816 = vmatprep.subr.bf16.mxu0 %v12750
  %12817 = vmatpush2.bf16.msra.mxu0 %v12749
  %12818 = vmatprep.subr.bf16.mxu0 %v12747
  %12819 = vmatpush2.bf16.msra.mxu0 %v12746
  %12820 = vmatprep.subr.bf16.mxu0 %v12744
  %12821 = vmatpush2.bf16.msra.mxu0 %v12743
  %12822 = vmatprep.subr.bf16.mxu0 %v12741
  %12823 = vmatpush2.bf16.msra.mxu0 %v12740
  %12824 = vmatprep.subr.bf16.mxu0 %v12738
  %12825 = vmatpush2.bf16.msra.mxu0 %v12737
  %12826 = vmatprep.subr.bf16.mxu0 %v12735
  %12827 = vmatpush2.bf16.msra.mxu0 %v12734
  %12828 = vmatprep.subr.bf16.mxu0 %v12732
  %12829 = vmatpush2.bf16.msra.mxu0 %v12731
  %12830 = vmatprep.subr.bf16.mxu0 %v12729
  %12831 = vmatpush2.bf16.msra.mxu0 %v12728
  %12832 = vmatprep.mubr.bf16.mxu0 %v12541
  %12833 = vmatmul.mubr.bf16.gmra.mxu0 %v12540
  %v12834 = vpop.f32.mrf.mxu0
  %v12835 = vadd.f32 0.0, %v12834
  %v12836 = vpop.f32.mrf.mxu0
  %v12837 = vadd.f32 0.0, %v12836
  %v12838 = vpop.f32.mrf.mxu0
  %v12839 = vpop.f32.mrf.mxu0
  %12840 = vdwg.mxu0
  %12841 = vmatprep.subr.bf16.mxu0 0
  %12842 = vmatpush1.bf16.msra.mxu0 %v12727
  %12843 = vmatprep.subr.bf16.mxu0 0
  %12844 = vmatpush1.bf16.msra.mxu0 %v12724
  %12845 = vmatprep.subr.bf16.mxu0 0
  %12846 = vmatpush1.bf16.msra.mxu0 %v12721
  %12847 = vmatprep.subr.bf16.mxu0 0
  %12848 = vmatpush1.bf16.msra.mxu0 %v12718
  %12849 = vmatprep.subr.bf16.mxu0 0
  %12850 = vmatpush1.bf16.msra.mxu0 %v12715
  %12851 = vmatprep.subr.bf16.mxu0 0
  %12852 = vmatpush1.bf16.msra.mxu0 %v12712
  %12853 = vmatprep.subr.bf16.mxu0 0
  %12854 = vmatpush1.bf16.msra.mxu0 %v12709
  %12855 = vmatprep.subr.bf16.mxu0 0
  %12856 = vmatpush1.bf16.msra.mxu0 %v12706
  %12857 = vmatprep.subr.bf16.mxu0 0
  %12858 = vmatpush2.bf16.msra.mxu0 %v12751
  %12859 = vmatprep.subr.bf16.mxu0 0
  %12860 = vmatpush2.bf16.msra.mxu0 %v12748
  %12861 = vmatprep.subr.bf16.mxu0 0
  %12862 = vmatpush2.bf16.msra.mxu0 %v12745
  %12863 = vmatprep.subr.bf16.mxu0 0
  %12864 = vmatpush2.bf16.msra.mxu0 %v12742
  %12865 = vmatprep.subr.bf16.mxu0 0
  %12866 = vmatpush2.bf16.msra.mxu0 %v12739
  %12867 = vmatprep.subr.bf16.mxu0 0
  %12868 = vmatpush2.bf16.msra.mxu0 %v12736
  %12869 = vmatprep.subr.bf16.mxu0 0
  %12870 = vmatpush2.bf16.msra.mxu0 %v12733
  %12871 = vmatprep.subr.bf16.mxu0 0
  %12872 = vmatpush2.bf16.msra.mxu0 %v12730
  %12873 = vmatprep.mubr.bf16.mxu0 %v12541
  %12874 = vmatmul.mubr.bf16.gmra.mxu0 %v12540
  %v12875 = vpop.f32.mrf.mxu0
  %v12876 = vadd.f32 0.0, %v12875
  %v12877 = vpop.f32.mrf.mxu0
  %v12878 = vpop.f32.mrf.mxu0
  %v12879 = vpop.f32.mrf.mxu0
  %12880 = vdwg.mxu0
  %v12881 = vadd.f32 %v12472, %v12835
  %v12882 = vadd.f32 %v12473, %v12837
  %v12883 = vadd.f32 %v12474, %v12876
  %v12884 = vpack.c.bf16 %v9613, %v9613
  %v12885 = vpack.c.bf16 %v9615, %v9615
  %s12886 = scalar_lea.vmem %s4, 3072
  %v12887 = vld [vmem:[%s12886] sm:$0xff]
  %v12888 = vld [vmem:[%s12886 + $0x8] sm:$0xf]
  %v12889 = vld [vmem:[%s12886 + $0xc] sm:$0xff]
  %v12890 = vld [vmem:[%s12886 + $0x14] sm:$0xf]
  %v12891 = vld [vmem:[%s12886 + $0x18] sm:$0xff]
  %v12892 = vld [vmem:[%s12886 + $0x20] sm:$0xf]
  %v12893 = vld [vmem:[%s12886 + $0x24] sm:$0xff]
  %v12894 = vld [vmem:[%s12886 + $0x2c] sm:$0xf]
  %v12895 = vld [vmem:[%s12886 + $0x30] sm:$0xff]
  %v12896 = vld [vmem:[%s12886 + $0x38] sm:$0xf]
  %v12897 = vld [vmem:[%s12886 + $0x3c] sm:$0xff]
  %v12898 = vld [vmem:[%s12886 + $0x44] sm:$0xf]
  %v12899 = vld [vmem:[%s12886 + $0x48] sm:$0xff]
  %v12900 = vld [vmem:[%s12886 + $0x50] sm:$0xf]
  %v12901 = vld [vmem:[%s12886 + $0x54] sm:$0xff]
  %v12902 = vld [vmem:[%s12886 + $0x5c] sm:$0xf]
  %v12903 = vld [vmem:[%s12886 + $0x60] sm:$0xff]
  %v12904 = vld [vmem:[%s12886 + $0x68] sm:$0xf]
  %v12905 = vld [vmem:[%s12886 + $0x6c] sm:$0xff]
  %v12906 = vld [vmem:[%s12886 + $0x74] sm:$0xf]
  %v12907 = vld [vmem:[%s12886 + $0x78] sm:$0xff]
  %v12908 = vld [vmem:[%s12886 + $0x80] sm:$0xf]
  %v12909 = vld [vmem:[%s12886 + $0x84] sm:$0xff]
  %v12910 = vld [vmem:[%s12886 + $0x8c] sm:$0xf]
  %v12911 = vld [vmem:[%s12886 + $0x90] sm:$0xff]
  %v12912 = vld [vmem:[%s12886 + $0x98] sm:$0xf]
  %v12913 = vld [vmem:[%s12886 + $0x9c] sm:$0xff]
  %v12914 = vld [vmem:[%s12886 + $0xa4] sm:$0xf]
  %v12915 = vld [vmem:[%s12886 + $0xa8] sm:$0xff]
  %v12916 = vld [vmem:[%s12886 + $0xb0] sm:$0xf]
  %v12917 = vld [vmem:[%s12886 + $0xb4] sm:$0xff]
  %v12918 = vld [vmem:[%s12886 + $0xbc] sm:$0xf]
  %v12919 = vld [vmem:[%s12886 + $0xc0] sm:$0xff]
  %v12920 = vld [vmem:[%s12886 + $0xc8] sm:$0xf]
  %v12921 = vld [vmem:[%s12886 + $0xcc] sm:$0xff]
  %v12922 = vld [vmem:[%s12886 + $0xd4] sm:$0xf]
  %v12923 = vld [vmem:[%s12886 + $0xd8] sm:$0xff]
  %v12924 = vld [vmem:[%s12886 + $0xe0] sm:$0xf]
  %v12925 = vld [vmem:[%s12886 + $0xe4] sm:$0xff]
  %v12926 = vld [vmem:[%s12886 + $0xec] sm:$0xf]
  %v12927 = vld [vmem:[%s12886 + $0xf0] sm:$0xff]
  %v12928 = vld [vmem:[%s12886 + $0xf8] sm:$0xf]
  %v12929 = vld [vmem:[%s12886 + $0xfc] sm:$0xff]
  %v12930 = vld [vmem:[%s12886 + $0x104] sm:$0xf]
  %v12931 = vld [vmem:[%s12886 + $0x108] sm:$0xff]
  %v12932 = vld [vmem:[%s12886 + $0x110] sm:$0xf]
  %v12933 = vld [vmem:[%s12886 + $0x114] sm:$0xff]
  %v12934 = vld [vmem:[%s12886 + $0x11c] sm:$0xf]
  %v12935 = vld [vmem:[%s12886 + $0x120] sm:$0xff]
  %v12936 = vld [vmem:[%s12886 + $0x128] sm:$0xf]
  %v12937 = vld [vmem:[%s12886 + $0x12c] sm:$0xff]
  %v12938 = vld [vmem:[%s12886 + $0x134] sm:$0xf]
  %v12939 = vld [vmem:[%s12886 + $0x138] sm:$0xff]
  %v12940 = vld [vmem:[%s12886 + $0x140] sm:$0xf]
  %v12941 = vld [vmem:[%s12886 + $0x144] sm:$0xff]
  %v12942 = vld [vmem:[%s12886 + $0x14c] sm:$0xf]
  %v12943 = vld [vmem:[%s12886 + $0x150] sm:$0xff]
  %v12944 = vld [vmem:[%s12886 + $0x158] sm:$0xf]
  %v12945 = vld [vmem:[%s12886 + $0x15c] sm:$0xff]
  %v12946 = vld [vmem:[%s12886 + $0x164] sm:$0xf]
  %v12947 = vld [vmem:[%s12886 + $0x168] sm:$0xff]
  %v12948 = vld [vmem:[%s12886 + $0x170] sm:$0xf]
  %v12949 = vld [vmem:[%s12886 + $0x174] sm:$0xff]
  %v12950 = vld [vmem:[%s12886 + $0x17c] sm:$0xf]
  %v13015 = vunpack.c.l.b16 %v12887
  %v13016 = vunpack.c.h.b16 %v12887
  %v13017 = vunpack.c.l.b16 %v12888
  %v13018 = vunpack.c.l.b16 %v12889
  %v13019 = vunpack.c.h.b16 %v12889
  %v13020 = vunpack.c.l.b16 %v12890
  %v13021 = vunpack.c.l.b16 %v12891
  %v13022 = vunpack.c.h.b16 %v12891
  %v13023 = vunpack.c.l.b16 %v12892
  %v13024 = vunpack.c.l.b16 %v12893
  %v13025 = vunpack.c.h.b16 %v12893
  %v13026 = vunpack.c.l.b16 %v12894
  %v13027 = vunpack.c.l.b16 %v12895
  %v13028 = vunpack.c.h.b16 %v12895
  %v13029 = vunpack.c.l.b16 %v12896
  %v13030 = vunpack.c.l.b16 %v12897
  %v13031 = vunpack.c.h.b16 %v12897
  %v13032 = vunpack.c.l.b16 %v12898
  %v13033 = vunpack.c.l.b16 %v12899
  %v13034 = vunpack.c.h.b16 %v12899
  %v13035 = vunpack.c.l.b16 %v12900
  %v13036 = vunpack.c.l.b16 %v12901
  %v13037 = vunpack.c.h.b16 %v12901
  %v13038 = vunpack.c.l.b16 %v12902
  %v13039 = vunpack.c.l.b16 %v12903
  %v13040 = vunpack.c.h.b16 %v12903
  %v13041 = vunpack.c.l.b16 %v12904
  %v13042 = vunpack.c.l.b16 %v12905
  %v13043 = vunpack.c.h.b16 %v12905
  %v13044 = vunpack.c.l.b16 %v12906
  %v13045 = vunpack.c.l.b16 %v12907
  %v13046 = vunpack.c.h.b16 %v12907
  %v13047 = vunpack.c.l.b16 %v12908
  %v13048 = vunpack.c.l.b16 %v12909
  %v13049 = vunpack.c.h.b16 %v12909
  %v13050 = vunpack.c.l.b16 %v12910
  %v13051 = vunpack.c.l.b16 %v12911
  %v13052 = vunpack.c.h.b16 %v12911
  %v13053 = vunpack.c.l.b16 %v12912
  %v13054 = vunpack.c.l.b16 %v12913
  %v13055 = vunpack.c.h.b16 %v12913
  %v13056 = vunpack.c.l.b16 %v12914
  %v13057 = vunpack.c.l.b16 %v12915
  %v13058 = vunpack.c.h.b16 %v12915
  %v13059 = vunpack.c.l.b16 %v12916
  %v13060 = vunpack.c.l.b16 %v12917
  %v13061 = vunpack.c.h.b16 %v12917
  %v13062 = vunpack.c.l.b16 %v12918
  %v13063 = vunpack.c.l.b16 %v12919
  %v13064 = vunpack.c.h.b16 %v12919
  %v13065 = vunpack.c.l.b16 %v12920
  %v13066 = vunpack.c.l.b16 %v12921
  %v13067 = vunpack.c.h.b16 %v12921
  %v13068 = vunpack.c.l.b16 %v12922
  %v13069 = vunpack.c.l.b16 %v12923
  %v13070 = vunpack.c.h.b16 %v12923
  %v13071 = vunpack.c.l.b16 %v12924
  %v13072 = vunpack.c.l.b16 %v12925
  %v13073 = vunpack.c.h.b16 %v12925
  %v13074 = vunpack.c.l.b16 %v12926
  %v13075 = vunpack.c.l.b16 %v12927
  %v13076 = vunpack.c.h.b16 %v12927
  %v13077 = vunpack.c.l.b16 %v12928
  %v13078 = vunpack.c.l.b16 %v12929
  %v13079 = vunpack.c.h.b16 %v12929
  %v13080 = vunpack.c.l.b16 %v12930
  %v13081 = vunpack.c.l.b16 %v12931
  %v13082 = vunpack.c.h.b16 %v12931
  %v13083 = vunpack.c.l.b16 %v12932
  %v13084 = vunpack.c.l.b16 %v12933
  %v13085 = vunpack.c.h.b16 %v12933
  %v13086 = vunpack.c.l.b16 %v12934
  %v13087 = vunpack.c.l.b16 %v12935
  %v13088 = vunpack.c.h.b16 %v12935
  %v13089 = vunpack.c.l.b16 %v12936
  %v13090 = vunpack.c.l.b16 %v12937
  %v13091 = vunpack.c.h.b16 %v12937
  %v13092 = vunpack.c.l.b16 %v12938
  %v13093 = vunpack.c.l.b16 %v12939
  %v13094 = vunpack.c.h.b16 %v12939
  %v13095 = vunpack.c.l.b16 %v12940
  %v13096 = vunpack.c.l.b16 %v12941
  %v13097 = vunpack.c.h.b16 %v12941
  %v13098 = vunpack.c.l.b16 %v12942
  %v13099 = vunpack.c.l.b16 %v12943
  %v13100 = vunpack.c.h.b16 %v12943
  %v13101 = vunpack.c.l.b16 %v12944
  %v13102 = vunpack.c.l.b16 %v12945
  %v13103 = vunpack.c.h.b16 %v12945
  %v13104 = vunpack.c.l.b16 %v12946
  %v13105 = vunpack.c.l.b16 %v12947
  %v13106 = vunpack.c.h.b16 %v12947
  %v13107 = vunpack.c.l.b16 %v12948
  %v13108 = vunpack.c.l.b16 %v12949
  %v13109 = vunpack.c.h.b16 %v12949
  %v13110 = vunpack.c.l.b16 %v12950
  %v13111 = vpack.c.b16 %v13018, %v13015
  %v13112 = vpack.c.b16 %v13019, %v13016
  %v13113 = vpack.c.b16 %v13020, %v13017
  %v13114 = vpack.c.b16 %v13024, %v13021
  %v13115 = vpack.c.b16 %v13025, %v13022
  %v13116 = vpack.c.b16 %v13026, %v13023
  %v13117 = vpack.c.b16 %v13030, %v13027
  %v13118 = vpack.c.b16 %v13031, %v13028
  %v13119 = vpack.c.b16 %v13032, %v13029
  %v13120 = vpack.c.b16 %v13036, %v13033
  %v13121 = vpack.c.b16 %v13037, %v13034
  %v13122 = vpack.c.b16 %v13038, %v13035
  %v13123 = vpack.c.b16 %v13042, %v13039
  %v13124 = vpack.c.b16 %v13043, %v13040
  %v13125 = vpack.c.b16 %v13044, %v13041
  %v13126 = vpack.c.b16 %v13048, %v13045
  %v13127 = vpack.c.b16 %v13049, %v13046
  %v13128 = vpack.c.b16 %v13050, %v13047
  %v13129 = vpack.c.b16 %v13054, %v13051
  %v13130 = vpack.c.b16 %v13055, %v13052
  %v13131 = vpack.c.b16 %v13056, %v13053
  %v13132 = vpack.c.b16 %v13060, %v13057
  %v13133 = vpack.c.b16 %v13061, %v13058
  %v13134 = vpack.c.b16 %v13062, %v13059
  %v13135 = vpack.c.b16 %v13066, %v13063
  %v13136 = vpack.c.b16 %v13067, %v13064
  %v13137 = vpack.c.b16 %v13068, %v13065
  %v13138 = vpack.c.b16 %v13072, %v13069
  %v13139 = vpack.c.b16 %v13073, %v13070
  %v13140 = vpack.c.b16 %v13074, %v13071
  %v13141 = vpack.c.b16 %v13078, %v13075
  %v13142 = vpack.c.b16 %v13079, %v13076
  %v13143 = vpack.c.b16 %v13080, %v13077
  %v13144 = vpack.c.b16 %v13084, %v13081
  %v13145 = vpack.c.b16 %v13085, %v13082
  %v13146 = vpack.c.b16 %v13086, %v13083
  %v13147 = vpack.c.b16 %v13090, %v13087
  %v13148 = vpack.c.b16 %v13091, %v13088
  %v13149 = vpack.c.b16 %v13092, %v13089
  %v13150 = vpack.c.b16 %v13096, %v13093
  %v13151 = vpack.c.b16 %v13097, %v13094
  %v13152 = vpack.c.b16 %v13098, %v13095
  %v13153 = vpack.c.b16 %v13102, %v13099
  %v13154 = vpack.c.b16 %v13103, %v13100
  %v13155 = vpack.c.b16 %v13104, %v13101
  %v13156 = vpack.c.b16 %v13108, %v13105
  %v13157 = vpack.c.b16 %v13109, %v13106
  %v13158 = vpack.c.b16 %v13110, %v13107
  %13207 = vmatprep.subr.bf16.mxu0 %v13133
  %13208 = vmatpush1.bf16.msra.mxu0 %v13132
  %13209 = vmatprep.subr.bf16.mxu0 %v13130
  %13210 = vmatpush1.bf16.msra.mxu0 %v13129
  %13211 = vmatprep.subr.bf16.mxu0 %v13127
  %13212 = vmatpush1.bf16.msra.mxu0 %v13126
  %13213 = vmatprep.subr.bf16.mxu0 %v13124
  %13214 = vmatpush1.bf16.msra.mxu0 %v13123
  %13215 = vmatprep.subr.bf16.mxu0 %v13121
  %13216 = vmatpush1.bf16.msra.mxu0 %v13120
  %13217 = vmatprep.subr.bf16.mxu0 %v13118
  %13218 = vmatpush1.bf16.msra.mxu0 %v13117
  %13219 = vmatprep.subr.bf16.mxu0 %v13115
  %13220 = vmatpush1.bf16.msra.mxu0 %v13114
  %13221 = vmatprep.subr.bf16.mxu0 %v13112
  %13222 = vmatpush1.bf16.msra.mxu0 %v13111
  %13223 = vmatprep.subr.bf16.mxu0 %v13157
  %13224 = vmatpush2.bf16.msra.mxu0 %v13156
  %13225 = vmatprep.subr.bf16.mxu0 %v13154
  %13226 = vmatpush2.bf16.msra.mxu0 %v13153
  %13227 = vmatprep.subr.bf16.mxu0 %v13151
  %13228 = vmatpush2.bf16.msra.mxu0 %v13150
  %13229 = vmatprep.subr.bf16.mxu0 %v13148
  %13230 = vmatpush2.bf16.msra.mxu0 %v13147
  %13231 = vmatprep.subr.bf16.mxu0 %v13145
  %13232 = vmatpush2.bf16.msra.mxu0 %v13144
  %13233 = vmatprep.subr.bf16.mxu0 %v13142
  %13234 = vmatpush2.bf16.msra.mxu0 %v13141
  %13235 = vmatprep.subr.bf16.mxu0 %v13139
  %13236 = vmatpush2.bf16.msra.mxu0 %v13138
  %13237 = vmatprep.subr.bf16.mxu0 %v13136
  %13238 = vmatpush2.bf16.msra.mxu0 %v13135
  %13239 = vmatprep.mubr.bf16.mxu0 %v12885
  %13240 = vmatmul.mubr.bf16.gmra.mxu0 %v12884
  %v13241 = vpop.f32.mrf.mxu0
  %v13242 = vadd.f32 0.0, %v13241
  %v13243 = vpop.f32.mrf.mxu0
  %v13244 = vadd.f32 0.0, %v13243
  %v13245 = vpop.f32.mrf.mxu0
  %v13246 = vpop.f32.mrf.mxu0
  %13247 = vdwg.mxu0
  %13248 = vmatprep.subr.bf16.mxu0 0
  %13249 = vmatpush1.bf16.msra.mxu0 %v13134
  %13250 = vmatprep.subr.bf16.mxu0 0
  %13251 = vmatpush1.bf16.msra.mxu0 %v13131
  %13252 = vmatprep.subr.bf16.mxu0 0
  %13253 = vmatpush1.bf16.msra.mxu0 %v13128
  %13254 = vmatprep.subr.bf16.mxu0 0
  %13255 = vmatpush1.bf16.msra.mxu0 %v13125
  %13256 = vmatprep.subr.bf16.mxu0 0
  %13257 = vmatpush1.bf16.msra.mxu0 %v13122
  %13258 = vmatprep.subr.bf16.mxu0 0
  %13259 = vmatpush1.bf16.msra.mxu0 %v13119
  %13260 = vmatprep.subr.bf16.mxu0 0
  %13261 = vmatpush1.bf16.msra.mxu0 %v13116
  %13262 = vmatprep.subr.bf16.mxu0 0
  %13263 = vmatpush1.bf16.msra.mxu0 %v13113
  %13264 = vmatprep.subr.bf16.mxu0 0
  %13265 = vmatpush2.bf16.msra.mxu0 %v13158
  %13266 = vmatprep.subr.bf16.mxu0 0
  %13267 = vmatpush2.bf16.msra.mxu0 %v13155
  %13268 = vmatprep.subr.bf16.mxu0 0
  %13269 = vmatpush2.bf16.msra.mxu0 %v13152
  %13270 = vmatprep.subr.bf16.mxu0 0
  %13271 = vmatpush2.bf16.msra.mxu0 %v13149
  %13272 = vmatprep.subr.bf16.mxu0 0
  %13273 = vmatpush2.bf16.msra.mxu0 %v13146
  %13274 = vmatprep.subr.bf16.mxu0 0
  %13275 = vmatpush2.bf16.msra.mxu0 %v13143
  %13276 = vmatprep.subr.bf16.mxu0 0
  %13277 = vmatpush2.bf16.msra.mxu0 %v13140
  %13278 = vmatprep.subr.bf16.mxu0 0
  %13279 = vmatpush2.bf16.msra.mxu0 %v13137
  %13280 = vmatprep.mubr.bf16.mxu0 %v12885
  %13281 = vmatmul.mubr.bf16.gmra.mxu0 %v12884
  %v13282 = vpop.f32.mrf.mxu0
  %v13283 = vadd.f32 0.0, %v13282
  %v13284 = vpop.f32.mrf.mxu0
  %v13285 = vpop.f32.mrf.mxu0
  %v13286 = vpop.f32.mrf.mxu0
  %13287 = vdwg.mxu0
  %v13288 = vadd.f32 %v12881, %v13242
  %v13289 = vadd.f32 %v12882, %v13244
  %v13290 = vadd.f32 %v12883, %v13283
  %v13291 = vld [vmem:[#allocation2] sm:$0x1]
  %v13293 = vlaneseq
  %v13294 = vshrl.u32 %v13293, 7
  %v13295 = vsub.s32 0, %v13294
  %v13296 = vrot.slane %v13291, %v13295
  %13297 = vset.pattern.permute.xlu0 0
  %13298 = vperm.xlu0 %13297, %v13296
  %v13299 = vpop.permute.xlu0 %13298
  %v13301 = vadd.f32 %v13288, %v13299
  %v13302 = vadd.f32 %v13289, %v13299
  %v13303 = vadd.f32 %v13290, %v13299
  %v13307 = vcombine.low %v13301, %v13302
  %v13309 = vunpack.c.l.s4 1983009808
  %v13310 = vunpack.c.0.s8 %v13309
  %v13311 = vlaneseq
  %v13312 = vshrl.u32 %v13311, 7
  %v13313 = vsub.s32 %v13310, %v13312
  %v13314 = vrot.slane %v13307, %v13313
  %v13316 = vunpack.c.l.s4 1983009808
  %v13317 = vunpack.c.0.s8 %v13316
  %v13318 = vlaneseq
  %v13319 = vshrl.u32 %v13318, 7
  %v13320 = vsub.s32 %v13317, %v13319
  %v13321 = vrot.slane %v13303, %v13320
  %v13322 = vcombine.low %v13314, %v13321
  %vm13324 = vcmask 1041408
  %vm13325 = vcmask 1043458
  %vm13326 = vmor %vm13325, %vm13324
  %vm13327 = vcmask 553988
  %vm13328 = vmor %vm13327, %vm13326
  %13329 = vst.msk [vmem:[%s9] sm:$0x3f] %vm13328, %v13322
  // Predicated region
  $region38: #{discriminator_forward.1} parent=0 // pred_check
    _
  $region39: #{discriminator_forward.1} parent=0 // pred_check_branch
    %13331 = sbr.rel (0) target = $region41
  $region40: #{discriminator_forward.1} parent=0 // pred_region
    _
  $region41: #{discriminator_forward.1} parent=0 // pred_fallthru
    _
  // Predicated region
  $region42: #{discriminator_forward.1} parent=0 // pred_check
    _
  $region43: #{discriminator_forward.1} parent=0 // pred_check_branch
    %13333 = sbr.rel (0) target = $region45
  $region44: #{discriminator_forward.1} parent=0 // pred_region
    _
  $region45: #{discriminator_forward.1} parent=0 // pred_fallthru
    _

</llo_original>
